<compile_context>
chip_gen: v7x
topology: tpu7x:2x2x1
jax: 0.10.0
libtpu: 0.0.40
codegen_flags: <defaults>
</compile_context>

<pallas_src>
import functools
import math

import jax
import jax.numpy as jnp
from jax.experimental import pallas as pl
from jax.experimental.pallas import tpu as pltpu

_EPS = float(jnp.finfo(jnp.float32).eps)   # torch F.rms_norm default eps (fp32)
_VMEM = pltpu.MemorySpace.VMEM
_SMEM = pltpu.MemorySpace.SMEM

CFG = dict(vocab_size=48, mask_token_id=47, bos_token_id=0, num_layers=2,
           num_heads=4, model_dim=32, max_seq_len=64, mlp_ratio=4, num_steps=8)


def next_multiple_of_n(v, *, n):
    return -v % n + v


def _vspec():
    return pl.BlockSpec(memory_space=_VMEM)


def _sspec():
    return pl.BlockSpec(memory_space=_SMEM)


def _rms(x):
    return x * jax.lax.rsqrt(jnp.mean(x * x, axis=-1, keepdims=True) + _EPS)


def _matT(a, w):
    """a @ w.T  (PyTorch nn.Linear convention, w: (out, in), no bias)."""
    return jax.lax.dot_general(a, w, (((1,), (1,)), ((), ())),
                               preferred_element_type=jnp.float32)


# --------------------------- fused forward kernel ----------------------------
def _forward_kernel(attn_lam_ref, block_lam_ref,                  # SMEM scalars
                    x_ref, sincos_ref, cos_ref, sin_ref, bias_ref,
                    te_w1_ref, te_b1_ref, te_w2_ref, te_b2_ref,
                    qkv_w_ref, attn_proj_w_ref,
                    mlp_w1_ref, mlp_w2_ref,
                    tc_enc_w_ref, tc_enc_b_ref, tc_dec_w_ref, tc_dec_b_ref,
                    lm_head_w_ref,
                    logits_ref, loss_ref, tc_acts_ref,
                    *, num_layers, num_heads, head_dim, scale, denom):
    hdim = num_heads * head_dim
    half = head_dim // 2

    # --- time-embedding MLP: Linear -> ReLU -> Linear on the (1, d) sinusoid ---
    te_h = jnp.maximum(_matT(sincos_ref[...], te_w1_ref[...]) + te_b1_ref[...], 0.0)
    te = _matT(te_h, te_w2_ref[...]) + te_b2_ref[...]              # (1, d)

    x = _rms(x_ref[...].astype(jnp.float32)) + te                  # (L, d)

    cosf = cos_ref[...]                                            # (L, hd)
    sinf = sin_ref[...]                                            # (L, hd)
    bias = bias_ref[...]                                           # (L, L)

    def rope(z):                                                   # rotate-half rotary
        zr = jnp.concatenate([z[:, half:], z[:, :half]], axis=-1)
        return z * cosf + zr * sinf

    loss = jnp.float32(0.0)
    for l in range(num_layers):                                    # static unroll (2)
        x = block_lam_ref[l] * x
        xn = _rms(x)
        qkv = _matT(xn, qkv_w_ref[l])                              # (L, 3*hdim)
        attn_lam = attn_lam_ref[l]

        heads = []
        for h in range(num_heads):                                 # static unroll (4)
            lo = h * head_dim
            qh = rope(_rms(qkv[:, lo:lo + head_dim]))
            kh = rope(_rms(qkv[:, hdim + lo:hdim + lo + head_dim]))
            vh = attn_lam * qkv[:, 2 * hdim + lo:2 * hdim + lo + head_dim]
            s = jax.lax.dot_general(qh, kh, (((1,), (1,)), ((), ())),
                                    preferred_element_type=jnp.float32) * scale
            s = s + bias                                           # same-doc mask
            s = s - jnp.max(s, axis=-1, keepdims=True)
            p = jnp.exp(s)
            p = p / jnp.sum(p, axis=-1, keepdims=True)
            heads.append(jnp.dot(p, vh, preferred_element_type=jnp.float32))
        y = jnp.concatenate(heads, axis=-1)                        # (L, hdim)

        pre_mlp = x + _matT(y, attn_proj_w_ref[l])

        # block MLP (bias-free CastedLinear layers)
        mlp_h = jnp.maximum(_matT(_rms(pre_mlp), mlp_w1_ref[l]), 0.0)
        post_mlp = pre_mlp + _matT(mlp_h, mlp_w2_ref[l])

        # transcoder (nn.Linear layers with bias)
        tc_act = jnp.maximum(_matT(pre_mlp, tc_enc_w_ref[l]) + tc_enc_b_ref[l], 0.0)
        tc_out = _matT(tc_act, tc_dec_w_ref[l]) + tc_dec_b_ref[l]
        tc_acts_ref[l] = tc_act                                    # (L, tc_h), lane-dense

        diff = tc_out - post_mlp                                   # fused MSE
        loss = loss + jnp.sum(diff * diff) / float(diff.shape[0] * diff.shape[1])

        x = post_mlp

    loss_ref[0, 0] = loss

    logits = _matT(_rms(x), lm_head_w_ref[...])                    # (L, vpad)
    logits_ref[...] = 30.0 * jax.nn.sigmoid(logits / denom)


# ------------------------------- model glue ----------------------------------
def init_params(key, cfg):
    d = cfg["model_dim"]
    nh = cfg["num_heads"]
    hd = d // nh
    hdim = nh * hd
    mlp_h = cfg["mlp_ratio"] * d
    tc_h = 2 * cfg["mlp_ratio"] * d
    vpad = next_multiple_of_n(cfg["vocab_size"], n=128)

    keys = iter(jax.random.split(key, 64))

    def nrm(shape, scale=0.02):
        return (scale * jax.random.normal(next(keys), shape)).astype(jnp.float32)

    def uni(shape, bound):
        return jax.random.uniform(next(keys), shape, jnp.float32, -bound, bound)

    qkv_bound = (3.0 ** 0.5) * 0.5 * d ** -0.5
    lin_bound = 1.0 / math.sqrt(d)

    # NOTE: the PyTorch module zero-initializes c_proj / mlp.c_proj / lm_head
    # weights; we use small random values so the kernel computes something
    # non-degenerate (documented deviation).
    params = {
        "embed": nrm((cfg["vocab_size"], d), 1.0),
        "te_w1": uni((d, d), lin_bound), "te_b1": uni((d,), lin_bound),
        "te_w2": uni((d, d), lin_bound), "te_b2": uni((d,), lin_bound),
        "lm_head_w": nrm((vpad, d)),
        "blocks": [],
    }
    for _ in range(cfg["num_layers"]):
        params["blocks"].append({
            "qkv_w": uni((3 * hdim, d), qkv_bound),
            "attn_lambda": jnp.float32(0.5),
            "attn_proj_w": nrm((d, hdim)),
            "block_lambda": jnp.float32(1.0),
            "mlp_w1": uni((mlp_h, d), lin_bound),
            "mlp_w2": nrm((d, mlp_h)),
            "tc_enc_w": uni((tc_h, d), lin_bound),
            "tc_enc_b": uni((tc_h,), lin_bound),
            "tc_dec_w": uni((d, tc_h), 1.0 / math.sqrt(tc_h)),
            "tc_dec_b": uni((d,), 1.0 / math.sqrt(tc_h)),
        })
    return params


def forward(params, input_seq, t, cfg):
    d = cfg["model_dim"]
    nh = cfg["num_heads"]
    hd = d // nh
    nl = cfg["num_layers"]
    tc_h = 2 * cfg["mlp_ratio"] * d
    vpad = next_multiple_of_n(cfg["vocab_size"], n=128)
    L = input_seq.shape[0]
    scale = 1.0 / math.sqrt(hd)
    denom = 7.5 * (d ** 0.5)

    # ---------- cheap host glue (constant tables, embedding gather) ----------
    # document mask (create_block_mask(doc_causal)): attend iff same document
    docs = jnp.cumsum((input_seq == cfg["bos_token_id"]).astype(jnp.int32))
    bias = jnp.where(docs[:, None] == docs[None, :], 0.0, -1e30).astype(jnp.float32)
    # TODO(synk): the stochastic p_mask token masking in the PyTorch forward is
    # computed but never affects the returned (logits, loss, activations); omitted.

    # nanogpt half-truncated rotary tables
    ang = (1.0 / 1024.0) ** jnp.linspace(0.0, 1.0, hd // 4)
    ang = jnp.concatenate([ang, jnp.zeros((hd // 4,), jnp.float32)])
    theta = jnp.arange(cfg["max_seq_len"], dtype=jnp.float32)[:, None] * ang[None, :]
    cos, sin = jnp.cos(theta)[:L], jnp.sin(theta)[:L]
    cosf = jnp.concatenate([cos, cos], axis=-1)                    # (L, hd)
    sinf = jnp.concatenate([sin, -sin], axis=-1)                   # (L, hd)

    # sinusoidal time embedding (the 2-layer time-MLP runs inside the kernel)
    nfreq = d // 2
    freq = jnp.exp(jnp.arange(nfreq, dtype=jnp.float32)
                   * -(math.log(10000.0) / (nfreq - 1)))
    args = t.astype(jnp.float32)[:, None] * freq[None, :]
    sincos = jnp.concatenate([jnp.sin(args), jnp.cos(args)], axis=-1)   # (1, d)

    x_emb = params["embed"][input_seq]                             # (L, d) gather

    # stack per-layer weights so the fused kernel can statically index layer l
    stack = lambda k: jnp.stack([b[k] for b in params["blocks"]])
    attn_lam = jnp.stack([b["attn_lambda"] for b in params["blocks"]])   # (nl,)
    block_lam = jnp.stack([b["block_lambda"] for b in params["blocks"]])
    qkv_w = stack("qkv_w")
    attn_proj_w = stack("attn_proj_w")
    mlp_w1 = stack("mlp_w1")
    mlp_w2 = stack("mlp_w2")
    tc_enc_w = stack("tc_enc_w")
    tc_enc_b = stack("tc_enc_b").reshape(nl, 1, tc_h)
    tc_dec_w = stack("tc_dec_w")
    tc_dec_b = stack("tc_dec_b").reshape(nl, 1, d)

    kernel = functools.partial(_forward_kernel, num_layers=nl, num_heads=nh,
                               head_dim=hd, scale=scale, denom=denom)

    logits, loss, tc_acts = pl.pallas_call(
        kernel,
        out_shape=(jax.ShapeDtypeStruct((L, vpad), jnp.float32),    # lane-dense (128)
                   jax.ShapeDtypeStruct((1, 1), jnp.float32),       # scalar loss (SMEM)
                   jax.ShapeDtypeStruct((nl, L, tc_h), jnp.float32)),  # lane-dense (256)
        in_specs=[_sspec(), _sspec()] + [_vspec()] * 18,
        out_specs=(_vspec(), _sspec(), _vspec()),
    )(attn_lam, block_lam,
      x_emb, sincos, cosf, sinf, bias,
      params["te_w1"], params["te_b1"].reshape(1, d),
      params["te_w2"], params["te_b2"].reshape(1, d),
      qkv_w, attn_proj_w, mlp_w1, mlp_w2,
      tc_enc_w, tc_enc_b, tc_dec_w, tc_dec_b,
      params["lm_head_w"])

    transcoder_activations = [tc_acts[l][None] for l in range(nl)]
    return logits[None], loss[0, 0], transcoder_activations


if __name__ == "__main__":
    cfg = CFG
    key = jax.random.PRNGKey(0)
    k_par, k_seq = jax.random.split(key)
    params = init_params(k_par, cfg)

    L = cfg["max_seq_len"]
    input_seq = jax.random.randint(k_seq, (L,), 0, cfg["vocab_size"], dtype=jnp.int32)
    input_seq = input_seq.at[0].set(cfg["bos_token_id"])
    t = jnp.array([3], dtype=jnp.int32)

    fwd = jax.jit(lambda p, s, tt: forward(p, s, tt, cfg))
    logits, loss, acts = fwd(params, input_seq, t)
    jax.block_until_ready((logits, loss, acts))

    assert logits.shape == (1, L, next_multiple_of_n(cfg["vocab_size"], n=128))
    assert loss.shape == ()
    assert all(a.shape == (1, L, 2 * cfg["mlp_ratio"] * cfg["model_dim"]) for a in acts)
    print("KERNEL_OK")
</pallas_src>

<mosaic_0001>
module attributes {stable_mosaic.version = 11 : i64} {
  func.func @_forward_kernel(%arg0: memref<2xf32, #tpu.memory_space<smem>>, %arg1: memref<2xf32, #tpu.memory_space<smem>>, %arg2: memref<64x32xf32, #tpu.memory_space<vmem>>, %arg3: memref<1x32xf32, #tpu.memory_space<vmem>>, %arg4: memref<64x8xf32, #tpu.memory_space<vmem>>, %arg5: memref<64x8xf32, #tpu.memory_space<vmem>>, %arg6: memref<64x64xf32, #tpu.memory_space<vmem>>, %arg7: memref<32x32xf32, #tpu.memory_space<vmem>>, %arg8: memref<1x32xf32, #tpu.memory_space<vmem>>, %arg9: memref<32x32xf32, #tpu.memory_space<vmem>>, %arg10: memref<1x32xf32, #tpu.memory_space<vmem>>, %arg11: memref<2x96x32xf32, #tpu.memory_space<vmem>>, %arg12: memref<2x32x32xf32, #tpu.memory_space<vmem>>, %arg13: memref<2x128x32xf32, #tpu.memory_space<vmem>>, %arg14: memref<2x32x128xf32, #tpu.memory_space<vmem>>, %arg15: memref<2x256x32xf32, #tpu.memory_space<vmem>>, %arg16: memref<2x1x256xf32, #tpu.memory_space<vmem>>, %arg17: memref<2x32x256xf32, #tpu.memory_space<vmem>>, %arg18: memref<2x1x32xf32, #tpu.memory_space<vmem>>, %arg19: memref<128x32xf32, #tpu.memory_space<vmem>>, %arg20: memref<64x128xf32, #tpu.memory_space<vmem>>, %arg21: memref<1x1xf32, #tpu.memory_space<smem>>, %arg22: memref<2x64x256xf32, #tpu.memory_space<vmem>>) attributes {dimension_semantics = [], scalar_prefetch = 0 : i64, scratch_operands = 0 : i64, tpu.core_type = #tpu.core_type<tc>} {
    %c0 = arith.constant 0 : index
    %c0_0 = arith.constant 0 : index
    %0 = vector.load %arg3[%c0, %c0_0] : memref<1x32xf32, #tpu.memory_space<vmem>>, vector<1x32xf32>
    %c0_1 = arith.constant 0 : index
    %c0_2 = arith.constant 0 : index
    %1 = vector.load %arg7[%c0_1, %c0_2] : memref<32x32xf32, #tpu.memory_space<vmem>>, vector<32x32xf32>
    %cst = arith.constant dense<0.000000e+00> : vector<1x32xf32>
    %2 = tpu.matmul %0, %1, %cst {dimension_numbers = #tpu.dot_dimension_numbers<[1], [1], [0], [0], [0, 0, 1, 0], [], []>} : vector<1x32xf32>, vector<32x32xf32>, vector<1x32xf32> -> vector<1x32xf32>
    %c0_3 = arith.constant 0 : index
    %c0_4 = arith.constant 0 : index
    %3 = vector.load %arg8[%c0_3, %c0_4] : memref<1x32xf32, #tpu.memory_space<vmem>>, vector<1x32xf32>
    %4 = arith.addf %2, %3 : vector<1x32xf32>
    %cst_5 = arith.constant 0.000000e+00 : f32
    %5 = vector.broadcast %cst_5 : f32 to vector<1x32xf32>
    %6 = arith.maximumf %4, %5 : vector<1x32xf32>
    %c0_6 = arith.constant 0 : index
    %c0_7 = arith.constant 0 : index
    %7 = vector.load %arg9[%c0_6, %c0_7] : memref<32x32xf32, #tpu.memory_space<vmem>>, vector<32x32xf32>
    %cst_8 = arith.constant dense<0.000000e+00> : vector<1x32xf32>
    %8 = tpu.matmul %6, %7, %cst_8 {dimension_numbers = #tpu.dot_dimension_numbers<[1], [1], [0], [0], [0, 0, 1, 0], [], []>} : vector<1x32xf32>, vector<32x32xf32>, vector<1x32xf32> -> vector<1x32xf32>
    %c0_9 = arith.constant 0 : index
    %c0_10 = arith.constant 0 : index
    %9 = vector.load %arg10[%c0_9, %c0_10] : memref<1x32xf32, #tpu.memory_space<vmem>>, vector<1x32xf32>
    %10 = arith.addf %8, %9 : vector<1x32xf32>
    %c0_11 = arith.constant 0 : index
    %c0_12 = arith.constant 0 : index
    %11 = vector.load %arg2[%c0_11, %c0_12] : memref<64x32xf32, #tpu.memory_space<vmem>>, vector<64x32xf32>
    %12 = arith.mulf %11, %11 : vector<64x32xf32>
    %cst_13 = arith.constant dense<0.000000e+00> : vector<64xf32>
    %13 = vector.multi_reduction <add>, %12, %cst_13 [1] : vector<64x32xf32> to vector<64xf32>
    %14 = vector.shape_cast %13 : vector<64xf32> to vector<64x1xf32>
    %cst_14 = arith.constant 3.200000e+01 : f32
    %15 = vector.broadcast %cst_14 : f32 to vector<64x1xf32>
    %16 = arith.divf %14, %15 : vector<64x1xf32>
    %cst_15 = arith.constant 1.1920929E-7 : f32
    %17 = vector.broadcast %cst_15 : f32 to vector<64x1xf32>
    %18 = arith.addf %16, %17 : vector<64x1xf32>
    %19 = math.rsqrt %18 : vector<64x1xf32>
    %20 = vector.broadcast %19 : vector<64x1xf32> to vector<64x32xf32>
    %21 = arith.mulf %11, %20 : vector<64x32xf32>
    %22 = vector.broadcast %10 : vector<1x32xf32> to vector<64x32xf32>
    %23 = arith.addf %21, %22 : vector<64x32xf32>
    %c0_16 = arith.constant 0 : index
    %c0_17 = arith.constant 0 : index
    %24 = vector.load %arg4[%c0_16, %c0_17] : memref<64x8xf32, #tpu.memory_space<vmem>>, vector<64x8xf32>
    %c0_18 = arith.constant 0 : index
    %c0_19 = arith.constant 0 : index
    %25 = vector.load %arg5[%c0_18, %c0_19] : memref<64x8xf32, #tpu.memory_space<vmem>>, vector<64x8xf32>
    %c0_20 = arith.constant 0 : index
    %c0_21 = arith.constant 0 : index
    %26 = vector.load %arg6[%c0_20, %c0_21] : memref<64x64xf32, #tpu.memory_space<vmem>>, vector<64x64xf32>
    %c0_22 = arith.constant 0 : index
    %27 = memref.load %arg1[%c0_22] : memref<2xf32, #tpu.memory_space<smem>>
    %28 = vector.broadcast %27 : f32 to vector<64x32xf32>
    %29 = arith.mulf %28, %23 : vector<64x32xf32>
    %30 = arith.mulf %29, %29 : vector<64x32xf32>
    %cst_23 = arith.constant dense<0.000000e+00> : vector<64xf32>
    %31 = vector.multi_reduction <add>, %30, %cst_23 [1] : vector<64x32xf32> to vector<64xf32>
    %32 = vector.shape_cast %31 : vector<64xf32> to vector<64x1xf32>
    %cst_24 = arith.constant 3.200000e+01 : f32
    %33 = vector.broadcast %cst_24 : f32 to vector<64x1xf32>
    %34 = arith.divf %32, %33 : vector<64x1xf32>
    %cst_25 = arith.constant 1.1920929E-7 : f32
    %35 = vector.broadcast %cst_25 : f32 to vector<64x1xf32>
    %36 = arith.addf %34, %35 : vector<64x1xf32>
    %37 = math.rsqrt %36 : vector<64x1xf32>
    %38 = vector.broadcast %37 : vector<64x1xf32> to vector<64x32xf32>
    %39 = arith.mulf %29, %38 : vector<64x32xf32>
    %c0_26 = arith.constant 0 : index
    %c0_27 = arith.constant 0 : index
    %c0_28 = arith.constant 0 : index
    %40 = vector.load %arg11[%c0_26, %c0_27, %c0_28] : memref<2x96x32xf32, #tpu.memory_space<vmem>>, vector<1x96x32xf32>
    %41 = vector.shape_cast %40 : vector<1x96x32xf32> to vector<96x32xf32>
    %cst_29 = arith.constant dense<0.000000e+00> : vector<64x96xf32>
    %42 = tpu.matmul %39, %41, %cst_29 {dimension_numbers = #tpu.dot_dimension_numbers<[1], [1], [0], [0], [0, 0, 1, 0], [], []>} : vector<64x32xf32>, vector<96x32xf32>, vector<64x96xf32> -> vector<64x96xf32>
    %c0_30 = arith.constant 0 : index
    %43 = memref.load %arg0[%c0_30] : memref<2xf32, #tpu.memory_space<smem>>
    %44 = vector.extract_strided_slice %42 {offsets = [0, 0], sizes = [64, 8], strides = [1, 1]} : vector<64x96xf32> to vector<64x8xf32>
    %45 = arith.mulf %44, %44 : vector<64x8xf32>
    %cst_31 = arith.constant dense<0.000000e+00> : vector<64xf32>
    %46 = vector.multi_reduction <add>, %45, %cst_31 [1] : vector<64x8xf32> to vector<64xf32>
    %47 = vector.shape_cast %46 : vector<64xf32> to vector<64x1xf32>
    %cst_32 = arith.constant 8.000000e+00 : f32
    %48 = vector.broadcast %cst_32 : f32 to vector<64x1xf32>
    %49 = arith.divf %47, %48 : vector<64x1xf32>
    %cst_33 = arith.constant 1.1920929E-7 : f32
    %50 = vector.broadcast %cst_33 : f32 to vector<64x1xf32>
    %51 = arith.addf %49, %50 : vector<64x1xf32>
    %52 = math.rsqrt %51 : vector<64x1xf32>
    %53 = vector.broadcast %52 : vector<64x1xf32> to vector<64x8xf32>
    %54 = arith.mulf %44, %53 : vector<64x8xf32>
    %55 = vector.extract_strided_slice %54 {offsets = [0, 4], sizes = [64, 4], strides = [1, 1]} : vector<64x8xf32> to vector<64x4xf32>
    %56 = vector.extract_strided_slice %54 {offsets = [0, 0], sizes = [64, 4], strides = [1, 1]} : vector<64x8xf32> to vector<64x4xf32>
    %57 = tpu.concatenate %55, %56 in 1 : vector<64x4xf32>, vector<64x4xf32> -> vector<64x8xf32>
    %58 = arith.mulf %54, %24 : vector<64x8xf32>
    %59 = arith.mulf %57, %25 : vector<64x8xf32>
    %60 = arith.addf %58, %59 : vector<64x8xf32>
    %61 = vector.extract_strided_slice %42 {offsets = [0, 32], sizes = [64, 8], strides = [1, 1]} : vector<64x96xf32> to vector<64x8xf32>
    %62 = arith.mulf %61, %61 : vector<64x8xf32>
    %cst_34 = arith.constant dense<0.000000e+00> : vector<64xf32>
    %63 = vector.multi_reduction <add>, %62, %cst_34 [1] : vector<64x8xf32> to vector<64xf32>
    %64 = vector.shape_cast %63 : vector<64xf32> to vector<64x1xf32>
    %cst_35 = arith.constant 8.000000e+00 : f32
    %65 = vector.broadcast %cst_35 : f32 to vector<64x1xf32>
    %66 = arith.divf %64, %65 : vector<64x1xf32>
    %cst_36 = arith.constant 1.1920929E-7 : f32
    %67 = vector.broadcast %cst_36 : f32 to vector<64x1xf32>
    %68 = arith.addf %66, %67 : vector<64x1xf32>
    %69 = math.rsqrt %68 : vector<64x1xf32>
    %70 = vector.broadcast %69 : vector<64x1xf32> to vector<64x8xf32>
    %71 = arith.mulf %61, %70 : vector<64x8xf32>
    %72 = vector.extract_strided_slice %71 {offsets = [0, 4], sizes = [64, 4], strides = [1, 1]} : vector<64x8xf32> to vector<64x4xf32>
    %73 = vector.extract_strided_slice %71 {offsets = [0, 0], sizes = [64, 4], strides = [1, 1]} : vector<64x8xf32> to vector<64x4xf32>
    %74 = tpu.concatenate %72, %73 in 1 : vector<64x4xf32>, vector<64x4xf32> -> vector<64x8xf32>
    %75 = arith.mulf %71, %24 : vector<64x8xf32>
    %76 = arith.mulf %74, %25 : vector<64x8xf32>
    %77 = arith.addf %75, %76 : vector<64x8xf32>
    %78 = vector.extract_strided_slice %42 {offsets = [0, 64], sizes = [64, 8], strides = [1, 1]} : vector<64x96xf32> to vector<64x8xf32>
    %79 = vector.broadcast %43 : f32 to vector<64x8xf32>
    %80 = arith.mulf %79, %78 : vector<64x8xf32>
    %cst_37 = arith.constant dense<0.000000e+00> : vector<64x64xf32>
    %81 = tpu.matmul %60, %77, %cst_37 {dimension_numbers = #tpu.dot_dimension_numbers<[1], [1], [0], [0], [0, 0, 1, 0], [], []>} : vector<64x8xf32>, vector<64x8xf32>, vector<64x64xf32> -> vector<64x64xf32>
    %cst_38 = arith.constant 0.353553385 : f32
    %82 = vector.broadcast %cst_38 : f32 to vector<64x64xf32>
    %83 = arith.mulf %81, %82 : vector<64x64xf32>
    %84 = arith.addf %83, %26 : vector<64x64xf32>
    %cst_39 = arith.constant dense<0xFF800000> : vector<64xf32>
    %85 = vector.multi_reduction <maximumf>, %84, %cst_39 [1] : vector<64x64xf32> to vector<64xf32>
    %86 = vector.shape_cast %85 : vector<64xf32> to vector<64x1xf32>
    %87 = vector.broadcast %86 : vector<64x1xf32> to vector<64x64xf32>
    %88 = arith.subf %84, %87 : vector<64x64xf32>
    %89 = math.exp %88 : vector<64x64xf32>
    %cst_40 = arith.constant dense<0.000000e+00> : vector<64xf32>
    %90 = vector.multi_reduction <add>, %89, %cst_40 [1] : vector<64x64xf32> to vector<64xf32>
    %91 = vector.shape_cast %90 : vector<64xf32> to vector<64x1xf32>
    %92 = vector.broadcast %91 : vector<64x1xf32> to vector<64x64xf32>
    %93 = arith.divf %89, %92 : vector<64x64xf32>
    %cst_41 = arith.constant dense<0.000000e+00> : vector<64x8xf32>
    %94 = tpu.matmul %93, %80, %cst_41 {dimension_numbers = #tpu.dot_dimension_numbers<[1], [0], [0], [1], [0, 0, 1, 1], [], []>} : vector<64x64xf32>, vector<64x8xf32>, vector<64x8xf32> -> vector<64x8xf32>
    %95 = vector.extract_strided_slice %42 {offsets = [0, 8], sizes = [64, 8], strides = [1, 1]} : vector<64x96xf32> to vector<64x8xf32>
    %96 = arith.mulf %95, %95 : vector<64x8xf32>
    %cst_42 = arith.constant dense<0.000000e+00> : vector<64xf32>
    %97 = vector.multi_reduction <add>, %96, %cst_42 [1] : vector<64x8xf32> to vector<64xf32>
    %98 = vector.shape_cast %97 : vector<64xf32> to vector<64x1xf32>
    %cst_43 = arith.constant 8.000000e+00 : f32
    %99 = vector.broadcast %cst_43 : f32 to vector<64x1xf32>
    %100 = arith.divf %98, %99 : vector<64x1xf32>
    %cst_44 = arith.constant 1.1920929E-7 : f32
    %101 = vector.broadcast %cst_44 : f32 to vector<64x1xf32>
    %102 = arith.addf %100, %101 : vector<64x1xf32>
    %103 = math.rsqrt %102 : vector<64x1xf32>
    %104 = vector.broadcast %103 : vector<64x1xf32> to vector<64x8xf32>
    %105 = arith.mulf %95, %104 : vector<64x8xf32>
    %106 = vector.extract_strided_slice %105 {offsets = [0, 4], sizes = [64, 4], strides = [1, 1]} : vector<64x8xf32> to vector<64x4xf32>
    %107 = vector.extract_strided_slice %105 {offsets = [0, 0], sizes = [64, 4], strides = [1, 1]} : vector<64x8xf32> to vector<64x4xf32>
    %108 = tpu.concatenate %106, %107 in 1 : vector<64x4xf32>, vector<64x4xf32> -> vector<64x8xf32>
    %109 = arith.mulf %105, %24 : vector<64x8xf32>
    %110 = arith.mulf %108, %25 : vector<64x8xf32>
    %111 = arith.addf %109, %110 : vector<64x8xf32>
    %112 = vector.extract_strided_slice %42 {offsets = [0, 40], sizes = [64, 8], strides = [1, 1]} : vector<64x96xf32> to vector<64x8xf32>
    %113 = arith.mulf %112, %112 : vector<64x8xf32>
    %cst_45 = arith.constant dense<0.000000e+00> : vector<64xf32>
    %114 = vector.multi_reduction <add>, %113, %cst_45 [1] : vector<64x8xf32> to vector<64xf32>
    %115 = vector.shape_cast %114 : vector<64xf32> to vector<64x1xf32>
    %cst_46 = arith.constant 8.000000e+00 : f32
    %116 = vector.broadcast %cst_46 : f32 to vector<64x1xf32>
    %117 = arith.divf %115, %116 : vector<64x1xf32>
    %cst_47 = arith.constant 1.1920929E-7 : f32
    %118 = vector.broadcast %cst_47 : f32 to vector<64x1xf32>
    %119 = arith.addf %117, %118 : vector<64x1xf32>
    %120 = math.rsqrt %119 : vector<64x1xf32>
    %121 = vector.broadcast %120 : vector<64x1xf32> to vector<64x8xf32>
    %122 = arith.mulf %112, %121 : vector<64x8xf32>
    %123 = vector.extract_strided_slice %122 {offsets = [0, 4], sizes = [64, 4], strides = [1, 1]} : vector<64x8xf32> to vector<64x4xf32>
    %124 = vector.extract_strided_slice %122 {offsets = [0, 0], sizes = [64, 4], strides = [1, 1]} : vector<64x8xf32> to vector<64x4xf32>
    %125 = tpu.concatenate %123, %124 in 1 : vector<64x4xf32>, vector<64x4xf32> -> vector<64x8xf32>
    %126 = arith.mulf %122, %24 : vector<64x8xf32>
    %127 = arith.mulf %125, %25 : vector<64x8xf32>
    %128 = arith.addf %126, %127 : vector<64x8xf32>
    %129 = vector.extract_strided_slice %42 {offsets = [0, 72], sizes = [64, 8], strides = [1, 1]} : vector<64x96xf32> to vector<64x8xf32>
    %130 = vector.broadcast %43 : f32 to vector<64x8xf32>
    %131 = arith.mulf %130, %129 : vector<64x8xf32>
    %cst_48 = arith.constant dense<0.000000e+00> : vector<64x64xf32>
    %132 = tpu.matmul %111, %128, %cst_48 {dimension_numbers = #tpu.dot_dimension_numbers<[1], [1], [0], [0], [0, 0, 1, 0], [], []>} : vector<64x8xf32>, vector<64x8xf32>, vector<64x64xf32> -> vector<64x64xf32>
    %cst_49 = arith.constant 0.353553385 : f32
    %133 = vector.broadcast %cst_49 : f32 to vector<64x64xf32>
    %134 = arith.mulf %132, %133 : vector<64x64xf32>
    %135 = arith.addf %134, %26 : vector<64x64xf32>
    %cst_50 = arith.constant dense<0xFF800000> : vector<64xf32>
    %136 = vector.multi_reduction <maximumf>, %135, %cst_50 [1] : vector<64x64xf32> to vector<64xf32>
    %137 = vector.shape_cast %136 : vector<64xf32> to vector<64x1xf32>
    %138 = vector.broadcast %137 : vector<64x1xf32> to vector<64x64xf32>
    %139 = arith.subf %135, %138 : vector<64x64xf32>
    %140 = math.exp %139 : vector<64x64xf32>
    %cst_51 = arith.constant dense<0.000000e+00> : vector<64xf32>
    %141 = vector.multi_reduction <add>, %140, %cst_51 [1] : vector<64x64xf32> to vector<64xf32>
    %142 = vector.shape_cast %141 : vector<64xf32> to vector<64x1xf32>
    %143 = vector.broadcast %142 : vector<64x1xf32> to vector<64x64xf32>
    %144 = arith.divf %140, %143 : vector<64x64xf32>
    %cst_52 = arith.constant dense<0.000000e+00> : vector<64x8xf32>
    %145 = tpu.matmul %144, %131, %cst_52 {dimension_numbers = #tpu.dot_dimension_numbers<[1], [0], [0], [1], [0, 0, 1, 1], [], []>} : vector<64x64xf32>, vector<64x8xf32>, vector<64x8xf32> -> vector<64x8xf32>
    %146 = vector.extract_strided_slice %42 {offsets = [0, 16], sizes = [64, 8], strides = [1, 1]} : vector<64x96xf32> to vector<64x8xf32>
    %147 = arith.mulf %146, %146 : vector<64x8xf32>
    %cst_53 = arith.constant dense<0.000000e+00> : vector<64xf32>
    %148 = vector.multi_reduction <add>, %147, %cst_53 [1] : vector<64x8xf32> to vector<64xf32>
    %149 = vector.shape_cast %148 : vector<64xf32> to vector<64x1xf32>
    %cst_54 = arith.constant 8.000000e+00 : f32
    %150 = vector.broadcast %cst_54 : f32 to vector<64x1xf32>
    %151 = arith.divf %149, %150 : vector<64x1xf32>
    %cst_55 = arith.constant 1.1920929E-7 : f32
    %152 = vector.broadcast %cst_55 : f32 to vector<64x1xf32>
    %153 = arith.addf %151, %152 : vector<64x1xf32>
    %154 = math.rsqrt %153 : vector<64x1xf32>
    %155 = vector.broadcast %154 : vector<64x1xf32> to vector<64x8xf32>
    %156 = arith.mulf %146, %155 : vector<64x8xf32>
    %157 = vector.extract_strided_slice %156 {offsets = [0, 4], sizes = [64, 4], strides = [1, 1]} : vector<64x8xf32> to vector<64x4xf32>
    %158 = vector.extract_strided_slice %156 {offsets = [0, 0], sizes = [64, 4], strides = [1, 1]} : vector<64x8xf32> to vector<64x4xf32>
    %159 = tpu.concatenate %157, %158 in 1 : vector<64x4xf32>, vector<64x4xf32> -> vector<64x8xf32>
    %160 = arith.mulf %156, %24 : vector<64x8xf32>
    %161 = arith.mulf %159, %25 : vector<64x8xf32>
    %162 = arith.addf %160, %161 : vector<64x8xf32>
    %163 = vector.extract_strided_slice %42 {offsets = [0, 48], sizes = [64, 8], strides = [1, 1]} : vector<64x96xf32> to vector<64x8xf32>
    %164 = arith.mulf %163, %163 : vector<64x8xf32>
    %cst_56 = arith.constant dense<0.000000e+00> : vector<64xf32>
    %165 = vector.multi_reduction <add>, %164, %cst_56 [1] : vector<64x8xf32> to vector<64xf32>
    %166 = vector.shape_cast %165 : vector<64xf32> to vector<64x1xf32>
    %cst_57 = arith.constant 8.000000e+00 : f32
    %167 = vector.broadcast %cst_57 : f32 to vector<64x1xf32>
    %168 = arith.divf %166, %167 : vector<64x1xf32>
    %cst_58 = arith.constant 1.1920929E-7 : f32
    %169 = vector.broadcast %cst_58 : f32 to vector<64x1xf32>
    %170 = arith.addf %168, %169 : vector<64x1xf32>
    %171 = math.rsqrt %170 : vector<64x1xf32>
    %172 = vector.broadcast %171 : vector<64x1xf32> to vector<64x8xf32>
    %173 = arith.mulf %163, %172 : vector<64x8xf32>
    %174 = vector.extract_strided_slice %173 {offsets = [0, 4], sizes = [64, 4], strides = [1, 1]} : vector<64x8xf32> to vector<64x4xf32>
    %175 = vector.extract_strided_slice %173 {offsets = [0, 0], sizes = [64, 4], strides = [1, 1]} : vector<64x8xf32> to vector<64x4xf32>
    %176 = tpu.concatenate %174, %175 in 1 : vector<64x4xf32>, vector<64x4xf32> -> vector<64x8xf32>
    %177 = arith.mulf %173, %24 : vector<64x8xf32>
    %178 = arith.mulf %176, %25 : vector<64x8xf32>
    %179 = arith.addf %177, %178 : vector<64x8xf32>
    %180 = vector.extract_strided_slice %42 {offsets = [0, 80], sizes = [64, 8], strides = [1, 1]} : vector<64x96xf32> to vector<64x8xf32>
    %181 = vector.broadcast %43 : f32 to vector<64x8xf32>
    %182 = arith.mulf %181, %180 : vector<64x8xf32>
    %cst_59 = arith.constant dense<0.000000e+00> : vector<64x64xf32>
    %183 = tpu.matmul %162, %179, %cst_59 {dimension_numbers = #tpu.dot_dimension_numbers<[1], [1], [0], [0], [0, 0, 1, 0], [], []>} : vector<64x8xf32>, vector<64x8xf32>, vector<64x64xf32> -> vector<64x64xf32>
    %cst_60 = arith.constant 0.353553385 : f32
    %184 = vector.broadcast %cst_60 : f32 to vector<64x64xf32>
    %185 = arith.mulf %183, %184 : vector<64x64xf32>
    %186 = arith.addf %185, %26 : vector<64x64xf32>
    %cst_61 = arith.constant dense<0xFF800000> : vector<64xf32>
    %187 = vector.multi_reduction <maximumf>, %186, %cst_61 [1] : vector<64x64xf32> to vector<64xf32>
    %188 = vector.shape_cast %187 : vector<64xf32> to vector<64x1xf32>
    %189 = vector.broadcast %188 : vector<64x1xf32> to vector<64x64xf32>
    %190 = arith.subf %186, %189 : vector<64x64xf32>
    %191 = math.exp %190 : vector<64x64xf32>
    %cst_62 = arith.constant dense<0.000000e+00> : vector<64xf32>
    %192 = vector.multi_reduction <add>, %191, %cst_62 [1] : vector<64x64xf32> to vector<64xf32>
    %193 = vector.shape_cast %192 : vector<64xf32> to vector<64x1xf32>
    %194 = vector.broadcast %193 : vector<64x1xf32> to vector<64x64xf32>
    %195 = arith.divf %191, %194 : vector<64x64xf32>
    %cst_63 = arith.constant dense<0.000000e+00> : vector<64x8xf32>
    %196 = tpu.matmul %195, %182, %cst_63 {dimension_numbers = #tpu.dot_dimension_numbers<[1], [0], [0], [1], [0, 0, 1, 1], [], []>} : vector<64x64xf32>, vector<64x8xf32>, vector<64x8xf32> -> vector<64x8xf32>
    %197 = vector.extract_strided_slice %42 {offsets = [0, 24], sizes = [64, 8], strides = [1, 1]} : vector<64x96xf32> to vector<64x8xf32>
    %198 = arith.mulf %197, %197 : vector<64x8xf32>
    %cst_64 = arith.constant dense<0.000000e+00> : vector<64xf32>
    %199 = vector.multi_reduction <add>, %198, %cst_64 [1] : vector<64x8xf32> to vector<64xf32>
    %200 = vector.shape_cast %199 : vector<64xf32> to vector<64x1xf32>
    %cst_65 = arith.constant 8.000000e+00 : f32
    %201 = vector.broadcast %cst_65 : f32 to vector<64x1xf32>
    %202 = arith.divf %200, %201 : vector<64x1xf32>
    %cst_66 = arith.constant 1.1920929E-7 : f32
    %203 = vector.broadcast %cst_66 : f32 to vector<64x1xf32>
    %204 = arith.addf %202, %203 : vector<64x1xf32>
    %205 = math.rsqrt %204 : vector<64x1xf32>
    %206 = vector.broadcast %205 : vector<64x1xf32> to vector<64x8xf32>
    %207 = arith.mulf %197, %206 : vector<64x8xf32>
    %208 = vector.extract_strided_slice %207 {offsets = [0, 4], sizes = [64, 4], strides = [1, 1]} : vector<64x8xf32> to vector<64x4xf32>
    %209 = vector.extract_strided_slice %207 {offsets = [0, 0], sizes = [64, 4], strides = [1, 1]} : vector<64x8xf32> to vector<64x4xf32>
    %210 = tpu.concatenate %208, %209 in 1 : vector<64x4xf32>, vector<64x4xf32> -> vector<64x8xf32>
    %211 = arith.mulf %207, %24 : vector<64x8xf32>
    %212 = arith.mulf %210, %25 : vector<64x8xf32>
    %213 = arith.addf %211, %212 : vector<64x8xf32>
    %214 = vector.extract_strided_slice %42 {offsets = [0, 56], sizes = [64, 8], strides = [1, 1]} : vector<64x96xf32> to vector<64x8xf32>
    %215 = arith.mulf %214, %214 : vector<64x8xf32>
    %cst_67 = arith.constant dense<0.000000e+00> : vector<64xf32>
    %216 = vector.multi_reduction <add>, %215, %cst_67 [1] : vector<64x8xf32> to vector<64xf32>
    %217 = vector.shape_cast %216 : vector<64xf32> to vector<64x1xf32>
    %cst_68 = arith.constant 8.000000e+00 : f32
    %218 = vector.broadcast %cst_68 : f32 to vector<64x1xf32>
    %219 = arith.divf %217, %218 : vector<64x1xf32>
    %cst_69 = arith.constant 1.1920929E-7 : f32
    %220 = vector.broadcast %cst_69 : f32 to vector<64x1xf32>
    %221 = arith.addf %219, %220 : vector<64x1xf32>
    %222 = math.rsqrt %221 : vector<64x1xf32>
    %223 = vector.broadcast %222 : vector<64x1xf32> to vector<64x8xf32>
    %224 = arith.mulf %214, %223 : vector<64x8xf32>
    %225 = vector.extract_strided_slice %224 {offsets = [0, 4], sizes = [64, 4], strides = [1, 1]} : vector<64x8xf32> to vector<64x4xf32>
    %226 = vector.extract_strided_slice %224 {offsets = [0, 0], sizes = [64, 4], strides = [1, 1]} : vector<64x8xf32> to vector<64x4xf32>
    %227 = tpu.concatenate %225, %226 in 1 : vector<64x4xf32>, vector<64x4xf32> -> vector<64x8xf32>
    %228 = arith.mulf %224, %24 : vector<64x8xf32>
    %229 = arith.mulf %227, %25 : vector<64x8xf32>
    %230 = arith.addf %228, %229 : vector<64x8xf32>
    %231 = vector.extract_strided_slice %42 {offsets = [0, 88], sizes = [64, 8], strides = [1, 1]} : vector<64x96xf32> to vector<64x8xf32>
    %232 = vector.broadcast %43 : f32 to vector<64x8xf32>
    %233 = arith.mulf %232, %231 : vector<64x8xf32>
    %cst_70 = arith.constant dense<0.000000e+00> : vector<64x64xf32>
    %234 = tpu.matmul %213, %230, %cst_70 {dimension_numbers = #tpu.dot_dimension_numbers<[1], [1], [0], [0], [0, 0, 1, 0], [], []>} : vector<64x8xf32>, vector<64x8xf32>, vector<64x64xf32> -> vector<64x64xf32>
    %cst_71 = arith.constant 0.353553385 : f32
    %235 = vector.broadcast %cst_71 : f32 to vector<64x64xf32>
    %236 = arith.mulf %234, %235 : vector<64x64xf32>
    %237 = arith.addf %236, %26 : vector<64x64xf32>
    %cst_72 = arith.constant dense<0xFF800000> : vector<64xf32>
    %238 = vector.multi_reduction <maximumf>, %237, %cst_72 [1] : vector<64x64xf32> to vector<64xf32>
    %239 = vector.shape_cast %238 : vector<64xf32> to vector<64x1xf32>
    %240 = vector.broadcast %239 : vector<64x1xf32> to vector<64x64xf32>
    %241 = arith.subf %237, %240 : vector<64x64xf32>
    %242 = math.exp %241 : vector<64x64xf32>
    %cst_73 = arith.constant dense<0.000000e+00> : vector<64xf32>
    %243 = vector.multi_reduction <add>, %242, %cst_73 [1] : vector<64x64xf32> to vector<64xf32>
    %244 = vector.shape_cast %243 : vector<64xf32> to vector<64x1xf32>
    %245 = vector.broadcast %244 : vector<64x1xf32> to vector<64x64xf32>
    %246 = arith.divf %242, %245 : vector<64x64xf32>
    %cst_74 = arith.constant dense<0.000000e+00> : vector<64x8xf32>
    %247 = tpu.matmul %246, %233, %cst_74 {dimension_numbers = #tpu.dot_dimension_numbers<[1], [0], [0], [1], [0, 0, 1, 1], [], []>} : vector<64x64xf32>, vector<64x8xf32>, vector<64x8xf32> -> vector<64x8xf32>
    %248 = tpu.concatenate %94, %145, %196, %247 in 1 : vector<64x8xf32>, vector<64x8xf32>, vector<64x8xf32>, vector<64x8xf32> -> vector<64x32xf32>
    %c0_75 = arith.constant 0 : index
    %c0_76 = arith.constant 0 : index
    %c0_77 = arith.constant 0 : index
    %249 = vector.load %arg12[%c0_75, %c0_76, %c0_77] : memref<2x32x32xf32, #tpu.memory_space<vmem>>, vector<1x32x32xf32>
    %250 = vector.shape_cast %249 : vector<1x32x32xf32> to vector<32x32xf32>
    %cst_78 = arith.constant dense<0.000000e+00> : vector<64x32xf32>
    %251 = tpu.matmul %248, %250, %cst_78 {dimension_numbers = #tpu.dot_dimension_numbers<[1], [1], [0], [0], [0, 0, 1, 0], [], []>} : vector<64x32xf32>, vector<32x32xf32>, vector<64x32xf32> -> vector<64x32xf32>
    %252 = arith.addf %29, %251 : vector<64x32xf32>
    %253 = arith.mulf %252, %252 : vector<64x32xf32>
    %cst_79 = arith.constant dense<0.000000e+00> : vector<64xf32>
    %254 = vector.multi_reduction <add>, %253, %cst_79 [1] : vector<64x32xf32> to vector<64xf32>
    %255 = vector.shape_cast %254 : vector<64xf32> to vector<64x1xf32>
    %cst_80 = arith.constant 3.200000e+01 : f32
    %256 = vector.broadcast %cst_80 : f32 to vector<64x1xf32>
    %257 = arith.divf %255, %256 : vector<64x1xf32>
    %cst_81 = arith.constant 1.1920929E-7 : f32
    %258 = vector.broadcast %cst_81 : f32 to vector<64x1xf32>
    %259 = arith.addf %257, %258 : vector<64x1xf32>
    %260 = math.rsqrt %259 : vector<64x1xf32>
    %261 = vector.broadcast %260 : vector<64x1xf32> to vector<64x32xf32>
    %262 = arith.mulf %252, %261 : vector<64x32xf32>
    %c0_82 = arith.constant 0 : index
    %c0_83 = arith.constant 0 : index
    %c0_84 = arith.constant 0 : index
    %263 = vector.load %arg13[%c0_82, %c0_83, %c0_84] : memref<2x128x32xf32, #tpu.memory_space<vmem>>, vector<1x128x32xf32>
    %264 = vector.shape_cast %263 : vector<1x128x32xf32> to vector<128x32xf32>
    %cst_85 = arith.constant dense<0.000000e+00> : vector<64x128xf32>
    %265 = tpu.matmul %262, %264, %cst_85 {dimension_numbers = #tpu.dot_dimension_numbers<[1], [1], [0], [0], [0, 0, 1, 0], [], []>} : vector<64x32xf32>, vector<128x32xf32>, vector<64x128xf32> -> vector<64x128xf32>
    %cst_86 = arith.constant 0.000000e+00 : f32
    %266 = vector.broadcast %cst_86 : f32 to vector<64x128xf32>
    %267 = arith.maximumf %265, %266 : vector<64x128xf32>
    %c0_87 = arith.constant 0 : index
    %c0_88 = arith.constant 0 : index
    %c0_89 = arith.constant 0 : index
    %268 = vector.load %arg14[%c0_87, %c0_88, %c0_89] : memref<2x32x128xf32, #tpu.memory_space<vmem>>, vector<1x32x128xf32>
    %269 = vector.shape_cast %268 : vector<1x32x128xf32> to vector<32x128xf32>
    %cst_90 = arith.constant dense<0.000000e+00> : vector<64x32xf32>
    %270 = tpu.matmul %267, %269, %cst_90 {dimension_numbers = #tpu.dot_dimension_numbers<[1], [1], [0], [0], [0, 0, 1, 0], [], []>} : vector<64x128xf32>, vector<32x128xf32>, vector<64x32xf32> -> vector<64x32xf32>
    %271 = arith.addf %252, %270 : vector<64x32xf32>
    %c0_91 = arith.constant 0 : index
    %c0_92 = arith.constant 0 : index
    %c0_93 = arith.constant 0 : index
    %272 = vector.load %arg15[%c0_91, %c0_92, %c0_93] : memref<2x256x32xf32, #tpu.memory_space<vmem>>, vector<1x256x32xf32>
    %273 = vector.shape_cast %272 : vector<1x256x32xf32> to vector<256x32xf32>
    %cst_94 = arith.constant dense<0.000000e+00> : vector<64x256xf32>
    %274 = tpu.matmul %252, %273, %cst_94 {dimension_numbers = #tpu.dot_dimension_numbers<[1], [1], [0], [0], [0, 0, 1, 0], [], []>} : vector<64x32xf32>, vector<256x32xf32>, vector<64x256xf32> -> vector<64x256xf32>
    %c0_95 = arith.constant 0 : index
    %c0_96 = arith.constant 0 : index
    %c0_97 = arith.constant 0 : index
    %275 = vector.load %arg16[%c0_95, %c0_96, %c0_97] : memref<2x1x256xf32, #tpu.memory_space<vmem>>, vector<1x1x256xf32>
    %276 = vector.shape_cast %275 : vector<1x1x256xf32> to vector<1x256xf32>
    %277 = vector.broadcast %276 : vector<1x256xf32> to vector<64x256xf32>
    %278 = arith.addf %274, %277 : vector<64x256xf32>
    %cst_98 = arith.constant 0.000000e+00 : f32
    %279 = vector.broadcast %cst_98 : f32 to vector<64x256xf32>
    %280 = arith.maximumf %278, %279 : vector<64x256xf32>
    %c0_99 = arith.constant 0 : index
    %c0_100 = arith.constant 0 : index
    %c0_101 = arith.constant 0 : index
    %281 = vector.load %arg17[%c0_99, %c0_100, %c0_101] : memref<2x32x256xf32, #tpu.memory_space<vmem>>, vector<1x32x256xf32>
    %282 = vector.shape_cast %281 : vector<1x32x256xf32> to vector<32x256xf32>
    %cst_102 = arith.constant dense<0.000000e+00> : vector<64x32xf32>
    %283 = tpu.matmul %280, %282, %cst_102 {dimension_numbers = #tpu.dot_dimension_numbers<[1], [1], [0], [0], [0, 0, 1, 0], [], []>} : vector<64x256xf32>, vector<32x256xf32>, vector<64x32xf32> -> vector<64x32xf32>
    %c0_103 = arith.constant 0 : index
    %c0_104 = arith.constant 0 : index
    %c0_105 = arith.constant 0 : index
    %284 = vector.load %arg18[%c0_103, %c0_104, %c0_105] : memref<2x1x32xf32, #tpu.memory_space<vmem>>, vector<1x1x32xf32>
    %285 = vector.shape_cast %284 : vector<1x1x32xf32> to vector<1x32xf32>
    %286 = vector.broadcast %285 : vector<1x32xf32> to vector<64x32xf32>
    %287 = arith.addf %283, %286 : vector<64x32xf32>
    %c0_106 = arith.constant 0 : index
    %c0_107 = arith.constant 0 : index
    %c0_108 = arith.constant 0 : index
    %288 = vector.load %arg22[%c0_106, %c0_107, %c0_108] : memref<2x64x256xf32, #tpu.memory_space<vmem>>, vector<1x64x256xf32>
    %289 = vector.shape_cast %288 : vector<1x64x256xf32> to vector<64x256xf32>
    %290 = vector.shape_cast %280 : vector<64x256xf32> to vector<1x64x256xf32>
    tpu.vector_store %arg22[%c0_106, %c0_107, %c0_108], %290 {strides = array<i32>} : memref<2x64x256xf32, #tpu.memory_space<vmem>>, vector<1x64x256xf32>,
    %291 = arith.subf %287, %271 : vector<64x32xf32>
    %292 = arith.mulf %291, %291 : vector<64x32xf32>
    %293 = vector.shape_cast %292 : vector<64x32xf32> to vector<1x64x32xf32>
    %cst_109 = arith.constant dense<0.000000e+00> : vector<1xf32>
    %294 = vector.multi_reduction <add>, %293, %cst_109 [1, 2] : vector<1x64x32xf32> to vector<1xf32>
    %295 = vector.shape_cast %294 : vector<1xf32> to vector<1x1x1xf32>
    %296 = vector.extract %295[0, 0, 0] : f32 from vector<1x1x1xf32>
    %cst_110 = arith.constant 2.048000e+03 : f32
    %297 = arith.divf %296, %cst_110 : f32
    %cst_111 = arith.constant 0.000000e+00 : f32
    %298 = arith.addf %cst_111, %297 : f32
    %c1 = arith.constant 1 : index
    %299 = memref.load %arg1[%c1] : memref<2xf32, #tpu.memory_space<smem>>
    %300 = vector.broadcast %299 : f32 to vector<64x32xf32>
    %301 = arith.mulf %300, %271 : vector<64x32xf32>
    %302 = arith.mulf %301, %301 : vector<64x32xf32>
    %cst_112 = arith.constant dense<0.000000e+00> : vector<64xf32>
    %303 = vector.multi_reduction <add>, %302, %cst_112 [1] : vector<64x32xf32> to vector<64xf32>
    %304 = vector.shape_cast %303 : vector<64xf32> to vector<64x1xf32>
    %cst_113 = arith.constant 3.200000e+01 : f32
    %305 = vector.broadcast %cst_113 : f32 to vector<64x1xf32>
    %306 = arith.divf %304, %305 : vector<64x1xf32>
    %cst_114 = arith.constant 1.1920929E-7 : f32
    %307 = vector.broadcast %cst_114 : f32 to vector<64x1xf32>
    %308 = arith.addf %306, %307 : vector<64x1xf32>
    %309 = math.rsqrt %308 : vector<64x1xf32>
    %310 = vector.broadcast %309 : vector<64x1xf32> to vector<64x32xf32>
    %311 = arith.mulf %301, %310 : vector<64x32xf32>
    %c1_115 = arith.constant 1 : index
    %c0_116 = arith.constant 0 : index
    %c0_117 = arith.constant 0 : index
    %312 = vector.load %arg11[%c1_115, %c0_116, %c0_117] : memref<2x96x32xf32, #tpu.memory_space<vmem>>, vector<1x96x32xf32>
    %313 = vector.shape_cast %312 : vector<1x96x32xf32> to vector<96x32xf32>
    %cst_118 = arith.constant dense<0.000000e+00> : vector<64x96xf32>
    %314 = tpu.matmul %311, %313, %cst_118 {dimension_numbers = #tpu.dot_dimension_numbers<[1], [1], [0], [0], [0, 0, 1, 0], [], []>} : vector<64x32xf32>, vector<96x32xf32>, vector<64x96xf32> -> vector<64x96xf32>
    %c1_119 = arith.constant 1 : index
    %315 = memref.load %arg0[%c1_119] : memref<2xf32, #tpu.memory_space<smem>>
    %316 = vector.extract_strided_slice %314 {offsets = [0, 0], sizes = [64, 8], strides = [1, 1]} : vector<64x96xf32> to vector<64x8xf32>
    %317 = arith.mulf %316, %316 : vector<64x8xf32>
    %cst_120 = arith.constant dense<0.000000e+00> : vector<64xf32>
    %318 = vector.multi_reduction <add>, %317, %cst_120 [1] : vector<64x8xf32> to vector<64xf32>
    %319 = vector.shape_cast %318 : vector<64xf32> to vector<64x1xf32>
    %cst_121 = arith.constant 8.000000e+00 : f32
    %320 = vector.broadcast %cst_121 : f32 to vector<64x1xf32>
    %321 = arith.divf %319, %320 : vector<64x1xf32>
    %cst_122 = arith.constant 1.1920929E-7 : f32
    %322 = vector.broadcast %cst_122 : f32 to vector<64x1xf32>
    %323 = arith.addf %321, %322 : vector<64x1xf32>
    %324 = math.rsqrt %323 : vector<64x1xf32>
    %325 = vector.broadcast %324 : vector<64x1xf32> to vector<64x8xf32>
    %326 = arith.mulf %316, %325 : vector<64x8xf32>
    %327 = vector.extract_strided_slice %326 {offsets = [0, 4], sizes = [64, 4], strides = [1, 1]} : vector<64x8xf32> to vector<64x4xf32>
    %328 = vector.extract_strided_slice %326 {offsets = [0, 0], sizes = [64, 4], strides = [1, 1]} : vector<64x8xf32> to vector<64x4xf32>
    %329 = tpu.concatenate %327, %328 in 1 : vector<64x4xf32>, vector<64x4xf32> -> vector<64x8xf32>
    %330 = arith.mulf %326, %24 : vector<64x8xf32>
    %331 = arith.mulf %329, %25 : vector<64x8xf32>
    %332 = arith.addf %330, %331 : vector<64x8xf32>
    %333 = vector.extract_strided_slice %314 {offsets = [0, 32], sizes = [64, 8], strides = [1, 1]} : vector<64x96xf32> to vector<64x8xf32>
    %334 = arith.mulf %333, %333 : vector<64x8xf32>
    %cst_123 = arith.constant dense<0.000000e+00> : vector<64xf32>
    %335 = vector.multi_reduction <add>, %334, %cst_123 [1] : vector<64x8xf32> to vector<64xf32>
    %336 = vector.shape_cast %335 : vector<64xf32> to vector<64x1xf32>
    %cst_124 = arith.constant 8.000000e+00 : f32
    %337 = vector.broadcast %cst_124 : f32 to vector<64x1xf32>
    %338 = arith.divf %336, %337 : vector<64x1xf32>
    %cst_125 = arith.constant 1.1920929E-7 : f32
    %339 = vector.broadcast %cst_125 : f32 to vector<64x1xf32>
    %340 = arith.addf %338, %339 : vector<64x1xf32>
    %341 = math.rsqrt %340 : vector<64x1xf32>
    %342 = vector.broadcast %341 : vector<64x1xf32> to vector<64x8xf32>
    %343 = arith.mulf %333, %342 : vector<64x8xf32>
    %344 = vector.extract_strided_slice %343 {offsets = [0, 4], sizes = [64, 4], strides = [1, 1]} : vector<64x8xf32> to vector<64x4xf32>
    %345 = vector.extract_strided_slice %343 {offsets = [0, 0], sizes = [64, 4], strides = [1, 1]} : vector<64x8xf32> to vector<64x4xf32>
    %346 = tpu.concatenate %344, %345 in 1 : vector<64x4xf32>, vector<64x4xf32> -> vector<64x8xf32>
    %347 = arith.mulf %343, %24 : vector<64x8xf32>
    %348 = arith.mulf %346, %25 : vector<64x8xf32>
    %349 = arith.addf %347, %348 : vector<64x8xf32>
    %350 = vector.extract_strided_slice %314 {offsets = [0, 64], sizes = [64, 8], strides = [1, 1]} : vector<64x96xf32> to vector<64x8xf32>
    %351 = vector.broadcast %315 : f32 to vector<64x8xf32>
    %352 = arith.mulf %351, %350 : vector<64x8xf32>
    %cst_126 = arith.constant dense<0.000000e+00> : vector<64x64xf32>
    %353 = tpu.matmul %332, %349, %cst_126 {dimension_numbers = #tpu.dot_dimension_numbers<[1], [1], [0], [0], [0, 0, 1, 0], [], []>} : vector<64x8xf32>, vector<64x8xf32>, vector<64x64xf32> -> vector<64x64xf32>
    %cst_127 = arith.constant 0.353553385 : f32
    %354 = vector.broadcast %cst_127 : f32 to vector<64x64xf32>
    %355 = arith.mulf %353, %354 : vector<64x64xf32>
    %356 = arith.addf %355, %26 : vector<64x64xf32>
    %cst_128 = arith.constant dense<0xFF800000> : vector<64xf32>
    %357 = vector.multi_reduction <maximumf>, %356, %cst_128 [1] : vector<64x64xf32> to vector<64xf32>
    %358 = vector.shape_cast %357 : vector<64xf32> to vector<64x1xf32>
    %359 = vector.broadcast %358 : vector<64x1xf32> to vector<64x64xf32>
    %360 = arith.subf %356, %359 : vector<64x64xf32>
    %361 = math.exp %360 : vector<64x64xf32>
    %cst_129 = arith.constant dense<0.000000e+00> : vector<64xf32>
    %362 = vector.multi_reduction <add>, %361, %cst_129 [1] : vector<64x64xf32> to vector<64xf32>
    %363 = vector.shape_cast %362 : vector<64xf32> to vector<64x1xf32>
    %364 = vector.broadcast %363 : vector<64x1xf32> to vector<64x64xf32>
    %365 = arith.divf %361, %364 : vector<64x64xf32>
    %cst_130 = arith.constant dense<0.000000e+00> : vector<64x8xf32>
    %366 = tpu.matmul %365, %352, %cst_130 {dimension_numbers = #tpu.dot_dimension_numbers<[1], [0], [0], [1], [0, 0, 1, 1], [], []>} : vector<64x64xf32>, vector<64x8xf32>, vector<64x8xf32> -> vector<64x8xf32>
    %367 = vector.extract_strided_slice %314 {offsets = [0, 8], sizes = [64, 8], strides = [1, 1]} : vector<64x96xf32> to vector<64x8xf32>
    %368 = arith.mulf %367, %367 : vector<64x8xf32>
    %cst_131 = arith.constant dense<0.000000e+00> : vector<64xf32>
    %369 = vector.multi_reduction <add>, %368, %cst_131 [1] : vector<64x8xf32> to vector<64xf32>
    %370 = vector.shape_cast %369 : vector<64xf32> to vector<64x1xf32>
    %cst_132 = arith.constant 8.000000e+00 : f32
    %371 = vector.broadcast %cst_132 : f32 to vector<64x1xf32>
    %372 = arith.divf %370, %371 : vector<64x1xf32>
    %cst_133 = arith.constant 1.1920929E-7 : f32
    %373 = vector.broadcast %cst_133 : f32 to vector<64x1xf32>
    %374 = arith.addf %372, %373 : vector<64x1xf32>
    %375 = math.rsqrt %374 : vector<64x1xf32>
    %376 = vector.broadcast %375 : vector<64x1xf32> to vector<64x8xf32>
    %377 = arith.mulf %367, %376 : vector<64x8xf32>
    %378 = vector.extract_strided_slice %377 {offsets = [0, 4], sizes = [64, 4], strides = [1, 1]} : vector<64x8xf32> to vector<64x4xf32>
    %379 = vector.extract_strided_slice %377 {offsets = [0, 0], sizes = [64, 4], strides = [1, 1]} : vector<64x8xf32> to vector<64x4xf32>
    %380 = tpu.concatenate %378, %379 in 1 : vector<64x4xf32>, vector<64x4xf32> -> vector<64x8xf32>
    %381 = arith.mulf %377, %24 : vector<64x8xf32>
    %382 = arith.mulf %380, %25 : vector<64x8xf32>
    %383 = arith.addf %381, %382 : vector<64x8xf32>
    %384 = vector.extract_strided_slice %314 {offsets = [0, 40], sizes = [64, 8], strides = [1, 1]} : vector<64x96xf32> to vector<64x8xf32>
    %385 = arith.mulf %384, %384 : vector<64x8xf32>
    %cst_134 = arith.constant dense<0.000000e+00> : vector<64xf32>
    %386 = vector.multi_reduction <add>, %385, %cst_134 [1] : vector<64x8xf32> to vector<64xf32>
    %387 = vector.shape_cast %386 : vector<64xf32> to vector<64x1xf32>
    %cst_135 = arith.constant 8.000000e+00 : f32
    %388 = vector.broadcast %cst_135 : f32 to vector<64x1xf32>
    %389 = arith.divf %387, %388 : vector<64x1xf32>
    %cst_136 = arith.constant 1.1920929E-7 : f32
    %390 = vector.broadcast %cst_136 : f32 to vector<64x1xf32>
    %391 = arith.addf %389, %390 : vector<64x1xf32>
    %392 = math.rsqrt %391 : vector<64x1xf32>
    %393 = vector.broadcast %392 : vector<64x1xf32> to vector<64x8xf32>
    %394 = arith.mulf %384, %393 : vector<64x8xf32>
    %395 = vector.extract_strided_slice %394 {offsets = [0, 4], sizes = [64, 4], strides = [1, 1]} : vector<64x8xf32> to vector<64x4xf32>
    %396 = vector.extract_strided_slice %394 {offsets = [0, 0], sizes = [64, 4], strides = [1, 1]} : vector<64x8xf32> to vector<64x4xf32>
    %397 = tpu.concatenate %395, %396 in 1 : vector<64x4xf32>, vector<64x4xf32> -> vector<64x8xf32>
    %398 = arith.mulf %394, %24 : vector<64x8xf32>
    %399 = arith.mulf %397, %25 : vector<64x8xf32>
    %400 = arith.addf %398, %399 : vector<64x8xf32>
    %401 = vector.extract_strided_slice %314 {offsets = [0, 72], sizes = [64, 8], strides = [1, 1]} : vector<64x96xf32> to vector<64x8xf32>
    %402 = vector.broadcast %315 : f32 to vector<64x8xf32>
    %403 = arith.mulf %402, %401 : vector<64x8xf32>
    %cst_137 = arith.constant dense<0.000000e+00> : vector<64x64xf32>
    %404 = tpu.matmul %383, %400, %cst_137 {dimension_numbers = #tpu.dot_dimension_numbers<[1], [1], [0], [0], [0, 0, 1, 0], [], []>} : vector<64x8xf32>, vector<64x8xf32>, vector<64x64xf32> -> vector<64x64xf32>
    %cst_138 = arith.constant 0.353553385 : f32
    %405 = vector.broadcast %cst_138 : f32 to vector<64x64xf32>
    %406 = arith.mulf %404, %405 : vector<64x64xf32>
    %407 = arith.addf %406, %26 : vector<64x64xf32>
    %cst_139 = arith.constant dense<0xFF800000> : vector<64xf32>
    %408 = vector.multi_reduction <maximumf>, %407, %cst_139 [1] : vector<64x64xf32> to vector<64xf32>
    %409 = vector.shape_cast %408 : vector<64xf32> to vector<64x1xf32>
    %410 = vector.broadcast %409 : vector<64x1xf32> to vector<64x64xf32>
    %411 = arith.subf %407, %410 : vector<64x64xf32>
    %412 = math.exp %411 : vector<64x64xf32>
    %cst_140 = arith.constant dense<0.000000e+00> : vector<64xf32>
    %413 = vector.multi_reduction <add>, %412, %cst_140 [1] : vector<64x64xf32> to vector<64xf32>
    %414 = vector.shape_cast %413 : vector<64xf32> to vector<64x1xf32>
    %415 = vector.broadcast %414 : vector<64x1xf32> to vector<64x64xf32>
    %416 = arith.divf %412, %415 : vector<64x64xf32>
    %cst_141 = arith.constant dense<0.000000e+00> : vector<64x8xf32>
    %417 = tpu.matmul %416, %403, %cst_141 {dimension_numbers = #tpu.dot_dimension_numbers<[1], [0], [0], [1], [0, 0, 1, 1], [], []>} : vector<64x64xf32>, vector<64x8xf32>, vector<64x8xf32> -> vector<64x8xf32>
    %418 = vector.extract_strided_slice %314 {offsets = [0, 16], sizes = [64, 8], strides = [1, 1]} : vector<64x96xf32> to vector<64x8xf32>
    %419 = arith.mulf %418, %418 : vector<64x8xf32>
    %cst_142 = arith.constant dense<0.000000e+00> : vector<64xf32>
    %420 = vector.multi_reduction <add>, %419, %cst_142 [1] : vector<64x8xf32> to vector<64xf32>
    %421 = vector.shape_cast %420 : vector<64xf32> to vector<64x1xf32>
    %cst_143 = arith.constant 8.000000e+00 : f32
    %422 = vector.broadcast %cst_143 : f32 to vector<64x1xf32>
    %423 = arith.divf %421, %422 : vector<64x1xf32>
    %cst_144 = arith.constant 1.1920929E-7 : f32
    %424 = vector.broadcast %cst_144 : f32 to vector<64x1xf32>
    %425 = arith.addf %423, %424 : vector<64x1xf32>
    %426 = math.rsqrt %425 : vector<64x1xf32>
    %427 = vector.broadcast %426 : vector<64x1xf32> to vector<64x8xf32>
    %428 = arith.mulf %418, %427 : vector<64x8xf32>
    %429 = vector.extract_strided_slice %428 {offsets = [0, 4], sizes = [64, 4], strides = [1, 1]} : vector<64x8xf32> to vector<64x4xf32>
    %430 = vector.extract_strided_slice %428 {offsets = [0, 0], sizes = [64, 4], strides = [1, 1]} : vector<64x8xf32> to vector<64x4xf32>
    %431 = tpu.concatenate %429, %430 in 1 : vector<64x4xf32>, vector<64x4xf32> -> vector<64x8xf32>
    %432 = arith.mulf %428, %24 : vector<64x8xf32>
    %433 = arith.mulf %431, %25 : vector<64x8xf32>
    %434 = arith.addf %432, %433 : vector<64x8xf32>
    %435 = vector.extract_strided_slice %314 {offsets = [0, 48], sizes = [64, 8], strides = [1, 1]} : vector<64x96xf32> to vector<64x8xf32>
    %436 = arith.mulf %435, %435 : vector<64x8xf32>
    %cst_145 = arith.constant dense<0.000000e+00> : vector<64xf32>
    %437 = vector.multi_reduction <add>, %436, %cst_145 [1] : vector<64x8xf32> to vector<64xf32>
    %438 = vector.shape_cast %437 : vector<64xf32> to vector<64x1xf32>
    %cst_146 = arith.constant 8.000000e+00 : f32
    %439 = vector.broadcast %cst_146 : f32 to vector<64x1xf32>
    %440 = arith.divf %438, %439 : vector<64x1xf32>
    %cst_147 = arith.constant 1.1920929E-7 : f32
    %441 = vector.broadcast %cst_147 : f32 to vector<64x1xf32>
    %442 = arith.addf %440, %441 : vector<64x1xf32>
    %443 = math.rsqrt %442 : vector<64x1xf32>
    %444 = vector.broadcast %443 : vector<64x1xf32> to vector<64x8xf32>
    %445 = arith.mulf %435, %444 : vector<64x8xf32>
    %446 = vector.extract_strided_slice %445 {offsets = [0, 4], sizes = [64, 4], strides = [1, 1]} : vector<64x8xf32> to vector<64x4xf32>
    %447 = vector.extract_strided_slice %445 {offsets = [0, 0], sizes = [64, 4], strides = [1, 1]} : vector<64x8xf32> to vector<64x4xf32>
    %448 = tpu.concatenate %446, %447 in 1 : vector<64x4xf32>, vector<64x4xf32> -> vector<64x8xf32>
    %449 = arith.mulf %445, %24 : vector<64x8xf32>
    %450 = arith.mulf %448, %25 : vector<64x8xf32>
    %451 = arith.addf %449, %450 : vector<64x8xf32>
    %452 = vector.extract_strided_slice %314 {offsets = [0, 80], sizes = [64, 8], strides = [1, 1]} : vector<64x96xf32> to vector<64x8xf32>
    %453 = vector.broadcast %315 : f32 to vector<64x8xf32>
    %454 = arith.mulf %453, %452 : vector<64x8xf32>
    %cst_148 = arith.constant dense<0.000000e+00> : vector<64x64xf32>
    %455 = tpu.matmul %434, %451, %cst_148 {dimension_numbers = #tpu.dot_dimension_numbers<[1], [1], [0], [0], [0, 0, 1, 0], [], []>} : vector<64x8xf32>, vector<64x8xf32>, vector<64x64xf32> -> vector<64x64xf32>
    %cst_149 = arith.constant 0.353553385 : f32
    %456 = vector.broadcast %cst_149 : f32 to vector<64x64xf32>
    %457 = arith.mulf %455, %456 : vector<64x64xf32>
    %458 = arith.addf %457, %26 : vector<64x64xf32>
    %cst_150 = arith.constant dense<0xFF800000> : vector<64xf32>
    %459 = vector.multi_reduction <maximumf>, %458, %cst_150 [1] : vector<64x64xf32> to vector<64xf32>
    %460 = vector.shape_cast %459 : vector<64xf32> to vector<64x1xf32>
    %461 = vector.broadcast %460 : vector<64x1xf32> to vector<64x64xf32>
    %462 = arith.subf %458, %461 : vector<64x64xf32>
    %463 = math.exp %462 : vector<64x64xf32>
    %cst_151 = arith.constant dense<0.000000e+00> : vector<64xf32>
    %464 = vector.multi_reduction <add>, %463, %cst_151 [1] : vector<64x64xf32> to vector<64xf32>
    %465 = vector.shape_cast %464 : vector<64xf32> to vector<64x1xf32>
    %466 = vector.broadcast %465 : vector<64x1xf32> to vector<64x64xf32>
    %467 = arith.divf %463, %466 : vector<64x64xf32>
    %cst_152 = arith.constant dense<0.000000e+00> : vector<64x8xf32>
    %468 = tpu.matmul %467, %454, %cst_152 {dimension_numbers = #tpu.dot_dimension_numbers<[1], [0], [0], [1], [0, 0, 1, 1], [], []>} : vector<64x64xf32>, vector<64x8xf32>, vector<64x8xf32> -> vector<64x8xf32>
    %469 = vector.extract_strided_slice %314 {offsets = [0, 24], sizes = [64, 8], strides = [1, 1]} : vector<64x96xf32> to vector<64x8xf32>
    %470 = arith.mulf %469, %469 : vector<64x8xf32>
    %cst_153 = arith.constant dense<0.000000e+00> : vector<64xf32>
    %471 = vector.multi_reduction <add>, %470, %cst_153 [1] : vector<64x8xf32> to vector<64xf32>
    %472 = vector.shape_cast %471 : vector<64xf32> to vector<64x1xf32>
    %cst_154 = arith.constant 8.000000e+00 : f32
    %473 = vector.broadcast %cst_154 : f32 to vector<64x1xf32>
    %474 = arith.divf %472, %473 : vector<64x1xf32>
    %cst_155 = arith.constant 1.1920929E-7 : f32
    %475 = vector.broadcast %cst_155 : f32 to vector<64x1xf32>
    %476 = arith.addf %474, %475 : vector<64x1xf32>
    %477 = math.rsqrt %476 : vector<64x1xf32>
    %478 = vector.broadcast %477 : vector<64x1xf32> to vector<64x8xf32>
    %479 = arith.mulf %469, %478 : vector<64x8xf32>
    %480 = vector.extract_strided_slice %479 {offsets = [0, 4], sizes = [64, 4], strides = [1, 1]} : vector<64x8xf32> to vector<64x4xf32>
    %481 = vector.extract_strided_slice %479 {offsets = [0, 0], sizes = [64, 4], strides = [1, 1]} : vector<64x8xf32> to vector<64x4xf32>
    %482 = tpu.concatenate %480, %481 in 1 : vector<64x4xf32>, vector<64x4xf32> -> vector<64x8xf32>
    %483 = arith.mulf %479, %24 : vector<64x8xf32>
    %484 = arith.mulf %482, %25 : vector<64x8xf32>
    %485 = arith.addf %483, %484 : vector<64x8xf32>
    %486 = vector.extract_strided_slice %314 {offsets = [0, 56], sizes = [64, 8], strides = [1, 1]} : vector<64x96xf32> to vector<64x8xf32>
    %487 = arith.mulf %486, %486 : vector<64x8xf32>
    %cst_156 = arith.constant dense<0.000000e+00> : vector<64xf32>
    %488 = vector.multi_reduction <add>, %487, %cst_156 [1] : vector<64x8xf32> to vector<64xf32>
    %489 = vector.shape_cast %488 : vector<64xf32> to vector<64x1xf32>
    %cst_157 = arith.constant 8.000000e+00 : f32
    %490 = vector.broadcast %cst_157 : f32 to vector<64x1xf32>
    %491 = arith.divf %489, %490 : vector<64x1xf32>
    %cst_158 = arith.constant 1.1920929E-7 : f32
    %492 = vector.broadcast %cst_158 : f32 to vector<64x1xf32>
    %493 = arith.addf %491, %492 : vector<64x1xf32>
    %494 = math.rsqrt %493 : vector<64x1xf32>
    %495 = vector.broadcast %494 : vector<64x1xf32> to vector<64x8xf32>
    %496 = arith.mulf %486, %495 : vector<64x8xf32>
    %497 = vector.extract_strided_slice %496 {offsets = [0, 4], sizes = [64, 4], strides = [1, 1]} : vector<64x8xf32> to vector<64x4xf32>
    %498 = vector.extract_strided_slice %496 {offsets = [0, 0], sizes = [64, 4], strides = [1, 1]} : vector<64x8xf32> to vector<64x4xf32>
    %499 = tpu.concatenate %497, %498 in 1 : vector<64x4xf32>, vector<64x4xf32> -> vector<64x8xf32>
    %500 = arith.mulf %496, %24 : vector<64x8xf32>
    %501 = arith.mulf %499, %25 : vector<64x8xf32>
    %502 = arith.addf %500, %501 : vector<64x8xf32>
    %503 = vector.extract_strided_slice %314 {offsets = [0, 88], sizes = [64, 8], strides = [1, 1]} : vector<64x96xf32> to vector<64x8xf32>
    %504 = vector.broadcast %315 : f32 to vector<64x8xf32>
    %505 = arith.mulf %504, %503 : vector<64x8xf32>
    %cst_159 = arith.constant dense<0.000000e+00> : vector<64x64xf32>
    %506 = tpu.matmul %485, %502, %cst_159 {dimension_numbers = #tpu.dot_dimension_numbers<[1], [1], [0], [0], [0, 0, 1, 0], [], []>} : vector<64x8xf32>, vector<64x8xf32>, vector<64x64xf32> -> vector<64x64xf32>
    %cst_160 = arith.constant 0.353553385 : f32
    %507 = vector.broadcast %cst_160 : f32 to vector<64x64xf32>
    %508 = arith.mulf %506, %507 : vector<64x64xf32>
    %509 = arith.addf %508, %26 : vector<64x64xf32>
    %cst_161 = arith.constant dense<0xFF800000> : vector<64xf32>
    %510 = vector.multi_reduction <maximumf>, %509, %cst_161 [1] : vector<64x64xf32> to vector<64xf32>
    %511 = vector.shape_cast %510 : vector<64xf32> to vector<64x1xf32>
    %512 = vector.broadcast %511 : vector<64x1xf32> to vector<64x64xf32>
    %513 = arith.subf %509, %512 : vector<64x64xf32>
    %514 = math.exp %513 : vector<64x64xf32>
    %cst_162 = arith.constant dense<0.000000e+00> : vector<64xf32>
    %515 = vector.multi_reduction <add>, %514, %cst_162 [1] : vector<64x64xf32> to vector<64xf32>
    %516 = vector.shape_cast %515 : vector<64xf32> to vector<64x1xf32>
    %517 = vector.broadcast %516 : vector<64x1xf32> to vector<64x64xf32>
    %518 = arith.divf %514, %517 : vector<64x64xf32>
    %cst_163 = arith.constant dense<0.000000e+00> : vector<64x8xf32>
    %519 = tpu.matmul %518, %505, %cst_163 {dimension_numbers = #tpu.dot_dimension_numbers<[1], [0], [0], [1], [0, 0, 1, 1], [], []>} : vector<64x64xf32>, vector<64x8xf32>, vector<64x8xf32> -> vector<64x8xf32>
    %520 = tpu.concatenate %366, %417, %468, %519 in 1 : vector<64x8xf32>, vector<64x8xf32>, vector<64x8xf32>, vector<64x8xf32> -> vector<64x32xf32>
    %c1_164 = arith.constant 1 : index
    %c0_165 = arith.constant 0 : index
    %c0_166 = arith.constant 0 : index
    %521 = vector.load %arg12[%c1_164, %c0_165, %c0_166] : memref<2x32x32xf32, #tpu.memory_space<vmem>>, vector<1x32x32xf32>
    %522 = vector.shape_cast %521 : vector<1x32x32xf32> to vector<32x32xf32>
    %cst_167 = arith.constant dense<0.000000e+00> : vector<64x32xf32>
    %523 = tpu.matmul %520, %522, %cst_167 {dimension_numbers = #tpu.dot_dimension_numbers<[1], [1], [0], [0], [0, 0, 1, 0], [], []>} : vector<64x32xf32>, vector<32x32xf32>, vector<64x32xf32> -> vector<64x32xf32>
    %524 = arith.addf %301, %523 : vector<64x32xf32>
    %525 = arith.mulf %524, %524 : vector<64x32xf32>
    %cst_168 = arith.constant dense<0.000000e+00> : vector<64xf32>
    %526 = vector.multi_reduction <add>, %525, %cst_168 [1] : vector<64x32xf32> to vector<64xf32>
    %527 = vector.shape_cast %526 : vector<64xf32> to vector<64x1xf32>
    %cst_169 = arith.constant 3.200000e+01 : f32
    %528 = vector.broadcast %cst_169 : f32 to vector<64x1xf32>
    %529 = arith.divf %527, %528 : vector<64x1xf32>
    %cst_170 = arith.constant 1.1920929E-7 : f32
    %530 = vector.broadcast %cst_170 : f32 to vector<64x1xf32>
    %531 = arith.addf %529, %530 : vector<64x1xf32>
    %532 = math.rsqrt %531 : vector<64x1xf32>
    %533 = vector.broadcast %532 : vector<64x1xf32> to vector<64x32xf32>
    %534 = arith.mulf %524, %533 : vector<64x32xf32>
    %c1_171 = arith.constant 1 : index
    %c0_172 = arith.constant 0 : index
    %c0_173 = arith.constant 0 : index
    %535 = vector.load %arg13[%c1_171, %c0_172, %c0_173] : memref<2x128x32xf32, #tpu.memory_space<vmem>>, vector<1x128x32xf32>
    %536 = vector.shape_cast %535 : vector<1x128x32xf32> to vector<128x32xf32>
    %cst_174 = arith.constant dense<0.000000e+00> : vector<64x128xf32>
    %537 = tpu.matmul %534, %536, %cst_174 {dimension_numbers = #tpu.dot_dimension_numbers<[1], [1], [0], [0], [0, 0, 1, 0], [], []>} : vector<64x32xf32>, vector<128x32xf32>, vector<64x128xf32> -> vector<64x128xf32>
    %cst_175 = arith.constant 0.000000e+00 : f32
    %538 = vector.broadcast %cst_175 : f32 to vector<64x128xf32>
    %539 = arith.maximumf %537, %538 : vector<64x128xf32>
    %c1_176 = arith.constant 1 : index
    %c0_177 = arith.constant 0 : index
    %c0_178 = arith.constant 0 : index
    %540 = vector.load %arg14[%c1_176, %c0_177, %c0_178] : memref<2x32x128xf32, #tpu.memory_space<vmem>>, vector<1x32x128xf32>
    %541 = vector.shape_cast %540 : vector<1x32x128xf32> to vector<32x128xf32>
    %cst_179 = arith.constant dense<0.000000e+00> : vector<64x32xf32>
    %542 = tpu.matmul %539, %541, %cst_179 {dimension_numbers = #tpu.dot_dimension_numbers<[1], [1], [0], [0], [0, 0, 1, 0], [], []>} : vector<64x128xf32>, vector<32x128xf32>, vector<64x32xf32> -> vector<64x32xf32>
    %543 = arith.addf %524, %542 : vector<64x32xf32>
    %c1_180 = arith.constant 1 : index
    %c0_181 = arith.constant 0 : index
    %c0_182 = arith.constant 0 : index
    %544 = vector.load %arg15[%c1_180, %c0_181, %c0_182] : memref<2x256x32xf32, #tpu.memory_space<vmem>>, vector<1x256x32xf32>
    %545 = vector.shape_cast %544 : vector<1x256x32xf32> to vector<256x32xf32>
    %cst_183 = arith.constant dense<0.000000e+00> : vector<64x256xf32>
    %546 = tpu.matmul %524, %545, %cst_183 {dimension_numbers = #tpu.dot_dimension_numbers<[1], [1], [0], [0], [0, 0, 1, 0], [], []>} : vector<64x32xf32>, vector<256x32xf32>, vector<64x256xf32> -> vector<64x256xf32>
    %c1_184 = arith.constant 1 : index
    %c0_185 = arith.constant 0 : index
    %c0_186 = arith.constant 0 : index
    %547 = vector.load %arg16[%c1_184, %c0_185, %c0_186] : memref<2x1x256xf32, #tpu.memory_space<vmem>>, vector<1x1x256xf32>
    %548 = vector.shape_cast %547 : vector<1x1x256xf32> to vector<1x256xf32>
    %549 = vector.broadcast %548 : vector<1x256xf32> to vector<64x256xf32>
    %550 = arith.addf %546, %549 : vector<64x256xf32>
    %cst_187 = arith.constant 0.000000e+00 : f32
    %551 = vector.broadcast %cst_187 : f32 to vector<64x256xf32>
    %552 = arith.maximumf %550, %551 : vector<64x256xf32>
    %c1_188 = arith.constant 1 : index
    %c0_189 = arith.constant 0 : index
    %c0_190 = arith.constant 0 : index
    %553 = vector.load %arg17[%c1_188, %c0_189, %c0_190] : memref<2x32x256xf32, #tpu.memory_space<vmem>>, vector<1x32x256xf32>
    %554 = vector.shape_cast %553 : vector<1x32x256xf32> to vector<32x256xf32>
    %cst_191 = arith.constant dense<0.000000e+00> : vector<64x32xf32>
    %555 = tpu.matmul %552, %554, %cst_191 {dimension_numbers = #tpu.dot_dimension_numbers<[1], [1], [0], [0], [0, 0, 1, 0], [], []>} : vector<64x256xf32>, vector<32x256xf32>, vector<64x32xf32> -> vector<64x32xf32>
    %c1_192 = arith.constant 1 : index
    %c0_193 = arith.constant 0 : index
    %c0_194 = arith.constant 0 : index
    %556 = vector.load %arg18[%c1_192, %c0_193, %c0_194] : memref<2x1x32xf32, #tpu.memory_space<vmem>>, vector<1x1x32xf32>
    %557 = vector.shape_cast %556 : vector<1x1x32xf32> to vector<1x32xf32>
    %558 = vector.broadcast %557 : vector<1x32xf32> to vector<64x32xf32>
    %559 = arith.addf %555, %558 : vector<64x32xf32>
    %c1_195 = arith.constant 1 : index
    %c0_196 = arith.constant 0 : index
    %c0_197 = arith.constant 0 : index
    %560 = vector.load %arg22[%c1_195, %c0_196, %c0_197] : memref<2x64x256xf32, #tpu.memory_space<vmem>>, vector<1x64x256xf32>
    %561 = vector.shape_cast %560 : vector<1x64x256xf32> to vector<64x256xf32>
    %562 = vector.shape_cast %552 : vector<64x256xf32> to vector<1x64x256xf32>
    tpu.vector_store %arg22[%c1_195, %c0_196, %c0_197], %562 {strides = array<i32>} : memref<2x64x256xf32, #tpu.memory_space<vmem>>, vector<1x64x256xf32>,
    %563 = arith.subf %559, %543 : vector<64x32xf32>
    %564 = arith.mulf %563, %563 : vector<64x32xf32>
    %565 = vector.shape_cast %564 : vector<64x32xf32> to vector<1x64x32xf32>
    %cst_198 = arith.constant dense<0.000000e+00> : vector<1xf32>
    %566 = vector.multi_reduction <add>, %565, %cst_198 [1, 2] : vector<1x64x32xf32> to vector<1xf32>
    %567 = vector.shape_cast %566 : vector<1xf32> to vector<1x1x1xf32>
    %568 = vector.extract %567[0, 0, 0] : f32 from vector<1x1x1xf32>
    %cst_199 = arith.constant 2.048000e+03 : f32
    %569 = arith.divf %568, %cst_199 : f32
    %570 = arith.addf %298, %569 : f32
    %c0_200 = arith.constant 0 : index
    %c0_201 = arith.constant 0 : index
    %571 = memref.load %arg21[%c0_200, %c0_201] : memref<1x1xf32, #tpu.memory_space<smem>>
    memref.store %570, %arg21[%c0_200, %c0_201] : memref<1x1xf32, #tpu.memory_space<smem>>
    %572 = arith.mulf %543, %543 : vector<64x32xf32>
    %cst_202 = arith.constant dense<0.000000e+00> : vector<64xf32>
    %573 = vector.multi_reduction <add>, %572, %cst_202 [1] : vector<64x32xf32> to vector<64xf32>
    %574 = vector.shape_cast %573 : vector<64xf32> to vector<64x1xf32>
    %cst_203 = arith.constant 3.200000e+01 : f32
    %575 = vector.broadcast %cst_203 : f32 to vector<64x1xf32>
    %576 = arith.divf %574, %575 : vector<64x1xf32>
    %cst_204 = arith.constant 1.1920929E-7 : f32
    %577 = vector.broadcast %cst_204 : f32 to vector<64x1xf32>
    %578 = arith.addf %576, %577 : vector<64x1xf32>
    %579 = math.rsqrt %578 : vector<64x1xf32>
    %580 = vector.broadcast %579 : vector<64x1xf32> to vector<64x32xf32>
    %581 = arith.mulf %543, %580 : vector<64x32xf32>
    %c0_205 = arith.constant 0 : index
    %c0_206 = arith.constant 0 : index
    %582 = vector.load %arg19[%c0_205, %c0_206] : memref<128x32xf32, #tpu.memory_space<vmem>>, vector<128x32xf32>
    %cst_207 = arith.constant dense<0.000000e+00> : vector<64x128xf32>
    %583 = tpu.matmul %581, %582, %cst_207 {dimension_numbers = #tpu.dot_dimension_numbers<[1], [1], [0], [0], [0, 0, 1, 0], [], []>} : vector<64x32xf32>, vector<128x32xf32>, vector<64x128xf32> -> vector<64x128xf32>
    %cst_208 = arith.constant 42.4264069 : f32
    %584 = vector.broadcast %cst_208 : f32 to vector<64x128xf32>
    %585 = arith.divf %583, %584 : vector<64x128xf32>
    %586 = arith.negf %585 : vector<64x128xf32>
    %587 = math.exp %586 : vector<64x128xf32>
    %cst_209 = arith.constant 1.000000e+00 : f32
    %588 = vector.broadcast %cst_209 : f32 to vector<64x128xf32>
    %589 = arith.addf %588, %587 : vector<64x128xf32>
    %590 = arith.divf %588, %589 : vector<64x128xf32>
    %cst_210 = arith.constant 3.000000e+01 : f32
    %591 = vector.broadcast %cst_210 : f32 to vector<64x128xf32>
    %592 = arith.mulf %591, %590 : vector<64x128xf32>
    %c0_211 = arith.constant 0 : index
    %c0_212 = arith.constant 0 : index
    %593 = vector.load %arg20[%c0_211, %c0_212] : memref<64x128xf32, #tpu.memory_space<vmem>>, vector<64x128xf32>
    tpu.vector_store %arg20[%c0_211, %c0_212], %592 {strides = array<i32>} : memref<64x128xf32, #tpu.memory_space<vmem>>, vector<64x128xf32>,
    return
  }
}

</mosaic_0001>

<llo_original>
// kernel: _lambda_.1
$region0: #{_lambda_.1}
  #allocation0 [shape = 'u32[]', space=smem, size = 0x4, offset = 0x4, fixed_abs, tag = 'smem constant byte address 0x4 - core index']
  #allocation1 [shape = 'u32[144,128]{1,0:T(1,128)}', space=vmem, size = 0x12000, scoped, tag = 'internal scratch']
  %s0 = inlined_call_operand.vmem [shape: f32[2], index: 0, kind: input, shape index: {}]
  %s1 = inlined_call_operand.vmem [shape: f32[2], index: 1, kind: input, shape index: {}]
  %s2 = inlined_call_operand.vmem [shape: f32[64,32], index: 2, kind: input, shape index: {}]
  %s3 = inlined_call_operand.vmem [shape: f32[1,32], index: 3, kind: input, shape index: {}]
  %s4 = inlined_call_operand.vmem [shape: f32[64,8], index: 4, kind: input, shape index: {}]
  %s5 = inlined_call_operand.vmem [shape: f32[64,8], index: 5, kind: input, shape index: {}]
  %s6 = inlined_call_operand.vmem [shape: f32[64,64], index: 6, kind: input, shape index: {}]
  %s7 = inlined_call_operand.vmem [shape: f32[32,32], index: 7, kind: input, shape index: {}]
  %s8 = inlined_call_operand.vmem [shape: f32[1,32], index: 8, kind: input, shape index: {}]
  %s9 = inlined_call_operand.vmem [shape: f32[32,32], index: 9, kind: input, shape index: {}]
  %s10 = inlined_call_operand.vmem [shape: f32[1,32], index: 10, kind: input, shape index: {}]
  %s11 = inlined_call_operand.vmem [shape: f32[2,96,32], index: 11, kind: input, shape index: {}]
  %s12 = inlined_call_operand.vmem [shape: f32[2,32,32], index: 12, kind: input, shape index: {}]
  %s13 = inlined_call_operand.vmem [shape: f32[2,128,32], index: 13, kind: input, shape index: {}]
  %s14 = inlined_call_operand.vmem [shape: f32[2,32,128], index: 14, kind: input, shape index: {}]
  %s15 = inlined_call_operand.vmem [shape: f32[2,256,32], index: 15, kind: input, shape index: {}]
  %s16 = inlined_call_operand.vmem [shape: f32[2,1,256], index: 16, kind: input, shape index: {}]
  %s17 = inlined_call_operand.vmem [shape: f32[2,32,256], index: 17, kind: input, shape index: {}]
  %s18 = inlined_call_operand.vmem [shape: f32[2,1,32], index: 18, kind: input, shape index: {}]
  %s19 = inlined_call_operand.vmem [shape: f32[128,32], index: 19, kind: input, shape index: {}]
  %s20 = inlined_call_operand.hbm [shape: f32[64,128], index: 20, kind: output, shape index: {0}]
  %s21 = inlined_call_operand.hbm [shape: f32[1,1], index: 21, kind: output, shape index: {1}]
  %s22 = inlined_call_operand.vmem [shape: f32[2,64,256], index: 22, kind: output, shape index: {2}]
  %23 = xla_tuple %s20, %s21, %s22
  %s24 = sld [smem:[#allocation0]]
  $region114: #{_lambda_.1} parent=0
    _
  %s26 = ssub.s32 1, %s24
  %s27 = scalar_select 0, %s26, %s24
  $region1: #{_lambda_.1} parent=0
    #allocation2 [shape = 'u8[512]{0}', space=smem, size = 0x200, scoped, tag = 'input window, operand 0, single buffered']
    #allocation3 [shape = 's32[1]{0}', space=sflag, size = 0x4, scoped, tag = 'scoped memory for _lambda_.1']
    #allocation4 [shape = 's32[1]{0}', space=sflag, size = 0x4, scoped, tag = 'scoped memory for _lambda_.1']
    #allocation5 [shape = 's32[1]{0}', space=sflag, size = 0x4, scoped, tag = 'scoped memory for _lambda_.1']
    #allocation6 [shape = 'u8[512]{0}', space=smem, size = 0x200, scoped, tag = 'input window, operand 1, single buffered']
    #allocation7 [shape = 's32[1]{0}', space=sflag, size = 0x4, scoped, tag = 'scoped memory for _lambda_.1']
    #allocation8 [shape = 'u8[32768]{0}', space=vmem, size = 0x8000, scoped, tag = 'output window, operand 0, single buffered']
    #allocation9 [shape = 'u8[512]{0}', space=smem, size = 0x200, scoped, tag = 'output window, operand 1, single buffered']
    %28 = vsyncpa [#allocation5], 0
    %29 = vsyncpa [#allocation7], 0
    %30 = vsyncpa [#allocation3], 0
    %31 = vsyncpa [#allocation4], 0
    // Predicated region
    $region2: #{_lambda_.1} parent=1 // pred_check
      _
    $region3: #{_lambda_.1} parent=1 // pred_check_branch
      %33 = sbr.rel (0) target = $region5
    $region4: #{_lambda_.1} parent=1 // pred_region
      %s35 = ssub.s32 16, 16
      %36 = vsyncadd [#allocation5], %s35
      %s38 = sshll.u32 %s0, 4
      %s39 = int_to_ptr.vmem [resolvable:$true] %s38
      %41 = dma.vmem_to_smem %s39, 16, [#allocation2], [#allocation5]
    $region5: #{_lambda_.1} parent=1 // pred_fallthru
      _
    // Predicated region
    $region6: #{_lambda_.1} parent=1 // pred_check
      _
    $region7: #{_lambda_.1} parent=1 // pred_check_branch
      %43 = sbr.rel (0) target = $region9
    $region8: #{_lambda_.1} parent=1 // pred_region
      %s45 = ssub.s32 16, 16
      %46 = vsyncadd [#allocation7], %s45
      %s48 = sshll.u32 %s1, 4
      %s49 = int_to_ptr.vmem [resolvable:$true] %s48
      %51 = dma.vmem_to_smem %s49, 16, [#allocation6], [#allocation7]
    $region9: #{_lambda_.1} parent=1 // pred_fallthru
      _
    // Predicated region
    $region10: #{_lambda_.1} parent=1 // pred_check
      _
    $region11: #{_lambda_.1} parent=1 // pred_check_branch
      %53 = sbr.rel (0) target = $region13
    $region12: #{_lambda_.1} parent=1 // pred_region
      _
    $region13: #{_lambda_.1} parent=1 // pred_fallthru
      _
    // Predicated region
    $region14: #{_lambda_.1} parent=1 // pred_check
      _
    $region15: #{_lambda_.1} parent=1 // pred_check_branch
      %55 = sbr.rel (0) target = $region17
    $region16: #{_lambda_.1} parent=1 // pred_region
      _
    $region17: #{_lambda_.1} parent=1 // pred_fallthru
      _
    // Predicated region
    $region18: #{_lambda_.1} parent=1 // pred_check
      _
    $region19: #{_lambda_.1} parent=1 // pred_check_branch
      %57 = sbr.rel (0) target = $region21
    $region20: #{_lambda_.1} parent=1 // pred_region
      _
    $region21: #{_lambda_.1} parent=1 // pred_fallthru
      _
    // Predicated region
    $region22: #{_lambda_.1} parent=1 // pred_check
      _
    $region23: #{_lambda_.1} parent=1 // pred_check_branch
      %59 = sbr.rel (0) target = $region25
    $region24: #{_lambda_.1} parent=1 // pred_region
      _
    $region25: #{_lambda_.1} parent=1 // pred_fallthru
      _
    // Predicated region
    $region26: #{_lambda_.1} parent=1 // pred_check
      _
    $region27: #{_lambda_.1} parent=1 // pred_check_branch
      %61 = sbr.rel (0) target = $region29
    $region28: #{_lambda_.1} parent=1 // pred_region
      _
    $region29: #{_lambda_.1} parent=1 // pred_fallthru
      _
    // Predicated region
    $region30: #{_lambda_.1} parent=1 // pred_check
      _
    $region31: #{_lambda_.1} parent=1 // pred_check_branch
      %63 = sbr.rel (0) target = $region33
    $region32: #{_lambda_.1} parent=1 // pred_region
      _
    $region33: #{_lambda_.1} parent=1 // pred_fallthru
      _
    // Predicated region
    $region34: #{_lambda_.1} parent=1 // pred_check
      _
    $region35: #{_lambda_.1} parent=1 // pred_check_branch
      %65 = sbr.rel (0) target = $region37
    $region36: #{_lambda_.1} parent=1 // pred_region
      _
    $region37: #{_lambda_.1} parent=1 // pred_fallthru
      _
    // Predicated region
    $region38: #{_lambda_.1} parent=1 // pred_check
      _
    $region39: #{_lambda_.1} parent=1 // pred_check_branch
      %67 = sbr.rel (0) target = $region41
    $region40: #{_lambda_.1} parent=1 // pred_region
      _
    $region41: #{_lambda_.1} parent=1 // pred_fallthru
      _
    // Predicated region
    $region42: #{_lambda_.1} parent=1 // pred_check
      _
    $region43: #{_lambda_.1} parent=1 // pred_check_branch
      %69 = sbr.rel (0) target = $region45
    $region44: #{_lambda_.1} parent=1 // pred_region
      _
    $region45: #{_lambda_.1} parent=1 // pred_fallthru
      _
    // Predicated region
    $region46: #{_lambda_.1} parent=1 // pred_check
      _
    $region47: #{_lambda_.1} parent=1 // pred_check_branch
      %71 = sbr.rel (0) target = $region49
    $region48: #{_lambda_.1} parent=1 // pred_region
      _
    $region49: #{_lambda_.1} parent=1 // pred_fallthru
      _
    // Predicated region
    $region50: #{_lambda_.1} parent=1 // pred_check
      _
    $region51: #{_lambda_.1} parent=1 // pred_check_branch
      %73 = sbr.rel (0) target = $region53
    $region52: #{_lambda_.1} parent=1 // pred_region
      _
    $region53: #{_lambda_.1} parent=1 // pred_fallthru
      _
    // Predicated region
    $region54: #{_lambda_.1} parent=1 // pred_check
      _
    $region55: #{_lambda_.1} parent=1 // pred_check_branch
      %75 = sbr.rel (0) target = $region57
    $region56: #{_lambda_.1} parent=1 // pred_region
      _
    $region57: #{_lambda_.1} parent=1 // pred_fallthru
      _
    // Predicated region
    $region58: #{_lambda_.1} parent=1 // pred_check
      _
    $region59: #{_lambda_.1} parent=1 // pred_check_branch
      %77 = sbr.rel (0) target = $region61
    $region60: #{_lambda_.1} parent=1 // pred_region
      _
    $region61: #{_lambda_.1} parent=1 // pred_fallthru
      _
    // Predicated region
    $region62: #{_lambda_.1} parent=1 // pred_check
      _
    $region63: #{_lambda_.1} parent=1 // pred_check_branch
      %79 = sbr.rel (0) target = $region65
    $region64: #{_lambda_.1} parent=1 // pred_region
      _
    $region65: #{_lambda_.1} parent=1 // pred_fallthru
      _
    // Predicated region
    $region66: #{_lambda_.1} parent=1 // pred_check
      _
    $region67: #{_lambda_.1} parent=1 // pred_check_branch
      %81 = sbr.rel (0) target = $region69
    $region68: #{_lambda_.1} parent=1 // pred_region
      _
    $region69: #{_lambda_.1} parent=1 // pred_fallthru
      _
    // Predicated region
    $region70: #{_lambda_.1} parent=1 // pred_check
      _
    $region71: #{_lambda_.1} parent=1 // pred_check_branch
      %83 = sbr.rel (0) target = $region73
    $region72: #{_lambda_.1} parent=1 // pred_region
      _
    $region73: #{_lambda_.1} parent=1 // pred_fallthru
      _
    // Predicated region
    $region74: #{_lambda_.1} parent=1 // pred_check
      _
    $region75: #{_lambda_.1} parent=1 // pred_check_branch
      %85 = sbr.rel (0) target = $region77
    $region76: #{_lambda_.1} parent=1 // pred_region
      _
    $region77: #{_lambda_.1} parent=1 // pred_fallthru
      _
    // Predicated region
    $region78: #{_lambda_.1} parent=1 // pred_check
      _
    $region79: #{_lambda_.1} parent=1 // pred_check_branch
      %87 = sbr.rel (0) target = $region81
    $region80: #{_lambda_.1} parent=1 // pred_region
      _
    $region81: #{_lambda_.1} parent=1 // pred_fallthru
      _
    // Predicated region
    $region82: #{_lambda_.1} parent=1 // pred_check
      _
    $region83: #{_lambda_.1} parent=1 // pred_check_branch
      %89 = sbr.rel (0) target = $region85
    $region84: #{_lambda_.1} parent=1 // pred_region
      %90 = dma.done [#allocation5], 16
    $region85: #{_lambda_.1} parent=1 // pred_fallthru
      _
    // Predicated region
    $region86: #{_lambda_.1} parent=1 // pred_check
      _
    $region87: #{_lambda_.1} parent=1 // pred_check_branch
      %92 = sbr.rel (0) target = $region89
    $region88: #{_lambda_.1} parent=1 // pred_region
      %93 = dma.done [#allocation7], 16
    $region89: #{_lambda_.1} parent=1 // pred_fallthru
      _
    %94 = sfence
    %v95 = vld [vmem:[%s3] sm:$0x1]
    %v96 = vld [vmem:[%s7] sm:$0xff]
    %v97 = vld [vmem:[%s7 + $0x8] sm:$0xff]
    %v98 = vld [vmem:[%s7 + $0x10] sm:$0xff]
    %v99 = vld [vmem:[%s7 + $0x18] sm:$0xff]
    %v100 = vld [vmem:[%s8] sm:$0x1]
    %vm101 = vcmask 261120
    %v103 = vsel %vm101, %v95, 0
    %v106 = vsel %vm101, %v96, 0
    %v109 = vsel %vm101, %v97, 0
    %v112 = vsel %vm101, %v98, 0
    %v115 = vsel %vm101, %v99, 0
    %117 = vmatprep.subr.mxu0 0.0
    %118 = vmatpush1.xpose.msra.mxu0 %v106
    %119 = vmatprep.subr.mxu0 0.0
    %120 = vmatpush1.xpose.msra.mxu0 %v109
    %121 = vmatprep.subr.mxu0 0.0
    %122 = vmatpush1.xpose.msra.mxu0 %v112
    %123 = vmatprep.subr.mxu0 0.0
    %124 = vmatpush1.xpose.msra.mxu0 %v115
    %125 = vmatprep.subr.mxu0 0.0
    %126 = vmatpush1.xpose.msra.mxu0 0.0
    %127 = vmatprep.subr.mxu0 0.0
    %128 = vmatpush1.xpose.msra.mxu0 0.0
    %129 = vmatprep.subr.mxu0 0.0
    %130 = vmatpush1.xpose.msra.mxu0 0.0
    %131 = vmatprep.subr.mxu0 0.0
    %132 = vmatpush1.xpose.msra.mxu0 0.0
    %133 = vmatprep.subr.mxu0 0.0
    %134 = vmatpush1.xpose.msra.mxu0 0.0
    %135 = vmatprep.subr.mxu0 0.0
    %136 = vmatpush1.xpose.msra.mxu0 0.0
    %137 = vmatprep.subr.mxu0 0.0
    %138 = vmatpush1.xpose.msra.mxu0 0.0
    %139 = vmatprep.subr.mxu0 0.0
    %140 = vmatpush1.xpose.msra.mxu0 0.0
    %141 = vmatprep.subr.mxu0 0.0
    %142 = vmatpush1.xpose.msra.mxu0 0.0
    %143 = vmatprep.subr.mxu0 0.0
    %144 = vmatpush1.xpose.msra.mxu0 0.0
    %145 = vmatprep.subr.mxu0 0.0
    %146 = vmatpush1.xpose.msra.mxu0 0.0
    %147 = vmatprep.subr.mxu0 0.0
    %148 = vmatpush1.xpose.msra.mxu0 0.0
    %149 = vmatprep.subr.mxu0 0.0
    %150 = vmatpush1.xpose.msra.mxu0 0.0
    %151 = vmatprep.subr.mxu0 0.0
    %152 = vmatpush1.xpose.msra.mxu0 0.0
    %153 = vmatprep.subr.mxu0 0.0
    %154 = vmatpush1.xpose.msra.mxu0 0.0
    %155 = vmatprep.subr.mxu0 0.0
    %156 = vmatpush1.xpose.msra.mxu0 0.0
    %157 = vmatprep.subr.mxu0 0.0
    %158 = vmatpush1.xpose.msra.mxu0 0.0
    %159 = vmatprep.subr.mxu0 0.0
    %160 = vmatpush1.xpose.msra.mxu0 0.0
    %161 = vmatprep.subr.mxu0 0.0
    %162 = vmatpush1.xpose.msra.mxu0 0.0
    %163 = vmatprep.subr.mxu0 0.0
    %164 = vmatpush1.xpose.msra.mxu0 0.0
    %165 = vmatprep.subr.mxu0 0.0
    %166 = vmatpush1.xpose.msra.mxu0 0.0
    %167 = vmatprep.subr.mxu0 0.0
    %168 = vmatpush1.xpose.msra.mxu0 0.0
    %169 = vmatprep.subr.mxu0 0.0
    %170 = vmatpush1.xpose.msra.mxu0 0.0
    %171 = vmatprep.subr.mxu0 0.0
    %172 = vmatpush1.xpose.msra.mxu0 0.0
    %173 = vmatprep.subr.mxu0 0.0
    %174 = vmatpush1.xpose.msra.mxu0 0.0
    %175 = vmatprep.subr.mxu0 0.0
    %176 = vmatpush1.xpose.msra.mxu0 0.0
    %177 = vmatprep.subr.mxu0 0.0
    %178 = vmatpush1.xpose.msra.mxu0 0.0
    %179 = vmatprep.subr.mxu0 0.0
    %180 = vmatpush1.xpose.msra.mxu0 0.0
    %181 = vmatprep.mubr.f32.mxu0 0.0
    %182 = vmatmul.mubr.f32.gmra.mrb[0].mxu0 %v103
    %v183 = vpop.f32.mrb[0].mxu0
    %v184 = vadd.f32 %v100, %v183
    %v185 = vpop.f32.mrb[0].mxu0
    %186 = vdwg.mxu0
    %v187 = vmax.f32 %v184, 0.0
    %v188 = vld [vmem:[%s9] sm:$0xff]
    %v189 = vld [vmem:[%s9 + $0x8] sm:$0xff]
    %v190 = vld [vmem:[%s9 + $0x10] sm:$0xff]
    %v191 = vld [vmem:[%s9 + $0x18] sm:$0xff]
    %v192 = vld [vmem:[%s10] sm:$0x1]
    %v194 = vsel %vm101, %v187, 0
    %v197 = vsel %vm101, %v188, 0
    %v200 = vsel %vm101, %v189, 0
    %v203 = vsel %vm101, %v190, 0
    %v206 = vsel %vm101, %v191, 0
    %208 = vmatprep.subr.mxu0 0.0
    %209 = vmatpush1.xpose.msra.mxu0 %v197
    %210 = vmatprep.subr.mxu0 0.0
    %211 = vmatpush1.xpose.msra.mxu0 %v200
    %212 = vmatprep.subr.mxu0 0.0
    %213 = vmatpush1.xpose.msra.mxu0 %v203
    %214 = vmatprep.subr.mxu0 0.0
    %215 = vmatpush1.xpose.msra.mxu0 %v206
    %216 = vmatprep.subr.mxu0 0.0
    %217 = vmatpush1.xpose.msra.mxu0 0.0
    %218 = vmatprep.subr.mxu0 0.0
    %219 = vmatpush1.xpose.msra.mxu0 0.0
    %220 = vmatprep.subr.mxu0 0.0
    %221 = vmatpush1.xpose.msra.mxu0 0.0
    %222 = vmatprep.subr.mxu0 0.0
    %223 = vmatpush1.xpose.msra.mxu0 0.0
    %224 = vmatprep.subr.mxu0 0.0
    %225 = vmatpush1.xpose.msra.mxu0 0.0
    %226 = vmatprep.subr.mxu0 0.0
    %227 = vmatpush1.xpose.msra.mxu0 0.0
    %228 = vmatprep.subr.mxu0 0.0
    %229 = vmatpush1.xpose.msra.mxu0 0.0
    %230 = vmatprep.subr.mxu0 0.0
    %231 = vmatpush1.xpose.msra.mxu0 0.0
    %232 = vmatprep.subr.mxu0 0.0
    %233 = vmatpush1.xpose.msra.mxu0 0.0
    %234 = vmatprep.subr.mxu0 0.0
    %235 = vmatpush1.xpose.msra.mxu0 0.0
    %236 = vmatprep.subr.mxu0 0.0
    %237 = vmatpush1.xpose.msra.mxu0 0.0
    %238 = vmatprep.subr.mxu0 0.0
    %239 = vmatpush1.xpose.msra.mxu0 0.0
    %240 = vmatprep.subr.mxu0 0.0
    %241 = vmatpush1.xpose.msra.mxu0 0.0
    %242 = vmatprep.subr.mxu0 0.0
    %243 = vmatpush1.xpose.msra.mxu0 0.0
    %244 = vmatprep.subr.mxu0 0.0
    %245 = vmatpush1.xpose.msra.mxu0 0.0
    %246 = vmatprep.subr.mxu0 0.0
    %247 = vmatpush1.xpose.msra.mxu0 0.0
    %248 = vmatprep.subr.mxu0 0.0
    %249 = vmatpush1.xpose.msra.mxu0 0.0
    %250 = vmatprep.subr.mxu0 0.0
    %251 = vmatpush1.xpose.msra.mxu0 0.0
    %252 = vmatprep.subr.mxu0 0.0
    %253 = vmatpush1.xpose.msra.mxu0 0.0
    %254 = vmatprep.subr.mxu0 0.0
    %255 = vmatpush1.xpose.msra.mxu0 0.0
    %256 = vmatprep.subr.mxu0 0.0
    %257 = vmatpush1.xpose.msra.mxu0 0.0
    %258 = vmatprep.subr.mxu0 0.0
    %259 = vmatpush1.xpose.msra.mxu0 0.0
    %260 = vmatprep.subr.mxu0 0.0
    %261 = vmatpush1.xpose.msra.mxu0 0.0
    %262 = vmatprep.subr.mxu0 0.0
    %263 = vmatpush1.xpose.msra.mxu0 0.0
    %264 = vmatprep.subr.mxu0 0.0
    %265 = vmatpush1.xpose.msra.mxu0 0.0
    %266 = vmatprep.subr.mxu0 0.0
    %267 = vmatpush1.xpose.msra.mxu0 0.0
    %268 = vmatprep.subr.mxu0 0.0
    %269 = vmatpush1.xpose.msra.mxu0 0.0
    %270 = vmatprep.subr.mxu0 0.0
    %271 = vmatpush1.xpose.msra.mxu0 0.0
    %272 = vmatprep.mubr.f32.mxu0 0.0
    %273 = vmatmul.mubr.f32.gmra.mrb[0].mxu0 %v194
    %v274 = vpop.f32.mrb[0].mxu0
    %v275 = vadd.f32 %v192, %v274
    %v276 = vpop.f32.mrb[0].mxu0
    %277 = vdwg.mxu0
    %v278 = vld [vmem:[%s2] sm:$0xff]
    %v279 = vld [vmem:[%s2 + $0x8] sm:$0xff]
    %v280 = vld [vmem:[%s2 + $0x10] sm:$0xff]
    %v281 = vld [vmem:[%s2 + $0x18] sm:$0xff]
    %v282 = vld [vmem:[%s2 + $0x20] sm:$0xff]
    %v283 = vld [vmem:[%s2 + $0x28] sm:$0xff]
    %v284 = vld [vmem:[%s2 + $0x30] sm:$0xff]
    %v285 = vld [vmem:[%s2 + $0x38] sm:$0xff]
    %v286 = vmul.f32 %v278, %v278
    %v287 = vmul.f32 %v279, %v279
    %v288 = vmul.f32 %v280, %v280
    %v289 = vmul.f32 %v281, %v281
    %v290 = vmul.f32 %v282, %v282
    %v291 = vmul.f32 %v283, %v283
    %v292 = vmul.f32 %v284, %v284
    %v293 = vmul.f32 %v285, %v285
    %v294 = vsel %vm101, %v286, 0.0
    %295 = vadd.xlane.f32.xlu0 %v294
    %v296 = vpop.xlane.xlu0 %295
    %v297 = vsel %vm101, %v287, 0.0
    %298 = vadd.xlane.f32.xlu0 %v297
    %v299 = vpop.xlane.xlu0 %298
    %v300 = vsel %vm101, %v288, 0.0
    %301 = vadd.xlane.f32.xlu0 %v300
    %v302 = vpop.xlane.xlu0 %301
    %v303 = vsel %vm101, %v289, 0.0
    %304 = vadd.xlane.f32.xlu0 %v303
    %v305 = vpop.xlane.xlu0 %304
    %v306 = vsel %vm101, %v290, 0.0
    %307 = vadd.xlane.f32.xlu0 %v306
    %v308 = vpop.xlane.xlu0 %307
    %v309 = vsel %vm101, %v291, 0.0
    %310 = vadd.xlane.f32.xlu0 %v309
    %v311 = vpop.xlane.xlu0 %310
    %v312 = vsel %vm101, %v292, 0.0
    %313 = vadd.xlane.f32.xlu0 %v312
    %v314 = vpop.xlane.xlu0 %313
    %v315 = vsel %vm101, %v293, 0.0
    %316 = vadd.xlane.f32.xlu0 %v315
    %v317 = vpop.xlane.xlu0 %316
    %v318 = vrcp.pop 32.0
    %v319 = vmul.f32 %v296, %v318
    %v320 = vmul.f32 %v299, %v318
    %v321 = vmul.f32 %v302, %v318
    %v322 = vmul.f32 %v305, %v318
    %v323 = vmul.f32 %v308, %v318
    %v324 = vmul.f32 %v311, %v318
    %v325 = vmul.f32 %v314, %v318
    %v326 = vmul.f32 %v317, %v318
    %v327 = vadd.f32 %v319, 1.1920929e-07
    %v328 = vadd.f32 %v320, 1.1920929e-07
    %v329 = vadd.f32 %v321, 1.1920929e-07
    %v330 = vadd.f32 %v322, 1.1920929e-07
    %v331 = vadd.f32 %v323, 1.1920929e-07
    %v332 = vadd.f32 %v324, 1.1920929e-07
    %v333 = vadd.f32 %v325, 1.1920929e-07
    %v334 = vadd.f32 %v326, 1.1920929e-07
    %v335 = vrsqrt.pop %v327
    %v336 = vrsqrt.pop %v328
    %v337 = vrsqrt.pop %v329
    %v338 = vrsqrt.pop %v330
    %v339 = vrsqrt.pop %v331
    %v340 = vrsqrt.pop %v332
    %v341 = vrsqrt.pop %v333
    %v342 = vrsqrt.pop %v334
    %v343 = vmul.f32 %v278, %v335
    %v344 = vmul.f32 %v279, %v336
    %v345 = vmul.f32 %v280, %v337
    %v346 = vmul.f32 %v281, %v338
    %v347 = vmul.f32 %v282, %v339
    %v348 = vmul.f32 %v283, %v340
    %v349 = vmul.f32 %v284, %v341
    %v350 = vmul.f32 %v285, %v342
    %v351 = vlaneseq
    %v352 = vshrl.u32 %v351, 7
    %v353 = vsub.s32 0, %v352
    %v354 = vrot.slane %v275, %v353
    %v355 = vadd.f32 %v343, %v354
    %v356 = vadd.f32 %v344, %v354
    %v357 = vadd.f32 %v345, %v354
    %v358 = vadd.f32 %v346, %v354
    %v359 = vadd.f32 %v347, %v354
    %v360 = vadd.f32 %v348, %v354
    %v361 = vadd.f32 %v349, %v354
    %v362 = vadd.f32 %v350, %v354
    %v363 = vld [vmem:[%s4] sm:$0xff]
    %v364 = vld [vmem:[%s4 + $0x8] sm:$0xff]
    %v365 = vld [vmem:[%s4 + $0x10] sm:$0xff]
    %v366 = vld [vmem:[%s4 + $0x18] sm:$0xff]
    %v367 = vld [vmem:[%s4 + $0x20] sm:$0xff]
    %v368 = vld [vmem:[%s4 + $0x28] sm:$0xff]
    %v369 = vld [vmem:[%s4 + $0x30] sm:$0xff]
    %v370 = vld [vmem:[%s4 + $0x38] sm:$0xff]
    %v371 = vld [vmem:[%s5] sm:$0xff]
    %v372 = vld [vmem:[%s5 + $0x8] sm:$0xff]
    %v373 = vld [vmem:[%s5 + $0x10] sm:$0xff]
    %v374 = vld [vmem:[%s5 + $0x18] sm:$0xff]
    %v375 = vld [vmem:[%s5 + $0x20] sm:$0xff]
    %v376 = vld [vmem:[%s5 + $0x28] sm:$0xff]
    %v377 = vld [vmem:[%s5 + $0x30] sm:$0xff]
    %v378 = vld [vmem:[%s5 + $0x38] sm:$0xff]
    %v379 = vld [vmem:[%s6] sm:$0xff]
    %v380 = vld [vmem:[%s6 + $0x8] sm:$0xff]
    %v381 = vld [vmem:[%s6 + $0x10] sm:$0xff]
    %v382 = vld [vmem:[%s6 + $0x18] sm:$0xff]
    %v383 = vld [vmem:[%s6 + $0x20] sm:$0xff]
    %v384 = vld [vmem:[%s6 + $0x28] sm:$0xff]
    %v385 = vld [vmem:[%s6 + $0x30] sm:$0xff]
    %v386 = vld [vmem:[%s6 + $0x38] sm:$0xff]
    %s387 = sld [smem:[#allocation6]]
    %v388 = vstv %s387
    %v389 = vmul.f32 %v388, %v355
    %v390 = vmul.f32 %v388, %v356
    %v391 = vmul.f32 %v388, %v357
    %v392 = vmul.f32 %v388, %v358
    %v393 = vmul.f32 %v388, %v359
    %v394 = vmul.f32 %v388, %v360
    %v395 = vmul.f32 %v388, %v361
    %v396 = vmul.f32 %v388, %v362
    %v397 = vmul.f32 %v389, %v389
    %v398 = vmul.f32 %v390, %v390
    %v399 = vmul.f32 %v391, %v391
    %v400 = vmul.f32 %v392, %v392
    %v401 = vmul.f32 %v393, %v393
    %v402 = vmul.f32 %v394, %v394
    %v403 = vmul.f32 %v395, %v395
    %v404 = vmul.f32 %v396, %v396
    %v405 = vsel %vm101, %v397, 0.0
    %406 = vadd.xlane.f32.xlu0 %v405
    %v407 = vpop.xlane.xlu0 %406
    %v408 = vsel %vm101, %v398, 0.0
    %409 = vadd.xlane.f32.xlu0 %v408
    %v410 = vpop.xlane.xlu0 %409
    %v411 = vsel %vm101, %v399, 0.0
    %412 = vadd.xlane.f32.xlu0 %v411
    %v413 = vpop.xlane.xlu0 %412
    %v414 = vsel %vm101, %v400, 0.0
    %415 = vadd.xlane.f32.xlu0 %v414
    %v416 = vpop.xlane.xlu0 %415
    %v417 = vsel %vm101, %v401, 0.0
    %418 = vadd.xlane.f32.xlu0 %v417
    %v419 = vpop.xlane.xlu0 %418
    %v420 = vsel %vm101, %v402, 0.0
    %421 = vadd.xlane.f32.xlu0 %v420
    %v422 = vpop.xlane.xlu0 %421
    %v423 = vsel %vm101, %v403, 0.0
    %424 = vadd.xlane.f32.xlu0 %v423
    %v425 = vpop.xlane.xlu0 %424
    %v426 = vsel %vm101, %v404, 0.0
    %427 = vadd.xlane.f32.xlu0 %v426
    %v428 = vpop.xlane.xlu0 %427
    %v429 = vmul.f32 %v407, %v318
    %v430 = vmul.f32 %v410, %v318
    %v431 = vmul.f32 %v413, %v318
    %v432 = vmul.f32 %v416, %v318
    %v433 = vmul.f32 %v419, %v318
    %v434 = vmul.f32 %v422, %v318
    %v435 = vmul.f32 %v425, %v318
    %v436 = vmul.f32 %v428, %v318
    %v437 = vadd.f32 %v429, 1.1920929e-07
    %v438 = vadd.f32 %v430, 1.1920929e-07
    %v439 = vadd.f32 %v431, 1.1920929e-07
    %v440 = vadd.f32 %v432, 1.1920929e-07
    %v441 = vadd.f32 %v433, 1.1920929e-07
    %v442 = vadd.f32 %v434, 1.1920929e-07
    %v443 = vadd.f32 %v435, 1.1920929e-07
    %v444 = vadd.f32 %v436, 1.1920929e-07
    %v445 = vrsqrt.pop %v437
    %v446 = vrsqrt.pop %v438
    %v447 = vrsqrt.pop %v439
    %v448 = vrsqrt.pop %v440
    %v449 = vrsqrt.pop %v441
    %v450 = vrsqrt.pop %v442
    %v451 = vrsqrt.pop %v443
    %v452 = vrsqrt.pop %v444
    %v453 = vmul.f32 %v389, %v445
    %v454 = vmul.f32 %v390, %v446
    %v455 = vmul.f32 %v391, %v447
    %v456 = vmul.f32 %v392, %v448
    %v457 = vmul.f32 %v393, %v449
    %v458 = vmul.f32 %v394, %v450
    %v459 = vmul.f32 %v395, %v451
    %v460 = vmul.f32 %v396, %v452
    %v461 = vld [vmem:[%s11] sm:$0xff]
    %v462 = vld [vmem:[%s11 + $0x8] sm:$0xff]
    %v463 = vld [vmem:[%s11 + $0x10] sm:$0xff]
    %v464 = vld [vmem:[%s11 + $0x18] sm:$0xff]
    %v465 = vld [vmem:[%s11 + $0x20] sm:$0xff]
    %v466 = vld [vmem:[%s11 + $0x28] sm:$0xff]
    %v467 = vld [vmem:[%s11 + $0x30] sm:$0xff]
    %v468 = vld [vmem:[%s11 + $0x38] sm:$0xff]
    %v469 = vld [vmem:[%s11 + $0x40] sm:$0xff]
    %v470 = vld [vmem:[%s11 + $0x48] sm:$0xff]
    %v471 = vld [vmem:[%s11 + $0x50] sm:$0xff]
    %v472 = vld [vmem:[%s11 + $0x58] sm:$0xff]
    %v474 = vsel %vm101, %v453, 0
    %v477 = vsel %vm101, %v454, 0
    %v480 = vsel %vm101, %v455, 0
    %v483 = vsel %vm101, %v456, 0
    %v486 = vsel %vm101, %v457, 0
    %v489 = vsel %vm101, %v458, 0
    %v492 = vsel %vm101, %v459, 0
    %v495 = vsel %vm101, %v460, 0
    %v498 = vsel %vm101, %v461, 0
    %v501 = vsel %vm101, %v462, 0
    %v504 = vsel %vm101, %v463, 0
    %v507 = vsel %vm101, %v464, 0
    %v510 = vsel %vm101, %v465, 0
    %v513 = vsel %vm101, %v466, 0
    %v516 = vsel %vm101, %v467, 0
    %v519 = vsel %vm101, %v468, 0
    %v522 = vsel %vm101, %v469, 0
    %v525 = vsel %vm101, %v470, 0
    %v528 = vsel %vm101, %v471, 0
    %v531 = vsel %vm101, %v472, 0
    %533 = vmatprep.subr.mxu0 0.0
    %534 = vmatpush1.xpose.msra.mxu0 %v498
    %535 = vmatprep.subr.mxu0 0.0
    %536 = vmatpush1.xpose.msra.mxu0 %v501
    %537 = vmatprep.subr.mxu0 0.0
    %538 = vmatpush1.xpose.msra.mxu0 %v504
    %539 = vmatprep.subr.mxu0 0.0
    %540 = vmatpush1.xpose.msra.mxu0 %v507
    %541 = vmatprep.subr.mxu0 0.0
    %542 = vmatpush1.xpose.msra.mxu0 %v510
    %543 = vmatprep.subr.mxu0 0.0
    %544 = vmatpush1.xpose.msra.mxu0 %v513
    %545 = vmatprep.subr.mxu0 0.0
    %546 = vmatpush1.xpose.msra.mxu0 %v516
    %547 = vmatprep.subr.mxu0 0.0
    %548 = vmatpush1.xpose.msra.mxu0 %v519
    %549 = vmatprep.subr.mxu0 0.0
    %550 = vmatpush1.xpose.msra.mxu0 %v522
    %551 = vmatprep.subr.mxu0 0.0
    %552 = vmatpush1.xpose.msra.mxu0 %v525
    %553 = vmatprep.subr.mxu0 0.0
    %554 = vmatpush1.xpose.msra.mxu0 %v528
    %555 = vmatprep.subr.mxu0 0.0
    %556 = vmatpush1.xpose.msra.mxu0 %v531
    %557 = vmatprep.subr.mxu0 0.0
    %558 = vmatpush1.xpose.msra.mxu0 0.0
    %559 = vmatprep.subr.mxu0 0.0
    %560 = vmatpush1.xpose.msra.mxu0 0.0
    %561 = vmatprep.subr.mxu0 0.0
    %562 = vmatpush1.xpose.msra.mxu0 0.0
    %563 = vmatprep.subr.mxu0 0.0
    %564 = vmatpush1.xpose.msra.mxu0 0.0
    %565 = vmatprep.subr.mxu0 0.0
    %566 = vmatpush1.xpose.msra.mxu0 0.0
    %567 = vmatprep.subr.mxu0 0.0
    %568 = vmatpush1.xpose.msra.mxu0 0.0
    %569 = vmatprep.subr.mxu0 0.0
    %570 = vmatpush1.xpose.msra.mxu0 0.0
    %571 = vmatprep.subr.mxu0 0.0
    %572 = vmatpush1.xpose.msra.mxu0 0.0
    %573 = vmatprep.subr.mxu0 0.0
    %574 = vmatpush1.xpose.msra.mxu0 0.0
    %575 = vmatprep.subr.mxu0 0.0
    %576 = vmatpush1.xpose.msra.mxu0 0.0
    %577 = vmatprep.subr.mxu0 0.0
    %578 = vmatpush1.xpose.msra.mxu0 0.0
    %579 = vmatprep.subr.mxu0 0.0
    %580 = vmatpush1.xpose.msra.mxu0 0.0
    %581 = vmatprep.subr.mxu0 0.0
    %582 = vmatpush1.xpose.msra.mxu0 0.0
    %583 = vmatprep.subr.mxu0 0.0
    %584 = vmatpush1.xpose.msra.mxu0 0.0
    %585 = vmatprep.subr.mxu0 0.0
    %586 = vmatpush1.xpose.msra.mxu0 0.0
    %587 = vmatprep.subr.mxu0 0.0
    %588 = vmatpush1.xpose.msra.mxu0 0.0
    %589 = vmatprep.subr.mxu0 0.0
    %590 = vmatpush1.xpose.msra.mxu0 0.0
    %591 = vmatprep.subr.mxu0 0.0
    %592 = vmatpush1.xpose.msra.mxu0 0.0
    %593 = vmatprep.subr.mxu0 0.0
    %594 = vmatpush1.xpose.msra.mxu0 0.0
    %595 = vmatprep.subr.mxu0 0.0
    %596 = vmatpush1.xpose.msra.mxu0 0.0
    %597 = vmatprep.mubr.f32.mxu0 0.0
    %598 = vmatmul.mubr.f32.gmra.mrb[0].mxu0 %v474
    %v599 = vpop.f32.mrb[0].mxu0
    %v600 = vadd.f32 0.0, %v599
    %v601 = vpop.f32.mrb[0].mxu0
    %602 = vmatprep.mubr.f32.mxu0 0.0
    %603 = vmatmul.mubr.f32.gmra.mrb[0].mxu0 %v477
    %v604 = vpop.f32.mrb[0].mxu0
    %v605 = vadd.f32 0.0, %v604
    %v606 = vpop.f32.mrb[0].mxu0
    %607 = vmatprep.mubr.f32.mxu0 0.0
    %608 = vmatmul.mubr.f32.gmra.mrb[0].mxu0 %v480
    %v609 = vpop.f32.mrb[0].mxu0
    %v610 = vadd.f32 0.0, %v609
    %v611 = vpop.f32.mrb[0].mxu0
    %612 = vmatprep.mubr.f32.mxu0 0.0
    %613 = vmatmul.mubr.f32.gmra.mrb[0].mxu0 %v483
    %v614 = vpop.f32.mrb[0].mxu0
    %v615 = vadd.f32 0.0, %v614
    %v616 = vpop.f32.mrb[0].mxu0
    %617 = vmatprep.mubr.f32.mxu0 0.0
    %618 = vmatmul.mubr.f32.gmra.mrb[0].mxu0 %v486
    %v619 = vpop.f32.mrb[0].mxu0
    %v620 = vadd.f32 0.0, %v619
    %v621 = vpop.f32.mrb[0].mxu0
    %622 = vmatprep.mubr.f32.mxu0 0.0
    %623 = vmatmul.mubr.f32.gmra.mrb[0].mxu0 %v489
    %v624 = vpop.f32.mrb[0].mxu0
    %v625 = vadd.f32 0.0, %v624
    %v626 = vpop.f32.mrb[0].mxu0
    %627 = vmatprep.mubr.f32.mxu0 0.0
    %628 = vmatmul.mubr.f32.gmra.mrb[0].mxu0 %v492
    %v629 = vpop.f32.mrb[0].mxu0
    %v630 = vadd.f32 0.0, %v629
    %v631 = vpop.f32.mrb[0].mxu0
    %632 = vmatprep.mubr.f32.mxu0 0.0
    %633 = vmatmul.mubr.f32.gmra.mrb[0].mxu0 %v495
    %v634 = vpop.f32.mrb[0].mxu0
    %v635 = vadd.f32 0.0, %v634
    %v636 = vpop.f32.mrb[0].mxu0
    %637 = vdwg.mxu0
    %s638 = sld [smem:[#allocation2]]
    %v639 = vmul.f32 %v600, %v600
    %v640 = vmul.f32 %v605, %v605
    %v641 = vmul.f32 %v610, %v610
    %v642 = vmul.f32 %v615, %v615
    %v643 = vmul.f32 %v620, %v620
    %v644 = vmul.f32 %v625, %v625
    %v645 = vmul.f32 %v630, %v630
    %v646 = vmul.f32 %v635, %v635
    %vm647 = vcmask 64512
    %v648 = vsel %vm647, %v639, 0.0
    %649 = vadd.xlane.f32.xlu0 %v648
    %v650 = vpop.xlane.xlu0 %649
    %v651 = vsel %vm647, %v640, 0.0
    %652 = vadd.xlane.f32.xlu0 %v651
    %v653 = vpop.xlane.xlu0 %652
    %v654 = vsel %vm647, %v641, 0.0
    %655 = vadd.xlane.f32.xlu0 %v654
    %v656 = vpop.xlane.xlu0 %655
    %v657 = vsel %vm647, %v642, 0.0
    %658 = vadd.xlane.f32.xlu0 %v657
    %v659 = vpop.xlane.xlu0 %658
    %v660 = vsel %vm647, %v643, 0.0
    %661 = vadd.xlane.f32.xlu0 %v660
    %v662 = vpop.xlane.xlu0 %661
    %v663 = vsel %vm647, %v644, 0.0
    %664 = vadd.xlane.f32.xlu0 %v663
    %v665 = vpop.xlane.xlu0 %664
    %v666 = vsel %vm647, %v645, 0.0
    %667 = vadd.xlane.f32.xlu0 %v666
    %v668 = vpop.xlane.xlu0 %667
    %v669 = vsel %vm647, %v646, 0.0
    %670 = vadd.xlane.f32.xlu0 %v669
    %v671 = vpop.xlane.xlu0 %670
    %v672 = vrcp.pop 8.0
    %v673 = vmul.f32 %v650, %v672
    %v674 = vmul.f32 %v653, %v672
    %v675 = vmul.f32 %v656, %v672
    %v676 = vmul.f32 %v659, %v672
    %v677 = vmul.f32 %v662, %v672
    %v678 = vmul.f32 %v665, %v672
    %v679 = vmul.f32 %v668, %v672
    %v680 = vmul.f32 %v671, %v672
    %v681 = vadd.f32 %v673, 1.1920929e-07
    %v682 = vadd.f32 %v674, 1.1920929e-07
    %v683 = vadd.f32 %v675, 1.1920929e-07
    %v684 = vadd.f32 %v676, 1.1920929e-07
    %v685 = vadd.f32 %v677, 1.1920929e-07
    %v686 = vadd.f32 %v678, 1.1920929e-07
    %v687 = vadd.f32 %v679, 1.1920929e-07
    %v688 = vadd.f32 %v680, 1.1920929e-07
    %v689 = vrsqrt.pop %v681
    %v690 = vrsqrt.pop %v682
    %v691 = vrsqrt.pop %v683
    %v692 = vrsqrt.pop %v684
    %v693 = vrsqrt.pop %v685
    %v694 = vrsqrt.pop %v686
    %v695 = vrsqrt.pop %v687
    %v696 = vrsqrt.pop %v688
    %v697 = vmul.f32 %v600, %v689
    %v698 = vmul.f32 %v605, %v690
    %v699 = vmul.f32 %v610, %v691
    %v700 = vmul.f32 %v615, %v692
    %v701 = vmul.f32 %v620, %v693
    %v702 = vmul.f32 %v625, %v694
    %v703 = vmul.f32 %v630, %v695
    %v704 = vmul.f32 %v635, %v696
    %713 = vrot.lane.b32.xlu0 %v697, 124
    %v714 = vpop.permute.xlu0 %713
    %715 = vrot.lane.b32.xlu0 %v698, 124
    %v716 = vpop.permute.xlu0 %715
    %717 = vrot.lane.b32.xlu0 %v699, 124
    %v718 = vpop.permute.xlu0 %717
    %719 = vrot.lane.b32.xlu0 %v700, 124
    %v720 = vpop.permute.xlu0 %719
    %721 = vrot.lane.b32.xlu0 %v701, 124
    %v722 = vpop.permute.xlu0 %721
    %723 = vrot.lane.b32.xlu0 %v702, 124
    %v724 = vpop.permute.xlu0 %723
    %725 = vrot.lane.b32.xlu0 %v703, 124
    %v726 = vpop.permute.xlu0 %725
    %727 = vrot.lane.b32.xlu0 %v704, 124
    %v728 = vpop.permute.xlu0 %727
    %737 = vrot.lane.b32.xlu0 %v697, 4
    %v738 = vpop.permute.xlu0 %737
    %739 = vrot.lane.b32.xlu0 %v698, 4
    %v740 = vpop.permute.xlu0 %739
    %741 = vrot.lane.b32.xlu0 %v699, 4
    %v742 = vpop.permute.xlu0 %741
    %743 = vrot.lane.b32.xlu0 %v700, 4
    %v744 = vpop.permute.xlu0 %743
    %745 = vrot.lane.b32.xlu0 %v701, 4
    %v746 = vpop.permute.xlu0 %745
    %747 = vrot.lane.b32.xlu0 %v702, 4
    %v748 = vpop.permute.xlu0 %747
    %749 = vrot.lane.b32.xlu0 %v703, 4
    %v750 = vpop.permute.xlu0 %749
    %751 = vrot.lane.b32.xlu0 %v704, 4
    %v752 = vpop.permute.xlu0 %751
    %vm761 = vcmask 31744
    %v762 = vsel %vm761, %v714, %v738
    %v763 = vsel %vm761, %v716, %v740
    %v764 = vsel %vm761, %v718, %v742
    %v765 = vsel %vm761, %v720, %v744
    %v766 = vsel %vm761, %v722, %v746
    %v767 = vsel %vm761, %v724, %v748
    %v768 = vsel %vm761, %v726, %v750
    %v769 = vsel %vm761, %v728, %v752
    %v770 = vmul.f32 %v697, %v363
    %v771 = vmul.f32 %v698, %v364
    %v772 = vmul.f32 %v699, %v365
    %v773 = vmul.f32 %v700, %v366
    %v774 = vmul.f32 %v701, %v367
    %v775 = vmul.f32 %v702, %v368
    %v776 = vmul.f32 %v703, %v369
    %v777 = vmul.f32 %v704, %v370
    %v778 = vmul.f32 %v762, %v371
    %v779 = vmul.f32 %v763, %v372
    %v780 = vmul.f32 %v764, %v373
    %v781 = vmul.f32 %v765, %v374
    %v782 = vmul.f32 %v766, %v375
    %v783 = vmul.f32 %v767, %v376
    %v784 = vmul.f32 %v768, %v377
    %v785 = vmul.f32 %v769, %v378
    %v786 = vadd.f32 %v770, %v778
    %v787 = vadd.f32 %v771, %v779
    %v788 = vadd.f32 %v772, %v780
    %v789 = vadd.f32 %v773, %v781
    %v790 = vadd.f32 %v774, %v782
    %v791 = vadd.f32 %v775, %v783
    %v792 = vadd.f32 %v776, %v784
    %v793 = vadd.f32 %v777, %v785
    %802 = vrot.lane.b32.xlu0 %v639, 96
    %v803 = vpop.permute.xlu0 %802
    %804 = vrot.lane.b32.xlu0 %v640, 96
    %v805 = vpop.permute.xlu0 %804
    %806 = vrot.lane.b32.xlu0 %v641, 96
    %v807 = vpop.permute.xlu0 %806
    %808 = vrot.lane.b32.xlu0 %v642, 96
    %v809 = vpop.permute.xlu0 %808
    %810 = vrot.lane.b32.xlu0 %v643, 96
    %v811 = vpop.permute.xlu0 %810
    %812 = vrot.lane.b32.xlu0 %v644, 96
    %v813 = vpop.permute.xlu0 %812
    %814 = vrot.lane.b32.xlu0 %v645, 96
    %v815 = vpop.permute.xlu0 %814
    %816 = vrot.lane.b32.xlu0 %v646, 96
    %v817 = vpop.permute.xlu0 %816
    %v826 = vsel %vm647, %v803, 0.0
    %827 = vadd.xlane.f32.xlu0 %v826
    %v828 = vpop.xlane.xlu0 %827
    %v829 = vsel %vm647, %v805, 0.0
    %830 = vadd.xlane.f32.xlu0 %v829
    %v831 = vpop.xlane.xlu0 %830
    %v832 = vsel %vm647, %v807, 0.0
    %833 = vadd.xlane.f32.xlu0 %v832
    %v834 = vpop.xlane.xlu0 %833
    %v835 = vsel %vm647, %v809, 0.0
    %836 = vadd.xlane.f32.xlu0 %v835
    %v837 = vpop.xlane.xlu0 %836
    %v838 = vsel %vm647, %v811, 0.0
    %839 = vadd.xlane.f32.xlu0 %v838
    %v840 = vpop.xlane.xlu0 %839
    %v841 = vsel %vm647, %v813, 0.0
    %842 = vadd.xlane.f32.xlu0 %v841
    %v843 = vpop.xlane.xlu0 %842
    %v844 = vsel %vm647, %v815, 0.0
    %845 = vadd.xlane.f32.xlu0 %v844
    %v846 = vpop.xlane.xlu0 %845
    %v847 = vsel %vm647, %v817, 0.0
    %848 = vadd.xlane.f32.xlu0 %v847
    %v849 = vpop.xlane.xlu0 %848
    %v850 = vmul.f32 %v828, %v672
    %v851 = vmul.f32 %v831, %v672
    %v852 = vmul.f32 %v834, %v672
    %v853 = vmul.f32 %v837, %v672
    %v854 = vmul.f32 %v840, %v672
    %v855 = vmul.f32 %v843, %v672
    %v856 = vmul.f32 %v846, %v672
    %v857 = vmul.f32 %v849, %v672
    %v858 = vadd.f32 %v850, 1.1920929e-07
    %v859 = vadd.f32 %v851, 1.1920929e-07
    %v860 = vadd.f32 %v852, 1.1920929e-07
    %v861 = vadd.f32 %v853, 1.1920929e-07
    %v862 = vadd.f32 %v854, 1.1920929e-07
    %v863 = vadd.f32 %v855, 1.1920929e-07
    %v864 = vadd.f32 %v856, 1.1920929e-07
    %v865 = vadd.f32 %v857, 1.1920929e-07
    %v866 = vrsqrt.pop %v858
    %v867 = vrsqrt.pop %v859
    %v868 = vrsqrt.pop %v860
    %v869 = vrsqrt.pop %v861
    %v870 = vrsqrt.pop %v862
    %v871 = vrsqrt.pop %v863
    %v872 = vrsqrt.pop %v864
    %v873 = vrsqrt.pop %v865
    %v874 = vmul.f32 %v600, %v866
    %v875 = vmul.f32 %v605, %v867
    %v876 = vmul.f32 %v610, %v868
    %v877 = vmul.f32 %v615, %v869
    %v878 = vmul.f32 %v620, %v870
    %v879 = vmul.f32 %v625, %v871
    %v880 = vmul.f32 %v630, %v872
    %v881 = vmul.f32 %v635, %v873
    %890 = vrot.lane.b32.xlu0 %v874, 92
    %v891 = vpop.permute.xlu0 %890
    %892 = vrot.lane.b32.xlu0 %v875, 92
    %v893 = vpop.permute.xlu0 %892
    %894 = vrot.lane.b32.xlu0 %v876, 92
    %v895 = vpop.permute.xlu0 %894
    %896 = vrot.lane.b32.xlu0 %v877, 92
    %v897 = vpop.permute.xlu0 %896
    %898 = vrot.lane.b32.xlu0 %v878, 92
    %v899 = vpop.permute.xlu0 %898
    %900 = vrot.lane.b32.xlu0 %v879, 92
    %v901 = vpop.permute.xlu0 %900
    %902 = vrot.lane.b32.xlu0 %v880, 92
    %v903 = vpop.permute.xlu0 %902
    %904 = vrot.lane.b32.xlu0 %v881, 92
    %v905 = vpop.permute.xlu0 %904
    %914 = vrot.lane.b32.xlu0 %v874, 100
    %v915 = vpop.permute.xlu0 %914
    %916 = vrot.lane.b32.xlu0 %v875, 100
    %v917 = vpop.permute.xlu0 %916
    %918 = vrot.lane.b32.xlu0 %v876, 100
    %v919 = vpop.permute.xlu0 %918
    %920 = vrot.lane.b32.xlu0 %v877, 100
    %v921 = vpop.permute.xlu0 %920
    %922 = vrot.lane.b32.xlu0 %v878, 100
    %v923 = vpop.permute.xlu0 %922
    %924 = vrot.lane.b32.xlu0 %v879, 100
    %v925 = vpop.permute.xlu0 %924
    %926 = vrot.lane.b32.xlu0 %v880, 100
    %v927 = vpop.permute.xlu0 %926
    %928 = vrot.lane.b32.xlu0 %v881, 100
    %v929 = vpop.permute.xlu0 %928
    %v938 = vsel %vm761, %v891, %v915
    %v939 = vsel %vm761, %v893, %v917
    %v940 = vsel %vm761, %v895, %v919
    %v941 = vsel %vm761, %v897, %v921
    %v942 = vsel %vm761, %v899, %v923
    %v943 = vsel %vm761, %v901, %v925
    %v944 = vsel %vm761, %v903, %v927
    %v945 = vsel %vm761, %v905, %v929
    %954 = vrot.lane.b32.xlu0 %v363, 32
    %v955 = vpop.permute.xlu0 %954
    %956 = vrot.lane.b32.xlu0 %v364, 32
    %v957 = vpop.permute.xlu0 %956
    %958 = vrot.lane.b32.xlu0 %v365, 32
    %v959 = vpop.permute.xlu0 %958
    %960 = vrot.lane.b32.xlu0 %v366, 32
    %v961 = vpop.permute.xlu0 %960
    %962 = vrot.lane.b32.xlu0 %v367, 32
    %v963 = vpop.permute.xlu0 %962
    %964 = vrot.lane.b32.xlu0 %v368, 32
    %v965 = vpop.permute.xlu0 %964
    %966 = vrot.lane.b32.xlu0 %v369, 32
    %v967 = vpop.permute.xlu0 %966
    %968 = vrot.lane.b32.xlu0 %v370, 32
    %v969 = vpop.permute.xlu0 %968
    %v978 = vmul.f32 %v874, %v955
    %v979 = vmul.f32 %v875, %v957
    %v980 = vmul.f32 %v876, %v959
    %v981 = vmul.f32 %v877, %v961
    %v982 = vmul.f32 %v878, %v963
    %v983 = vmul.f32 %v879, %v965
    %v984 = vmul.f32 %v880, %v967
    %v985 = vmul.f32 %v881, %v969
    %v986 = vmul.f32 %v938, %v371
    %v987 = vmul.f32 %v939, %v372
    %v988 = vmul.f32 %v940, %v373
    %v989 = vmul.f32 %v941, %v374
    %v990 = vmul.f32 %v942, %v375
    %v991 = vmul.f32 %v943, %v376
    %v992 = vmul.f32 %v944, %v377
    %v993 = vmul.f32 %v945, %v378
    %1002 = vrot.lane.b32.xlu0 %v986, 32
    %v1003 = vpop.permute.xlu0 %1002
    %1004 = vrot.lane.b32.xlu0 %v987, 32
    %v1005 = vpop.permute.xlu0 %1004
    %1006 = vrot.lane.b32.xlu0 %v988, 32
    %v1007 = vpop.permute.xlu0 %1006
    %1008 = vrot.lane.b32.xlu0 %v989, 32
    %v1009 = vpop.permute.xlu0 %1008
    %1010 = vrot.lane.b32.xlu0 %v990, 32
    %v1011 = vpop.permute.xlu0 %1010
    %1012 = vrot.lane.b32.xlu0 %v991, 32
    %v1013 = vpop.permute.xlu0 %1012
    %1014 = vrot.lane.b32.xlu0 %v992, 32
    %v1015 = vpop.permute.xlu0 %1014
    %1016 = vrot.lane.b32.xlu0 %v993, 32
    %v1017 = vpop.permute.xlu0 %1016
    %v1026 = vadd.f32 %v978, %v1003
    %v1027 = vadd.f32 %v979, %v1005
    %v1028 = vadd.f32 %v980, %v1007
    %v1029 = vadd.f32 %v981, %v1009
    %v1030 = vadd.f32 %v982, %v1011
    %v1031 = vadd.f32 %v983, %v1013
    %v1032 = vadd.f32 %v984, %v1015
    %v1033 = vadd.f32 %v985, %v1017
    %v1034 = vstv %s638
    %v1035 = vmul.f32 %v1034, %v600
    %v1036 = vmul.f32 %v1034, %v605
    %v1037 = vmul.f32 %v1034, %v610
    %v1038 = vmul.f32 %v1034, %v615
    %v1039 = vmul.f32 %v1034, %v620
    %v1040 = vmul.f32 %v1034, %v625
    %v1041 = vmul.f32 %v1034, %v630
    %v1042 = vmul.f32 %v1034, %v635
    %1051 = vrot.lane.b32.xlu0 %v1026, 96
    %v1052 = vpop.permute.xlu0 %1051
    %1053 = vrot.lane.b32.xlu0 %v1027, 96
    %v1054 = vpop.permute.xlu0 %1053
    %1055 = vrot.lane.b32.xlu0 %v1028, 96
    %v1056 = vpop.permute.xlu0 %1055
    %1057 = vrot.lane.b32.xlu0 %v1029, 96
    %v1058 = vpop.permute.xlu0 %1057
    %1059 = vrot.lane.b32.xlu0 %v1030, 96
    %v1060 = vpop.permute.xlu0 %1059
    %1061 = vrot.lane.b32.xlu0 %v1031, 96
    %v1062 = vpop.permute.xlu0 %1061
    %1063 = vrot.lane.b32.xlu0 %v1032, 96
    %v1064 = vpop.permute.xlu0 %1063
    %1065 = vrot.lane.b32.xlu0 %v1033, 96
    %v1066 = vpop.permute.xlu0 %1065
    %v1068 = vsel %vm647, %v786, 0
    %v1071 = vsel %vm647, %v787, 0
    %v1074 = vsel %vm647, %v788, 0
    %v1077 = vsel %vm647, %v789, 0
    %v1080 = vsel %vm647, %v790, 0
    %v1083 = vsel %vm647, %v791, 0
    %v1086 = vsel %vm647, %v792, 0
    %v1089 = vsel %vm647, %v793, 0
    %v1091 = vsel %vm647, %v1052, 0
    %v1093 = vsel %vm647, %v1054, 0
    %v1095 = vsel %vm647, %v1056, 0
    %v1097 = vsel %vm647, %v1058, 0
    %v1099 = vsel %vm647, %v1060, 0
    %v1101 = vsel %vm647, %v1062, 0
    %v1103 = vsel %vm647, %v1064, 0
    %v1105 = vsel %vm647, %v1066, 0
    %1107 = vmatprep.subr.mxu0 0.0
    %1108 = vmatpush1.xpose.msra.mxu0 %v1091
    %1109 = vmatprep.subr.mxu0 0.0
    %1110 = vmatpush1.xpose.msra.mxu0 %v1093
    %1111 = vmatprep.subr.mxu0 0.0
    %1112 = vmatpush1.xpose.msra.mxu0 %v1095
    %1113 = vmatprep.subr.mxu0 0.0
    %1114 = vmatpush1.xpose.msra.mxu0 %v1097
    %1115 = vmatprep.subr.mxu0 0.0
    %1116 = vmatpush1.xpose.msra.mxu0 %v1099
    %1117 = vmatprep.subr.mxu0 0.0
    %1118 = vmatpush1.xpose.msra.mxu0 %v1101
    %1119 = vmatprep.subr.mxu0 0.0
    %1120 = vmatpush1.xpose.msra.mxu0 %v1103
    %1121 = vmatprep.subr.mxu0 0.0
    %1122 = vmatpush1.xpose.msra.mxu0 %v1105
    %1123 = vmatprep.subr.mxu0 0.0
    %1124 = vmatpush1.xpose.msra.mxu0 0.0
    %1125 = vmatprep.subr.mxu0 0.0
    %1126 = vmatpush1.xpose.msra.mxu0 0.0
    %1127 = vmatprep.subr.mxu0 0.0
    %1128 = vmatpush1.xpose.msra.mxu0 0.0
    %1129 = vmatprep.subr.mxu0 0.0
    %1130 = vmatpush1.xpose.msra.mxu0 0.0
    %1131 = vmatprep.subr.mxu0 0.0
    %1132 = vmatpush1.xpose.msra.mxu0 0.0
    %1133 = vmatprep.subr.mxu0 0.0
    %1134 = vmatpush1.xpose.msra.mxu0 0.0
    %1135 = vmatprep.subr.mxu0 0.0
    %1136 = vmatpush1.xpose.msra.mxu0 0.0
    %1137 = vmatprep.subr.mxu0 0.0
    %1138 = vmatpush1.xpose.msra.mxu0 0.0
    %1139 = vmatprep.subr.mxu0 0.0
    %1140 = vmatpush1.xpose.msra.mxu0 0.0
    %1141 = vmatprep.subr.mxu0 0.0
    %1142 = vmatpush1.xpose.msra.mxu0 0.0
    %1143 = vmatprep.subr.mxu0 0.0
    %1144 = vmatpush1.xpose.msra.mxu0 0.0
    %1145 = vmatprep.subr.mxu0 0.0
    %1146 = vmatpush1.xpose.msra.mxu0 0.0
    %1147 = vmatprep.subr.mxu0 0.0
    %1148 = vmatpush1.xpose.msra.mxu0 0.0
    %1149 = vmatprep.subr.mxu0 0.0
    %1150 = vmatpush1.xpose.msra.mxu0 0.0
    %1151 = vmatprep.subr.mxu0 0.0
    %1152 = vmatpush1.xpose.msra.mxu0 0.0
    %1153 = vmatprep.subr.mxu0 0.0
    %1154 = vmatpush1.xpose.msra.mxu0 0.0
    %1155 = vmatprep.subr.mxu0 0.0
    %1156 = vmatpush1.xpose.msra.mxu0 0.0
    %1157 = vmatprep.subr.mxu0 0.0
    %1158 = vmatpush1.xpose.msra.mxu0 0.0
    %1159 = vmatprep.subr.mxu0 0.0
    %1160 = vmatpush1.xpose.msra.mxu0 0.0
    %1161 = vmatprep.subr.mxu0 0.0
    %1162 = vmatpush1.xpose.msra.mxu0 0.0
    %1163 = vmatprep.subr.mxu0 0.0
    %1164 = vmatpush1.xpose.msra.mxu0 0.0
    %1165 = vmatprep.subr.mxu0 0.0
    %1166 = vmatpush1.xpose.msra.mxu0 0.0
    %1167 = vmatprep.subr.mxu0 0.0
    %1168 = vmatpush1.xpose.msra.mxu0 0.0
    %1169 = vmatprep.subr.mxu0 0.0
    %1170 = vmatpush1.xpose.msra.mxu0 0.0
    %1171 = vmatprep.mubr.f32.mxu0 0.0
    %1172 = vmatmul.mubr.f32.gmra.mrb[0].mxu0 %v1068
    %v1173 = vpop.f32.mrb[0].mxu0
    %v1174 = vadd.f32 0.0, %v1173
    %v1175 = vpop.f32.mrb[0].mxu0
    %1176 = vmatprep.mubr.f32.mxu0 0.0
    %1177 = vmatmul.mubr.f32.gmra.mrb[0].mxu0 %v1071
    %v1178 = vpop.f32.mrb[0].mxu0
    %v1179 = vadd.f32 0.0, %v1178
    %v1180 = vpop.f32.mrb[0].mxu0
    %1181 = vmatprep.mubr.f32.mxu0 0.0
    %1182 = vmatmul.mubr.f32.gmra.mrb[0].mxu0 %v1074
    %v1183 = vpop.f32.mrb[0].mxu0
    %v1184 = vadd.f32 0.0, %v1183
    %v1185 = vpop.f32.mrb[0].mxu0
    %1186 = vmatprep.mubr.f32.mxu0 0.0
    %1187 = vmatmul.mubr.f32.gmra.mrb[0].mxu0 %v1077
    %v1188 = vpop.f32.mrb[0].mxu0
    %v1189 = vadd.f32 0.0, %v1188
    %v1190 = vpop.f32.mrb[0].mxu0
    %1191 = vmatprep.mubr.f32.mxu0 0.0
    %1192 = vmatmul.mubr.f32.gmra.mrb[0].mxu0 %v1080
    %v1193 = vpop.f32.mrb[0].mxu0
    %v1194 = vadd.f32 0.0, %v1193
    %v1195 = vpop.f32.mrb[0].mxu0
    %1196 = vmatprep.mubr.f32.mxu0 0.0
    %1197 = vmatmul.mubr.f32.gmra.mrb[0].mxu0 %v1083
    %v1198 = vpop.f32.mrb[0].mxu0
    %v1199 = vadd.f32 0.0, %v1198
    %v1200 = vpop.f32.mrb[0].mxu0
    %1201 = vmatprep.mubr.f32.mxu0 0.0
    %1202 = vmatmul.mubr.f32.gmra.mrb[0].mxu0 %v1086
    %v1203 = vpop.f32.mrb[0].mxu0
    %v1204 = vadd.f32 0.0, %v1203
    %v1205 = vpop.f32.mrb[0].mxu0
    %1206 = vmatprep.mubr.f32.mxu0 0.0
    %1207 = vmatmul.mubr.f32.gmra.mrb[0].mxu0 %v1089
    %v1208 = vpop.f32.mrb[0].mxu0
    %v1209 = vadd.f32 0.0, %v1208
    %v1210 = vpop.f32.mrb[0].mxu0
    %1211 = vdwg.mxu0
    %v1212 = vmul.f32 %v1174, 0.35355338
    %v1213 = vmul.f32 %v1179, 0.35355338
    %v1214 = vmul.f32 %v1184, 0.35355338
    %v1215 = vmul.f32 %v1189, 0.35355338
    %v1216 = vmul.f32 %v1194, 0.35355338
    %v1217 = vmul.f32 %v1199, 0.35355338
    %v1218 = vmul.f32 %v1204, 0.35355338
    %v1219 = vmul.f32 %v1209, 0.35355338
    %v1220 = vadd.f32 %v1212, %v379
    %v1221 = vadd.f32 %v1213, %v380
    %v1222 = vadd.f32 %v1214, %v381
    %v1223 = vadd.f32 %v1215, %v382
    %v1224 = vadd.f32 %v1216, %v383
    %v1225 = vadd.f32 %v1217, %v384
    %v1226 = vadd.f32 %v1218, %v385
    %v1227 = vadd.f32 %v1219, %v386
    %vm1228 = vcmask 523264
    %v1229 = vsel %vm1228, %v1220, -inf
    %1230 = vmax.xlane.f32.xlu0 %v1229
    %v1231 = vpop.xlane.xlu0 %1230
    %v1232 = vsel %vm1228, %v1221, -inf
    %1233 = vmax.xlane.f32.xlu0 %v1232
    %v1234 = vpop.xlane.xlu0 %1233
    %v1235 = vsel %vm1228, %v1222, -inf
    %1236 = vmax.xlane.f32.xlu0 %v1235
    %v1237 = vpop.xlane.xlu0 %1236
    %v1238 = vsel %vm1228, %v1223, -inf
    %1239 = vmax.xlane.f32.xlu0 %v1238
    %v1240 = vpop.xlane.xlu0 %1239
    %v1241 = vsel %vm1228, %v1224, -inf
    %1242 = vmax.xlane.f32.xlu0 %v1241
    %v1243 = vpop.xlane.xlu0 %1242
    %v1244 = vsel %vm1228, %v1225, -inf
    %1245 = vmax.xlane.f32.xlu0 %v1244
    %v1246 = vpop.xlane.xlu0 %1245
    %v1247 = vsel %vm1228, %v1226, -inf
    %1248 = vmax.xlane.f32.xlu0 %v1247
    %v1249 = vpop.xlane.xlu0 %1248
    %v1250 = vsel %vm1228, %v1227, -inf
    %1251 = vmax.xlane.f32.xlu0 %v1250
    %v1252 = vpop.xlane.xlu0 %1251
    %v1253 = vsub.f32 %v1220, %v1231
    %v1254 = vsub.f32 %v1221, %v1234
    %v1255 = vsub.f32 %v1222, %v1237
    %v1256 = vsub.f32 %v1223, %v1240
    %v1257 = vsub.f32 %v1224, %v1243
    %v1258 = vsub.f32 %v1225, %v1246
    %v1259 = vsub.f32 %v1226, %v1249
    %v1260 = vsub.f32 %v1227, %v1252
    %v1261 = vmul.f32 %v1253, 1.442695
    %v1262 = vpow.pop %v1261
    %v1263 = vmul.f32 %v1254, 1.442695
    %v1264 = vpow.pop %v1263
    %v1265 = vmul.f32 %v1255, 1.442695
    %v1266 = vpow.pop %v1265
    %v1267 = vmul.f32 %v1256, 1.442695
    %v1268 = vpow.pop %v1267
    %v1269 = vmul.f32 %v1257, 1.442695
    %v1270 = vpow.pop %v1269
    %v1271 = vmul.f32 %v1258, 1.442695
    %v1272 = vpow.pop %v1271
    %v1273 = vmul.f32 %v1259, 1.442695
    %v1274 = vpow.pop %v1273
    %v1275 = vmul.f32 %v1260, 1.442695
    %v1276 = vpow.pop %v1275
    %v1277 = vsel %vm1228, %v1262, 0.0
    %1278 = vadd.xlane.f32.xlu0 %v1277
    %v1279 = vpop.xlane.xlu0 %1278
    %v1280 = vsel %vm1228, %v1264, 0.0
    %1281 = vadd.xlane.f32.xlu0 %v1280
    %v1282 = vpop.xlane.xlu0 %1281
    %v1283 = vsel %vm1228, %v1266, 0.0
    %1284 = vadd.xlane.f32.xlu0 %v1283
    %v1285 = vpop.xlane.xlu0 %1284
    %v1286 = vsel %vm1228, %v1268, 0.0
    %1287 = vadd.xlane.f32.xlu0 %v1286
    %v1288 = vpop.xlane.xlu0 %1287
    %v1289 = vsel %vm1228, %v1270, 0.0
    %1290 = vadd.xlane.f32.xlu0 %v1289
    %v1291 = vpop.xlane.xlu0 %1290
    %v1292 = vsel %vm1228, %v1272, 0.0
    %1293 = vadd.xlane.f32.xlu0 %v1292
    %v1294 = vpop.xlane.xlu0 %1293
    %v1295 = vsel %vm1228, %v1274, 0.0
    %1296 = vadd.xlane.f32.xlu0 %v1295
    %v1297 = vpop.xlane.xlu0 %1296
    %v1298 = vsel %vm1228, %v1276, 0.0
    %1299 = vadd.xlane.f32.xlu0 %v1298
    %v1300 = vpop.xlane.xlu0 %1299
    %v1301 = vrcp.pop %v1279
    %v1302 = vmul.f32 %v1262, %v1301
    %v1303 = vrcp.pop %v1282
    %v1304 = vmul.f32 %v1264, %v1303
    %v1305 = vrcp.pop %v1285
    %v1306 = vmul.f32 %v1266, %v1305
    %v1307 = vrcp.pop %v1288
    %v1308 = vmul.f32 %v1268, %v1307
    %v1309 = vrcp.pop %v1291
    %v1310 = vmul.f32 %v1270, %v1309
    %v1311 = vrcp.pop %v1294
    %v1312 = vmul.f32 %v1272, %v1311
    %v1313 = vrcp.pop %v1297
    %v1314 = vmul.f32 %v1274, %v1313
    %v1315 = vrcp.pop %v1300
    %v1316 = vmul.f32 %v1276, %v1315
    %1325 = vrot.lane.b32.xlu0 %v1035, 64
    %v1326 = vpop.permute.xlu0 %1325
    %1327 = vrot.lane.b32.xlu0 %v1036, 64
    %v1328 = vpop.permute.xlu0 %1327
    %1329 = vrot.lane.b32.xlu0 %v1037, 64
    %v1330 = vpop.permute.xlu0 %1329
    %1331 = vrot.lane.b32.xlu0 %v1038, 64
    %v1332 = vpop.permute.xlu0 %1331
    %1333 = vrot.lane.b32.xlu0 %v1039, 64
    %v1334 = vpop.permute.xlu0 %1333
    %1335 = vrot.lane.b32.xlu0 %v1040, 64
    %v1336 = vpop.permute.xlu0 %1335
    %1337 = vrot.lane.b32.xlu0 %v1041, 64
    %v1338 = vpop.permute.xlu0 %1337
    %1339 = vrot.lane.b32.xlu0 %v1042, 64
    %v1340 = vpop.permute.xlu0 %1339
    %v1350 = vsel %vm1228, %v1302, 0
    %v1353 = vsel %vm1228, %v1304, 0
    %v1356 = vsel %vm1228, %v1306, 0
    %v1359 = vsel %vm1228, %v1308, 0
    %v1362 = vsel %vm1228, %v1310, 0
    %v1365 = vsel %vm1228, %v1312, 0
    %v1368 = vsel %vm1228, %v1314, 0
    %v1371 = vsel %vm1228, %v1316, 0
    %1373 = vmatprep.subr.mxu0 0.0
    %1374 = vmatpush1.msra.mxu0 %v1326
    %1375 = vmatprep.subr.mxu0 0.0
    %1376 = vmatpush1.msra.mxu0 %v1328
    %1377 = vmatprep.subr.mxu0 0.0
    %1378 = vmatpush1.msra.mxu0 %v1330
    %1379 = vmatprep.subr.mxu0 0.0
    %1380 = vmatpush1.msra.mxu0 %v1332
    %1381 = vmatprep.subr.mxu0 0.0
    %1382 = vmatpush1.msra.mxu0 %v1334
    %1383 = vmatprep.subr.mxu0 0.0
    %1384 = vmatpush1.msra.mxu0 %v1336
    %1385 = vmatprep.subr.mxu0 0.0
    %1386 = vmatpush1.msra.mxu0 %v1338
    %1387 = vmatprep.subr.mxu0 0.0
    %1388 = vmatpush1.msra.mxu0 %v1340
    %1389 = vmatprep.subr.mxu0 0.0
    %1390 = vmatpush1.msra.mxu0 0.0
    %1391 = vmatprep.subr.mxu0 0.0
    %1392 = vmatpush1.msra.mxu0 0.0
    %1393 = vmatprep.subr.mxu0 0.0
    %1394 = vmatpush1.msra.mxu0 0.0
    %1395 = vmatprep.subr.mxu0 0.0
    %1396 = vmatpush1.msra.mxu0 0.0
    %1397 = vmatprep.subr.mxu0 0.0
    %1398 = vmatpush1.msra.mxu0 0.0
    %1399 = vmatprep.subr.mxu0 0.0
    %1400 = vmatpush1.msra.mxu0 0.0
    %1401 = vmatprep.subr.mxu0 0.0
    %1402 = vmatpush1.msra.mxu0 0.0
    %1403 = vmatprep.subr.mxu0 0.0
    %1404 = vmatpush1.msra.mxu0 0.0
    %1405 = vmatprep.subr.mxu0 0.0
    %1406 = vmatpush1.msra.mxu0 0.0
    %1407 = vmatprep.subr.mxu0 0.0
    %1408 = vmatpush1.msra.mxu0 0.0
    %1409 = vmatprep.subr.mxu0 0.0
    %1410 = vmatpush1.msra.mxu0 0.0
    %1411 = vmatprep.subr.mxu0 0.0
    %1412 = vmatpush1.msra.mxu0 0.0
    %1413 = vmatprep.subr.mxu0 0.0
    %1414 = vmatpush1.msra.mxu0 0.0
    %1415 = vmatprep.subr.mxu0 0.0
    %1416 = vmatpush1.msra.mxu0 0.0
    %1417 = vmatprep.subr.mxu0 0.0
    %1418 = vmatpush1.msra.mxu0 0.0
    %1419 = vmatprep.subr.mxu0 0.0
    %1420 = vmatpush1.msra.mxu0 0.0
    %1421 = vmatprep.subr.mxu0 0.0
    %1422 = vmatpush1.msra.mxu0 0.0
    %1423 = vmatprep.subr.mxu0 0.0
    %1424 = vmatpush1.msra.mxu0 0.0
    %1425 = vmatprep.subr.mxu0 0.0
    %1426 = vmatpush1.msra.mxu0 0.0
    %1427 = vmatprep.subr.mxu0 0.0
    %1428 = vmatpush1.msra.mxu0 0.0
    %1429 = vmatprep.subr.mxu0 0.0
    %1430 = vmatpush1.msra.mxu0 0.0
    %1431 = vmatprep.subr.mxu0 0.0
    %1432 = vmatpush1.msra.mxu0 0.0
    %1433 = vmatprep.subr.mxu0 0.0
    %1434 = vmatpush1.msra.mxu0 0.0
    %1435 = vmatprep.subr.mxu0 0.0
    %1436 = vmatpush1.msra.mxu0 0.0
    %1437 = vmatprep.mubr.f32.mxu0 0.0
    %1438 = vmatmul.mubr.f32.gmra.mrb[0].mxu0 %v1350
    %v1439 = vpop.f32.mrb[0].mxu0
    %v1440 = vadd.f32 0.0, %v1439
    %v1441 = vpop.f32.mrb[0].mxu0
    %1442 = vmatprep.mubr.f32.mxu0 0.0
    %1443 = vmatmul.mubr.f32.gmra.mrb[0].mxu0 %v1353
    %v1444 = vpop.f32.mrb[0].mxu0
    %v1445 = vadd.f32 0.0, %v1444
    %v1446 = vpop.f32.mrb[0].mxu0
    %1447 = vmatprep.mubr.f32.mxu0 0.0
    %1448 = vmatmul.mubr.f32.gmra.mrb[0].mxu0 %v1356
    %v1449 = vpop.f32.mrb[0].mxu0
    %v1450 = vadd.f32 0.0, %v1449
    %v1451 = vpop.f32.mrb[0].mxu0
    %1452 = vmatprep.mubr.f32.mxu0 0.0
    %1453 = vmatmul.mubr.f32.gmra.mrb[0].mxu0 %v1359
    %v1454 = vpop.f32.mrb[0].mxu0
    %v1455 = vadd.f32 0.0, %v1454
    %v1456 = vpop.f32.mrb[0].mxu0
    %1457 = vmatprep.mubr.f32.mxu0 0.0
    %1458 = vmatmul.mubr.f32.gmra.mrb[0].mxu0 %v1362
    %v1459 = vpop.f32.mrb[0].mxu0
    %v1460 = vadd.f32 0.0, %v1459
    %v1461 = vpop.f32.mrb[0].mxu0
    %1462 = vmatprep.mubr.f32.mxu0 0.0
    %1463 = vmatmul.mubr.f32.gmra.mrb[0].mxu0 %v1365
    %v1464 = vpop.f32.mrb[0].mxu0
    %v1465 = vadd.f32 0.0, %v1464
    %v1466 = vpop.f32.mrb[0].mxu0
    %1467 = vmatprep.mubr.f32.mxu0 0.0
    %1468 = vmatmul.mubr.f32.gmra.mrb[0].mxu0 %v1368
    %v1469 = vpop.f32.mrb[0].mxu0
    %v1470 = vadd.f32 0.0, %v1469
    %v1471 = vpop.f32.mrb[0].mxu0
    %1472 = vmatprep.mubr.f32.mxu0 0.0
    %1473 = vmatmul.mubr.f32.gmra.mrb[0].mxu0 %v1371
    %v1474 = vpop.f32.mrb[0].mxu0
    %v1475 = vadd.f32 0.0, %v1474
    %v1476 = vpop.f32.mrb[0].mxu0
    %1477 = vdwg.mxu0
    %1478 = vrot.lane.b32.xlu0 %v639, 120
    %v1479 = vpop.permute.xlu0 %1478
    %1480 = vrot.lane.b32.xlu0 %v640, 120
    %v1481 = vpop.permute.xlu0 %1480
    %1482 = vrot.lane.b32.xlu0 %v641, 120
    %v1483 = vpop.permute.xlu0 %1482
    %1484 = vrot.lane.b32.xlu0 %v642, 120
    %v1485 = vpop.permute.xlu0 %1484
    %1486 = vrot.lane.b32.xlu0 %v643, 120
    %v1487 = vpop.permute.xlu0 %1486
    %1488 = vrot.lane.b32.xlu0 %v644, 120
    %v1489 = vpop.permute.xlu0 %1488
    %1490 = vrot.lane.b32.xlu0 %v645, 120
    %v1491 = vpop.permute.xlu0 %1490
    %1492 = vrot.lane.b32.xlu0 %v646, 120
    %v1493 = vpop.permute.xlu0 %1492
    %v1502 = vsel %vm647, %v1479, 0.0
    %1503 = vadd.xlane.f32.xlu0 %v1502
    %v1504 = vpop.xlane.xlu0 %1503
    %v1505 = vsel %vm647, %v1481, 0.0
    %1506 = vadd.xlane.f32.xlu0 %v1505
    %v1507 = vpop.xlane.xlu0 %1506
    %v1508 = vsel %vm647, %v1483, 0.0
    %1509 = vadd.xlane.f32.xlu0 %v1508
    %v1510 = vpop.xlane.xlu0 %1509
    %v1511 = vsel %vm647, %v1485, 0.0
    %1512 = vadd.xlane.f32.xlu0 %v1511
    %v1513 = vpop.xlane.xlu0 %1512
    %v1514 = vsel %vm647, %v1487, 0.0
    %1515 = vadd.xlane.f32.xlu0 %v1514
    %v1516 = vpop.xlane.xlu0 %1515
    %v1517 = vsel %vm647, %v1489, 0.0
    %1518 = vadd.xlane.f32.xlu0 %v1517
    %v1519 = vpop.xlane.xlu0 %1518
    %v1520 = vsel %vm647, %v1491, 0.0
    %1521 = vadd.xlane.f32.xlu0 %v1520
    %v1522 = vpop.xlane.xlu0 %1521
    %v1523 = vsel %vm647, %v1493, 0.0
    %1524 = vadd.xlane.f32.xlu0 %v1523
    %v1525 = vpop.xlane.xlu0 %1524
    %v1526 = vmul.f32 %v1504, %v672
    %v1527 = vmul.f32 %v1507, %v672
    %v1528 = vmul.f32 %v1510, %v672
    %v1529 = vmul.f32 %v1513, %v672
    %v1530 = vmul.f32 %v1516, %v672
    %v1531 = vmul.f32 %v1519, %v672
    %v1532 = vmul.f32 %v1522, %v672
    %v1533 = vmul.f32 %v1525, %v672
    %v1534 = vadd.f32 %v1526, 1.1920929e-07
    %v1535 = vadd.f32 %v1527, 1.1920929e-07
    %v1536 = vadd.f32 %v1528, 1.1920929e-07
    %v1537 = vadd.f32 %v1529, 1.1920929e-07
    %v1538 = vadd.f32 %v1530, 1.1920929e-07
    %v1539 = vadd.f32 %v1531, 1.1920929e-07
    %v1540 = vadd.f32 %v1532, 1.1920929e-07
    %v1541 = vadd.f32 %v1533, 1.1920929e-07
    %v1542 = vrsqrt.pop %v1534
    %v1543 = vrsqrt.pop %v1535
    %v1544 = vrsqrt.pop %v1536
    %v1545 = vrsqrt.pop %v1537
    %v1546 = vrsqrt.pop %v1538
    %v1547 = vrsqrt.pop %v1539
    %v1548 = vrsqrt.pop %v1540
    %v1549 = vrsqrt.pop %v1541
    %v1550 = vmul.f32 %v600, %v1542
    %v1551 = vmul.f32 %v605, %v1543
    %v1552 = vmul.f32 %v610, %v1544
    %v1553 = vmul.f32 %v615, %v1545
    %v1554 = vmul.f32 %v620, %v1546
    %v1555 = vmul.f32 %v625, %v1547
    %v1556 = vmul.f32 %v630, %v1548
    %v1557 = vmul.f32 %v635, %v1549
    %1566 = vrot.lane.b32.xlu0 %v1550, 116
    %v1567 = vpop.permute.xlu0 %1566
    %1568 = vrot.lane.b32.xlu0 %v1551, 116
    %v1569 = vpop.permute.xlu0 %1568
    %1570 = vrot.lane.b32.xlu0 %v1552, 116
    %v1571 = vpop.permute.xlu0 %1570
    %1572 = vrot.lane.b32.xlu0 %v1553, 116
    %v1573 = vpop.permute.xlu0 %1572
    %1574 = vrot.lane.b32.xlu0 %v1554, 116
    %v1575 = vpop.permute.xlu0 %1574
    %1576 = vrot.lane.b32.xlu0 %v1555, 116
    %v1577 = vpop.permute.xlu0 %1576
    %1578 = vrot.lane.b32.xlu0 %v1556, 116
    %v1579 = vpop.permute.xlu0 %1578
    %1580 = vrot.lane.b32.xlu0 %v1557, 116
    %v1581 = vpop.permute.xlu0 %1580
    %1590 = vrot.lane.b32.xlu0 %v1550, 124
    %v1591 = vpop.permute.xlu0 %1590
    %1592 = vrot.lane.b32.xlu0 %v1551, 124
    %v1593 = vpop.permute.xlu0 %1592
    %1594 = vrot.lane.b32.xlu0 %v1552, 124
    %v1595 = vpop.permute.xlu0 %1594
    %1596 = vrot.lane.b32.xlu0 %v1553, 124
    %v1597 = vpop.permute.xlu0 %1596
    %1598 = vrot.lane.b32.xlu0 %v1554, 124
    %v1599 = vpop.permute.xlu0 %1598
    %1600 = vrot.lane.b32.xlu0 %v1555, 124
    %v1601 = vpop.permute.xlu0 %1600
    %1602 = vrot.lane.b32.xlu0 %v1556, 124
    %v1603 = vpop.permute.xlu0 %1602
    %1604 = vrot.lane.b32.xlu0 %v1557, 124
    %v1605 = vpop.permute.xlu0 %1604
    %v1614 = vsel %vm761, %v1567, %v1591
    %v1615 = vsel %vm761, %v1569, %v1593
    %v1616 = vsel %vm761, %v1571, %v1595
    %v1617 = vsel %vm761, %v1573, %v1597
    %v1618 = vsel %vm761, %v1575, %v1599
    %v1619 = vsel %vm761, %v1577, %v1601
    %v1620 = vsel %vm761, %v1579, %v1603
    %v1621 = vsel %vm761, %v1581, %v1605
    %1622 = vrot.lane.b32.xlu0 %v363, 8
    %v1623 = vpop.permute.xlu0 %1622
    %1624 = vrot.lane.b32.xlu0 %v364, 8
    %v1625 = vpop.permute.xlu0 %1624
    %1626 = vrot.lane.b32.xlu0 %v365, 8
    %v1627 = vpop.permute.xlu0 %1626
    %1628 = vrot.lane.b32.xlu0 %v366, 8
    %v1629 = vpop.permute.xlu0 %1628
    %1630 = vrot.lane.b32.xlu0 %v367, 8
    %v1631 = vpop.permute.xlu0 %1630
    %1632 = vrot.lane.b32.xlu0 %v368, 8
    %v1633 = vpop.permute.xlu0 %1632
    %1634 = vrot.lane.b32.xlu0 %v369, 8
    %v1635 = vpop.permute.xlu0 %1634
    %1636 = vrot.lane.b32.xlu0 %v370, 8
    %v1637 = vpop.permute.xlu0 %1636
    %v1646 = vmul.f32 %v1550, %v1623
    %v1647 = vmul.f32 %v1551, %v1625
    %v1648 = vmul.f32 %v1552, %v1627
    %v1649 = vmul.f32 %v1553, %v1629
    %v1650 = vmul.f32 %v1554, %v1631
    %v1651 = vmul.f32 %v1555, %v1633
    %v1652 = vmul.f32 %v1556, %v1635
    %v1653 = vmul.f32 %v1557, %v1637
    %v1654 = vmul.f32 %v1614, %v371
    %v1655 = vmul.f32 %v1615, %v372
    %v1656 = vmul.f32 %v1616, %v373
    %v1657 = vmul.f32 %v1617, %v374
    %v1658 = vmul.f32 %v1618, %v375
    %v1659 = vmul.f32 %v1619, %v376
    %v1660 = vmul.f32 %v1620, %v377
    %v1661 = vmul.f32 %v1621, %v378
    %1670 = vrot.lane.b32.xlu0 %v1654, 8
    %v1671 = vpop.permute.xlu0 %1670
    %1672 = vrot.lane.b32.xlu0 %v1655, 8
    %v1673 = vpop.permute.xlu0 %1672
    %1674 = vrot.lane.b32.xlu0 %v1656, 8
    %v1675 = vpop.permute.xlu0 %1674
    %1676 = vrot.lane.b32.xlu0 %v1657, 8
    %v1677 = vpop.permute.xlu0 %1676
    %1678 = vrot.lane.b32.xlu0 %v1658, 8
    %v1679 = vpop.permute.xlu0 %1678
    %1680 = vrot.lane.b32.xlu0 %v1659, 8
    %v1681 = vpop.permute.xlu0 %1680
    %1682 = vrot.lane.b32.xlu0 %v1660, 8
    %v1683 = vpop.permute.xlu0 %1682
    %1684 = vrot.lane.b32.xlu0 %v1661, 8
    %v1685 = vpop.permute.xlu0 %1684
    %v1694 = vadd.f32 %v1646, %v1671
    %v1695 = vadd.f32 %v1647, %v1673
    %v1696 = vadd.f32 %v1648, %v1675
    %v1697 = vadd.f32 %v1649, %v1677
    %v1698 = vadd.f32 %v1650, %v1679
    %v1699 = vadd.f32 %v1651, %v1681
    %v1700 = vadd.f32 %v1652, %v1683
    %v1701 = vadd.f32 %v1653, %v1685
    %1702 = vrot.lane.b32.xlu0 %v639, 88
    %v1703 = vpop.permute.xlu0 %1702
    %1704 = vrot.lane.b32.xlu0 %v640, 88
    %v1705 = vpop.permute.xlu0 %1704
    %1706 = vrot.lane.b32.xlu0 %v641, 88
    %v1707 = vpop.permute.xlu0 %1706
    %1708 = vrot.lane.b32.xlu0 %v642, 88
    %v1709 = vpop.permute.xlu0 %1708
    %1710 = vrot.lane.b32.xlu0 %v643, 88
    %v1711 = vpop.permute.xlu0 %1710
    %1712 = vrot.lane.b32.xlu0 %v644, 88
    %v1713 = vpop.permute.xlu0 %1712
    %1714 = vrot.lane.b32.xlu0 %v645, 88
    %v1715 = vpop.permute.xlu0 %1714
    %1716 = vrot.lane.b32.xlu0 %v646, 88
    %v1717 = vpop.permute.xlu0 %1716
    %v1726 = vsel %vm647, %v1703, 0.0
    %1727 = vadd.xlane.f32.xlu0 %v1726
    %v1728 = vpop.xlane.xlu0 %1727
    %v1729 = vsel %vm647, %v1705, 0.0
    %1730 = vadd.xlane.f32.xlu0 %v1729
    %v1731 = vpop.xlane.xlu0 %1730
    %v1732 = vsel %vm647, %v1707, 0.0
    %1733 = vadd.xlane.f32.xlu0 %v1732
    %v1734 = vpop.xlane.xlu0 %1733
    %v1735 = vsel %vm647, %v1709, 0.0
    %1736 = vadd.xlane.f32.xlu0 %v1735
    %v1737 = vpop.xlane.xlu0 %1736
    %v1738 = vsel %vm647, %v1711, 0.0
    %1739 = vadd.xlane.f32.xlu0 %v1738
    %v1740 = vpop.xlane.xlu0 %1739
    %v1741 = vsel %vm647, %v1713, 0.0
    %1742 = vadd.xlane.f32.xlu0 %v1741
    %v1743 = vpop.xlane.xlu0 %1742
    %v1744 = vsel %vm647, %v1715, 0.0
    %1745 = vadd.xlane.f32.xlu0 %v1744
    %v1746 = vpop.xlane.xlu0 %1745
    %v1747 = vsel %vm647, %v1717, 0.0
    %1748 = vadd.xlane.f32.xlu0 %v1747
    %v1749 = vpop.xlane.xlu0 %1748
    %v1750 = vmul.f32 %v1728, %v672
    %v1751 = vmul.f32 %v1731, %v672
    %v1752 = vmul.f32 %v1734, %v672
    %v1753 = vmul.f32 %v1737, %v672
    %v1754 = vmul.f32 %v1740, %v672
    %v1755 = vmul.f32 %v1743, %v672
    %v1756 = vmul.f32 %v1746, %v672
    %v1757 = vmul.f32 %v1749, %v672
    %v1758 = vadd.f32 %v1750, 1.1920929e-07
    %v1759 = vadd.f32 %v1751, 1.1920929e-07
    %v1760 = vadd.f32 %v1752, 1.1920929e-07
    %v1761 = vadd.f32 %v1753, 1.1920929e-07
    %v1762 = vadd.f32 %v1754, 1.1920929e-07
    %v1763 = vadd.f32 %v1755, 1.1920929e-07
    %v1764 = vadd.f32 %v1756, 1.1920929e-07
    %v1765 = vadd.f32 %v1757, 1.1920929e-07
    %v1766 = vrsqrt.pop %v1758
    %v1767 = vrsqrt.pop %v1759
    %v1768 = vrsqrt.pop %v1760
    %v1769 = vrsqrt.pop %v1761
    %v1770 = vrsqrt.pop %v1762
    %v1771 = vrsqrt.pop %v1763
    %v1772 = vrsqrt.pop %v1764
    %v1773 = vrsqrt.pop %v1765
    %v1774 = vmul.f32 %v600, %v1766
    %v1775 = vmul.f32 %v605, %v1767
    %v1776 = vmul.f32 %v610, %v1768
    %v1777 = vmul.f32 %v615, %v1769
    %v1778 = vmul.f32 %v620, %v1770
    %v1779 = vmul.f32 %v625, %v1771
    %v1780 = vmul.f32 %v630, %v1772
    %v1781 = vmul.f32 %v635, %v1773
    %1790 = vrot.lane.b32.xlu0 %v1774, 84
    %v1791 = vpop.permute.xlu0 %1790
    %1792 = vrot.lane.b32.xlu0 %v1775, 84
    %v1793 = vpop.permute.xlu0 %1792
    %1794 = vrot.lane.b32.xlu0 %v1776, 84
    %v1795 = vpop.permute.xlu0 %1794
    %1796 = vrot.lane.b32.xlu0 %v1777, 84
    %v1797 = vpop.permute.xlu0 %1796
    %1798 = vrot.lane.b32.xlu0 %v1778, 84
    %v1799 = vpop.permute.xlu0 %1798
    %1800 = vrot.lane.b32.xlu0 %v1779, 84
    %v1801 = vpop.permute.xlu0 %1800
    %1802 = vrot.lane.b32.xlu0 %v1780, 84
    %v1803 = vpop.permute.xlu0 %1802
    %1804 = vrot.lane.b32.xlu0 %v1781, 84
    %v1805 = vpop.permute.xlu0 %1804
    %1814 = vrot.lane.b32.xlu0 %v1774, 92
    %v1815 = vpop.permute.xlu0 %1814
    %1816 = vrot.lane.b32.xlu0 %v1775, 92
    %v1817 = vpop.permute.xlu0 %1816
    %1818 = vrot.lane.b32.xlu0 %v1776, 92
    %v1819 = vpop.permute.xlu0 %1818
    %1820 = vrot.lane.b32.xlu0 %v1777, 92
    %v1821 = vpop.permute.xlu0 %1820
    %1822 = vrot.lane.b32.xlu0 %v1778, 92
    %v1823 = vpop.permute.xlu0 %1822
    %1824 = vrot.lane.b32.xlu0 %v1779, 92
    %v1825 = vpop.permute.xlu0 %1824
    %1826 = vrot.lane.b32.xlu0 %v1780, 92
    %v1827 = vpop.permute.xlu0 %1826
    %1828 = vrot.lane.b32.xlu0 %v1781, 92
    %v1829 = vpop.permute.xlu0 %1828
    %v1838 = vsel %vm761, %v1791, %v1815
    %v1839 = vsel %vm761, %v1793, %v1817
    %v1840 = vsel %vm761, %v1795, %v1819
    %v1841 = vsel %vm761, %v1797, %v1821
    %v1842 = vsel %vm761, %v1799, %v1823
    %v1843 = vsel %vm761, %v1801, %v1825
    %v1844 = vsel %vm761, %v1803, %v1827
    %v1845 = vsel %vm761, %v1805, %v1829
    %1846 = vrot.lane.b32.xlu0 %v363, 40
    %v1847 = vpop.permute.xlu0 %1846
    %1848 = vrot.lane.b32.xlu0 %v364, 40
    %v1849 = vpop.permute.xlu0 %1848
    %1850 = vrot.lane.b32.xlu0 %v365, 40
    %v1851 = vpop.permute.xlu0 %1850
    %1852 = vrot.lane.b32.xlu0 %v366, 40
    %v1853 = vpop.permute.xlu0 %1852
    %1854 = vrot.lane.b32.xlu0 %v367, 40
    %v1855 = vpop.permute.xlu0 %1854
    %1856 = vrot.lane.b32.xlu0 %v368, 40
    %v1857 = vpop.permute.xlu0 %1856
    %1858 = vrot.lane.b32.xlu0 %v369, 40
    %v1859 = vpop.permute.xlu0 %1858
    %1860 = vrot.lane.b32.xlu0 %v370, 40
    %v1861 = vpop.permute.xlu0 %1860
    %v1870 = vmul.f32 %v1774, %v1847
    %v1871 = vmul.f32 %v1775, %v1849
    %v1872 = vmul.f32 %v1776, %v1851
    %v1873 = vmul.f32 %v1777, %v1853
    %v1874 = vmul.f32 %v1778, %v1855
    %v1875 = vmul.f32 %v1779, %v1857
    %v1876 = vmul.f32 %v1780, %v1859
    %v1877 = vmul.f32 %v1781, %v1861
    %v1878 = vmul.f32 %v1838, %v371
    %v1879 = vmul.f32 %v1839, %v372
    %v1880 = vmul.f32 %v1840, %v373
    %v1881 = vmul.f32 %v1841, %v374
    %v1882 = vmul.f32 %v1842, %v375
    %v1883 = vmul.f32 %v1843, %v376
    %v1884 = vmul.f32 %v1844, %v377
    %v1885 = vmul.f32 %v1845, %v378
    %1894 = vrot.lane.b32.xlu0 %v1878, 40
    %v1895 = vpop.permute.xlu0 %1894
    %1896 = vrot.lane.b32.xlu0 %v1879, 40
    %v1897 = vpop.permute.xlu0 %1896
    %1898 = vrot.lane.b32.xlu0 %v1880, 40
    %v1899 = vpop.permute.xlu0 %1898
    %1900 = vrot.lane.b32.xlu0 %v1881, 40
    %v1901 = vpop.permute.xlu0 %1900
    %1902 = vrot.lane.b32.xlu0 %v1882, 40
    %v1903 = vpop.permute.xlu0 %1902
    %1904 = vrot.lane.b32.xlu0 %v1883, 40
    %v1905 = vpop.permute.xlu0 %1904
    %1906 = vrot.lane.b32.xlu0 %v1884, 40
    %v1907 = vpop.permute.xlu0 %1906
    %1908 = vrot.lane.b32.xlu0 %v1885, 40
    %v1909 = vpop.permute.xlu0 %1908
    %v1918 = vadd.f32 %v1870, %v1895
    %v1919 = vadd.f32 %v1871, %v1897
    %v1920 = vadd.f32 %v1872, %v1899
    %v1921 = vadd.f32 %v1873, %v1901
    %v1922 = vadd.f32 %v1874, %v1903
    %v1923 = vadd.f32 %v1875, %v1905
    %v1924 = vadd.f32 %v1876, %v1907
    %v1925 = vadd.f32 %v1877, %v1909
    %1934 = vrot.lane.b32.xlu0 %v1694, 120
    %v1935 = vpop.permute.xlu0 %1934
    %1936 = vrot.lane.b32.xlu0 %v1695, 120
    %v1937 = vpop.permute.xlu0 %1936
    %1938 = vrot.lane.b32.xlu0 %v1696, 120
    %v1939 = vpop.permute.xlu0 %1938
    %1940 = vrot.lane.b32.xlu0 %v1697, 120
    %v1941 = vpop.permute.xlu0 %1940
    %1942 = vrot.lane.b32.xlu0 %v1698, 120
    %v1943 = vpop.permute.xlu0 %1942
    %1944 = vrot.lane.b32.xlu0 %v1699, 120
    %v1945 = vpop.permute.xlu0 %1944
    %1946 = vrot.lane.b32.xlu0 %v1700, 120
    %v1947 = vpop.permute.xlu0 %1946
    %1948 = vrot.lane.b32.xlu0 %v1701, 120
    %v1949 = vpop.permute.xlu0 %1948
    %1958 = vrot.lane.b32.xlu0 %v1918, 88
    %v1959 = vpop.permute.xlu0 %1958
    %1960 = vrot.lane.b32.xlu0 %v1919, 88
    %v1961 = vpop.permute.xlu0 %1960
    %1962 = vrot.lane.b32.xlu0 %v1920, 88
    %v1963 = vpop.permute.xlu0 %1962
    %1964 = vrot.lane.b32.xlu0 %v1921, 88
    %v1965 = vpop.permute.xlu0 %1964
    %1966 = vrot.lane.b32.xlu0 %v1922, 88
    %v1967 = vpop.permute.xlu0 %1966
    %1968 = vrot.lane.b32.xlu0 %v1923, 88
    %v1969 = vpop.permute.xlu0 %1968
    %1970 = vrot.lane.b32.xlu0 %v1924, 88
    %v1971 = vpop.permute.xlu0 %1970
    %1972 = vrot.lane.b32.xlu0 %v1925, 88
    %v1973 = vpop.permute.xlu0 %1972
    %v1974 = vsel %vm647, %v1935, 0
    %v1976 = vsel %vm647, %v1937, 0
    %v1978 = vsel %vm647, %v1939, 0
    %v1980 = vsel %vm647, %v1941, 0
    %v1982 = vsel %vm647, %v1943, 0
    %v1984 = vsel %vm647, %v1945, 0
    %v1986 = vsel %vm647, %v1947, 0
    %v1988 = vsel %vm647, %v1949, 0
    %v1990 = vsel %vm647, %v1959, 0
    %v1992 = vsel %vm647, %v1961, 0
    %v1994 = vsel %vm647, %v1963, 0
    %v1996 = vsel %vm647, %v1965, 0
    %v1998 = vsel %vm647, %v1967, 0
    %v2000 = vsel %vm647, %v1969, 0
    %v2002 = vsel %vm647, %v1971, 0
    %v2004 = vsel %vm647, %v1973, 0
    %2006 = vmatprep.subr.mxu0 0.0
    %2007 = vmatpush1.xpose.msra.mxu0 %v1990
    %2008 = vmatprep.subr.mxu0 0.0
    %2009 = vmatpush1.xpose.msra.mxu0 %v1992
    %2010 = vmatprep.subr.mxu0 0.0
    %2011 = vmatpush1.xpose.msra.mxu0 %v1994
    %2012 = vmatprep.subr.mxu0 0.0
    %2013 = vmatpush1.xpose.msra.mxu0 %v1996
    %2014 = vmatprep.subr.mxu0 0.0
    %2015 = vmatpush1.xpose.msra.mxu0 %v1998
    %2016 = vmatprep.subr.mxu0 0.0
    %2017 = vmatpush1.xpose.msra.mxu0 %v2000
    %2018 = vmatprep.subr.mxu0 0.0
    %2019 = vmatpush1.xpose.msra.mxu0 %v2002
    %2020 = vmatprep.subr.mxu0 0.0
    %2021 = vmatpush1.xpose.msra.mxu0 %v2004
    %2022 = vmatprep.subr.mxu0 0.0
    %2023 = vmatpush1.xpose.msra.mxu0 0.0
    %2024 = vmatprep.subr.mxu0 0.0
    %2025 = vmatpush1.xpose.msra.mxu0 0.0
    %2026 = vmatprep.subr.mxu0 0.0
    %2027 = vmatpush1.xpose.msra.mxu0 0.0
    %2028 = vmatprep.subr.mxu0 0.0
    %2029 = vmatpush1.xpose.msra.mxu0 0.0
    %2030 = vmatprep.subr.mxu0 0.0
    %2031 = vmatpush1.xpose.msra.mxu0 0.0
    %2032 = vmatprep.subr.mxu0 0.0
    %2033 = vmatpush1.xpose.msra.mxu0 0.0
    %2034 = vmatprep.subr.mxu0 0.0
    %2035 = vmatpush1.xpose.msra.mxu0 0.0
    %2036 = vmatprep.subr.mxu0 0.0
    %2037 = vmatpush1.xpose.msra.mxu0 0.0
    %2038 = vmatprep.subr.mxu0 0.0
    %2039 = vmatpush1.xpose.msra.mxu0 0.0
    %2040 = vmatprep.subr.mxu0 0.0
    %2041 = vmatpush1.xpose.msra.mxu0 0.0
    %2042 = vmatprep.subr.mxu0 0.0
    %2043 = vmatpush1.xpose.msra.mxu0 0.0
    %2044 = vmatprep.subr.mxu0 0.0
    %2045 = vmatpush1.xpose.msra.mxu0 0.0
    %2046 = vmatprep.subr.mxu0 0.0
    %2047 = vmatpush1.xpose.msra.mxu0 0.0
    %2048 = vmatprep.subr.mxu0 0.0
    %2049 = vmatpush1.xpose.msra.mxu0 0.0
    %2050 = vmatprep.subr.mxu0 0.0
    %2051 = vmatpush1.xpose.msra.mxu0 0.0
    %2052 = vmatprep.subr.mxu0 0.0
    %2053 = vmatpush1.xpose.msra.mxu0 0.0
    %2054 = vmatprep.subr.mxu0 0.0
    %2055 = vmatpush1.xpose.msra.mxu0 0.0
    %2056 = vmatprep.subr.mxu0 0.0
    %2057 = vmatpush1.xpose.msra.mxu0 0.0
    %2058 = vmatprep.subr.mxu0 0.0
    %2059 = vmatpush1.xpose.msra.mxu0 0.0
    %2060 = vmatprep.subr.mxu0 0.0
    %2061 = vmatpush1.xpose.msra.mxu0 0.0
    %2062 = vmatprep.subr.mxu0 0.0
    %2063 = vmatpush1.xpose.msra.mxu0 0.0
    %2064 = vmatprep.subr.mxu0 0.0
    %2065 = vmatpush1.xpose.msra.mxu0 0.0
    %2066 = vmatprep.subr.mxu0 0.0
    %2067 = vmatpush1.xpose.msra.mxu0 0.0
    %2068 = vmatprep.subr.mxu0 0.0
    %2069 = vmatpush1.xpose.msra.mxu0 0.0
    %2070 = vmatprep.mubr.f32.mxu0 0.0
    %2071 = vmatmul.mubr.f32.gmra.mrb[0].mxu0 %v1974
    %v2072 = vpop.f32.mrb[0].mxu0
    %v2073 = vadd.f32 0.0, %v2072
    %v2074 = vpop.f32.mrb[0].mxu0
    %2075 = vmatprep.mubr.f32.mxu0 0.0
    %2076 = vmatmul.mubr.f32.gmra.mrb[0].mxu0 %v1976
    %v2077 = vpop.f32.mrb[0].mxu0
    %v2078 = vadd.f32 0.0, %v2077
    %v2079 = vpop.f32.mrb[0].mxu0
    %2080 = vmatprep.mubr.f32.mxu0 0.0
    %2081 = vmatmul.mubr.f32.gmra.mrb[0].mxu0 %v1978
    %v2082 = vpop.f32.mrb[0].mxu0
    %v2083 = vadd.f32 0.0, %v2082
    %v2084 = vpop.f32.mrb[0].mxu0
    %2085 = vmatprep.mubr.f32.mxu0 0.0
    %2086 = vmatmul.mubr.f32.gmra.mrb[0].mxu0 %v1980
    %v2087 = vpop.f32.mrb[0].mxu0
    %v2088 = vadd.f32 0.0, %v2087
    %v2089 = vpop.f32.mrb[0].mxu0
    %2090 = vmatprep.mubr.f32.mxu0 0.0
    %2091 = vmatmul.mubr.f32.gmra.mrb[0].mxu0 %v1982
    %v2092 = vpop.f32.mrb[0].mxu0
    %v2093 = vadd.f32 0.0, %v2092
    %v2094 = vpop.f32.mrb[0].mxu0
    %2095 = vmatprep.mubr.f32.mxu0 0.0
    %2096 = vmatmul.mubr.f32.gmra.mrb[0].mxu0 %v1984
    %v2097 = vpop.f32.mrb[0].mxu0
    %v2098 = vadd.f32 0.0, %v2097
    %v2099 = vpop.f32.mrb[0].mxu0
    %2100 = vmatprep.mubr.f32.mxu0 0.0
    %2101 = vmatmul.mubr.f32.gmra.mrb[0].mxu0 %v1986
    %v2102 = vpop.f32.mrb[0].mxu0
    %v2103 = vadd.f32 0.0, %v2102
    %v2104 = vpop.f32.mrb[0].mxu0
    %2105 = vmatprep.mubr.f32.mxu0 0.0
    %2106 = vmatmul.mubr.f32.gmra.mrb[0].mxu0 %v1988
    %v2107 = vpop.f32.mrb[0].mxu0
    %v2108 = vadd.f32 0.0, %v2107
    %v2109 = vpop.f32.mrb[0].mxu0
    %2110 = vdwg.mxu0
    %v2111 = vmul.f32 %v2073, 0.35355338
    %v2112 = vmul.f32 %v2078, 0.35355338
    %v2113 = vmul.f32 %v2083, 0.35355338
    %v2114 = vmul.f32 %v2088, 0.35355338
    %v2115 = vmul.f32 %v2093, 0.35355338
    %v2116 = vmul.f32 %v2098, 0.35355338
    %v2117 = vmul.f32 %v2103, 0.35355338
    %v2118 = vmul.f32 %v2108, 0.35355338
    %v2119 = vadd.f32 %v2111, %v379
    %v2120 = vadd.f32 %v2112, %v380
    %v2121 = vadd.f32 %v2113, %v381
    %v2122 = vadd.f32 %v2114, %v382
    %v2123 = vadd.f32 %v2115, %v383
    %v2124 = vadd.f32 %v2116, %v384
    %v2125 = vadd.f32 %v2117, %v385
    %v2126 = vadd.f32 %v2118, %v386
    %v2127 = vsel %vm1228, %v2119, -inf
    %2128 = vmax.xlane.f32.xlu0 %v2127
    %v2129 = vpop.xlane.xlu0 %2128
    %v2130 = vsel %vm1228, %v2120, -inf
    %2131 = vmax.xlane.f32.xlu0 %v2130
    %v2132 = vpop.xlane.xlu0 %2131
    %v2133 = vsel %vm1228, %v2121, -inf
    %2134 = vmax.xlane.f32.xlu0 %v2133
    %v2135 = vpop.xlane.xlu0 %2134
    %v2136 = vsel %vm1228, %v2122, -inf
    %2137 = vmax.xlane.f32.xlu0 %v2136
    %v2138 = vpop.xlane.xlu0 %2137
    %v2139 = vsel %vm1228, %v2123, -inf
    %2140 = vmax.xlane.f32.xlu0 %v2139
    %v2141 = vpop.xlane.xlu0 %2140
    %v2142 = vsel %vm1228, %v2124, -inf
    %2143 = vmax.xlane.f32.xlu0 %v2142
    %v2144 = vpop.xlane.xlu0 %2143
    %v2145 = vsel %vm1228, %v2125, -inf
    %2146 = vmax.xlane.f32.xlu0 %v2145
    %v2147 = vpop.xlane.xlu0 %2146
    %v2148 = vsel %vm1228, %v2126, -inf
    %2149 = vmax.xlane.f32.xlu0 %v2148
    %v2150 = vpop.xlane.xlu0 %2149
    %v2151 = vsub.f32 %v2119, %v2129
    %v2152 = vsub.f32 %v2120, %v2132
    %v2153 = vsub.f32 %v2121, %v2135
    %v2154 = vsub.f32 %v2122, %v2138
    %v2155 = vsub.f32 %v2123, %v2141
    %v2156 = vsub.f32 %v2124, %v2144
    %v2157 = vsub.f32 %v2125, %v2147
    %v2158 = vsub.f32 %v2126, %v2150
    %v2159 = vmul.f32 %v2151, 1.442695
    %v2160 = vpow.pop %v2159
    %v2161 = vmul.f32 %v2152, 1.442695
    %v2162 = vpow.pop %v2161
    %v2163 = vmul.f32 %v2153, 1.442695
    %v2164 = vpow.pop %v2163
    %v2165 = vmul.f32 %v2154, 1.442695
    %v2166 = vpow.pop %v2165
    %v2167 = vmul.f32 %v2155, 1.442695
    %v2168 = vpow.pop %v2167
    %v2169 = vmul.f32 %v2156, 1.442695
    %v2170 = vpow.pop %v2169
    %v2171 = vmul.f32 %v2157, 1.442695
    %v2172 = vpow.pop %v2171
    %v2173 = vmul.f32 %v2158, 1.442695
    %v2174 = vpow.pop %v2173
    %v2175 = vsel %vm1228, %v2160, 0.0
    %2176 = vadd.xlane.f32.xlu0 %v2175
    %v2177 = vpop.xlane.xlu0 %2176
    %v2178 = vsel %vm1228, %v2162, 0.0
    %2179 = vadd.xlane.f32.xlu0 %v2178
    %v2180 = vpop.xlane.xlu0 %2179
    %v2181 = vsel %vm1228, %v2164, 0.0
    %2182 = vadd.xlane.f32.xlu0 %v2181
    %v2183 = vpop.xlane.xlu0 %2182
    %v2184 = vsel %vm1228, %v2166, 0.0
    %2185 = vadd.xlane.f32.xlu0 %v2184
    %v2186 = vpop.xlane.xlu0 %2185
    %v2187 = vsel %vm1228, %v2168, 0.0
    %2188 = vadd.xlane.f32.xlu0 %v2187
    %v2189 = vpop.xlane.xlu0 %2188
    %v2190 = vsel %vm1228, %v2170, 0.0
    %2191 = vadd.xlane.f32.xlu0 %v2190
    %v2192 = vpop.xlane.xlu0 %2191
    %v2193 = vsel %vm1228, %v2172, 0.0
    %2194 = vadd.xlane.f32.xlu0 %v2193
    %v2195 = vpop.xlane.xlu0 %2194
    %v2196 = vsel %vm1228, %v2174, 0.0
    %2197 = vadd.xlane.f32.xlu0 %v2196
    %v2198 = vpop.xlane.xlu0 %2197
    %v2199 = vrcp.pop %v2177
    %v2200 = vmul.f32 %v2160, %v2199
    %v2201 = vrcp.pop %v2180
    %v2202 = vmul.f32 %v2162, %v2201
    %v2203 = vrcp.pop %v2183
    %v2204 = vmul.f32 %v2164, %v2203
    %v2205 = vrcp.pop %v2186
    %v2206 = vmul.f32 %v2166, %v2205
    %v2207 = vrcp.pop %v2189
    %v2208 = vmul.f32 %v2168, %v2207
    %v2209 = vrcp.pop %v2192
    %v2210 = vmul.f32 %v2170, %v2209
    %v2211 = vrcp.pop %v2195
    %v2212 = vmul.f32 %v2172, %v2211
    %v2213 = vrcp.pop %v2198
    %v2214 = vmul.f32 %v2174, %v2213
    %2215 = vrot.lane.b32.xlu0 %v1035, 56
    %v2216 = vpop.permute.xlu0 %2215
    %2217 = vrot.lane.b32.xlu0 %v1036, 56
    %v2218 = vpop.permute.xlu0 %2217
    %2219 = vrot.lane.b32.xlu0 %v1037, 56
    %v2220 = vpop.permute.xlu0 %2219
    %2221 = vrot.lane.b32.xlu0 %v1038, 56
    %v2222 = vpop.permute.xlu0 %2221
    %2223 = vrot.lane.b32.xlu0 %v1039, 56
    %v2224 = vpop.permute.xlu0 %2223
    %2225 = vrot.lane.b32.xlu0 %v1040, 56
    %v2226 = vpop.permute.xlu0 %2225
    %2227 = vrot.lane.b32.xlu0 %v1041, 56
    %v2228 = vpop.permute.xlu0 %2227
    %2229 = vrot.lane.b32.xlu0 %v1042, 56
    %v2230 = vpop.permute.xlu0 %2229
    %v2240 = vsel %vm1228, %v2200, 0
    %v2243 = vsel %vm1228, %v2202, 0
    %v2246 = vsel %vm1228, %v2204, 0
    %v2249 = vsel %vm1228, %v2206, 0
    %v2252 = vsel %vm1228, %v2208, 0
    %v2255 = vsel %vm1228, %v2210, 0
    %v2258 = vsel %vm1228, %v2212, 0
    %v2261 = vsel %vm1228, %v2214, 0
    %2263 = vmatprep.subr.mxu0 0.0
    %2264 = vmatpush1.msra.mxu0 %v2216
    %2265 = vmatprep.subr.mxu0 0.0
    %2266 = vmatpush1.msra.mxu0 %v2218
    %2267 = vmatprep.subr.mxu0 0.0
    %2268 = vmatpush1.msra.mxu0 %v2220
    %2269 = vmatprep.subr.mxu0 0.0
    %2270 = vmatpush1.msra.mxu0 %v2222
    %2271 = vmatprep.subr.mxu0 0.0
    %2272 = vmatpush1.msra.mxu0 %v2224
    %2273 = vmatprep.subr.mxu0 0.0
    %2274 = vmatpush1.msra.mxu0 %v2226
    %2275 = vmatprep.subr.mxu0 0.0
    %2276 = vmatpush1.msra.mxu0 %v2228
    %2277 = vmatprep.subr.mxu0 0.0
    %2278 = vmatpush1.msra.mxu0 %v2230
    %2279 = vmatprep.subr.mxu0 0.0
    %2280 = vmatpush1.msra.mxu0 0.0
    %2281 = vmatprep.subr.mxu0 0.0
    %2282 = vmatpush1.msra.mxu0 0.0
    %2283 = vmatprep.subr.mxu0 0.0
    %2284 = vmatpush1.msra.mxu0 0.0
    %2285 = vmatprep.subr.mxu0 0.0
    %2286 = vmatpush1.msra.mxu0 0.0
    %2287 = vmatprep.subr.mxu0 0.0
    %2288 = vmatpush1.msra.mxu0 0.0
    %2289 = vmatprep.subr.mxu0 0.0
    %2290 = vmatpush1.msra.mxu0 0.0
    %2291 = vmatprep.subr.mxu0 0.0
    %2292 = vmatpush1.msra.mxu0 0.0
    %2293 = vmatprep.subr.mxu0 0.0
    %2294 = vmatpush1.msra.mxu0 0.0
    %2295 = vmatprep.subr.mxu0 0.0
    %2296 = vmatpush1.msra.mxu0 0.0
    %2297 = vmatprep.subr.mxu0 0.0
    %2298 = vmatpush1.msra.mxu0 0.0
    %2299 = vmatprep.subr.mxu0 0.0
    %2300 = vmatpush1.msra.mxu0 0.0
    %2301 = vmatprep.subr.mxu0 0.0
    %2302 = vmatpush1.msra.mxu0 0.0
    %2303 = vmatprep.subr.mxu0 0.0
    %2304 = vmatpush1.msra.mxu0 0.0
    %2305 = vmatprep.subr.mxu0 0.0
    %2306 = vmatpush1.msra.mxu0 0.0
    %2307 = vmatprep.subr.mxu0 0.0
    %2308 = vmatpush1.msra.mxu0 0.0
    %2309 = vmatprep.subr.mxu0 0.0
    %2310 = vmatpush1.msra.mxu0 0.0
    %2311 = vmatprep.subr.mxu0 0.0
    %2312 = vmatpush1.msra.mxu0 0.0
    %2313 = vmatprep.subr.mxu0 0.0
    %2314 = vmatpush1.msra.mxu0 0.0
    %2315 = vmatprep.subr.mxu0 0.0
    %2316 = vmatpush1.msra.mxu0 0.0
    %2317 = vmatprep.subr.mxu0 0.0
    %2318 = vmatpush1.msra.mxu0 0.0
    %2319 = vmatprep.subr.mxu0 0.0
    %2320 = vmatpush1.msra.mxu0 0.0
    %2321 = vmatprep.subr.mxu0 0.0
    %2322 = vmatpush1.msra.mxu0 0.0
    %2323 = vmatprep.subr.mxu0 0.0
    %2324 = vmatpush1.msra.mxu0 0.0
    %2325 = vmatprep.subr.mxu0 0.0
    %2326 = vmatpush1.msra.mxu0 0.0
    %2327 = vmatprep.mubr.f32.mxu0 0.0
    %2328 = vmatmul.mubr.f32.gmra.mrb[0].mxu0 %v2240
    %v2329 = vpop.f32.mrb[0].mxu0
    %v2330 = vadd.f32 0.0, %v2329
    %v2331 = vpop.f32.mrb[0].mxu0
    %2332 = vmatprep.mubr.f32.mxu0 0.0
    %2333 = vmatmul.mubr.f32.gmra.mrb[0].mxu0 %v2243
    %v2334 = vpop.f32.mrb[0].mxu0
    %v2335 = vadd.f32 0.0, %v2334
    %v2336 = vpop.f32.mrb[0].mxu0
    %2337 = vmatprep.mubr.f32.mxu0 0.0
    %2338 = vmatmul.mubr.f32.gmra.mrb[0].mxu0 %v2246
    %v2339 = vpop.f32.mrb[0].mxu0
    %v2340 = vadd.f32 0.0, %v2339
    %v2341 = vpop.f32.mrb[0].mxu0
    %2342 = vmatprep.mubr.f32.mxu0 0.0
    %2343 = vmatmul.mubr.f32.gmra.mrb[0].mxu0 %v2249
    %v2344 = vpop.f32.mrb[0].mxu0
    %v2345 = vadd.f32 0.0, %v2344
    %v2346 = vpop.f32.mrb[0].mxu0
    %2347 = vmatprep.mubr.f32.mxu0 0.0
    %2348 = vmatmul.mubr.f32.gmra.mrb[0].mxu0 %v2252
    %v2349 = vpop.f32.mrb[0].mxu0
    %v2350 = vadd.f32 0.0, %v2349
    %v2351 = vpop.f32.mrb[0].mxu0
    %2352 = vmatprep.mubr.f32.mxu0 0.0
    %2353 = vmatmul.mubr.f32.gmra.mrb[0].mxu0 %v2255
    %v2354 = vpop.f32.mrb[0].mxu0
    %v2355 = vadd.f32 0.0, %v2354
    %v2356 = vpop.f32.mrb[0].mxu0
    %2357 = vmatprep.mubr.f32.mxu0 0.0
    %2358 = vmatmul.mubr.f32.gmra.mrb[0].mxu0 %v2258
    %v2359 = vpop.f32.mrb[0].mxu0
    %v2360 = vadd.f32 0.0, %v2359
    %v2361 = vpop.f32.mrb[0].mxu0
    %2362 = vmatprep.mubr.f32.mxu0 0.0
    %2363 = vmatmul.mubr.f32.gmra.mrb[0].mxu0 %v2261
    %v2364 = vpop.f32.mrb[0].mxu0
    %v2365 = vadd.f32 0.0, %v2364
    %v2366 = vpop.f32.mrb[0].mxu0
    %2367 = vdwg.mxu0
    %2368 = vrot.lane.b32.xlu0 %v639, 112
    %v2369 = vpop.permute.xlu0 %2368
    %2370 = vrot.lane.b32.xlu0 %v640, 112
    %v2371 = vpop.permute.xlu0 %2370
    %2372 = vrot.lane.b32.xlu0 %v641, 112
    %v2373 = vpop.permute.xlu0 %2372
    %2374 = vrot.lane.b32.xlu0 %v642, 112
    %v2375 = vpop.permute.xlu0 %2374
    %2376 = vrot.lane.b32.xlu0 %v643, 112
    %v2377 = vpop.permute.xlu0 %2376
    %2378 = vrot.lane.b32.xlu0 %v644, 112
    %v2379 = vpop.permute.xlu0 %2378
    %2380 = vrot.lane.b32.xlu0 %v645, 112
    %v2381 = vpop.permute.xlu0 %2380
    %2382 = vrot.lane.b32.xlu0 %v646, 112
    %v2383 = vpop.permute.xlu0 %2382
    %v2392 = vsel %vm647, %v2369, 0.0
    %2393 = vadd.xlane.f32.xlu0 %v2392
    %v2394 = vpop.xlane.xlu0 %2393
    %v2395 = vsel %vm647, %v2371, 0.0
    %2396 = vadd.xlane.f32.xlu0 %v2395
    %v2397 = vpop.xlane.xlu0 %2396
    %v2398 = vsel %vm647, %v2373, 0.0
    %2399 = vadd.xlane.f32.xlu0 %v2398
    %v2400 = vpop.xlane.xlu0 %2399
    %v2401 = vsel %vm647, %v2375, 0.0
    %2402 = vadd.xlane.f32.xlu0 %v2401
    %v2403 = vpop.xlane.xlu0 %2402
    %v2404 = vsel %vm647, %v2377, 0.0
    %2405 = vadd.xlane.f32.xlu0 %v2404
    %v2406 = vpop.xlane.xlu0 %2405
    %v2407 = vsel %vm647, %v2379, 0.0
    %2408 = vadd.xlane.f32.xlu0 %v2407
    %v2409 = vpop.xlane.xlu0 %2408
    %v2410 = vsel %vm647, %v2381, 0.0
    %2411 = vadd.xlane.f32.xlu0 %v2410
    %v2412 = vpop.xlane.xlu0 %2411
    %v2413 = vsel %vm647, %v2383, 0.0
    %2414 = vadd.xlane.f32.xlu0 %v2413
    %v2415 = vpop.xlane.xlu0 %2414
    %v2416 = vmul.f32 %v2394, %v672
    %v2417 = vmul.f32 %v2397, %v672
    %v2418 = vmul.f32 %v2400, %v672
    %v2419 = vmul.f32 %v2403, %v672
    %v2420 = vmul.f32 %v2406, %v672
    %v2421 = vmul.f32 %v2409, %v672
    %v2422 = vmul.f32 %v2412, %v672
    %v2423 = vmul.f32 %v2415, %v672
    %v2424 = vadd.f32 %v2416, 1.1920929e-07
    %v2425 = vadd.f32 %v2417, 1.1920929e-07
    %v2426 = vadd.f32 %v2418, 1.1920929e-07
    %v2427 = vadd.f32 %v2419, 1.1920929e-07
    %v2428 = vadd.f32 %v2420, 1.1920929e-07
    %v2429 = vadd.f32 %v2421, 1.1920929e-07
    %v2430 = vadd.f32 %v2422, 1.1920929e-07
    %v2431 = vadd.f32 %v2423, 1.1920929e-07
    %v2432 = vrsqrt.pop %v2424
    %v2433 = vrsqrt.pop %v2425
    %v2434 = vrsqrt.pop %v2426
    %v2435 = vrsqrt.pop %v2427
    %v2436 = vrsqrt.pop %v2428
    %v2437 = vrsqrt.pop %v2429
    %v2438 = vrsqrt.pop %v2430
    %v2439 = vrsqrt.pop %v2431
    %v2440 = vmul.f32 %v600, %v2432
    %v2441 = vmul.f32 %v605, %v2433
    %v2442 = vmul.f32 %v610, %v2434
    %v2443 = vmul.f32 %v615, %v2435
    %v2444 = vmul.f32 %v620, %v2436
    %v2445 = vmul.f32 %v625, %v2437
    %v2446 = vmul.f32 %v630, %v2438
    %v2447 = vmul.f32 %v635, %v2439
    %2456 = vrot.lane.b32.xlu0 %v2440, 108
    %v2457 = vpop.permute.xlu0 %2456
    %2458 = vrot.lane.b32.xlu0 %v2441, 108
    %v2459 = vpop.permute.xlu0 %2458
    %2460 = vrot.lane.b32.xlu0 %v2442, 108
    %v2461 = vpop.permute.xlu0 %2460
    %2462 = vrot.lane.b32.xlu0 %v2443, 108
    %v2463 = vpop.permute.xlu0 %2462
    %2464 = vrot.lane.b32.xlu0 %v2444, 108
    %v2465 = vpop.permute.xlu0 %2464
    %2466 = vrot.lane.b32.xlu0 %v2445, 108
    %v2467 = vpop.permute.xlu0 %2466
    %2468 = vrot.lane.b32.xlu0 %v2446, 108
    %v2469 = vpop.permute.xlu0 %2468
    %2470 = vrot.lane.b32.xlu0 %v2447, 108
    %v2471 = vpop.permute.xlu0 %2470
    %2480 = vrot.lane.b32.xlu0 %v2440, 116
    %v2481 = vpop.permute.xlu0 %2480
    %2482 = vrot.lane.b32.xlu0 %v2441, 116
    %v2483 = vpop.permute.xlu0 %2482
    %2484 = vrot.lane.b32.xlu0 %v2442, 116
    %v2485 = vpop.permute.xlu0 %2484
    %2486 = vrot.lane.b32.xlu0 %v2443, 116
    %v2487 = vpop.permute.xlu0 %2486
    %2488 = vrot.lane.b32.xlu0 %v2444, 116
    %v2489 = vpop.permute.xlu0 %2488
    %2490 = vrot.lane.b32.xlu0 %v2445, 116
    %v2491 = vpop.permute.xlu0 %2490
    %2492 = vrot.lane.b32.xlu0 %v2446, 116
    %v2493 = vpop.permute.xlu0 %2492
    %2494 = vrot.lane.b32.xlu0 %v2447, 116
    %v2495 = vpop.permute.xlu0 %2494
    %v2504 = vsel %vm761, %v2457, %v2481
    %v2505 = vsel %vm761, %v2459, %v2483
    %v2506 = vsel %vm761, %v2461, %v2485
    %v2507 = vsel %vm761, %v2463, %v2487
    %v2508 = vsel %vm761, %v2465, %v2489
    %v2509 = vsel %vm761, %v2467, %v2491
    %v2510 = vsel %vm761, %v2469, %v2493
    %v2511 = vsel %vm761, %v2471, %v2495
    %2512 = vrot.lane.b32.xlu0 %v363, 16
    %v2513 = vpop.permute.xlu0 %2512
    %2514 = vrot.lane.b32.xlu0 %v364, 16
    %v2515 = vpop.permute.xlu0 %2514
    %2516 = vrot.lane.b32.xlu0 %v365, 16
    %v2517 = vpop.permute.xlu0 %2516
    %2518 = vrot.lane.b32.xlu0 %v366, 16
    %v2519 = vpop.permute.xlu0 %2518
    %2520 = vrot.lane.b32.xlu0 %v367, 16
    %v2521 = vpop.permute.xlu0 %2520
    %2522 = vrot.lane.b32.xlu0 %v368, 16
    %v2523 = vpop.permute.xlu0 %2522
    %2524 = vrot.lane.b32.xlu0 %v369, 16
    %v2525 = vpop.permute.xlu0 %2524
    %2526 = vrot.lane.b32.xlu0 %v370, 16
    %v2527 = vpop.permute.xlu0 %2526
    %v2536 = vmul.f32 %v2440, %v2513
    %v2537 = vmul.f32 %v2441, %v2515
    %v2538 = vmul.f32 %v2442, %v2517
    %v2539 = vmul.f32 %v2443, %v2519
    %v2540 = vmul.f32 %v2444, %v2521
    %v2541 = vmul.f32 %v2445, %v2523
    %v2542 = vmul.f32 %v2446, %v2525
    %v2543 = vmul.f32 %v2447, %v2527
    %v2544 = vmul.f32 %v2504, %v371
    %v2545 = vmul.f32 %v2505, %v372
    %v2546 = vmul.f32 %v2506, %v373
    %v2547 = vmul.f32 %v2507, %v374
    %v2548 = vmul.f32 %v2508, %v375
    %v2549 = vmul.f32 %v2509, %v376
    %v2550 = vmul.f32 %v2510, %v377
    %v2551 = vmul.f32 %v2511, %v378
    %2560 = vrot.lane.b32.xlu0 %v2544, 16
    %v2561 = vpop.permute.xlu0 %2560
    %2562 = vrot.lane.b32.xlu0 %v2545, 16
    %v2563 = vpop.permute.xlu0 %2562
    %2564 = vrot.lane.b32.xlu0 %v2546, 16
    %v2565 = vpop.permute.xlu0 %2564
    %2566 = vrot.lane.b32.xlu0 %v2547, 16
    %v2567 = vpop.permute.xlu0 %2566
    %2568 = vrot.lane.b32.xlu0 %v2548, 16
    %v2569 = vpop.permute.xlu0 %2568
    %2570 = vrot.lane.b32.xlu0 %v2549, 16
    %v2571 = vpop.permute.xlu0 %2570
    %2572 = vrot.lane.b32.xlu0 %v2550, 16
    %v2573 = vpop.permute.xlu0 %2572
    %2574 = vrot.lane.b32.xlu0 %v2551, 16
    %v2575 = vpop.permute.xlu0 %2574
    %v2584 = vadd.f32 %v2536, %v2561
    %v2585 = vadd.f32 %v2537, %v2563
    %v2586 = vadd.f32 %v2538, %v2565
    %v2587 = vadd.f32 %v2539, %v2567
    %v2588 = vadd.f32 %v2540, %v2569
    %v2589 = vadd.f32 %v2541, %v2571
    %v2590 = vadd.f32 %v2542, %v2573
    %v2591 = vadd.f32 %v2543, %v2575
    %2592 = vrot.lane.b32.xlu0 %v639, 80
    %v2593 = vpop.permute.xlu0 %2592
    %2594 = vrot.lane.b32.xlu0 %v640, 80
    %v2595 = vpop.permute.xlu0 %2594
    %2596 = vrot.lane.b32.xlu0 %v641, 80
    %v2597 = vpop.permute.xlu0 %2596
    %2598 = vrot.lane.b32.xlu0 %v642, 80
    %v2599 = vpop.permute.xlu0 %2598
    %2600 = vrot.lane.b32.xlu0 %v643, 80
    %v2601 = vpop.permute.xlu0 %2600
    %2602 = vrot.lane.b32.xlu0 %v644, 80
    %v2603 = vpop.permute.xlu0 %2602
    %2604 = vrot.lane.b32.xlu0 %v645, 80
    %v2605 = vpop.permute.xlu0 %2604
    %2606 = vrot.lane.b32.xlu0 %v646, 80
    %v2607 = vpop.permute.xlu0 %2606
    %v2616 = vsel %vm647, %v2593, 0.0
    %2617 = vadd.xlane.f32.xlu0 %v2616
    %v2618 = vpop.xlane.xlu0 %2617
    %v2619 = vsel %vm647, %v2595, 0.0
    %2620 = vadd.xlane.f32.xlu0 %v2619
    %v2621 = vpop.xlane.xlu0 %2620
    %v2622 = vsel %vm647, %v2597, 0.0
    %2623 = vadd.xlane.f32.xlu0 %v2622
    %v2624 = vpop.xlane.xlu0 %2623
    %v2625 = vsel %vm647, %v2599, 0.0
    %2626 = vadd.xlane.f32.xlu0 %v2625
    %v2627 = vpop.xlane.xlu0 %2626
    %v2628 = vsel %vm647, %v2601, 0.0
    %2629 = vadd.xlane.f32.xlu0 %v2628
    %v2630 = vpop.xlane.xlu0 %2629
    %v2631 = vsel %vm647, %v2603, 0.0
    %2632 = vadd.xlane.f32.xlu0 %v2631
    %v2633 = vpop.xlane.xlu0 %2632
    %v2634 = vsel %vm647, %v2605, 0.0
    %2635 = vadd.xlane.f32.xlu0 %v2634
    %v2636 = vpop.xlane.xlu0 %2635
    %v2637 = vsel %vm647, %v2607, 0.0
    %2638 = vadd.xlane.f32.xlu0 %v2637
    %v2639 = vpop.xlane.xlu0 %2638
    %v2640 = vmul.f32 %v2618, %v672
    %v2641 = vmul.f32 %v2621, %v672
    %v2642 = vmul.f32 %v2624, %v672
    %v2643 = vmul.f32 %v2627, %v672
    %v2644 = vmul.f32 %v2630, %v672
    %v2645 = vmul.f32 %v2633, %v672
    %v2646 = vmul.f32 %v2636, %v672
    %v2647 = vmul.f32 %v2639, %v672
    %v2648 = vadd.f32 %v2640, 1.1920929e-07
    %v2649 = vadd.f32 %v2641, 1.1920929e-07
    %v2650 = vadd.f32 %v2642, 1.1920929e-07
    %v2651 = vadd.f32 %v2643, 1.1920929e-07
    %v2652 = vadd.f32 %v2644, 1.1920929e-07
    %v2653 = vadd.f32 %v2645, 1.1920929e-07
    %v2654 = vadd.f32 %v2646, 1.1920929e-07
    %v2655 = vadd.f32 %v2647, 1.1920929e-07
    %v2656 = vrsqrt.pop %v2648
    %v2657 = vrsqrt.pop %v2649
    %v2658 = vrsqrt.pop %v2650
    %v2659 = vrsqrt.pop %v2651
    %v2660 = vrsqrt.pop %v2652
    %v2661 = vrsqrt.pop %v2653
    %v2662 = vrsqrt.pop %v2654
    %v2663 = vrsqrt.pop %v2655
    %v2664 = vmul.f32 %v600, %v2656
    %v2665 = vmul.f32 %v605, %v2657
    %v2666 = vmul.f32 %v610, %v2658
    %v2667 = vmul.f32 %v615, %v2659
    %v2668 = vmul.f32 %v620, %v2660
    %v2669 = vmul.f32 %v625, %v2661
    %v2670 = vmul.f32 %v630, %v2662
    %v2671 = vmul.f32 %v635, %v2663
    %2680 = vrot.lane.b32.xlu0 %v2664, 76
    %v2681 = vpop.permute.xlu0 %2680
    %2682 = vrot.lane.b32.xlu0 %v2665, 76
    %v2683 = vpop.permute.xlu0 %2682
    %2684 = vrot.lane.b32.xlu0 %v2666, 76
    %v2685 = vpop.permute.xlu0 %2684
    %2686 = vrot.lane.b32.xlu0 %v2667, 76
    %v2687 = vpop.permute.xlu0 %2686
    %2688 = vrot.lane.b32.xlu0 %v2668, 76
    %v2689 = vpop.permute.xlu0 %2688
    %2690 = vrot.lane.b32.xlu0 %v2669, 76
    %v2691 = vpop.permute.xlu0 %2690
    %2692 = vrot.lane.b32.xlu0 %v2670, 76
    %v2693 = vpop.permute.xlu0 %2692
    %2694 = vrot.lane.b32.xlu0 %v2671, 76
    %v2695 = vpop.permute.xlu0 %2694
    %2704 = vrot.lane.b32.xlu0 %v2664, 84
    %v2705 = vpop.permute.xlu0 %2704
    %2706 = vrot.lane.b32.xlu0 %v2665, 84
    %v2707 = vpop.permute.xlu0 %2706
    %2708 = vrot.lane.b32.xlu0 %v2666, 84
    %v2709 = vpop.permute.xlu0 %2708
    %2710 = vrot.lane.b32.xlu0 %v2667, 84
    %v2711 = vpop.permute.xlu0 %2710
    %2712 = vrot.lane.b32.xlu0 %v2668, 84
    %v2713 = vpop.permute.xlu0 %2712
    %2714 = vrot.lane.b32.xlu0 %v2669, 84
    %v2715 = vpop.permute.xlu0 %2714
    %2716 = vrot.lane.b32.xlu0 %v2670, 84
    %v2717 = vpop.permute.xlu0 %2716
    %2718 = vrot.lane.b32.xlu0 %v2671, 84
    %v2719 = vpop.permute.xlu0 %2718
    %v2728 = vsel %vm761, %v2681, %v2705
    %v2729 = vsel %vm761, %v2683, %v2707
    %v2730 = vsel %vm761, %v2685, %v2709
    %v2731 = vsel %vm761, %v2687, %v2711
    %v2732 = vsel %vm761, %v2689, %v2713
    %v2733 = vsel %vm761, %v2691, %v2715
    %v2734 = vsel %vm761, %v2693, %v2717
    %v2735 = vsel %vm761, %v2695, %v2719
    %2736 = vrot.lane.b32.xlu0 %v363, 48
    %v2737 = vpop.permute.xlu0 %2736
    %2738 = vrot.lane.b32.xlu0 %v364, 48
    %v2739 = vpop.permute.xlu0 %2738
    %2740 = vrot.lane.b32.xlu0 %v365, 48
    %v2741 = vpop.permute.xlu0 %2740
    %2742 = vrot.lane.b32.xlu0 %v366, 48
    %v2743 = vpop.permute.xlu0 %2742
    %2744 = vrot.lane.b32.xlu0 %v367, 48
    %v2745 = vpop.permute.xlu0 %2744
    %2746 = vrot.lane.b32.xlu0 %v368, 48
    %v2747 = vpop.permute.xlu0 %2746
    %2748 = vrot.lane.b32.xlu0 %v369, 48
    %v2749 = vpop.permute.xlu0 %2748
    %2750 = vrot.lane.b32.xlu0 %v370, 48
    %v2751 = vpop.permute.xlu0 %2750
    %v2760 = vmul.f32 %v2664, %v2737
    %v2761 = vmul.f32 %v2665, %v2739
    %v2762 = vmul.f32 %v2666, %v2741
    %v2763 = vmul.f32 %v2667, %v2743
    %v2764 = vmul.f32 %v2668, %v2745
    %v2765 = vmul.f32 %v2669, %v2747
    %v2766 = vmul.f32 %v2670, %v2749
    %v2767 = vmul.f32 %v2671, %v2751
    %v2768 = vmul.f32 %v2728, %v371
    %v2769 = vmul.f32 %v2729, %v372
    %v2770 = vmul.f32 %v2730, %v373
    %v2771 = vmul.f32 %v2731, %v374
    %v2772 = vmul.f32 %v2732, %v375
    %v2773 = vmul.f32 %v2733, %v376
    %v2774 = vmul.f32 %v2734, %v377
    %v2775 = vmul.f32 %v2735, %v378
    %2784 = vrot.lane.b32.xlu0 %v2768, 48
    %v2785 = vpop.permute.xlu0 %2784
    %2786 = vrot.lane.b32.xlu0 %v2769, 48
    %v2787 = vpop.permute.xlu0 %2786
    %2788 = vrot.lane.b32.xlu0 %v2770, 48
    %v2789 = vpop.permute.xlu0 %2788
    %2790 = vrot.lane.b32.xlu0 %v2771, 48
    %v2791 = vpop.permute.xlu0 %2790
    %2792 = vrot.lane.b32.xlu0 %v2772, 48
    %v2793 = vpop.permute.xlu0 %2792
    %2794 = vrot.lane.b32.xlu0 %v2773, 48
    %v2795 = vpop.permute.xlu0 %2794
    %2796 = vrot.lane.b32.xlu0 %v2774, 48
    %v2797 = vpop.permute.xlu0 %2796
    %2798 = vrot.lane.b32.xlu0 %v2775, 48
    %v2799 = vpop.permute.xlu0 %2798
    %v2808 = vadd.f32 %v2760, %v2785
    %v2809 = vadd.f32 %v2761, %v2787
    %v2810 = vadd.f32 %v2762, %v2789
    %v2811 = vadd.f32 %v2763, %v2791
    %v2812 = vadd.f32 %v2764, %v2793
    %v2813 = vadd.f32 %v2765, %v2795
    %v2814 = vadd.f32 %v2766, %v2797
    %v2815 = vadd.f32 %v2767, %v2799
    %2824 = vrot.lane.b32.xlu0 %v2584, 112
    %v2825 = vpop.permute.xlu0 %2824
    %2826 = vrot.lane.b32.xlu0 %v2585, 112
    %v2827 = vpop.permute.xlu0 %2826
    %2828 = vrot.lane.b32.xlu0 %v2586, 112
    %v2829 = vpop.permute.xlu0 %2828
    %2830 = vrot.lane.b32.xlu0 %v2587, 112
    %v2831 = vpop.permute.xlu0 %2830
    %2832 = vrot.lane.b32.xlu0 %v2588, 112
    %v2833 = vpop.permute.xlu0 %2832
    %2834 = vrot.lane.b32.xlu0 %v2589, 112
    %v2835 = vpop.permute.xlu0 %2834
    %2836 = vrot.lane.b32.xlu0 %v2590, 112
    %v2837 = vpop.permute.xlu0 %2836
    %2838 = vrot.lane.b32.xlu0 %v2591, 112
    %v2839 = vpop.permute.xlu0 %2838
    %2848 = vrot.lane.b32.xlu0 %v2808, 80
    %v2849 = vpop.permute.xlu0 %2848
    %2850 = vrot.lane.b32.xlu0 %v2809, 80
    %v2851 = vpop.permute.xlu0 %2850
    %2852 = vrot.lane.b32.xlu0 %v2810, 80
    %v2853 = vpop.permute.xlu0 %2852
    %2854 = vrot.lane.b32.xlu0 %v2811, 80
    %v2855 = vpop.permute.xlu0 %2854
    %2856 = vrot.lane.b32.xlu0 %v2812, 80
    %v2857 = vpop.permute.xlu0 %2856
    %2858 = vrot.lane.b32.xlu0 %v2813, 80
    %v2859 = vpop.permute.xlu0 %2858
    %2860 = vrot.lane.b32.xlu0 %v2814, 80
    %v2861 = vpop.permute.xlu0 %2860
    %2862 = vrot.lane.b32.xlu0 %v2815, 80
    %v2863 = vpop.permute.xlu0 %2862
    %v2864 = vsel %vm647, %v2825, 0
    %v2866 = vsel %vm647, %v2827, 0
    %v2868 = vsel %vm647, %v2829, 0
    %v2870 = vsel %vm647, %v2831, 0
    %v2872 = vsel %vm647, %v2833, 0
    %v2874 = vsel %vm647, %v2835, 0
    %v2876 = vsel %vm647, %v2837, 0
    %v2878 = vsel %vm647, %v2839, 0
    %v2880 = vsel %vm647, %v2849, 0
    %v2882 = vsel %vm647, %v2851, 0
    %v2884 = vsel %vm647, %v2853, 0
    %v2886 = vsel %vm647, %v2855, 0
    %v2888 = vsel %vm647, %v2857, 0
    %v2890 = vsel %vm647, %v2859, 0
    %v2892 = vsel %vm647, %v2861, 0
    %v2894 = vsel %vm647, %v2863, 0
    %2896 = vmatprep.subr.mxu0 0.0
    %2897 = vmatpush1.xpose.msra.mxu0 %v2880
    %2898 = vmatprep.subr.mxu0 0.0
    %2899 = vmatpush1.xpose.msra.mxu0 %v2882
    %2900 = vmatprep.subr.mxu0 0.0
    %2901 = vmatpush1.xpose.msra.mxu0 %v2884
    %2902 = vmatprep.subr.mxu0 0.0
    %2903 = vmatpush1.xpose.msra.mxu0 %v2886
    %2904 = vmatprep.subr.mxu0 0.0
    %2905 = vmatpush1.xpose.msra.mxu0 %v2888
    %2906 = vmatprep.subr.mxu0 0.0
    %2907 = vmatpush1.xpose.msra.mxu0 %v2890
    %2908 = vmatprep.subr.mxu0 0.0
    %2909 = vmatpush1.xpose.msra.mxu0 %v2892
    %2910 = vmatprep.subr.mxu0 0.0
    %2911 = vmatpush1.xpose.msra.mxu0 %v2894
    %2912 = vmatprep.subr.mxu0 0.0
    %2913 = vmatpush1.xpose.msra.mxu0 0.0
    %2914 = vmatprep.subr.mxu0 0.0
    %2915 = vmatpush1.xpose.msra.mxu0 0.0
    %2916 = vmatprep.subr.mxu0 0.0
    %2917 = vmatpush1.xpose.msra.mxu0 0.0
    %2918 = vmatprep.subr.mxu0 0.0
    %2919 = vmatpush1.xpose.msra.mxu0 0.0
    %2920 = vmatprep.subr.mxu0 0.0
    %2921 = vmatpush1.xpose.msra.mxu0 0.0
    %2922 = vmatprep.subr.mxu0 0.0
    %2923 = vmatpush1.xpose.msra.mxu0 0.0
    %2924 = vmatprep.subr.mxu0 0.0
    %2925 = vmatpush1.xpose.msra.mxu0 0.0
    %2926 = vmatprep.subr.mxu0 0.0
    %2927 = vmatpush1.xpose.msra.mxu0 0.0
    %2928 = vmatprep.subr.mxu0 0.0
    %2929 = vmatpush1.xpose.msra.mxu0 0.0
    %2930 = vmatprep.subr.mxu0 0.0
    %2931 = vmatpush1.xpose.msra.mxu0 0.0
    %2932 = vmatprep.subr.mxu0 0.0
    %2933 = vmatpush1.xpose.msra.mxu0 0.0
    %2934 = vmatprep.subr.mxu0 0.0
    %2935 = vmatpush1.xpose.msra.mxu0 0.0
    %2936 = vmatprep.subr.mxu0 0.0
    %2937 = vmatpush1.xpose.msra.mxu0 0.0
    %2938 = vmatprep.subr.mxu0 0.0
    %2939 = vmatpush1.xpose.msra.mxu0 0.0
    %2940 = vmatprep.subr.mxu0 0.0
    %2941 = vmatpush1.xpose.msra.mxu0 0.0
    %2942 = vmatprep.subr.mxu0 0.0
    %2943 = vmatpush1.xpose.msra.mxu0 0.0
    %2944 = vmatprep.subr.mxu0 0.0
    %2945 = vmatpush1.xpose.msra.mxu0 0.0
    %2946 = vmatprep.subr.mxu0 0.0
    %2947 = vmatpush1.xpose.msra.mxu0 0.0
    %2948 = vmatprep.subr.mxu0 0.0
    %2949 = vmatpush1.xpose.msra.mxu0 0.0
    %2950 = vmatprep.subr.mxu0 0.0
    %2951 = vmatpush1.xpose.msra.mxu0 0.0
    %2952 = vmatprep.subr.mxu0 0.0
    %2953 = vmatpush1.xpose.msra.mxu0 0.0
    %2954 = vmatprep.subr.mxu0 0.0
    %2955 = vmatpush1.xpose.msra.mxu0 0.0
    %2956 = vmatprep.subr.mxu0 0.0
    %2957 = vmatpush1.xpose.msra.mxu0 0.0
    %2958 = vmatprep.subr.mxu0 0.0
    %2959 = vmatpush1.xpose.msra.mxu0 0.0
    %2960 = vmatprep.mubr.f32.mxu0 0.0
    %2961 = vmatmul.mubr.f32.gmra.mrb[0].mxu0 %v2864
    %v2962 = vpop.f32.mrb[0].mxu0
    %v2963 = vadd.f32 0.0, %v2962
    %v2964 = vpop.f32.mrb[0].mxu0
    %2965 = vmatprep.mubr.f32.mxu0 0.0
    %2966 = vmatmul.mubr.f32.gmra.mrb[0].mxu0 %v2866
    %v2967 = vpop.f32.mrb[0].mxu0
    %v2968 = vadd.f32 0.0, %v2967
    %v2969 = vpop.f32.mrb[0].mxu0
    %2970 = vmatprep.mubr.f32.mxu0 0.0
    %2971 = vmatmul.mubr.f32.gmra.mrb[0].mxu0 %v2868
    %v2972 = vpop.f32.mrb[0].mxu0
    %v2973 = vadd.f32 0.0, %v2972
    %v2974 = vpop.f32.mrb[0].mxu0
    %2975 = vmatprep.mubr.f32.mxu0 0.0
    %2976 = vmatmul.mubr.f32.gmra.mrb[0].mxu0 %v2870
    %v2977 = vpop.f32.mrb[0].mxu0
    %v2978 = vadd.f32 0.0, %v2977
    %v2979 = vpop.f32.mrb[0].mxu0
    %2980 = vmatprep.mubr.f32.mxu0 0.0
    %2981 = vmatmul.mubr.f32.gmra.mrb[0].mxu0 %v2872
    %v2982 = vpop.f32.mrb[0].mxu0
    %v2983 = vadd.f32 0.0, %v2982
    %v2984 = vpop.f32.mrb[0].mxu0
    %2985 = vmatprep.mubr.f32.mxu0 0.0
    %2986 = vmatmul.mubr.f32.gmra.mrb[0].mxu0 %v2874
    %v2987 = vpop.f32.mrb[0].mxu0
    %v2988 = vadd.f32 0.0, %v2987
    %v2989 = vpop.f32.mrb[0].mxu0
    %2990 = vmatprep.mubr.f32.mxu0 0.0
    %2991 = vmatmul.mubr.f32.gmra.mrb[0].mxu0 %v2876
    %v2992 = vpop.f32.mrb[0].mxu0
    %v2993 = vadd.f32 0.0, %v2992
    %v2994 = vpop.f32.mrb[0].mxu0
    %2995 = vmatprep.mubr.f32.mxu0 0.0
    %2996 = vmatmul.mubr.f32.gmra.mrb[0].mxu0 %v2878
    %v2997 = vpop.f32.mrb[0].mxu0
    %v2998 = vadd.f32 0.0, %v2997
    %v2999 = vpop.f32.mrb[0].mxu0
    %3000 = vdwg.mxu0
    %v3001 = vmul.f32 %v2963, 0.35355338
    %v3002 = vmul.f32 %v2968, 0.35355338
    %v3003 = vmul.f32 %v2973, 0.35355338
    %v3004 = vmul.f32 %v2978, 0.35355338
    %v3005 = vmul.f32 %v2983, 0.35355338
    %v3006 = vmul.f32 %v2988, 0.35355338
    %v3007 = vmul.f32 %v2993, 0.35355338
    %v3008 = vmul.f32 %v2998, 0.35355338
    %v3009 = vadd.f32 %v3001, %v379
    %v3010 = vadd.f32 %v3002, %v380
    %v3011 = vadd.f32 %v3003, %v381
    %v3012 = vadd.f32 %v3004, %v382
    %v3013 = vadd.f32 %v3005, %v383
    %v3014 = vadd.f32 %v3006, %v384
    %v3015 = vadd.f32 %v3007, %v385
    %v3016 = vadd.f32 %v3008, %v386
    %v3017 = vsel %vm1228, %v3009, -inf
    %3018 = vmax.xlane.f32.xlu0 %v3017
    %v3019 = vpop.xlane.xlu0 %3018
    %v3020 = vsel %vm1228, %v3010, -inf
    %3021 = vmax.xlane.f32.xlu0 %v3020
    %v3022 = vpop.xlane.xlu0 %3021
    %v3023 = vsel %vm1228, %v3011, -inf
    %3024 = vmax.xlane.f32.xlu0 %v3023
    %v3025 = vpop.xlane.xlu0 %3024
    %v3026 = vsel %vm1228, %v3012, -inf
    %3027 = vmax.xlane.f32.xlu0 %v3026
    %v3028 = vpop.xlane.xlu0 %3027
    %v3029 = vsel %vm1228, %v3013, -inf
    %3030 = vmax.xlane.f32.xlu0 %v3029
    %v3031 = vpop.xlane.xlu0 %3030
    %v3032 = vsel %vm1228, %v3014, -inf
    %3033 = vmax.xlane.f32.xlu0 %v3032
    %v3034 = vpop.xlane.xlu0 %3033
    %v3035 = vsel %vm1228, %v3015, -inf
    %3036 = vmax.xlane.f32.xlu0 %v3035
    %v3037 = vpop.xlane.xlu0 %3036
    %v3038 = vsel %vm1228, %v3016, -inf
    %3039 = vmax.xlane.f32.xlu0 %v3038
    %v3040 = vpop.xlane.xlu0 %3039
    %v3041 = vsub.f32 %v3009, %v3019
    %v3042 = vsub.f32 %v3010, %v3022
    %v3043 = vsub.f32 %v3011, %v3025
    %v3044 = vsub.f32 %v3012, %v3028
    %v3045 = vsub.f32 %v3013, %v3031
    %v3046 = vsub.f32 %v3014, %v3034
    %v3047 = vsub.f32 %v3015, %v3037
    %v3048 = vsub.f32 %v3016, %v3040
    %v3049 = vmul.f32 %v3041, 1.442695
    %v3050 = vpow.pop %v3049
    %v3051 = vmul.f32 %v3042, 1.442695
    %v3052 = vpow.pop %v3051
    %v3053 = vmul.f32 %v3043, 1.442695
    %v3054 = vpow.pop %v3053
    %v3055 = vmul.f32 %v3044, 1.442695
    %v3056 = vpow.pop %v3055
    %v3057 = vmul.f32 %v3045, 1.442695
    %v3058 = vpow.pop %v3057
    %v3059 = vmul.f32 %v3046, 1.442695
    %v3060 = vpow.pop %v3059
    %v3061 = vmul.f32 %v3047, 1.442695
    %v3062 = vpow.pop %v3061
    %v3063 = vmul.f32 %v3048, 1.442695
    %v3064 = vpow.pop %v3063
    %v3065 = vsel %vm1228, %v3050, 0.0
    %3066 = vadd.xlane.f32.xlu0 %v3065
    %v3067 = vpop.xlane.xlu0 %3066
    %v3068 = vsel %vm1228, %v3052, 0.0
    %3069 = vadd.xlane.f32.xlu0 %v3068
    %v3070 = vpop.xlane.xlu0 %3069
    %v3071 = vsel %vm1228, %v3054, 0.0
    %3072 = vadd.xlane.f32.xlu0 %v3071
    %v3073 = vpop.xlane.xlu0 %3072
    %v3074 = vsel %vm1228, %v3056, 0.0
    %3075 = vadd.xlane.f32.xlu0 %v3074
    %v3076 = vpop.xlane.xlu0 %3075
    %v3077 = vsel %vm1228, %v3058, 0.0
    %3078 = vadd.xlane.f32.xlu0 %v3077
    %v3079 = vpop.xlane.xlu0 %3078
    %v3080 = vsel %vm1228, %v3060, 0.0
    %3081 = vadd.xlane.f32.xlu0 %v3080
    %v3082 = vpop.xlane.xlu0 %3081
    %v3083 = vsel %vm1228, %v3062, 0.0
    %3084 = vadd.xlane.f32.xlu0 %v3083
    %v3085 = vpop.xlane.xlu0 %3084
    %v3086 = vsel %vm1228, %v3064, 0.0
    %3087 = vadd.xlane.f32.xlu0 %v3086
    %v3088 = vpop.xlane.xlu0 %3087
    %v3089 = vrcp.pop %v3067
    %v3090 = vmul.f32 %v3050, %v3089
    %v3091 = vrcp.pop %v3070
    %v3092 = vmul.f32 %v3052, %v3091
    %v3093 = vrcp.pop %v3073
    %v3094 = vmul.f32 %v3054, %v3093
    %v3095 = vrcp.pop %v3076
    %v3096 = vmul.f32 %v3056, %v3095
    %v3097 = vrcp.pop %v3079
    %v3098 = vmul.f32 %v3058, %v3097
    %v3099 = vrcp.pop %v3082
    %v3100 = vmul.f32 %v3060, %v3099
    %v3101 = vrcp.pop %v3085
    %v3102 = vmul.f32 %v3062, %v3101
    %v3103 = vrcp.pop %v3088
    %v3104 = vmul.f32 %v3064, %v3103
    %3105 = vrot.lane.b32.xlu0 %v1035, 48
    %v3106 = vpop.permute.xlu0 %3105
    %3107 = vrot.lane.b32.xlu0 %v1036, 48
    %v3108 = vpop.permute.xlu0 %3107
    %3109 = vrot.lane.b32.xlu0 %v1037, 48
    %v3110 = vpop.permute.xlu0 %3109
    %3111 = vrot.lane.b32.xlu0 %v1038, 48
    %v3112 = vpop.permute.xlu0 %3111
    %3113 = vrot.lane.b32.xlu0 %v1039, 48
    %v3114 = vpop.permute.xlu0 %3113
    %3115 = vrot.lane.b32.xlu0 %v1040, 48
    %v3116 = vpop.permute.xlu0 %3115
    %3117 = vrot.lane.b32.xlu0 %v1041, 48
    %v3118 = vpop.permute.xlu0 %3117
    %3119 = vrot.lane.b32.xlu0 %v1042, 48
    %v3120 = vpop.permute.xlu0 %3119
    %v3130 = vsel %vm1228, %v3090, 0
    %v3133 = vsel %vm1228, %v3092, 0
    %v3136 = vsel %vm1228, %v3094, 0
    %v3139 = vsel %vm1228, %v3096, 0
    %v3142 = vsel %vm1228, %v3098, 0
    %v3145 = vsel %vm1228, %v3100, 0
    %v3148 = vsel %vm1228, %v3102, 0
    %v3151 = vsel %vm1228, %v3104, 0
    %3153 = vmatprep.subr.mxu0 0.0
    %3154 = vmatpush1.msra.mxu0 %v3106
    %3155 = vmatprep.subr.mxu0 0.0
    %3156 = vmatpush1.msra.mxu0 %v3108
    %3157 = vmatprep.subr.mxu0 0.0
    %3158 = vmatpush1.msra.mxu0 %v3110
    %3159 = vmatprep.subr.mxu0 0.0
    %3160 = vmatpush1.msra.mxu0 %v3112
    %3161 = vmatprep.subr.mxu0 0.0
    %3162 = vmatpush1.msra.mxu0 %v3114
    %3163 = vmatprep.subr.mxu0 0.0
    %3164 = vmatpush1.msra.mxu0 %v3116
    %3165 = vmatprep.subr.mxu0 0.0
    %3166 = vmatpush1.msra.mxu0 %v3118
    %3167 = vmatprep.subr.mxu0 0.0
    %3168 = vmatpush1.msra.mxu0 %v3120
    %3169 = vmatprep.subr.mxu0 0.0
    %3170 = vmatpush1.msra.mxu0 0.0
    %3171 = vmatprep.subr.mxu0 0.0
    %3172 = vmatpush1.msra.mxu0 0.0
    %3173 = vmatprep.subr.mxu0 0.0
    %3174 = vmatpush1.msra.mxu0 0.0
    %3175 = vmatprep.subr.mxu0 0.0
    %3176 = vmatpush1.msra.mxu0 0.0
    %3177 = vmatprep.subr.mxu0 0.0
    %3178 = vmatpush1.msra.mxu0 0.0
    %3179 = vmatprep.subr.mxu0 0.0
    %3180 = vmatpush1.msra.mxu0 0.0
    %3181 = vmatprep.subr.mxu0 0.0
    %3182 = vmatpush1.msra.mxu0 0.0
    %3183 = vmatprep.subr.mxu0 0.0
    %3184 = vmatpush1.msra.mxu0 0.0
    %3185 = vmatprep.subr.mxu0 0.0
    %3186 = vmatpush1.msra.mxu0 0.0
    %3187 = vmatprep.subr.mxu0 0.0
    %3188 = vmatpush1.msra.mxu0 0.0
    %3189 = vmatprep.subr.mxu0 0.0
    %3190 = vmatpush1.msra.mxu0 0.0
    %3191 = vmatprep.subr.mxu0 0.0
    %3192 = vmatpush1.msra.mxu0 0.0
    %3193 = vmatprep.subr.mxu0 0.0
    %3194 = vmatpush1.msra.mxu0 0.0
    %3195 = vmatprep.subr.mxu0 0.0
    %3196 = vmatpush1.msra.mxu0 0.0
    %3197 = vmatprep.subr.mxu0 0.0
    %3198 = vmatpush1.msra.mxu0 0.0
    %3199 = vmatprep.subr.mxu0 0.0
    %3200 = vmatpush1.msra.mxu0 0.0
    %3201 = vmatprep.subr.mxu0 0.0
    %3202 = vmatpush1.msra.mxu0 0.0
    %3203 = vmatprep.subr.mxu0 0.0
    %3204 = vmatpush1.msra.mxu0 0.0
    %3205 = vmatprep.subr.mxu0 0.0
    %3206 = vmatpush1.msra.mxu0 0.0
    %3207 = vmatprep.subr.mxu0 0.0
    %3208 = vmatpush1.msra.mxu0 0.0
    %3209 = vmatprep.subr.mxu0 0.0
    %3210 = vmatpush1.msra.mxu0 0.0
    %3211 = vmatprep.subr.mxu0 0.0
    %3212 = vmatpush1.msra.mxu0 0.0
    %3213 = vmatprep.subr.mxu0 0.0
    %3214 = vmatpush1.msra.mxu0 0.0
    %3215 = vmatprep.subr.mxu0 0.0
    %3216 = vmatpush1.msra.mxu0 0.0
    %3217 = vmatprep.mubr.f32.mxu0 0.0
    %3218 = vmatmul.mubr.f32.gmra.mrb[0].mxu0 %v3130
    %v3219 = vpop.f32.mrb[0].mxu0
    %v3220 = vadd.f32 0.0, %v3219
    %v3221 = vpop.f32.mrb[0].mxu0
    %3222 = vmatprep.mubr.f32.mxu0 0.0
    %3223 = vmatmul.mubr.f32.gmra.mrb[0].mxu0 %v3133
    %v3224 = vpop.f32.mrb[0].mxu0
    %v3225 = vadd.f32 0.0, %v3224
    %v3226 = vpop.f32.mrb[0].mxu0
    %3227 = vmatprep.mubr.f32.mxu0 0.0
    %3228 = vmatmul.mubr.f32.gmra.mrb[0].mxu0 %v3136
    %v3229 = vpop.f32.mrb[0].mxu0
    %v3230 = vadd.f32 0.0, %v3229
    %v3231 = vpop.f32.mrb[0].mxu0
    %3232 = vmatprep.mubr.f32.mxu0 0.0
    %3233 = vmatmul.mubr.f32.gmra.mrb[0].mxu0 %v3139
    %v3234 = vpop.f32.mrb[0].mxu0
    %v3235 = vadd.f32 0.0, %v3234
    %v3236 = vpop.f32.mrb[0].mxu0
    %3237 = vmatprep.mubr.f32.mxu0 0.0
    %3238 = vmatmul.mubr.f32.gmra.mrb[0].mxu0 %v3142
    %v3239 = vpop.f32.mrb[0].mxu0
    %v3240 = vadd.f32 0.0, %v3239
    %v3241 = vpop.f32.mrb[0].mxu0
    %3242 = vmatprep.mubr.f32.mxu0 0.0
    %3243 = vmatmul.mubr.f32.gmra.mrb[0].mxu0 %v3145
    %v3244 = vpop.f32.mrb[0].mxu0
    %v3245 = vadd.f32 0.0, %v3244
    %v3246 = vpop.f32.mrb[0].mxu0
    %3247 = vmatprep.mubr.f32.mxu0 0.0
    %3248 = vmatmul.mubr.f32.gmra.mrb[0].mxu0 %v3148
    %v3249 = vpop.f32.mrb[0].mxu0
    %v3250 = vadd.f32 0.0, %v3249
    %v3251 = vpop.f32.mrb[0].mxu0
    %3252 = vmatprep.mubr.f32.mxu0 0.0
    %3253 = vmatmul.mubr.f32.gmra.mrb[0].mxu0 %v3151
    %v3254 = vpop.f32.mrb[0].mxu0
    %v3255 = vadd.f32 0.0, %v3254
    %v3256 = vpop.f32.mrb[0].mxu0
    %3257 = vdwg.mxu0
    %3258 = vrot.lane.b32.xlu0 %v639, 104
    %v3259 = vpop.permute.xlu0 %3258
    %3260 = vrot.lane.b32.xlu0 %v640, 104
    %v3261 = vpop.permute.xlu0 %3260
    %3262 = vrot.lane.b32.xlu0 %v641, 104
    %v3263 = vpop.permute.xlu0 %3262
    %3264 = vrot.lane.b32.xlu0 %v642, 104
    %v3265 = vpop.permute.xlu0 %3264
    %3266 = vrot.lane.b32.xlu0 %v643, 104
    %v3267 = vpop.permute.xlu0 %3266
    %3268 = vrot.lane.b32.xlu0 %v644, 104
    %v3269 = vpop.permute.xlu0 %3268
    %3270 = vrot.lane.b32.xlu0 %v645, 104
    %v3271 = vpop.permute.xlu0 %3270
    %3272 = vrot.lane.b32.xlu0 %v646, 104
    %v3273 = vpop.permute.xlu0 %3272
    %v3282 = vsel %vm647, %v3259, 0.0
    %3283 = vadd.xlane.f32.xlu0 %v3282
    %v3284 = vpop.xlane.xlu0 %3283
    %v3285 = vsel %vm647, %v3261, 0.0
    %3286 = vadd.xlane.f32.xlu0 %v3285
    %v3287 = vpop.xlane.xlu0 %3286
    %v3288 = vsel %vm647, %v3263, 0.0
    %3289 = vadd.xlane.f32.xlu0 %v3288
    %v3290 = vpop.xlane.xlu0 %3289
    %v3291 = vsel %vm647, %v3265, 0.0
    %3292 = vadd.xlane.f32.xlu0 %v3291
    %v3293 = vpop.xlane.xlu0 %3292
    %v3294 = vsel %vm647, %v3267, 0.0
    %3295 = vadd.xlane.f32.xlu0 %v3294
    %v3296 = vpop.xlane.xlu0 %3295
    %v3297 = vsel %vm647, %v3269, 0.0
    %3298 = vadd.xlane.f32.xlu0 %v3297
    %v3299 = vpop.xlane.xlu0 %3298
    %v3300 = vsel %vm647, %v3271, 0.0
    %3301 = vadd.xlane.f32.xlu0 %v3300
    %v3302 = vpop.xlane.xlu0 %3301
    %v3303 = vsel %vm647, %v3273, 0.0
    %3304 = vadd.xlane.f32.xlu0 %v3303
    %v3305 = vpop.xlane.xlu0 %3304
    %v3306 = vmul.f32 %v3284, %v672
    %v3307 = vmul.f32 %v3287, %v672
    %v3308 = vmul.f32 %v3290, %v672
    %v3309 = vmul.f32 %v3293, %v672
    %v3310 = vmul.f32 %v3296, %v672
    %v3311 = vmul.f32 %v3299, %v672
    %v3312 = vmul.f32 %v3302, %v672
    %v3313 = vmul.f32 %v3305, %v672
    %v3314 = vadd.f32 %v3306, 1.1920929e-07
    %v3315 = vadd.f32 %v3307, 1.1920929e-07
    %v3316 = vadd.f32 %v3308, 1.1920929e-07
    %v3317 = vadd.f32 %v3309, 1.1920929e-07
    %v3318 = vadd.f32 %v3310, 1.1920929e-07
    %v3319 = vadd.f32 %v3311, 1.1920929e-07
    %v3320 = vadd.f32 %v3312, 1.1920929e-07
    %v3321 = vadd.f32 %v3313, 1.1920929e-07
    %v3322 = vrsqrt.pop %v3314
    %v3323 = vrsqrt.pop %v3315
    %v3324 = vrsqrt.pop %v3316
    %v3325 = vrsqrt.pop %v3317
    %v3326 = vrsqrt.pop %v3318
    %v3327 = vrsqrt.pop %v3319
    %v3328 = vrsqrt.pop %v3320
    %v3329 = vrsqrt.pop %v3321
    %v3330 = vmul.f32 %v600, %v3322
    %v3331 = vmul.f32 %v605, %v3323
    %v3332 = vmul.f32 %v610, %v3324
    %v3333 = vmul.f32 %v615, %v3325
    %v3334 = vmul.f32 %v620, %v3326
    %v3335 = vmul.f32 %v625, %v3327
    %v3336 = vmul.f32 %v630, %v3328
    %v3337 = vmul.f32 %v635, %v3329
    %3346 = vrot.lane.b32.xlu0 %v3330, 100
    %v3347 = vpop.permute.xlu0 %3346
    %3348 = vrot.lane.b32.xlu0 %v3331, 100
    %v3349 = vpop.permute.xlu0 %3348
    %3350 = vrot.lane.b32.xlu0 %v3332, 100
    %v3351 = vpop.permute.xlu0 %3350
    %3352 = vrot.lane.b32.xlu0 %v3333, 100
    %v3353 = vpop.permute.xlu0 %3352
    %3354 = vrot.lane.b32.xlu0 %v3334, 100
    %v3355 = vpop.permute.xlu0 %3354
    %3356 = vrot.lane.b32.xlu0 %v3335, 100
    %v3357 = vpop.permute.xlu0 %3356
    %3358 = vrot.lane.b32.xlu0 %v3336, 100
    %v3359 = vpop.permute.xlu0 %3358
    %3360 = vrot.lane.b32.xlu0 %v3337, 100
    %v3361 = vpop.permute.xlu0 %3360
    %3370 = vrot.lane.b32.xlu0 %v3330, 108
    %v3371 = vpop.permute.xlu0 %3370
    %3372 = vrot.lane.b32.xlu0 %v3331, 108
    %v3373 = vpop.permute.xlu0 %3372
    %3374 = vrot.lane.b32.xlu0 %v3332, 108
    %v3375 = vpop.permute.xlu0 %3374
    %3376 = vrot.lane.b32.xlu0 %v3333, 108
    %v3377 = vpop.permute.xlu0 %3376
    %3378 = vrot.lane.b32.xlu0 %v3334, 108
    %v3379 = vpop.permute.xlu0 %3378
    %3380 = vrot.lane.b32.xlu0 %v3335, 108
    %v3381 = vpop.permute.xlu0 %3380
    %3382 = vrot.lane.b32.xlu0 %v3336, 108
    %v3383 = vpop.permute.xlu0 %3382
    %3384 = vrot.lane.b32.xlu0 %v3337, 108
    %v3385 = vpop.permute.xlu0 %3384
    %v3394 = vsel %vm761, %v3347, %v3371
    %v3395 = vsel %vm761, %v3349, %v3373
    %v3396 = vsel %vm761, %v3351, %v3375
    %v3397 = vsel %vm761, %v3353, %v3377
    %v3398 = vsel %vm761, %v3355, %v3379
    %v3399 = vsel %vm761, %v3357, %v3381
    %v3400 = vsel %vm761, %v3359, %v3383
    %v3401 = vsel %vm761, %v3361, %v3385
    %3402 = vrot.lane.b32.xlu0 %v363, 24
    %v3403 = vpop.permute.xlu0 %3402
    %3404 = vrot.lane.b32.xlu0 %v364, 24
    %v3405 = vpop.permute.xlu0 %3404
    %3406 = vrot.lane.b32.xlu0 %v365, 24
    %v3407 = vpop.permute.xlu0 %3406
    %3408 = vrot.lane.b32.xlu0 %v366, 24
    %v3409 = vpop.permute.xlu0 %3408
    %3410 = vrot.lane.b32.xlu0 %v367, 24
    %v3411 = vpop.permute.xlu0 %3410
    %3412 = vrot.lane.b32.xlu0 %v368, 24
    %v3413 = vpop.permute.xlu0 %3412
    %3414 = vrot.lane.b32.xlu0 %v369, 24
    %v3415 = vpop.permute.xlu0 %3414
    %3416 = vrot.lane.b32.xlu0 %v370, 24
    %v3417 = vpop.permute.xlu0 %3416
    %v3426 = vmul.f32 %v3330, %v3403
    %v3427 = vmul.f32 %v3331, %v3405
    %v3428 = vmul.f32 %v3332, %v3407
    %v3429 = vmul.f32 %v3333, %v3409
    %v3430 = vmul.f32 %v3334, %v3411
    %v3431 = vmul.f32 %v3335, %v3413
    %v3432 = vmul.f32 %v3336, %v3415
    %v3433 = vmul.f32 %v3337, %v3417
    %v3434 = vmul.f32 %v3394, %v371
    %v3435 = vmul.f32 %v3395, %v372
    %v3436 = vmul.f32 %v3396, %v373
    %v3437 = vmul.f32 %v3397, %v374
    %v3438 = vmul.f32 %v3398, %v375
    %v3439 = vmul.f32 %v3399, %v376
    %v3440 = vmul.f32 %v3400, %v377
    %v3441 = vmul.f32 %v3401, %v378
    %3450 = vrot.lane.b32.xlu0 %v3434, 24
    %v3451 = vpop.permute.xlu0 %3450
    %3452 = vrot.lane.b32.xlu0 %v3435, 24
    %v3453 = vpop.permute.xlu0 %3452
    %3454 = vrot.lane.b32.xlu0 %v3436, 24
    %v3455 = vpop.permute.xlu0 %3454
    %3456 = vrot.lane.b32.xlu0 %v3437, 24
    %v3457 = vpop.permute.xlu0 %3456
    %3458 = vrot.lane.b32.xlu0 %v3438, 24
    %v3459 = vpop.permute.xlu0 %3458
    %3460 = vrot.lane.b32.xlu0 %v3439, 24
    %v3461 = vpop.permute.xlu0 %3460
    %3462 = vrot.lane.b32.xlu0 %v3440, 24
    %v3463 = vpop.permute.xlu0 %3462
    %3464 = vrot.lane.b32.xlu0 %v3441, 24
    %v3465 = vpop.permute.xlu0 %3464
    %v3474 = vadd.f32 %v3426, %v3451
    %v3475 = vadd.f32 %v3427, %v3453
    %v3476 = vadd.f32 %v3428, %v3455
    %v3477 = vadd.f32 %v3429, %v3457
    %v3478 = vadd.f32 %v3430, %v3459
    %v3479 = vadd.f32 %v3431, %v3461
    %v3480 = vadd.f32 %v3432, %v3463
    %v3481 = vadd.f32 %v3433, %v3465
    %3482 = vrot.lane.b32.xlu0 %v639, 72
    %v3483 = vpop.permute.xlu0 %3482
    %3484 = vrot.lane.b32.xlu0 %v640, 72
    %v3485 = vpop.permute.xlu0 %3484
    %3486 = vrot.lane.b32.xlu0 %v641, 72
    %v3487 = vpop.permute.xlu0 %3486
    %3488 = vrot.lane.b32.xlu0 %v642, 72
    %v3489 = vpop.permute.xlu0 %3488
    %3490 = vrot.lane.b32.xlu0 %v643, 72
    %v3491 = vpop.permute.xlu0 %3490
    %3492 = vrot.lane.b32.xlu0 %v644, 72
    %v3493 = vpop.permute.xlu0 %3492
    %3494 = vrot.lane.b32.xlu0 %v645, 72
    %v3495 = vpop.permute.xlu0 %3494
    %3496 = vrot.lane.b32.xlu0 %v646, 72
    %v3497 = vpop.permute.xlu0 %3496
    %v3506 = vsel %vm647, %v3483, 0.0
    %3507 = vadd.xlane.f32.xlu0 %v3506
    %v3508 = vpop.xlane.xlu0 %3507
    %v3509 = vsel %vm647, %v3485, 0.0
    %3510 = vadd.xlane.f32.xlu0 %v3509
    %v3511 = vpop.xlane.xlu0 %3510
    %v3512 = vsel %vm647, %v3487, 0.0
    %3513 = vadd.xlane.f32.xlu0 %v3512
    %v3514 = vpop.xlane.xlu0 %3513
    %v3515 = vsel %vm647, %v3489, 0.0
    %3516 = vadd.xlane.f32.xlu0 %v3515
    %v3517 = vpop.xlane.xlu0 %3516
    %v3518 = vsel %vm647, %v3491, 0.0
    %3519 = vadd.xlane.f32.xlu0 %v3518
    %v3520 = vpop.xlane.xlu0 %3519
    %v3521 = vsel %vm647, %v3493, 0.0
    %3522 = vadd.xlane.f32.xlu0 %v3521
    %v3523 = vpop.xlane.xlu0 %3522
    %v3524 = vsel %vm647, %v3495, 0.0
    %3525 = vadd.xlane.f32.xlu0 %v3524
    %v3526 = vpop.xlane.xlu0 %3525
    %v3527 = vsel %vm647, %v3497, 0.0
    %3528 = vadd.xlane.f32.xlu0 %v3527
    %v3529 = vpop.xlane.xlu0 %3528
    %v3530 = vmul.f32 %v3508, %v672
    %v3531 = vmul.f32 %v3511, %v672
    %v3532 = vmul.f32 %v3514, %v672
    %v3533 = vmul.f32 %v3517, %v672
    %v3534 = vmul.f32 %v3520, %v672
    %v3535 = vmul.f32 %v3523, %v672
    %v3536 = vmul.f32 %v3526, %v672
    %v3537 = vmul.f32 %v3529, %v672
    %v3538 = vadd.f32 %v3530, 1.1920929e-07
    %v3539 = vadd.f32 %v3531, 1.1920929e-07
    %v3540 = vadd.f32 %v3532, 1.1920929e-07
    %v3541 = vadd.f32 %v3533, 1.1920929e-07
    %v3542 = vadd.f32 %v3534, 1.1920929e-07
    %v3543 = vadd.f32 %v3535, 1.1920929e-07
    %v3544 = vadd.f32 %v3536, 1.1920929e-07
    %v3545 = vadd.f32 %v3537, 1.1920929e-07
    %v3546 = vrsqrt.pop %v3538
    %v3547 = vrsqrt.pop %v3539
    %v3548 = vrsqrt.pop %v3540
    %v3549 = vrsqrt.pop %v3541
    %v3550 = vrsqrt.pop %v3542
    %v3551 = vrsqrt.pop %v3543
    %v3552 = vrsqrt.pop %v3544
    %v3553 = vrsqrt.pop %v3545
    %v3554 = vmul.f32 %v600, %v3546
    %v3555 = vmul.f32 %v605, %v3547
    %v3556 = vmul.f32 %v610, %v3548
    %v3557 = vmul.f32 %v615, %v3549
    %v3558 = vmul.f32 %v620, %v3550
    %v3559 = vmul.f32 %v625, %v3551
    %v3560 = vmul.f32 %v630, %v3552
    %v3561 = vmul.f32 %v635, %v3553
    %3570 = vrot.lane.b32.xlu0 %v3554, 68
    %v3571 = vpop.permute.xlu0 %3570
    %3572 = vrot.lane.b32.xlu0 %v3555, 68
    %v3573 = vpop.permute.xlu0 %3572
    %3574 = vrot.lane.b32.xlu0 %v3556, 68
    %v3575 = vpop.permute.xlu0 %3574
    %3576 = vrot.lane.b32.xlu0 %v3557, 68
    %v3577 = vpop.permute.xlu0 %3576
    %3578 = vrot.lane.b32.xlu0 %v3558, 68
    %v3579 = vpop.permute.xlu0 %3578
    %3580 = vrot.lane.b32.xlu0 %v3559, 68
    %v3581 = vpop.permute.xlu0 %3580
    %3582 = vrot.lane.b32.xlu0 %v3560, 68
    %v3583 = vpop.permute.xlu0 %3582
    %3584 = vrot.lane.b32.xlu0 %v3561, 68
    %v3585 = vpop.permute.xlu0 %3584
    %3594 = vrot.lane.b32.xlu0 %v3554, 76
    %v3595 = vpop.permute.xlu0 %3594
    %3596 = vrot.lane.b32.xlu0 %v3555, 76
    %v3597 = vpop.permute.xlu0 %3596
    %3598 = vrot.lane.b32.xlu0 %v3556, 76
    %v3599 = vpop.permute.xlu0 %3598
    %3600 = vrot.lane.b32.xlu0 %v3557, 76
    %v3601 = vpop.permute.xlu0 %3600
    %3602 = vrot.lane.b32.xlu0 %v3558, 76
    %v3603 = vpop.permute.xlu0 %3602
    %3604 = vrot.lane.b32.xlu0 %v3559, 76
    %v3605 = vpop.permute.xlu0 %3604
    %3606 = vrot.lane.b32.xlu0 %v3560, 76
    %v3607 = vpop.permute.xlu0 %3606
    %3608 = vrot.lane.b32.xlu0 %v3561, 76
    %v3609 = vpop.permute.xlu0 %3608
    %v3618 = vsel %vm761, %v3571, %v3595
    %v3619 = vsel %vm761, %v3573, %v3597
    %v3620 = vsel %vm761, %v3575, %v3599
    %v3621 = vsel %vm761, %v3577, %v3601
    %v3622 = vsel %vm761, %v3579, %v3603
    %v3623 = vsel %vm761, %v3581, %v3605
    %v3624 = vsel %vm761, %v3583, %v3607
    %v3625 = vsel %vm761, %v3585, %v3609
    %3626 = vrot.lane.b32.xlu0 %v363, 56
    %v3627 = vpop.permute.xlu0 %3626
    %3628 = vrot.lane.b32.xlu0 %v364, 56
    %v3629 = vpop.permute.xlu0 %3628
    %3630 = vrot.lane.b32.xlu0 %v365, 56
    %v3631 = vpop.permute.xlu0 %3630
    %3632 = vrot.lane.b32.xlu0 %v366, 56
    %v3633 = vpop.permute.xlu0 %3632
    %3634 = vrot.lane.b32.xlu0 %v367, 56
    %v3635 = vpop.permute.xlu0 %3634
    %3636 = vrot.lane.b32.xlu0 %v368, 56
    %v3637 = vpop.permute.xlu0 %3636
    %3638 = vrot.lane.b32.xlu0 %v369, 56
    %v3639 = vpop.permute.xlu0 %3638
    %3640 = vrot.lane.b32.xlu0 %v370, 56
    %v3641 = vpop.permute.xlu0 %3640
    %v3650 = vmul.f32 %v3554, %v3627
    %v3651 = vmul.f32 %v3555, %v3629
    %v3652 = vmul.f32 %v3556, %v3631
    %v3653 = vmul.f32 %v3557, %v3633
    %v3654 = vmul.f32 %v3558, %v3635
    %v3655 = vmul.f32 %v3559, %v3637
    %v3656 = vmul.f32 %v3560, %v3639
    %v3657 = vmul.f32 %v3561, %v3641
    %v3658 = vmul.f32 %v3618, %v371
    %v3659 = vmul.f32 %v3619, %v372
    %v3660 = vmul.f32 %v3620, %v373
    %v3661 = vmul.f32 %v3621, %v374
    %v3662 = vmul.f32 %v3622, %v375
    %v3663 = vmul.f32 %v3623, %v376
    %v3664 = vmul.f32 %v3624, %v377
    %v3665 = vmul.f32 %v3625, %v378
    %3674 = vrot.lane.b32.xlu0 %v3658, 56
    %v3675 = vpop.permute.xlu0 %3674
    %3676 = vrot.lane.b32.xlu0 %v3659, 56
    %v3677 = vpop.permute.xlu0 %3676
    %3678 = vrot.lane.b32.xlu0 %v3660, 56
    %v3679 = vpop.permute.xlu0 %3678
    %3680 = vrot.lane.b32.xlu0 %v3661, 56
    %v3681 = vpop.permute.xlu0 %3680
    %3682 = vrot.lane.b32.xlu0 %v3662, 56
    %v3683 = vpop.permute.xlu0 %3682
    %3684 = vrot.lane.b32.xlu0 %v3663, 56
    %v3685 = vpop.permute.xlu0 %3684
    %3686 = vrot.lane.b32.xlu0 %v3664, 56
    %v3687 = vpop.permute.xlu0 %3686
    %3688 = vrot.lane.b32.xlu0 %v3665, 56
    %v3689 = vpop.permute.xlu0 %3688
    %v3698 = vadd.f32 %v3650, %v3675
    %v3699 = vadd.f32 %v3651, %v3677
    %v3700 = vadd.f32 %v3652, %v3679
    %v3701 = vadd.f32 %v3653, %v3681
    %v3702 = vadd.f32 %v3654, %v3683
    %v3703 = vadd.f32 %v3655, %v3685
    %v3704 = vadd.f32 %v3656, %v3687
    %v3705 = vadd.f32 %v3657, %v3689
    %3714 = vrot.lane.b32.xlu0 %v3474, 104
    %v3715 = vpop.permute.xlu0 %3714
    %3716 = vrot.lane.b32.xlu0 %v3475, 104
    %v3717 = vpop.permute.xlu0 %3716
    %3718 = vrot.lane.b32.xlu0 %v3476, 104
    %v3719 = vpop.permute.xlu0 %3718
    %3720 = vrot.lane.b32.xlu0 %v3477, 104
    %v3721 = vpop.permute.xlu0 %3720
    %3722 = vrot.lane.b32.xlu0 %v3478, 104
    %v3723 = vpop.permute.xlu0 %3722
    %3724 = vrot.lane.b32.xlu0 %v3479, 104
    %v3725 = vpop.permute.xlu0 %3724
    %3726 = vrot.lane.b32.xlu0 %v3480, 104
    %v3727 = vpop.permute.xlu0 %3726
    %3728 = vrot.lane.b32.xlu0 %v3481, 104
    %v3729 = vpop.permute.xlu0 %3728
    %3738 = vrot.lane.b32.xlu0 %v3698, 72
    %v3739 = vpop.permute.xlu0 %3738
    %3740 = vrot.lane.b32.xlu0 %v3699, 72
    %v3741 = vpop.permute.xlu0 %3740
    %3742 = vrot.lane.b32.xlu0 %v3700, 72
    %v3743 = vpop.permute.xlu0 %3742
    %3744 = vrot.lane.b32.xlu0 %v3701, 72
    %v3745 = vpop.permute.xlu0 %3744
    %3746 = vrot.lane.b32.xlu0 %v3702, 72
    %v3747 = vpop.permute.xlu0 %3746
    %3748 = vrot.lane.b32.xlu0 %v3703, 72
    %v3749 = vpop.permute.xlu0 %3748
    %3750 = vrot.lane.b32.xlu0 %v3704, 72
    %v3751 = vpop.permute.xlu0 %3750
    %3752 = vrot.lane.b32.xlu0 %v3705, 72
    %v3753 = vpop.permute.xlu0 %3752
    %v3754 = vsel %vm647, %v3715, 0
    %v3756 = vsel %vm647, %v3717, 0
    %v3758 = vsel %vm647, %v3719, 0
    %v3760 = vsel %vm647, %v3721, 0
    %v3762 = vsel %vm647, %v3723, 0
    %v3764 = vsel %vm647, %v3725, 0
    %v3766 = vsel %vm647, %v3727, 0
    %v3768 = vsel %vm647, %v3729, 0
    %v3770 = vsel %vm647, %v3739, 0
    %v3772 = vsel %vm647, %v3741, 0
    %v3774 = vsel %vm647, %v3743, 0
    %v3776 = vsel %vm647, %v3745, 0
    %v3778 = vsel %vm647, %v3747, 0
    %v3780 = vsel %vm647, %v3749, 0
    %v3782 = vsel %vm647, %v3751, 0
    %v3784 = vsel %vm647, %v3753, 0
    %3786 = vmatprep.subr.mxu0 0.0
    %3787 = vmatpush1.xpose.msra.mxu0 %v3770
    %3788 = vmatprep.subr.mxu0 0.0
    %3789 = vmatpush1.xpose.msra.mxu0 %v3772
    %3790 = vmatprep.subr.mxu0 0.0
    %3791 = vmatpush1.xpose.msra.mxu0 %v3774
    %3792 = vmatprep.subr.mxu0 0.0
    %3793 = vmatpush1.xpose.msra.mxu0 %v3776
    %3794 = vmatprep.subr.mxu0 0.0
    %3795 = vmatpush1.xpose.msra.mxu0 %v3778
    %3796 = vmatprep.subr.mxu0 0.0
    %3797 = vmatpush1.xpose.msra.mxu0 %v3780
    %3798 = vmatprep.subr.mxu0 0.0
    %3799 = vmatpush1.xpose.msra.mxu0 %v3782
    %3800 = vmatprep.subr.mxu0 0.0
    %3801 = vmatpush1.xpose.msra.mxu0 %v3784
    %3802 = vmatprep.subr.mxu0 0.0
    %3803 = vmatpush1.xpose.msra.mxu0 0.0
    %3804 = vmatprep.subr.mxu0 0.0
    %3805 = vmatpush1.xpose.msra.mxu0 0.0
    %3806 = vmatprep.subr.mxu0 0.0
    %3807 = vmatpush1.xpose.msra.mxu0 0.0
    %3808 = vmatprep.subr.mxu0 0.0
    %3809 = vmatpush1.xpose.msra.mxu0 0.0
    %3810 = vmatprep.subr.mxu0 0.0
    %3811 = vmatpush1.xpose.msra.mxu0 0.0
    %3812 = vmatprep.subr.mxu0 0.0
    %3813 = vmatpush1.xpose.msra.mxu0 0.0
    %3814 = vmatprep.subr.mxu0 0.0
    %3815 = vmatpush1.xpose.msra.mxu0 0.0
    %3816 = vmatprep.subr.mxu0 0.0
    %3817 = vmatpush1.xpose.msra.mxu0 0.0
    %3818 = vmatprep.subr.mxu0 0.0
    %3819 = vmatpush1.xpose.msra.mxu0 0.0
    %3820 = vmatprep.subr.mxu0 0.0
    %3821 = vmatpush1.xpose.msra.mxu0 0.0
    %3822 = vmatprep.subr.mxu0 0.0
    %3823 = vmatpush1.xpose.msra.mxu0 0.0
    %3824 = vmatprep.subr.mxu0 0.0
    %3825 = vmatpush1.xpose.msra.mxu0 0.0
    %3826 = vmatprep.subr.mxu0 0.0
    %3827 = vmatpush1.xpose.msra.mxu0 0.0
    %3828 = vmatprep.subr.mxu0 0.0
    %3829 = vmatpush1.xpose.msra.mxu0 0.0
    %3830 = vmatprep.subr.mxu0 0.0
    %3831 = vmatpush1.xpose.msra.mxu0 0.0
    %3832 = vmatprep.subr.mxu0 0.0
    %3833 = vmatpush1.xpose.msra.mxu0 0.0
    %3834 = vmatprep.subr.mxu0 0.0
    %3835 = vmatpush1.xpose.msra.mxu0 0.0
    %3836 = vmatprep.subr.mxu0 0.0
    %3837 = vmatpush1.xpose.msra.mxu0 0.0
    %3838 = vmatprep.subr.mxu0 0.0
    %3839 = vmatpush1.xpose.msra.mxu0 0.0
    %3840 = vmatprep.subr.mxu0 0.0
    %3841 = vmatpush1.xpose.msra.mxu0 0.0
    %3842 = vmatprep.subr.mxu0 0.0
    %3843 = vmatpush1.xpose.msra.mxu0 0.0
    %3844 = vmatprep.subr.mxu0 0.0
    %3845 = vmatpush1.xpose.msra.mxu0 0.0
    %3846 = vmatprep.subr.mxu0 0.0
    %3847 = vmatpush1.xpose.msra.mxu0 0.0
    %3848 = vmatprep.subr.mxu0 0.0
    %3849 = vmatpush1.xpose.msra.mxu0 0.0
    %3850 = vmatprep.mubr.f32.mxu0 0.0
    %3851 = vmatmul.mubr.f32.gmra.mrb[0].mxu0 %v3754
    %v3852 = vpop.f32.mrb[0].mxu0
    %v3853 = vadd.f32 0.0, %v3852
    %v3854 = vpop.f32.mrb[0].mxu0
    %3855 = vmatprep.mubr.f32.mxu0 0.0
    %3856 = vmatmul.mubr.f32.gmra.mrb[0].mxu0 %v3756
    %v3857 = vpop.f32.mrb[0].mxu0
    %v3858 = vadd.f32 0.0, %v3857
    %v3859 = vpop.f32.mrb[0].mxu0
    %3860 = vmatprep.mubr.f32.mxu0 0.0
    %3861 = vmatmul.mubr.f32.gmra.mrb[0].mxu0 %v3758
    %v3862 = vpop.f32.mrb[0].mxu0
    %v3863 = vadd.f32 0.0, %v3862
    %v3864 = vpop.f32.mrb[0].mxu0
    %3865 = vmatprep.mubr.f32.mxu0 0.0
    %3866 = vmatmul.mubr.f32.gmra.mrb[0].mxu0 %v3760
    %v3867 = vpop.f32.mrb[0].mxu0
    %v3868 = vadd.f32 0.0, %v3867
    %v3869 = vpop.f32.mrb[0].mxu0
    %3870 = vmatprep.mubr.f32.mxu0 0.0
    %3871 = vmatmul.mubr.f32.gmra.mrb[0].mxu0 %v3762
    %v3872 = vpop.f32.mrb[0].mxu0
    %v3873 = vadd.f32 0.0, %v3872
    %v3874 = vpop.f32.mrb[0].mxu0
    %3875 = vmatprep.mubr.f32.mxu0 0.0
    %3876 = vmatmul.mubr.f32.gmra.mrb[0].mxu0 %v3764
    %v3877 = vpop.f32.mrb[0].mxu0
    %v3878 = vadd.f32 0.0, %v3877
    %v3879 = vpop.f32.mrb[0].mxu0
    %3880 = vmatprep.mubr.f32.mxu0 0.0
    %3881 = vmatmul.mubr.f32.gmra.mrb[0].mxu0 %v3766
    %v3882 = vpop.f32.mrb[0].mxu0
    %v3883 = vadd.f32 0.0, %v3882
    %v3884 = vpop.f32.mrb[0].mxu0
    %3885 = vmatprep.mubr.f32.mxu0 0.0
    %3886 = vmatmul.mubr.f32.gmra.mrb[0].mxu0 %v3768
    %v3887 = vpop.f32.mrb[0].mxu0
    %v3888 = vadd.f32 0.0, %v3887
    %v3889 = vpop.f32.mrb[0].mxu0
    %3890 = vdwg.mxu0
    %v3891 = vmul.f32 %v3853, 0.35355338
    %v3892 = vmul.f32 %v3858, 0.35355338
    %v3893 = vmul.f32 %v3863, 0.35355338
    %v3894 = vmul.f32 %v3868, 0.35355338
    %v3895 = vmul.f32 %v3873, 0.35355338
    %v3896 = vmul.f32 %v3878, 0.35355338
    %v3897 = vmul.f32 %v3883, 0.35355338
    %v3898 = vmul.f32 %v3888, 0.35355338
    %v3899 = vadd.f32 %v3891, %v379
    %v3900 = vadd.f32 %v3892, %v380
    %v3901 = vadd.f32 %v3893, %v381
    %v3902 = vadd.f32 %v3894, %v382
    %v3903 = vadd.f32 %v3895, %v383
    %v3904 = vadd.f32 %v3896, %v384
    %v3905 = vadd.f32 %v3897, %v385
    %v3906 = vadd.f32 %v3898, %v386
    %v3907 = vsel %vm1228, %v3899, -inf
    %3908 = vmax.xlane.f32.xlu0 %v3907
    %v3909 = vpop.xlane.xlu0 %3908
    %v3910 = vsel %vm1228, %v3900, -inf
    %3911 = vmax.xlane.f32.xlu0 %v3910
    %v3912 = vpop.xlane.xlu0 %3911
    %v3913 = vsel %vm1228, %v3901, -inf
    %3914 = vmax.xlane.f32.xlu0 %v3913
    %v3915 = vpop.xlane.xlu0 %3914
    %v3916 = vsel %vm1228, %v3902, -inf
    %3917 = vmax.xlane.f32.xlu0 %v3916
    %v3918 = vpop.xlane.xlu0 %3917
    %v3919 = vsel %vm1228, %v3903, -inf
    %3920 = vmax.xlane.f32.xlu0 %v3919
    %v3921 = vpop.xlane.xlu0 %3920
    %v3922 = vsel %vm1228, %v3904, -inf
    %3923 = vmax.xlane.f32.xlu0 %v3922
    %v3924 = vpop.xlane.xlu0 %3923
    %v3925 = vsel %vm1228, %v3905, -inf
    %3926 = vmax.xlane.f32.xlu0 %v3925
    %v3927 = vpop.xlane.xlu0 %3926
    %v3928 = vsel %vm1228, %v3906, -inf
    %3929 = vmax.xlane.f32.xlu0 %v3928
    %v3930 = vpop.xlane.xlu0 %3929
    %v3931 = vsub.f32 %v3899, %v3909
    %v3932 = vsub.f32 %v3900, %v3912
    %v3933 = vsub.f32 %v3901, %v3915
    %v3934 = vsub.f32 %v3902, %v3918
    %v3935 = vsub.f32 %v3903, %v3921
    %v3936 = vsub.f32 %v3904, %v3924
    %v3937 = vsub.f32 %v3905, %v3927
    %v3938 = vsub.f32 %v3906, %v3930
    %v3939 = vmul.f32 %v3931, 1.442695
    %v3940 = vpow.pop %v3939
    %v3941 = vmul.f32 %v3932, 1.442695
    %v3942 = vpow.pop %v3941
    %v3943 = vmul.f32 %v3933, 1.442695
    %v3944 = vpow.pop %v3943
    %v3945 = vmul.f32 %v3934, 1.442695
    %v3946 = vpow.pop %v3945
    %v3947 = vmul.f32 %v3935, 1.442695
    %v3948 = vpow.pop %v3947
    %v3949 = vmul.f32 %v3936, 1.442695
    %v3950 = vpow.pop %v3949
    %v3951 = vmul.f32 %v3937, 1.442695
    %v3952 = vpow.pop %v3951
    %v3953 = vmul.f32 %v3938, 1.442695
    %v3954 = vpow.pop %v3953
    %v3955 = vsel %vm1228, %v3940, 0.0
    %3956 = vadd.xlane.f32.xlu0 %v3955
    %v3957 = vpop.xlane.xlu0 %3956
    %v3958 = vsel %vm1228, %v3942, 0.0
    %3959 = vadd.xlane.f32.xlu0 %v3958
    %v3960 = vpop.xlane.xlu0 %3959
    %v3961 = vsel %vm1228, %v3944, 0.0
    %3962 = vadd.xlane.f32.xlu0 %v3961
    %v3963 = vpop.xlane.xlu0 %3962
    %v3964 = vsel %vm1228, %v3946, 0.0
    %3965 = vadd.xlane.f32.xlu0 %v3964
    %v3966 = vpop.xlane.xlu0 %3965
    %v3967 = vsel %vm1228, %v3948, 0.0
    %3968 = vadd.xlane.f32.xlu0 %v3967
    %v3969 = vpop.xlane.xlu0 %3968
    %v3970 = vsel %vm1228, %v3950, 0.0
    %3971 = vadd.xlane.f32.xlu0 %v3970
    %v3972 = vpop.xlane.xlu0 %3971
    %v3973 = vsel %vm1228, %v3952, 0.0
    %3974 = vadd.xlane.f32.xlu0 %v3973
    %v3975 = vpop.xlane.xlu0 %3974
    %v3976 = vsel %vm1228, %v3954, 0.0
    %3977 = vadd.xlane.f32.xlu0 %v3976
    %v3978 = vpop.xlane.xlu0 %3977
    %v3979 = vrcp.pop %v3957
    %v3980 = vmul.f32 %v3940, %v3979
    %v3981 = vrcp.pop %v3960
    %v3982 = vmul.f32 %v3942, %v3981
    %v3983 = vrcp.pop %v3963
    %v3984 = vmul.f32 %v3944, %v3983
    %v3985 = vrcp.pop %v3966
    %v3986 = vmul.f32 %v3946, %v3985
    %v3987 = vrcp.pop %v3969
    %v3988 = vmul.f32 %v3948, %v3987
    %v3989 = vrcp.pop %v3972
    %v3990 = vmul.f32 %v3950, %v3989
    %v3991 = vrcp.pop %v3975
    %v3992 = vmul.f32 %v3952, %v3991
    %v3993 = vrcp.pop %v3978
    %v3994 = vmul.f32 %v3954, %v3993
    %3995 = vrot.lane.b32.xlu0 %v1035, 40
    %v3996 = vpop.permute.xlu0 %3995
    %3997 = vrot.lane.b32.xlu0 %v1036, 40
    %v3998 = vpop.permute.xlu0 %3997
    %3999 = vrot.lane.b32.xlu0 %v1037, 40
    %v4000 = vpop.permute.xlu0 %3999
    %4001 = vrot.lane.b32.xlu0 %v1038, 40
    %v4002 = vpop.permute.xlu0 %4001
    %4003 = vrot.lane.b32.xlu0 %v1039, 40
    %v4004 = vpop.permute.xlu0 %4003
    %4005 = vrot.lane.b32.xlu0 %v1040, 40
    %v4006 = vpop.permute.xlu0 %4005
    %4007 = vrot.lane.b32.xlu0 %v1041, 40
    %v4008 = vpop.permute.xlu0 %4007
    %4009 = vrot.lane.b32.xlu0 %v1042, 40
    %v4010 = vpop.permute.xlu0 %4009
    %v4020 = vsel %vm1228, %v3980, 0
    %v4023 = vsel %vm1228, %v3982, 0
    %v4026 = vsel %vm1228, %v3984, 0
    %v4029 = vsel %vm1228, %v3986, 0
    %v4032 = vsel %vm1228, %v3988, 0
    %v4035 = vsel %vm1228, %v3990, 0
    %v4038 = vsel %vm1228, %v3992, 0
    %v4041 = vsel %vm1228, %v3994, 0
    %4043 = vmatprep.subr.mxu0 0.0
    %4044 = vmatpush1.msra.mxu0 %v3996
    %4045 = vmatprep.subr.mxu0 0.0
    %4046 = vmatpush1.msra.mxu0 %v3998
    %4047 = vmatprep.subr.mxu0 0.0
    %4048 = vmatpush1.msra.mxu0 %v4000
    %4049 = vmatprep.subr.mxu0 0.0
    %4050 = vmatpush1.msra.mxu0 %v4002
    %4051 = vmatprep.subr.mxu0 0.0
    %4052 = vmatpush1.msra.mxu0 %v4004
    %4053 = vmatprep.subr.mxu0 0.0
    %4054 = vmatpush1.msra.mxu0 %v4006
    %4055 = vmatprep.subr.mxu0 0.0
    %4056 = vmatpush1.msra.mxu0 %v4008
    %4057 = vmatprep.subr.mxu0 0.0
    %4058 = vmatpush1.msra.mxu0 %v4010
    %4059 = vmatprep.subr.mxu0 0.0
    %4060 = vmatpush1.msra.mxu0 0.0
    %4061 = vmatprep.subr.mxu0 0.0
    %4062 = vmatpush1.msra.mxu0 0.0
    %4063 = vmatprep.subr.mxu0 0.0
    %4064 = vmatpush1.msra.mxu0 0.0
    %4065 = vmatprep.subr.mxu0 0.0
    %4066 = vmatpush1.msra.mxu0 0.0
    %4067 = vmatprep.subr.mxu0 0.0
    %4068 = vmatpush1.msra.mxu0 0.0
    %4069 = vmatprep.subr.mxu0 0.0
    %4070 = vmatpush1.msra.mxu0 0.0
    %4071 = vmatprep.subr.mxu0 0.0
    %4072 = vmatpush1.msra.mxu0 0.0
    %4073 = vmatprep.subr.mxu0 0.0
    %4074 = vmatpush1.msra.mxu0 0.0
    %4075 = vmatprep.subr.mxu0 0.0
    %4076 = vmatpush1.msra.mxu0 0.0
    %4077 = vmatprep.subr.mxu0 0.0
    %4078 = vmatpush1.msra.mxu0 0.0
    %4079 = vmatprep.subr.mxu0 0.0
    %4080 = vmatpush1.msra.mxu0 0.0
    %4081 = vmatprep.subr.mxu0 0.0
    %4082 = vmatpush1.msra.mxu0 0.0
    %4083 = vmatprep.subr.mxu0 0.0
    %4084 = vmatpush1.msra.mxu0 0.0
    %4085 = vmatprep.subr.mxu0 0.0
    %4086 = vmatpush1.msra.mxu0 0.0
    %4087 = vmatprep.subr.mxu0 0.0
    %4088 = vmatpush1.msra.mxu0 0.0
    %4089 = vmatprep.subr.mxu0 0.0
    %4090 = vmatpush1.msra.mxu0 0.0
    %4091 = vmatprep.subr.mxu0 0.0
    %4092 = vmatpush1.msra.mxu0 0.0
    %4093 = vmatprep.subr.mxu0 0.0
    %4094 = vmatpush1.msra.mxu0 0.0
    %4095 = vmatprep.subr.mxu0 0.0
    %4096 = vmatpush1.msra.mxu0 0.0
    %4097 = vmatprep.subr.mxu0 0.0
    %4098 = vmatpush1.msra.mxu0 0.0
    %4099 = vmatprep.subr.mxu0 0.0
    %4100 = vmatpush1.msra.mxu0 0.0
    %4101 = vmatprep.subr.mxu0 0.0
    %4102 = vmatpush1.msra.mxu0 0.0
    %4103 = vmatprep.subr.mxu0 0.0
    %4104 = vmatpush1.msra.mxu0 0.0
    %4105 = vmatprep.subr.mxu0 0.0
    %4106 = vmatpush1.msra.mxu0 0.0
    %4107 = vmatprep.mubr.f32.mxu0 0.0
    %4108 = vmatmul.mubr.f32.gmra.mrb[0].mxu0 %v4020
    %v4109 = vpop.f32.mrb[0].mxu0
    %v4110 = vadd.f32 0.0, %v4109
    %v4111 = vpop.f32.mrb[0].mxu0
    %4112 = vmatprep.mubr.f32.mxu0 0.0
    %4113 = vmatmul.mubr.f32.gmra.mrb[0].mxu0 %v4023
    %v4114 = vpop.f32.mrb[0].mxu0
    %v4115 = vadd.f32 0.0, %v4114
    %v4116 = vpop.f32.mrb[0].mxu0
    %4117 = vmatprep.mubr.f32.mxu0 0.0
    %4118 = vmatmul.mubr.f32.gmra.mrb[0].mxu0 %v4026
    %v4119 = vpop.f32.mrb[0].mxu0
    %v4120 = vadd.f32 0.0, %v4119
    %v4121 = vpop.f32.mrb[0].mxu0
    %4122 = vmatprep.mubr.f32.mxu0 0.0
    %4123 = vmatmul.mubr.f32.gmra.mrb[0].mxu0 %v4029
    %v4124 = vpop.f32.mrb[0].mxu0
    %v4125 = vadd.f32 0.0, %v4124
    %v4126 = vpop.f32.mrb[0].mxu0
    %4127 = vmatprep.mubr.f32.mxu0 0.0
    %4128 = vmatmul.mubr.f32.gmra.mrb[0].mxu0 %v4032
    %v4129 = vpop.f32.mrb[0].mxu0
    %v4130 = vadd.f32 0.0, %v4129
    %v4131 = vpop.f32.mrb[0].mxu0
    %4132 = vmatprep.mubr.f32.mxu0 0.0
    %4133 = vmatmul.mubr.f32.gmra.mrb[0].mxu0 %v4035
    %v4134 = vpop.f32.mrb[0].mxu0
    %v4135 = vadd.f32 0.0, %v4134
    %v4136 = vpop.f32.mrb[0].mxu0
    %4137 = vmatprep.mubr.f32.mxu0 0.0
    %4138 = vmatmul.mubr.f32.gmra.mrb[0].mxu0 %v4038
    %v4139 = vpop.f32.mrb[0].mxu0
    %v4140 = vadd.f32 0.0, %v4139
    %v4141 = vpop.f32.mrb[0].mxu0
    %4142 = vmatprep.mubr.f32.mxu0 0.0
    %4143 = vmatmul.mubr.f32.gmra.mrb[0].mxu0 %v4041
    %v4144 = vpop.f32.mrb[0].mxu0
    %v4145 = vadd.f32 0.0, %v4144
    %v4146 = vpop.f32.mrb[0].mxu0
    %4147 = vdwg.mxu0
    %4156 = vrot.lane.b32.xlu0 %v2330, 8
    %v4157 = vpop.permute.xlu0 %4156
    %4158 = vrot.lane.b32.xlu0 %v2335, 8
    %v4159 = vpop.permute.xlu0 %4158
    %4160 = vrot.lane.b32.xlu0 %v2340, 8
    %v4161 = vpop.permute.xlu0 %4160
    %4162 = vrot.lane.b32.xlu0 %v2345, 8
    %v4163 = vpop.permute.xlu0 %4162
    %4164 = vrot.lane.b32.xlu0 %v2350, 8
    %v4165 = vpop.permute.xlu0 %4164
    %4166 = vrot.lane.b32.xlu0 %v2355, 8
    %v4167 = vpop.permute.xlu0 %4166
    %4168 = vrot.lane.b32.xlu0 %v2360, 8
    %v4169 = vpop.permute.xlu0 %4168
    %4170 = vrot.lane.b32.xlu0 %v2365, 8
    %v4171 = vpop.permute.xlu0 %4170
    %4188 = vrot.lane.b32.xlu0 %v3220, 16
    %v4189 = vpop.permute.xlu0 %4188
    %4190 = vrot.lane.b32.xlu0 %v3225, 16
    %v4191 = vpop.permute.xlu0 %4190
    %4192 = vrot.lane.b32.xlu0 %v3230, 16
    %v4193 = vpop.permute.xlu0 %4192
    %4194 = vrot.lane.b32.xlu0 %v3235, 16
    %v4195 = vpop.permute.xlu0 %4194
    %4196 = vrot.lane.b32.xlu0 %v3240, 16
    %v4197 = vpop.permute.xlu0 %4196
    %4198 = vrot.lane.b32.xlu0 %v3245, 16
    %v4199 = vpop.permute.xlu0 %4198
    %4200 = vrot.lane.b32.xlu0 %v3250, 16
    %v4201 = vpop.permute.xlu0 %4200
    %4202 = vrot.lane.b32.xlu0 %v3255, 16
    %v4203 = vpop.permute.xlu0 %4202
    %4220 = vrot.lane.b32.xlu0 %v4110, 24
    %v4221 = vpop.permute.xlu0 %4220
    %4222 = vrot.lane.b32.xlu0 %v4115, 24
    %v4223 = vpop.permute.xlu0 %4222
    %4224 = vrot.lane.b32.xlu0 %v4120, 24
    %v4225 = vpop.permute.xlu0 %4224
    %4226 = vrot.lane.b32.xlu0 %v4125, 24
    %v4227 = vpop.permute.xlu0 %4226
    %4228 = vrot.lane.b32.xlu0 %v4130, 24
    %v4229 = vpop.permute.xlu0 %4228
    %4230 = vrot.lane.b32.xlu0 %v4135, 24
    %v4231 = vpop.permute.xlu0 %4230
    %4232 = vrot.lane.b32.xlu0 %v4140, 24
    %v4233 = vpop.permute.xlu0 %4232
    %4234 = vrot.lane.b32.xlu0 %v4145, 24
    %v4235 = vpop.permute.xlu0 %4234
    %v4244 = vsel %vm647, %v1440, %v4157
    %v4245 = vsel %vm647, %v1445, %v4159
    %v4246 = vsel %vm647, %v1450, %v4161
    %v4247 = vsel %vm647, %v1455, %v4163
    %v4248 = vsel %vm647, %v1460, %v4165
    %v4249 = vsel %vm647, %v1465, %v4167
    %v4250 = vsel %vm647, %v1470, %v4169
    %v4251 = vsel %vm647, %v1475, %v4171
    %vm4252 = vcmask 130048
    %v4253 = vsel %vm4252, %v4244, %v4189
    %v4254 = vsel %vm4252, %v4245, %v4191
    %v4255 = vsel %vm4252, %v4246, %v4193
    %v4256 = vsel %vm4252, %v4247, %v4195
    %v4257 = vsel %vm4252, %v4248, %v4197
    %v4258 = vsel %vm4252, %v4249, %v4199
    %v4259 = vsel %vm4252, %v4250, %v4201
    %v4260 = vsel %vm4252, %v4251, %v4203
    %vm4261 = vcmask 195584
    %v4262 = vsel %vm4261, %v4253, %v4221
    %v4263 = vsel %vm4261, %v4254, %v4223
    %v4264 = vsel %vm4261, %v4255, %v4225
    %v4265 = vsel %vm4261, %v4256, %v4227
    %v4266 = vsel %vm4261, %v4257, %v4229
    %v4267 = vsel %vm4261, %v4258, %v4231
    %v4268 = vsel %vm4261, %v4259, %v4233
    %v4269 = vsel %vm4261, %v4260, %v4235
    %v4270 = vld [vmem:[%s12] sm:$0xff]
    %v4271 = vld [vmem:[%s12 + $0x8] sm:$0xff]
    %v4272 = vld [vmem:[%s12 + $0x10] sm:$0xff]
    %v4273 = vld [vmem:[%s12 + $0x18] sm:$0xff]
    %v4275 = vsel %vm101, %v4262, 0
    %v4278 = vsel %vm101, %v4263, 0
    %v4281 = vsel %vm101, %v4264, 0
    %v4284 = vsel %vm101, %v4265, 0
    %v4287 = vsel %vm101, %v4266, 0
    %v4290 = vsel %vm101, %v4267, 0
    %v4293 = vsel %vm101, %v4268, 0
    %v4296 = vsel %vm101, %v4269, 0
    %v4299 = vsel %vm101, %v4270, 0
    %v4302 = vsel %vm101, %v4271, 0
    %v4305 = vsel %vm101, %v4272, 0
    %v4308 = vsel %vm101, %v4273, 0
    %4310 = vmatprep.subr.mxu0 0.0
    %4311 = vmatpush1.xpose.msra.mxu0 %v4299
    %4312 = vmatprep.subr.mxu0 0.0
    %4313 = vmatpush1.xpose.msra.mxu0 %v4302
    %4314 = vmatprep.subr.mxu0 0.0
    %4315 = vmatpush1.xpose.msra.mxu0 %v4305
    %4316 = vmatprep.subr.mxu0 0.0
    %4317 = vmatpush1.xpose.msra.mxu0 %v4308
    %4318 = vmatprep.subr.mxu0 0.0
    %4319 = vmatpush1.xpose.msra.mxu0 0.0
    %4320 = vmatprep.subr.mxu0 0.0
    %4321 = vmatpush1.xpose.msra.mxu0 0.0
    %4322 = vmatprep.subr.mxu0 0.0
    %4323 = vmatpush1.xpose.msra.mxu0 0.0
    %4324 = vmatprep.subr.mxu0 0.0
    %4325 = vmatpush1.xpose.msra.mxu0 0.0
    %4326 = vmatprep.subr.mxu0 0.0
    %4327 = vmatpush1.xpose.msra.mxu0 0.0
    %4328 = vmatprep.subr.mxu0 0.0
    %4329 = vmatpush1.xpose.msra.mxu0 0.0
    %4330 = vmatprep.subr.mxu0 0.0
    %4331 = vmatpush1.xpose.msra.mxu0 0.0
    %4332 = vmatprep.subr.mxu0 0.0
    %4333 = vmatpush1.xpose.msra.mxu0 0.0
    %4334 = vmatprep.subr.mxu0 0.0
    %4335 = vmatpush1.xpose.msra.mxu0 0.0
    %4336 = vmatprep.subr.mxu0 0.0
    %4337 = vmatpush1.xpose.msra.mxu0 0.0
    %4338 = vmatprep.subr.mxu0 0.0
    %4339 = vmatpush1.xpose.msra.mxu0 0.0
    %4340 = vmatprep.subr.mxu0 0.0
    %4341 = vmatpush1.xpose.msra.mxu0 0.0
    %4342 = vmatprep.subr.mxu0 0.0
    %4343 = vmatpush1.xpose.msra.mxu0 0.0
    %4344 = vmatprep.subr.mxu0 0.0
    %4345 = vmatpush1.xpose.msra.mxu0 0.0
    %4346 = vmatprep.subr.mxu0 0.0
    %4347 = vmatpush1.xpose.msra.mxu0 0.0
    %4348 = vmatprep.subr.mxu0 0.0
    %4349 = vmatpush1.xpose.msra.mxu0 0.0
    %4350 = vmatprep.subr.mxu0 0.0
    %4351 = vmatpush1.xpose.msra.mxu0 0.0
    %4352 = vmatprep.subr.mxu0 0.0
    %4353 = vmatpush1.xpose.msra.mxu0 0.0
    %4354 = vmatprep.subr.mxu0 0.0
    %4355 = vmatpush1.xpose.msra.mxu0 0.0
    %4356 = vmatprep.subr.mxu0 0.0
    %4357 = vmatpush1.xpose.msra.mxu0 0.0
    %4358 = vmatprep.subr.mxu0 0.0
    %4359 = vmatpush1.xpose.msra.mxu0 0.0
    %4360 = vmatprep.subr.mxu0 0.0
    %4361 = vmatpush1.xpose.msra.mxu0 0.0
    %4362 = vmatprep.subr.mxu0 0.0
    %4363 = vmatpush1.xpose.msra.mxu0 0.0
    %4364 = vmatprep.subr.mxu0 0.0
    %4365 = vmatpush1.xpose.msra.mxu0 0.0
    %4366 = vmatprep.subr.mxu0 0.0
    %4367 = vmatpush1.xpose.msra.mxu0 0.0
    %4368 = vmatprep.subr.mxu0 0.0
    %4369 = vmatpush1.xpose.msra.mxu0 0.0
    %4370 = vmatprep.subr.mxu0 0.0
    %4371 = vmatpush1.xpose.msra.mxu0 0.0
    %4372 = vmatprep.subr.mxu0 0.0
    %4373 = vmatpush1.xpose.msra.mxu0 0.0
    %4374 = vmatprep.mubr.f32.mxu0 0.0
    %4375 = vmatmul.mubr.f32.gmra.mrb[0].mxu0 %v4275
    %v4376 = vpop.f32.mrb[0].mxu0
    %v4377 = vadd.f32 0.0, %v4376
    %v4378 = vpop.f32.mrb[0].mxu0
    %4379 = vmatprep.mubr.f32.mxu0 0.0
    %4380 = vmatmul.mubr.f32.gmra.mrb[0].mxu0 %v4278
    %v4381 = vpop.f32.mrb[0].mxu0
    %v4382 = vadd.f32 0.0, %v4381
    %v4383 = vpop.f32.mrb[0].mxu0
    %4384 = vmatprep.mubr.f32.mxu0 0.0
    %4385 = vmatmul.mubr.f32.gmra.mrb[0].mxu0 %v4281
    %v4386 = vpop.f32.mrb[0].mxu0
    %v4387 = vadd.f32 0.0, %v4386
    %v4388 = vpop.f32.mrb[0].mxu0
    %4389 = vmatprep.mubr.f32.mxu0 0.0
    %4390 = vmatmul.mubr.f32.gmra.mrb[0].mxu0 %v4284
    %v4391 = vpop.f32.mrb[0].mxu0
    %v4392 = vadd.f32 0.0, %v4391
    %v4393 = vpop.f32.mrb[0].mxu0
    %4394 = vmatprep.mubr.f32.mxu0 0.0
    %4395 = vmatmul.mubr.f32.gmra.mrb[0].mxu0 %v4287
    %v4396 = vpop.f32.mrb[0].mxu0
    %v4397 = vadd.f32 0.0, %v4396
    %v4398 = vpop.f32.mrb[0].mxu0
    %4399 = vmatprep.mubr.f32.mxu0 0.0
    %4400 = vmatmul.mubr.f32.gmra.mrb[0].mxu0 %v4290
    %v4401 = vpop.f32.mrb[0].mxu0
    %v4402 = vadd.f32 0.0, %v4401
    %v4403 = vpop.f32.mrb[0].mxu0
    %4404 = vmatprep.mubr.f32.mxu0 0.0
    %4405 = vmatmul.mubr.f32.gmra.mrb[0].mxu0 %v4293
    %v4406 = vpop.f32.mrb[0].mxu0
    %v4407 = vadd.f32 0.0, %v4406
    %v4408 = vpop.f32.mrb[0].mxu0
    %4409 = vmatprep.mubr.f32.mxu0 0.0
    %4410 = vmatmul.mubr.f32.gmra.mrb[0].mxu0 %v4296
    %v4411 = vpop.f32.mrb[0].mxu0
    %v4412 = vadd.f32 0.0, %v4411
    %v4413 = vpop.f32.mrb[0].mxu0
    %4414 = vdwg.mxu0
    %v4415 = vadd.f32 %v389, %v4377
    %v4416 = vadd.f32 %v390, %v4382
    %v4417 = vadd.f32 %v391, %v4387
    %v4418 = vadd.f32 %v392, %v4392
    %v4419 = vadd.f32 %v393, %v4397
    %v4420 = vadd.f32 %v394, %v4402
    %v4421 = vadd.f32 %v395, %v4407
    %v4422 = vadd.f32 %v396, %v4412
    %v4423 = vmul.f32 %v4415, %v4415
    %v4424 = vmul.f32 %v4416, %v4416
    %v4425 = vmul.f32 %v4417, %v4417
    %v4426 = vmul.f32 %v4418, %v4418
    %v4427 = vmul.f32 %v4419, %v4419
    %v4428 = vmul.f32 %v4420, %v4420
    %v4429 = vmul.f32 %v4421, %v4421
    %v4430 = vmul.f32 %v4422, %v4422
    %v4431 = vsel %vm101, %v4423, 0.0
    %4432 = vadd.xlane.f32.xlu0 %v4431
    %v4433 = vpop.xlane.xlu0 %4432
    %v4434 = vsel %vm101, %v4424, 0.0
    %4435 = vadd.xlane.f32.xlu0 %v4434
    %v4436 = vpop.xlane.xlu0 %4435
    %v4437 = vsel %vm101, %v4425, 0.0
    %4438 = vadd.xlane.f32.xlu0 %v4437
    %v4439 = vpop.xlane.xlu0 %4438
    %v4440 = vsel %vm101, %v4426, 0.0
    %4441 = vadd.xlane.f32.xlu0 %v4440
    %v4442 = vpop.xlane.xlu0 %4441
    %v4443 = vsel %vm101, %v4427, 0.0
    %4444 = vadd.xlane.f32.xlu0 %v4443
    %v4445 = vpop.xlane.xlu0 %4444
    %v4446 = vsel %vm101, %v4428, 0.0
    %4447 = vadd.xlane.f32.xlu0 %v4446
    %v4448 = vpop.xlane.xlu0 %4447
    %v4449 = vsel %vm101, %v4429, 0.0
    %4450 = vadd.xlane.f32.xlu0 %v4449
    %v4451 = vpop.xlane.xlu0 %4450
    %v4452 = vsel %vm101, %v4430, 0.0
    %4453 = vadd.xlane.f32.xlu0 %v4452
    %v4454 = vpop.xlane.xlu0 %4453
    %v4455 = vmul.f32 %v4433, %v318
    %v4456 = vmul.f32 %v4436, %v318
    %v4457 = vmul.f32 %v4439, %v318
    %v4458 = vmul.f32 %v4442, %v318
    %v4459 = vmul.f32 %v4445, %v318
    %v4460 = vmul.f32 %v4448, %v318
    %v4461 = vmul.f32 %v4451, %v318
    %v4462 = vmul.f32 %v4454, %v318
    %v4463 = vadd.f32 %v4455, 1.1920929e-07
    %v4464 = vadd.f32 %v4456, 1.1920929e-07
    %v4465 = vadd.f32 %v4457, 1.1920929e-07
    %v4466 = vadd.f32 %v4458, 1.1920929e-07
    %v4467 = vadd.f32 %v4459, 1.1920929e-07
    %v4468 = vadd.f32 %v4460, 1.1920929e-07
    %v4469 = vadd.f32 %v4461, 1.1920929e-07
    %v4470 = vadd.f32 %v4462, 1.1920929e-07
    %v4471 = vrsqrt.pop %v4463
    %v4472 = vrsqrt.pop %v4464
    %v4473 = vrsqrt.pop %v4465
    %v4474 = vrsqrt.pop %v4466
    %v4475 = vrsqrt.pop %v4467
    %v4476 = vrsqrt.pop %v4468
    %v4477 = vrsqrt.pop %v4469
    %v4478 = vrsqrt.pop %v4470
    %v4479 = vmul.f32 %v4415, %v4471
    %v4480 = vmul.f32 %v4416, %v4472
    %v4481 = vmul.f32 %v4417, %v4473
    %v4482 = vmul.f32 %v4418, %v4474
    %v4483 = vmul.f32 %v4419, %v4475
    %v4484 = vmul.f32 %v4420, %v4476
    %v4485 = vmul.f32 %v4421, %v4477
    %v4486 = vmul.f32 %v4422, %v4478
    %v4487 = vld [vmem:[%s13] sm:$0xff]
    %v4488 = vld [vmem:[%s13 + $0x8] sm:$0xff]
    %v4489 = vld [vmem:[%s13 + $0x10] sm:$0xff]
    %v4490 = vld [vmem:[%s13 + $0x18] sm:$0xff]
    %v4491 = vld [vmem:[%s13 + $0x20] sm:$0xff]
    %v4492 = vld [vmem:[%s13 + $0x28] sm:$0xff]
    %v4493 = vld [vmem:[%s13 + $0x30] sm:$0xff]
    %v4494 = vld [vmem:[%s13 + $0x38] sm:$0xff]
    %v4495 = vld [vmem:[%s13 + $0x40] sm:$0xff]
    %v4496 = vld [vmem:[%s13 + $0x48] sm:$0xff]
    %v4497 = vld [vmem:[%s13 + $0x50] sm:$0xff]
    %v4498 = vld [vmem:[%s13 + $0x58] sm:$0xff]
    %v4499 = vld [vmem:[%s13 + $0x60] sm:$0xff]
    %v4500 = vld [vmem:[%s13 + $0x68] sm:$0xff]
    %v4501 = vld [vmem:[%s13 + $0x70] sm:$0xff]
    %v4502 = vld [vmem:[%s13 + $0x78] sm:$0xff]
    %v4504 = vsel %vm101, %v4479, 0
    %v4507 = vsel %vm101, %v4480, 0
    %v4510 = vsel %vm101, %v4481, 0
    %v4513 = vsel %vm101, %v4482, 0
    %v4516 = vsel %vm101, %v4483, 0
    %v4519 = vsel %vm101, %v4484, 0
    %v4522 = vsel %vm101, %v4485, 0
    %v4525 = vsel %vm101, %v4486, 0
    %v4528 = vsel %vm101, %v4487, 0
    %v4531 = vsel %vm101, %v4488, 0
    %v4534 = vsel %vm101, %v4489, 0
    %v4537 = vsel %vm101, %v4490, 0
    %v4540 = vsel %vm101, %v4491, 0
    %v4543 = vsel %vm101, %v4492, 0
    %v4546 = vsel %vm101, %v4493, 0
    %v4549 = vsel %vm101, %v4494, 0
    %v4552 = vsel %vm101, %v4495, 0
    %v4555 = vsel %vm101, %v4496, 0
    %v4558 = vsel %vm101, %v4497, 0
    %v4561 = vsel %vm101, %v4498, 0
    %v4564 = vsel %vm101, %v4499, 0
    %v4567 = vsel %vm101, %v4500, 0
    %v4570 = vsel %vm101, %v4501, 0
    %v4573 = vsel %vm101, %v4502, 0
    %4575 = vmatprep.subr.mxu0 0.0
    %4576 = vmatpush1.xpose.msra.mxu0 %v4528
    %4577 = vmatprep.subr.mxu0 0.0
    %4578 = vmatpush1.xpose.msra.mxu0 %v4531
    %4579 = vmatprep.subr.mxu0 0.0
    %4580 = vmatpush1.xpose.msra.mxu0 %v4534
    %4581 = vmatprep.subr.mxu0 0.0
    %4582 = vmatpush1.xpose.msra.mxu0 %v4537
    %4583 = vmatprep.subr.mxu0 0.0
    %4584 = vmatpush1.xpose.msra.mxu0 %v4540
    %4585 = vmatprep.subr.mxu0 0.0
    %4586 = vmatpush1.xpose.msra.mxu0 %v4543
    %4587 = vmatprep.subr.mxu0 0.0
    %4588 = vmatpush1.xpose.msra.mxu0 %v4546
    %4589 = vmatprep.subr.mxu0 0.0
    %4590 = vmatpush1.xpose.msra.mxu0 %v4549
    %4591 = vmatprep.subr.mxu0 0.0
    %4592 = vmatpush1.xpose.msra.mxu0 %v4552
    %4593 = vmatprep.subr.mxu0 0.0
    %4594 = vmatpush1.xpose.msra.mxu0 %v4555
    %4595 = vmatprep.subr.mxu0 0.0
    %4596 = vmatpush1.xpose.msra.mxu0 %v4558
    %4597 = vmatprep.subr.mxu0 0.0
    %4598 = vmatpush1.xpose.msra.mxu0 %v4561
    %4599 = vmatprep.subr.mxu0 0.0
    %4600 = vmatpush1.xpose.msra.mxu0 %v4564
    %4601 = vmatprep.subr.mxu0 0.0
    %4602 = vmatpush1.xpose.msra.mxu0 %v4567
    %4603 = vmatprep.subr.mxu0 0.0
    %4604 = vmatpush1.xpose.msra.mxu0 %v4570
    %4605 = vmatprep.subr.mxu0 0.0
    %4606 = vmatpush1.xpose.msra.mxu0 %v4573
    %4607 = vmatprep.subr.mxu0 0.0
    %4608 = vmatpush1.xpose.msra.mxu0 0.0
    %4609 = vmatprep.subr.mxu0 0.0
    %4610 = vmatpush1.xpose.msra.mxu0 0.0
    %4611 = vmatprep.subr.mxu0 0.0
    %4612 = vmatpush1.xpose.msra.mxu0 0.0
    %4613 = vmatprep.subr.mxu0 0.0
    %4614 = vmatpush1.xpose.msra.mxu0 0.0
    %4615 = vmatprep.subr.mxu0 0.0
    %4616 = vmatpush1.xpose.msra.mxu0 0.0
    %4617 = vmatprep.subr.mxu0 0.0
    %4618 = vmatpush1.xpose.msra.mxu0 0.0
    %4619 = vmatprep.subr.mxu0 0.0
    %4620 = vmatpush1.xpose.msra.mxu0 0.0
    %4621 = vmatprep.subr.mxu0 0.0
    %4622 = vmatpush1.xpose.msra.mxu0 0.0
    %4623 = vmatprep.subr.mxu0 0.0
    %4624 = vmatpush1.xpose.msra.mxu0 0.0
    %4625 = vmatprep.subr.mxu0 0.0
    %4626 = vmatpush1.xpose.msra.mxu0 0.0
    %4627 = vmatprep.subr.mxu0 0.0
    %4628 = vmatpush1.xpose.msra.mxu0 0.0
    %4629 = vmatprep.subr.mxu0 0.0
    %4630 = vmatpush1.xpose.msra.mxu0 0.0
    %4631 = vmatprep.subr.mxu0 0.0
    %4632 = vmatpush1.xpose.msra.mxu0 0.0
    %4633 = vmatprep.subr.mxu0 0.0
    %4634 = vmatpush1.xpose.msra.mxu0 0.0
    %4635 = vmatprep.subr.mxu0 0.0
    %4636 = vmatpush1.xpose.msra.mxu0 0.0
    %4637 = vmatprep.subr.mxu0 0.0
    %4638 = vmatpush1.xpose.msra.mxu0 0.0
    %4639 = vmatprep.mubr.f32.mxu0 0.0
    %4640 = vmatmul.mubr.f32.gmra.mrb[0].mxu0 %v4504
    %v4641 = vpop.f32.mrb[0].mxu0
    %v4642 = vadd.f32 0.0, %v4641
    %v4643 = vpop.f32.mrb[0].mxu0
    %4644 = vmatprep.mubr.f32.mxu0 0.0
    %4645 = vmatmul.mubr.f32.gmra.mrb[0].mxu0 %v4507
    %v4646 = vpop.f32.mrb[0].mxu0
    %v4647 = vadd.f32 0.0, %v4646
    %v4648 = vpop.f32.mrb[0].mxu0
    %4649 = vmatprep.mubr.f32.mxu0 0.0
    %4650 = vmatmul.mubr.f32.gmra.mrb[0].mxu0 %v4510
    %v4651 = vpop.f32.mrb[0].mxu0
    %v4652 = vadd.f32 0.0, %v4651
    %v4653 = vpop.f32.mrb[0].mxu0
    %4654 = vmatprep.mubr.f32.mxu0 0.0
    %4655 = vmatmul.mubr.f32.gmra.mrb[0].mxu0 %v4513
    %v4656 = vpop.f32.mrb[0].mxu0
    %v4657 = vadd.f32 0.0, %v4656
    %v4658 = vpop.f32.mrb[0].mxu0
    %4659 = vmatprep.mubr.f32.mxu0 0.0
    %4660 = vmatmul.mubr.f32.gmra.mrb[0].mxu0 %v4516
    %v4661 = vpop.f32.mrb[0].mxu0
    %v4662 = vadd.f32 0.0, %v4661
    %v4663 = vpop.f32.mrb[0].mxu0
    %4664 = vmatprep.mubr.f32.mxu0 0.0
    %4665 = vmatmul.mubr.f32.gmra.mrb[0].mxu0 %v4519
    %v4666 = vpop.f32.mrb[0].mxu0
    %v4667 = vadd.f32 0.0, %v4666
    %v4668 = vpop.f32.mrb[0].mxu0
    %4669 = vmatprep.mubr.f32.mxu0 0.0
    %4670 = vmatmul.mubr.f32.gmra.mrb[0].mxu0 %v4522
    %v4671 = vpop.f32.mrb[0].mxu0
    %v4672 = vadd.f32 0.0, %v4671
    %v4673 = vpop.f32.mrb[0].mxu0
    %4674 = vmatprep.mubr.f32.mxu0 0.0
    %4675 = vmatmul.mubr.f32.gmra.mrb[0].mxu0 %v4525
    %v4676 = vpop.f32.mrb[0].mxu0
    %v4677 = vadd.f32 0.0, %v4676
    %v4678 = vpop.f32.mrb[0].mxu0
    %4679 = vdwg.mxu0
    %v4680 = vmax.f32 %v4642, 0.0
    %v4681 = vmax.f32 %v4647, 0.0
    %v4682 = vmax.f32 %v4652, 0.0
    %v4683 = vmax.f32 %v4657, 0.0
    %v4684 = vmax.f32 %v4662, 0.0
    %v4685 = vmax.f32 %v4667, 0.0
    %v4686 = vmax.f32 %v4672, 0.0
    %v4687 = vmax.f32 %v4677, 0.0
    %v4688 = vld [vmem:[%s14] sm:$0xff]
    %v4689 = vld [vmem:[%s14 + $0x8] sm:$0xff]
    %v4690 = vld [vmem:[%s14 + $0x10] sm:$0xff]
    %v4691 = vld [vmem:[%s14 + $0x18] sm:$0xff]
    %4692 = vmatprep.subr.mxu0 0.0
    %4693 = vmatpush1.xpose.msra.mxu0 %v4688
    %4694 = vmatprep.subr.mxu0 0.0
    %4695 = vmatpush1.xpose.msra.mxu0 %v4689
    %4696 = vmatprep.subr.mxu0 0.0
    %4697 = vmatpush1.xpose.msra.mxu0 %v4690
    %4698 = vmatprep.subr.mxu0 0.0
    %4699 = vmatpush1.xpose.msra.mxu0 %v4691
    %4700 = vmatprep.subr.mxu0 0.0
    %4701 = vmatpush1.xpose.msra.mxu0 0.0
    %4702 = vmatprep.subr.mxu0 0.0
    %4703 = vmatpush1.xpose.msra.mxu0 0.0
    %4704 = vmatprep.subr.mxu0 0.0
    %4705 = vmatpush1.xpose.msra.mxu0 0.0
    %4706 = vmatprep.subr.mxu0 0.0
    %4707 = vmatpush1.xpose.msra.mxu0 0.0
    %4708 = vmatprep.subr.mxu0 0.0
    %4709 = vmatpush1.xpose.msra.mxu0 0.0
    %4710 = vmatprep.subr.mxu0 0.0
    %4711 = vmatpush1.xpose.msra.mxu0 0.0
    %4712 = vmatprep.subr.mxu0 0.0
    %4713 = vmatpush1.xpose.msra.mxu0 0.0
    %4714 = vmatprep.subr.mxu0 0.0
    %4715 = vmatpush1.xpose.msra.mxu0 0.0
    %4716 = vmatprep.subr.mxu0 0.0
    %4717 = vmatpush1.xpose.msra.mxu0 0.0
    %4718 = vmatprep.subr.mxu0 0.0
    %4719 = vmatpush1.xpose.msra.mxu0 0.0
    %4720 = vmatprep.subr.mxu0 0.0
    %4721 = vmatpush1.xpose.msra.mxu0 0.0
    %4722 = vmatprep.subr.mxu0 0.0
    %4723 = vmatpush1.xpose.msra.mxu0 0.0
    %4724 = vmatprep.subr.mxu0 0.0
    %4725 = vmatpush1.xpose.msra.mxu0 0.0
    %4726 = vmatprep.subr.mxu0 0.0
    %4727 = vmatpush1.xpose.msra.mxu0 0.0
    %4728 = vmatprep.subr.mxu0 0.0
    %4729 = vmatpush1.xpose.msra.mxu0 0.0
    %4730 = vmatprep.subr.mxu0 0.0
    %4731 = vmatpush1.xpose.msra.mxu0 0.0
    %4732 = vmatprep.subr.mxu0 0.0
    %4733 = vmatpush1.xpose.msra.mxu0 0.0
    %4734 = vmatprep.subr.mxu0 0.0
    %4735 = vmatpush1.xpose.msra.mxu0 0.0
    %4736 = vmatprep.subr.mxu0 0.0
    %4737 = vmatpush1.xpose.msra.mxu0 0.0
    %4738 = vmatprep.subr.mxu0 0.0
    %4739 = vmatpush1.xpose.msra.mxu0 0.0
    %4740 = vmatprep.subr.mxu0 0.0
    %4741 = vmatpush1.xpose.msra.mxu0 0.0
    %4742 = vmatprep.subr.mxu0 0.0
    %4743 = vmatpush1.xpose.msra.mxu0 0.0
    %4744 = vmatprep.subr.mxu0 0.0
    %4745 = vmatpush1.xpose.msra.mxu0 0.0
    %4746 = vmatprep.subr.mxu0 0.0
    %4747 = vmatpush1.xpose.msra.mxu0 0.0
    %4748 = vmatprep.subr.mxu0 0.0
    %4749 = vmatpush1.xpose.msra.mxu0 0.0
    %4750 = vmatprep.subr.mxu0 0.0
    %4751 = vmatpush1.xpose.msra.mxu0 0.0
    %4752 = vmatprep.subr.mxu0 0.0
    %4753 = vmatpush1.xpose.msra.mxu0 0.0
    %4754 = vmatprep.subr.mxu0 0.0
    %4755 = vmatpush1.xpose.msra.mxu0 0.0
    %4756 = vmatprep.mubr.f32.mxu0 0.0
    %4757 = vmatmul.mubr.f32.gmra.mrb[0].mxu0 %v4680
    %v4758 = vpop.f32.mrb[0].mxu0
    %v4759 = vadd.f32 0.0, %v4758
    %v4760 = vpop.f32.mrb[0].mxu0
    %4761 = vmatprep.mubr.f32.mxu0 0.0
    %4762 = vmatmul.mubr.f32.gmra.mrb[0].mxu0 %v4681
    %v4763 = vpop.f32.mrb[0].mxu0
    %v4764 = vadd.f32 0.0, %v4763
    %v4765 = vpop.f32.mrb[0].mxu0
    %4766 = vmatprep.mubr.f32.mxu0 0.0
    %4767 = vmatmul.mubr.f32.gmra.mrb[0].mxu0 %v4682
    %v4768 = vpop.f32.mrb[0].mxu0
    %v4769 = vadd.f32 0.0, %v4768
    %v4770 = vpop.f32.mrb[0].mxu0
    %4771 = vmatprep.mubr.f32.mxu0 0.0
    %4772 = vmatmul.mubr.f32.gmra.mrb[0].mxu0 %v4683
    %v4773 = vpop.f32.mrb[0].mxu0
    %v4774 = vadd.f32 0.0, %v4773
    %v4775 = vpop.f32.mrb[0].mxu0
    %4776 = vmatprep.mubr.f32.mxu0 0.0
    %4777 = vmatmul.mubr.f32.gmra.mrb[0].mxu0 %v4684
    %v4778 = vpop.f32.mrb[0].mxu0
    %v4779 = vadd.f32 0.0, %v4778
    %v4780 = vpop.f32.mrb[0].mxu0
    %4781 = vmatprep.mubr.f32.mxu0 0.0
    %4782 = vmatmul.mubr.f32.gmra.mrb[0].mxu0 %v4685
    %v4783 = vpop.f32.mrb[0].mxu0
    %v4784 = vadd.f32 0.0, %v4783
    %v4785 = vpop.f32.mrb[0].mxu0
    %4786 = vmatprep.mubr.f32.mxu0 0.0
    %4787 = vmatmul.mubr.f32.gmra.mrb[0].mxu0 %v4686
    %v4788 = vpop.f32.mrb[0].mxu0
    %v4789 = vadd.f32 0.0, %v4788
    %v4790 = vpop.f32.mrb[0].mxu0
    %4791 = vmatprep.mubr.f32.mxu0 0.0
    %4792 = vmatmul.mubr.f32.gmra.mrb[0].mxu0 %v4687
    %v4793 = vpop.f32.mrb[0].mxu0
    %v4794 = vadd.f32 0.0, %v4793
    %v4795 = vpop.f32.mrb[0].mxu0
    %4796 = vdwg.mxu0
    %v4797 = vadd.f32 %v4415, %v4759
    %v4798 = vadd.f32 %v4416, %v4764
    %v4799 = vadd.f32 %v4417, %v4769
    %v4800 = vadd.f32 %v4418, %v4774
    %v4801 = vadd.f32 %v4419, %v4779
    %v4802 = vadd.f32 %v4420, %v4784
    %v4803 = vadd.f32 %v4421, %v4789
    %v4804 = vadd.f32 %v4422, %v4794
    %v4805 = vld [vmem:[%s15] sm:$0xff]
    %v4806 = vld [vmem:[%s15 + $0x8] sm:$0xff]
    %v4807 = vld [vmem:[%s15 + $0x10] sm:$0xff]
    %v4808 = vld [vmem:[%s15 + $0x18] sm:$0xff]
    %v4809 = vld [vmem:[%s15 + $0x20] sm:$0xff]
    %v4810 = vld [vmem:[%s15 + $0x28] sm:$0xff]
    %v4811 = vld [vmem:[%s15 + $0x30] sm:$0xff]
    %v4812 = vld [vmem:[%s15 + $0x38] sm:$0xff]
    %v4813 = vld [vmem:[%s15 + $0x40] sm:$0xff]
    %v4814 = vld [vmem:[%s15 + $0x48] sm:$0xff]
    %v4815 = vld [vmem:[%s15 + $0x50] sm:$0xff]
    %v4816 = vld [vmem:[%s15 + $0x58] sm:$0xff]
    %v4817 = vld [vmem:[%s15 + $0x60] sm:$0xff]
    %v4818 = vld [vmem:[%s15 + $0x68] sm:$0xff]
    %v4819 = vld [vmem:[%s15 + $0x70] sm:$0xff]
    %v4820 = vld [vmem:[%s15 + $0x78] sm:$0xff]
    %v4821 = vld [vmem:[%s15 + $0x80] sm:$0xff]
    %v4822 = vld [vmem:[%s15 + $0x88] sm:$0xff]
    %v4823 = vld [vmem:[%s15 + $0x90] sm:$0xff]
    %v4824 = vld [vmem:[%s15 + $0x98] sm:$0xff]
    %v4825 = vld [vmem:[%s15 + $0xa0] sm:$0xff]
    %v4826 = vld [vmem:[%s15 + $0xa8] sm:$0xff]
    %v4827 = vld [vmem:[%s15 + $0xb0] sm:$0xff]
    %v4828 = vld [vmem:[%s15 + $0xb8] sm:$0xff]
    %v4829 = vld [vmem:[%s15 + $0xc0] sm:$0xff]
    %v4830 = vld [vmem:[%s15 + $0xc8] sm:$0xff]
    %v4831 = vld [vmem:[%s15 + $0xd0] sm:$0xff]
    %v4832 = vld [vmem:[%s15 + $0xd8] sm:$0xff]
    %v4833 = vld [vmem:[%s15 + $0xe0] sm:$0xff]
    %v4834 = vld [vmem:[%s15 + $0xe8] sm:$0xff]
    %v4835 = vld [vmem:[%s15 + $0xf0] sm:$0xff]
    %v4836 = vld [vmem:[%s15 + $0xf8] sm:$0xff]
    %v4837 = vld [vmem:[%s16] sm:$0x3]
    %v4839 = vlaneseq
    %v4840 = vshrl.u32 %v4839, 7
    %v4841 = vsub.s32 0, %v4840
    %v4842 = vrot.slane %v4837, %v4841
    %v4843 = vlaneseq
    %v4844 = vshrl.u32 %v4843, 7
    %v4845 = vsub.s32 1, %v4844
    %v4846 = vrot.slane %v4837, %v4845
    %v4850 = vsel %vm101, %v4415, 0
    %v4853 = vsel %vm101, %v4416, 0
    %v4856 = vsel %vm101, %v4417, 0
    %v4859 = vsel %vm101, %v4418, 0
    %v4862 = vsel %vm101, %v4419, 0
    %v4865 = vsel %vm101, %v4420, 0
    %v4868 = vsel %vm101, %v4421, 0
    %v4871 = vsel %vm101, %v4422, 0
    %v4874 = vsel %vm101, %v4805, 0
    %v4877 = vsel %vm101, %v4806, 0
    %v4880 = vsel %vm101, %v4807, 0
    %v4883 = vsel %vm101, %v4808, 0
    %v4886 = vsel %vm101, %v4809, 0
    %v4889 = vsel %vm101, %v4810, 0
    %v4892 = vsel %vm101, %v4811, 0
    %v4895 = vsel %vm101, %v4812, 0
    %v4898 = vsel %vm101, %v4813, 0
    %v4901 = vsel %vm101, %v4814, 0
    %v4904 = vsel %vm101, %v4815, 0
    %v4907 = vsel %vm101, %v4816, 0
    %v4910 = vsel %vm101, %v4817, 0
    %v4913 = vsel %vm101, %v4818, 0
    %v4916 = vsel %vm101, %v4819, 0
    %v4919 = vsel %vm101, %v4820, 0
    %v4922 = vsel %vm101, %v4821, 0
    %v4925 = vsel %vm101, %v4822, 0
    %v4928 = vsel %vm101, %v4823, 0
    %v4931 = vsel %vm101, %v4824, 0
    %v4934 = vsel %vm101, %v4825, 0
    %v4937 = vsel %vm101, %v4826, 0
    %v4940 = vsel %vm101, %v4827, 0
    %v4943 = vsel %vm101, %v4828, 0
    %v4946 = vsel %vm101, %v4829, 0
    %v4949 = vsel %vm101, %v4830, 0
    %v4952 = vsel %vm101, %v4831, 0
    %v4955 = vsel %vm101, %v4832, 0
    %v4958 = vsel %vm101, %v4833, 0
    %v4961 = vsel %vm101, %v4834, 0
    %v4964 = vsel %vm101, %v4835, 0
    %v4967 = vsel %vm101, %v4836, 0
    %4969 = vmatprep.subr.mxu0 0.0
    %4970 = vmatpush1.xpose.msra.mxu0 %v4874
    %4971 = vmatprep.subr.mxu0 0.0
    %4972 = vmatpush1.xpose.msra.mxu0 %v4877
    %4973 = vmatprep.subr.mxu0 0.0
    %4974 = vmatpush1.xpose.msra.mxu0 %v4880
    %4975 = vmatprep.subr.mxu0 0.0
    %4976 = vmatpush1.xpose.msra.mxu0 %v4883
    %4977 = vmatprep.subr.mxu0 0.0
    %4978 = vmatpush1.xpose.msra.mxu0 %v4886
    %4979 = vmatprep.subr.mxu0 0.0
    %4980 = vmatpush1.xpose.msra.mxu0 %v4889
    %4981 = vmatprep.subr.mxu0 0.0
    %4982 = vmatpush1.xpose.msra.mxu0 %v4892
    %4983 = vmatprep.subr.mxu0 0.0
    %4984 = vmatpush1.xpose.msra.mxu0 %v4895
    %4985 = vmatprep.subr.mxu0 0.0
    %4986 = vmatpush1.xpose.msra.mxu0 %v4898
    %4987 = vmatprep.subr.mxu0 0.0
    %4988 = vmatpush1.xpose.msra.mxu0 %v4901
    %4989 = vmatprep.subr.mxu0 0.0
    %4990 = vmatpush1.xpose.msra.mxu0 %v4904
    %4991 = vmatprep.subr.mxu0 0.0
    %4992 = vmatpush1.xpose.msra.mxu0 %v4907
    %4993 = vmatprep.subr.mxu0 0.0
    %4994 = vmatpush1.xpose.msra.mxu0 %v4910
    %4995 = vmatprep.subr.mxu0 0.0
    %4996 = vmatpush1.xpose.msra.mxu0 %v4913
    %4997 = vmatprep.subr.mxu0 0.0
    %4998 = vmatpush1.xpose.msra.mxu0 %v4916
    %4999 = vmatprep.subr.mxu0 0.0
    %5000 = vmatpush1.xpose.msra.mxu0 %v4919
    %5001 = vmatprep.subr.mxu0 0.0
    %5002 = vmatpush1.xpose.msra.mxu0 %v4922
    %5003 = vmatprep.subr.mxu0 0.0
    %5004 = vmatpush1.xpose.msra.mxu0 %v4925
    %5005 = vmatprep.subr.mxu0 0.0
    %5006 = vmatpush1.xpose.msra.mxu0 %v4928
    %5007 = vmatprep.subr.mxu0 0.0
    %5008 = vmatpush1.xpose.msra.mxu0 %v4931
    %5009 = vmatprep.subr.mxu0 0.0
    %5010 = vmatpush1.xpose.msra.mxu0 %v4934
    %5011 = vmatprep.subr.mxu0 0.0
    %5012 = vmatpush1.xpose.msra.mxu0 %v4937
    %5013 = vmatprep.subr.mxu0 0.0
    %5014 = vmatpush1.xpose.msra.mxu0 %v4940
    %5015 = vmatprep.subr.mxu0 0.0
    %5016 = vmatpush1.xpose.msra.mxu0 %v4943
    %5017 = vmatprep.subr.mxu0 0.0
    %5018 = vmatpush1.xpose.msra.mxu0 %v4946
    %5019 = vmatprep.subr.mxu0 0.0
    %5020 = vmatpush1.xpose.msra.mxu0 %v4949
    %5021 = vmatprep.subr.mxu0 0.0
    %5022 = vmatpush1.xpose.msra.mxu0 %v4952
    %5023 = vmatprep.subr.mxu0 0.0
    %5024 = vmatpush1.xpose.msra.mxu0 %v4955
    %5025 = vmatprep.subr.mxu0 0.0
    %5026 = vmatpush1.xpose.msra.mxu0 %v4958
    %5027 = vmatprep.subr.mxu0 0.0
    %5028 = vmatpush1.xpose.msra.mxu0 %v4961
    %5029 = vmatprep.subr.mxu0 0.0
    %5030 = vmatpush1.xpose.msra.mxu0 %v4964
    %5031 = vmatprep.subr.mxu0 0.0
    %5032 = vmatpush1.xpose.msra.mxu0 %v4967
    %5033 = vmatprep.mubr.f32.mxu0 0.0
    %5034 = vmatmul.mubr.f32.gmra.mrb[0].mxu0 %v4850
    %v5035 = vpop.f32.mrb[0].mxu0
    %v5036 = vadd.f32 %v4842, %v5035
    %v5037 = vpop.f32.mrb[0].mxu0
    %v5038 = vadd.f32 %v4846, %v5037
    %5039 = vmatprep.mubr.f32.mxu0 0.0
    %5040 = vmatmul.mubr.f32.gmra.mrb[0].mxu0 %v4853
    %v5041 = vpop.f32.mrb[0].mxu0
    %v5042 = vadd.f32 %v4842, %v5041
    %v5043 = vpop.f32.mrb[0].mxu0
    %v5044 = vadd.f32 %v4846, %v5043
    %5045 = vmatprep.mubr.f32.mxu0 0.0
    %5046 = vmatmul.mubr.f32.gmra.mrb[0].mxu0 %v4856
    %v5047 = vpop.f32.mrb[0].mxu0
    %v5048 = vadd.f32 %v4842, %v5047
    %v5049 = vpop.f32.mrb[0].mxu0
    %v5050 = vadd.f32 %v4846, %v5049
    %5051 = vmatprep.mubr.f32.mxu0 0.0
    %5052 = vmatmul.mubr.f32.gmra.mrb[0].mxu0 %v4859
    %v5053 = vpop.f32.mrb[0].mxu0
    %v5054 = vadd.f32 %v4842, %v5053
    %v5055 = vpop.f32.mrb[0].mxu0
    %v5056 = vadd.f32 %v4846, %v5055
    %5057 = vmatprep.mubr.f32.mxu0 0.0
    %5058 = vmatmul.mubr.f32.gmra.mrb[0].mxu0 %v4862
    %v5059 = vpop.f32.mrb[0].mxu0
    %v5060 = vadd.f32 %v4842, %v5059
    %v5061 = vpop.f32.mrb[0].mxu0
    %v5062 = vadd.f32 %v4846, %v5061
    %5063 = vmatprep.mubr.f32.mxu0 0.0
    %5064 = vmatmul.mubr.f32.gmra.mrb[0].mxu0 %v4865
    %v5065 = vpop.f32.mrb[0].mxu0
    %v5066 = vadd.f32 %v4842, %v5065
    %v5067 = vpop.f32.mrb[0].mxu0
    %v5068 = vadd.f32 %v4846, %v5067
    %5069 = vmatprep.mubr.f32.mxu0 0.0
    %5070 = vmatmul.mubr.f32.gmra.mrb[0].mxu0 %v4868
    %v5071 = vpop.f32.mrb[0].mxu0
    %v5072 = vadd.f32 %v4842, %v5071
    %v5073 = vpop.f32.mrb[0].mxu0
    %v5074 = vadd.f32 %v4846, %v5073
    %5075 = vmatprep.mubr.f32.mxu0 0.0
    %5076 = vmatmul.mubr.f32.gmra.mrb[0].mxu0 %v4871
    %v5077 = vpop.f32.mrb[0].mxu0
    %v5078 = vadd.f32 %v4842, %v5077
    %v5079 = vpop.f32.mrb[0].mxu0
    %v5080 = vadd.f32 %v4846, %v5079
    %5081 = vdwg.mxu0
    %v5082 = vmax.f32 %v5036, 0.0
    %v5083 = vmax.f32 %v5038, 0.0
    %v5084 = vmax.f32 %v5042, 0.0
    %v5085 = vmax.f32 %v5044, 0.0
    %v5086 = vmax.f32 %v5048, 0.0
    %v5087 = vmax.f32 %v5050, 0.0
    %v5088 = vmax.f32 %v5054, 0.0
    %v5089 = vmax.f32 %v5056, 0.0
    %v5090 = vmax.f32 %v5060, 0.0
    %v5091 = vmax.f32 %v5062, 0.0
    %v5092 = vmax.f32 %v5066, 0.0
    %v5093 = vmax.f32 %v5068, 0.0
    %v5094 = vmax.f32 %v5072, 0.0
    %v5095 = vmax.f32 %v5074, 0.0
    %v5096 = vmax.f32 %v5078, 0.0
    %v5097 = vmax.f32 %v5080, 0.0
    %v5098 = vld [vmem:[%s17] sm:$0xff]
    %v5099 = vld [vmem:[%s17 + $0x8] sm:$0xff]
    %v5100 = vld [vmem:[%s17 + $0x10] sm:$0xff]
    %v5101 = vld [vmem:[%s17 + $0x18] sm:$0xff]
    %v5102 = vld [vmem:[%s17 + $0x20] sm:$0xff]
    %v5103 = vld [vmem:[%s17 + $0x28] sm:$0xff]
    %v5104 = vld [vmem:[%s17 + $0x30] sm:$0xff]
    %v5105 = vld [vmem:[%s17 + $0x38] sm:$0xff]
    %v5106 = vld [vmem:[%s18] sm:$0x1]
    %v5108 = vlaneseq
    %v5109 = vshrl.u32 %v5108, 7
    %v5110 = vsub.s32 0, %v5109
    %v5111 = vrot.slane %v5106, %v5110
    %5113 = vmatprep.subr.mxu0 %v5099
    %5114 = vmatpush1.xpose.msra.mxu0 %v5098
    %5115 = vmatprep.subr.mxu0 %v5101
    %5116 = vmatpush1.xpose.msra.mxu0 %v5100
    %5117 = vmatprep.subr.mxu0 %v5103
    %5118 = vmatpush1.xpose.msra.mxu0 %v5102
    %5119 = vmatprep.subr.mxu0 %v5105
    %5120 = vmatpush1.xpose.msra.mxu0 %v5104
    %5121 = vmatprep.subr.mxu0 0.0
    %5122 = vmatpush1.xpose.msra.mxu0 0.0
    %5123 = vmatprep.subr.mxu0 0.0
    %5124 = vmatpush1.xpose.msra.mxu0 0.0
    %5125 = vmatprep.subr.mxu0 0.0
    %5126 = vmatpush1.xpose.msra.mxu0 0.0
    %5127 = vmatprep.subr.mxu0 0.0
    %5128 = vmatpush1.xpose.msra.mxu0 0.0
    %5129 = vmatprep.subr.mxu0 0.0
    %5130 = vmatpush1.xpose.msra.mxu0 0.0
    %5131 = vmatprep.subr.mxu0 0.0
    %5132 = vmatpush1.xpose.msra.mxu0 0.0
    %5133 = vmatprep.subr.mxu0 0.0
    %5134 = vmatpush1.xpose.msra.mxu0 0.0
    %5135 = vmatprep.subr.mxu0 0.0
    %5136 = vmatpush1.xpose.msra.mxu0 0.0
    %5137 = vmatprep.subr.mxu0 0.0
    %5138 = vmatpush1.xpose.msra.mxu0 0.0
    %5139 = vmatprep.subr.mxu0 0.0
    %5140 = vmatpush1.xpose.msra.mxu0 0.0
    %5141 = vmatprep.subr.mxu0 0.0
    %5142 = vmatpush1.xpose.msra.mxu0 0.0
    %5143 = vmatprep.subr.mxu0 0.0
    %5144 = vmatpush1.xpose.msra.mxu0 0.0
    %5145 = vmatprep.subr.mxu0 0.0
    %5146 = vmatpush1.xpose.msra.mxu0 0.0
    %5147 = vmatprep.subr.mxu0 0.0
    %5148 = vmatpush1.xpose.msra.mxu0 0.0
    %5149 = vmatprep.subr.mxu0 0.0
    %5150 = vmatpush1.xpose.msra.mxu0 0.0
    %5151 = vmatprep.subr.mxu0 0.0
    %5152 = vmatpush1.xpose.msra.mxu0 0.0
    %5153 = vmatprep.subr.mxu0 0.0
    %5154 = vmatpush1.xpose.msra.mxu0 0.0
    %5155 = vmatprep.subr.mxu0 0.0
    %5156 = vmatpush1.xpose.msra.mxu0 0.0
    %5157 = vmatprep.subr.mxu0 0.0
    %5158 = vmatpush1.xpose.msra.mxu0 0.0
    %5159 = vmatprep.subr.mxu0 0.0
    %5160 = vmatpush1.xpose.msra.mxu0 0.0
    %5161 = vmatprep.subr.mxu0 0.0
    %5162 = vmatpush1.xpose.msra.mxu0 0.0
    %5163 = vmatprep.subr.mxu0 0.0
    %5164 = vmatpush1.xpose.msra.mxu0 0.0
    %5165 = vmatprep.subr.mxu0 0.0
    %5166 = vmatpush1.xpose.msra.mxu0 0.0
    %5167 = vmatprep.subr.mxu0 0.0
    %5168 = vmatpush1.xpose.msra.mxu0 0.0
    %5169 = vmatprep.subr.mxu0 0.0
    %5170 = vmatpush1.xpose.msra.mxu0 0.0
    %5171 = vmatprep.subr.mxu0 0.0
    %5172 = vmatpush1.xpose.msra.mxu0 0.0
    %5173 = vmatprep.subr.mxu0 0.0
    %5174 = vmatpush1.xpose.msra.mxu0 0.0
    %5175 = vmatprep.subr.mxu0 0.0
    %5176 = vmatpush1.xpose.msra.mxu0 0.0
    %5177 = vmatprep.mubr.f32.mxu0 %v5083
    %5178 = vmatmul.mubr.f32.gmra.mrb[0].mxu0 %v5082
    %v5179 = vpop.f32.mrb[0].mxu0
    %v5180 = vadd.f32 %v5111, %v5179
    %v5181 = vpop.f32.mrb[0].mxu0
    %5182 = vmatprep.mubr.f32.mxu0 %v5085
    %5183 = vmatmul.mubr.f32.gmra.mrb[0].mxu0 %v5084
    %v5184 = vpop.f32.mrb[0].mxu0
    %v5185 = vadd.f32 %v5111, %v5184
    %v5186 = vpop.f32.mrb[0].mxu0
    %5187 = vmatprep.mubr.f32.mxu0 %v5087
    %5188 = vmatmul.mubr.f32.gmra.mrb[0].mxu0 %v5086
    %v5189 = vpop.f32.mrb[0].mxu0
    %v5190 = vadd.f32 %v5111, %v5189
    %v5191 = vpop.f32.mrb[0].mxu0
    %5192 = vmatprep.mubr.f32.mxu0 %v5089
    %5193 = vmatmul.mubr.f32.gmra.mrb[0].mxu0 %v5088
    %v5194 = vpop.f32.mrb[0].mxu0
    %v5195 = vadd.f32 %v5111, %v5194
    %v5196 = vpop.f32.mrb[0].mxu0
    %5197 = vmatprep.mubr.f32.mxu0 %v5091
    %5198 = vmatmul.mubr.f32.gmra.mrb[0].mxu0 %v5090
    %v5199 = vpop.f32.mrb[0].mxu0
    %v5200 = vadd.f32 %v5111, %v5199
    %v5201 = vpop.f32.mrb[0].mxu0
    %5202 = vmatprep.mubr.f32.mxu0 %v5093
    %5203 = vmatmul.mubr.f32.gmra.mrb[0].mxu0 %v5092
    %v5204 = vpop.f32.mrb[0].mxu0
    %v5205 = vadd.f32 %v5111, %v5204
    %v5206 = vpop.f32.mrb[0].mxu0
    %5207 = vmatprep.mubr.f32.mxu0 %v5095
    %5208 = vmatmul.mubr.f32.gmra.mrb[0].mxu0 %v5094
    %v5209 = vpop.f32.mrb[0].mxu0
    %v5210 = vadd.f32 %v5111, %v5209
    %v5211 = vpop.f32.mrb[0].mxu0
    %5212 = vmatprep.mubr.f32.mxu0 %v5097
    %5213 = vmatmul.mubr.f32.gmra.mrb[0].mxu0 %v5096
    %v5214 = vpop.f32.mrb[0].mxu0
    %v5215 = vadd.f32 %v5111, %v5214
    %v5216 = vpop.f32.mrb[0].mxu0
    %5217 = vdwg.mxu0
    %5218 = vst [vmem:[%s22] sm:$0xff] %v5082
    %5219 = vst [vmem:[%s22 + $0x8] sm:$0xff] %v5083
    %5220 = vst [vmem:[%s22 + $0x10] sm:$0xff] %v5084
    %5221 = vst [vmem:[%s22 + $0x18] sm:$0xff] %v5085
    %5222 = vst [vmem:[%s22 + $0x20] sm:$0xff] %v5086
    %5223 = vst [vmem:[%s22 + $0x28] sm:$0xff] %v5087
    %5224 = vst [vmem:[%s22 + $0x30] sm:$0xff] %v5088
    %5225 = vst [vmem:[%s22 + $0x38] sm:$0xff] %v5089
    %5226 = vst [vmem:[%s22 + $0x40] sm:$0xff] %v5090
    %5227 = vst [vmem:[%s22 + $0x48] sm:$0xff] %v5091
    %5228 = vst [vmem:[%s22 + $0x50] sm:$0xff] %v5092
    %5229 = vst [vmem:[%s22 + $0x58] sm:$0xff] %v5093
    %5230 = vst [vmem:[%s22 + $0x60] sm:$0xff] %v5094
    %5231 = vst [vmem:[%s22 + $0x68] sm:$0xff] %v5095
    %5232 = vst [vmem:[%s22 + $0x70] sm:$0xff] %v5096
    %5233 = vst [vmem:[%s22 + $0x78] sm:$0xff] %v5097
    %v5234 = vsub.f32 %v5180, %v4797
    %v5235 = vsub.f32 %v5185, %v4798
    %v5236 = vsub.f32 %v5190, %v4799
    %v5237 = vsub.f32 %v5195, %v4800
    %v5238 = vsub.f32 %v5200, %v4801
    %v5239 = vsub.f32 %v5205, %v4802
    %v5240 = vsub.f32 %v5210, %v4803
    %v5241 = vsub.f32 %v5215, %v4804
    %v5242 = vmul.f32 %v5234, %v5234
    %v5243 = vmul.f32 %v5235, %v5235
    %v5244 = vmul.f32 %v5236, %v5236
    %v5245 = vmul.f32 %v5237, %v5237
    %v5246 = vmul.f32 %v5238, %v5238
    %v5247 = vmul.f32 %v5239, %v5239
    %v5248 = vmul.f32 %v5240, %v5240
    %v5249 = vmul.f32 %v5241, %v5241
    %v5250 = vsel %vm101, %v5242, 0.0
    %v5251 = vsel %vm101, %v5243, 0.0
    %v5252 = vadd.f32 %v5250, %v5251
    %v5253 = vsel %vm101, %v5244, 0.0
    %v5254 = vadd.f32 %v5252, %v5253
    %v5255 = vsel %vm101, %v5245, 0.0
    %v5256 = vadd.f32 %v5254, %v5255
    %v5257 = vsel %vm101, %v5246, 0.0
    %v5258 = vadd.f32 %v5256, %v5257
    %v5259 = vsel %vm101, %v5247, 0.0
    %v5260 = vadd.f32 %v5258, %v5259
    %v5261 = vsel %vm101, %v5248, 0.0
    %v5262 = vadd.f32 %v5260, %v5261
    %v5263 = vsel %vm101, %v5249, 0.0
    %v5264 = vadd.f32 %v5262, %v5263
    %5265 = vadd.xlane.f32.xlu0 %v5264
    %v5266 = vpop.xlane.xlu0 %5265
    %v5267 = vrot.slane %v5266, 4
    %v5268 = vadd.f32 %v5266, %v5267
    %v5269 = vrot.slane %v5268, 2
    %v5270 = vadd.f32 %v5268, %v5269
    %v5271 = vrot.slane %v5270, 1
    %v5272 = vadd.f32 %v5270, %v5271
    %s5273 = vtos %v5272
    %v5274 = vrcp.pop 2048.0
    %s5275 = vtos %v5274
    %s5276 = smul.f32 %s5273, %s5275
    %s5277 = sadd.f32 %s5276, 0.0
    %s5278 = sld [smem:[#allocation6 + $0x1]]
    %v5279 = vstv %s5278
    %v5280 = vmul.f32 %v5279, %v4797
    %v5281 = vmul.f32 %v5279, %v4798
    %v5282 = vmul.f32 %v5279, %v4799
    %v5283 = vmul.f32 %v5279, %v4800
    %v5284 = vmul.f32 %v5279, %v4801
    %v5285 = vmul.f32 %v5279, %v4802
    %v5286 = vmul.f32 %v5279, %v4803
    %v5287 = vmul.f32 %v5279, %v4804
    %v5288 = vmul.f32 %v5280, %v5280
    %v5289 = vmul.f32 %v5281, %v5281
    %v5290 = vmul.f32 %v5282, %v5282
    %v5291 = vmul.f32 %v5283, %v5283
    %v5292 = vmul.f32 %v5284, %v5284
    %v5293 = vmul.f32 %v5285, %v5285
    %v5294 = vmul.f32 %v5286, %v5286
    %v5295 = vmul.f32 %v5287, %v5287
    %v5296 = vsel %vm101, %v5288, 0.0
    %5297 = vadd.xlane.f32.xlu0 %v5296
    %v5298 = vpop.xlane.xlu0 %5297
    %v5299 = vsel %vm101, %v5289, 0.0
    %5300 = vadd.xlane.f32.xlu0 %v5299
    %v5301 = vpop.xlane.xlu0 %5300
    %v5302 = vsel %vm101, %v5290, 0.0
    %5303 = vadd.xlane.f32.xlu0 %v5302
    %v5304 = vpop.xlane.xlu0 %5303
    %v5305 = vsel %vm101, %v5291, 0.0
    %5306 = vadd.xlane.f32.xlu0 %v5305
    %v5307 = vpop.xlane.xlu0 %5306
    %v5308 = vsel %vm101, %v5292, 0.0
    %5309 = vadd.xlane.f32.xlu0 %v5308
    %v5310 = vpop.xlane.xlu0 %5309
    %v5311 = vsel %vm101, %v5293, 0.0
    %5312 = vadd.xlane.f32.xlu0 %v5311
    %v5313 = vpop.xlane.xlu0 %5312
    %v5314 = vsel %vm101, %v5294, 0.0
    %5315 = vadd.xlane.f32.xlu0 %v5314
    %v5316 = vpop.xlane.xlu0 %5315
    %v5317 = vsel %vm101, %v5295, 0.0
    %5318 = vadd.xlane.f32.xlu0 %v5317
    %v5319 = vpop.xlane.xlu0 %5318
    %v5320 = vmul.f32 %v5298, %v318
    %v5321 = vmul.f32 %v5301, %v318
    %v5322 = vmul.f32 %v5304, %v318
    %v5323 = vmul.f32 %v5307, %v318
    %v5324 = vmul.f32 %v5310, %v318
    %v5325 = vmul.f32 %v5313, %v318
    %v5326 = vmul.f32 %v5316, %v318
    %v5327 = vmul.f32 %v5319, %v318
    %v5328 = vadd.f32 %v5320, 1.1920929e-07
    %v5329 = vadd.f32 %v5321, 1.1920929e-07
    %v5330 = vadd.f32 %v5322, 1.1920929e-07
    %v5331 = vadd.f32 %v5323, 1.1920929e-07
    %v5332 = vadd.f32 %v5324, 1.1920929e-07
    %v5333 = vadd.f32 %v5325, 1.1920929e-07
    %v5334 = vadd.f32 %v5326, 1.1920929e-07
    %v5335 = vadd.f32 %v5327, 1.1920929e-07
    %v5336 = vrsqrt.pop %v5328
    %v5337 = vrsqrt.pop %v5329
    %v5338 = vrsqrt.pop %v5330
    %v5339 = vrsqrt.pop %v5331
    %v5340 = vrsqrt.pop %v5332
    %v5341 = vrsqrt.pop %v5333
    %v5342 = vrsqrt.pop %v5334
    %v5343 = vrsqrt.pop %v5335
    %v5344 = vmul.f32 %v5280, %v5336
    %v5345 = vmul.f32 %v5281, %v5337
    %v5346 = vmul.f32 %v5282, %v5338
    %v5347 = vmul.f32 %v5283, %v5339
    %v5348 = vmul.f32 %v5284, %v5340
    %v5349 = vmul.f32 %v5285, %v5341
    %v5350 = vmul.f32 %v5286, %v5342
    %v5351 = vmul.f32 %v5287, %v5343
    %s5352 = scalar_lea.vmem %s11, 96
    %v5353 = vld [vmem:[%s5352] sm:$0xff]
    %v5354 = vld [vmem:[%s5352 + $0x8] sm:$0xff]
    %v5355 = vld [vmem:[%s5352 + $0x10] sm:$0xff]
    %v5356 = vld [vmem:[%s5352 + $0x18] sm:$0xff]
    %v5357 = vld [vmem:[%s5352 + $0x20] sm:$0xff]
    %v5358 = vld [vmem:[%s5352 + $0x28] sm:$0xff]
    %v5359 = vld [vmem:[%s5352 + $0x30] sm:$0xff]
    %v5360 = vld [vmem:[%s5352 + $0x38] sm:$0xff]
    %v5361 = vld [vmem:[%s5352 + $0x40] sm:$0xff]
    %v5362 = vld [vmem:[%s5352 + $0x48] sm:$0xff]
    %v5363 = vld [vmem:[%s5352 + $0x50] sm:$0xff]
    %v5364 = vld [vmem:[%s5352 + $0x58] sm:$0xff]
    %v5366 = vsel %vm101, %v5344, 0
    %v5369 = vsel %vm101, %v5345, 0
    %v5372 = vsel %vm101, %v5346, 0
    %v5375 = vsel %vm101, %v5347, 0
    %v5378 = vsel %vm101, %v5348, 0
    %v5381 = vsel %vm101, %v5349, 0
    %v5384 = vsel %vm101, %v5350, 0
    %v5387 = vsel %vm101, %v5351, 0
    %v5390 = vsel %vm101, %v5353, 0
    %v5393 = vsel %vm101, %v5354, 0
    %v5396 = vsel %vm101, %v5355, 0
    %v5399 = vsel %vm101, %v5356, 0
    %v5402 = vsel %vm101, %v5357, 0
    %v5405 = vsel %vm101, %v5358, 0
    %v5408 = vsel %vm101, %v5359, 0
    %v5411 = vsel %vm101, %v5360, 0
    %v5414 = vsel %vm101, %v5361, 0
    %v5417 = vsel %vm101, %v5362, 0
    %v5420 = vsel %vm101, %v5363, 0
    %v5423 = vsel %vm101, %v5364, 0
    %5425 = vmatprep.subr.mxu0 0.0
    %5426 = vmatpush1.xpose.msra.mxu0 %v5390
    %5427 = vmatprep.subr.mxu0 0.0
    %5428 = vmatpush1.xpose.msra.mxu0 %v5393
    %5429 = vmatprep.subr.mxu0 0.0
    %5430 = vmatpush1.xpose.msra.mxu0 %v5396
    %5431 = vmatprep.subr.mxu0 0.0
    %5432 = vmatpush1.xpose.msra.mxu0 %v5399
    %5433 = vmatprep.subr.mxu0 0.0
    %5434 = vmatpush1.xpose.msra.mxu0 %v5402
    %5435 = vmatprep.subr.mxu0 0.0
    %5436 = vmatpush1.xpose.msra.mxu0 %v5405
    %5437 = vmatprep.subr.mxu0 0.0
    %5438 = vmatpush1.xpose.msra.mxu0 %v5408
    %5439 = vmatprep.subr.mxu0 0.0
    %5440 = vmatpush1.xpose.msra.mxu0 %v5411
    %5441 = vmatprep.subr.mxu0 0.0
    %5442 = vmatpush1.xpose.msra.mxu0 %v5414
    %5443 = vmatprep.subr.mxu0 0.0
    %5444 = vmatpush1.xpose.msra.mxu0 %v5417
    %5445 = vmatprep.subr.mxu0 0.0
    %5446 = vmatpush1.xpose.msra.mxu0 %v5420
    %5447 = vmatprep.subr.mxu0 0.0
    %5448 = vmatpush1.xpose.msra.mxu0 %v5423
    %5449 = vmatprep.subr.mxu0 0.0
    %5450 = vmatpush1.xpose.msra.mxu0 0.0
    %5451 = vmatprep.subr.mxu0 0.0
    %5452 = vmatpush1.xpose.msra.mxu0 0.0
    %5453 = vmatprep.subr.mxu0 0.0
    %5454 = vmatpush1.xpose.msra.mxu0 0.0
    %5455 = vmatprep.subr.mxu0 0.0
    %5456 = vmatpush1.xpose.msra.mxu0 0.0
    %5457 = vmatprep.subr.mxu0 0.0
    %5458 = vmatpush1.xpose.msra.mxu0 0.0
    %5459 = vmatprep.subr.mxu0 0.0
    %5460 = vmatpush1.xpose.msra.mxu0 0.0
    %5461 = vmatprep.subr.mxu0 0.0
    %5462 = vmatpush1.xpose.msra.mxu0 0.0
    %5463 = vmatprep.subr.mxu0 0.0
    %5464 = vmatpush1.xpose.msra.mxu0 0.0
    %5465 = vmatprep.subr.mxu0 0.0
    %5466 = vmatpush1.xpose.msra.mxu0 0.0
    %5467 = vmatprep.subr.mxu0 0.0
    %5468 = vmatpush1.xpose.msra.mxu0 0.0
    %5469 = vmatprep.subr.mxu0 0.0
    %5470 = vmatpush1.xpose.msra.mxu0 0.0
    %5471 = vmatprep.subr.mxu0 0.0
    %5472 = vmatpush1.xpose.msra.mxu0 0.0
    %5473 = vmatprep.subr.mxu0 0.0
    %5474 = vmatpush1.xpose.msra.mxu0 0.0
    %5475 = vmatprep.subr.mxu0 0.0
    %5476 = vmatpush1.xpose.msra.mxu0 0.0
    %5477 = vmatprep.subr.mxu0 0.0
    %5478 = vmatpush1.xpose.msra.mxu0 0.0
    %5479 = vmatprep.subr.mxu0 0.0
    %5480 = vmatpush1.xpose.msra.mxu0 0.0
    %5481 = vmatprep.subr.mxu0 0.0
    %5482 = vmatpush1.xpose.msra.mxu0 0.0
    %5483 = vmatprep.subr.mxu0 0.0
    %5484 = vmatpush1.xpose.msra.mxu0 0.0
    %5485 = vmatprep.subr.mxu0 0.0
    %5486 = vmatpush1.xpose.msra.mxu0 0.0
    %5487 = vmatprep.subr.mxu0 0.0
    %5488 = vmatpush1.xpose.msra.mxu0 0.0
    %5489 = vmatprep.mubr.f32.mxu0 0.0
    %5490 = vmatmul.mubr.f32.gmra.mrb[0].mxu0 %v5366
    %v5491 = vpop.f32.mrb[0].mxu0
    %v5492 = vadd.f32 0.0, %v5491
    %v5493 = vpop.f32.mrb[0].mxu0
    %5494 = vmatprep.mubr.f32.mxu0 0.0
    %5495 = vmatmul.mubr.f32.gmra.mrb[0].mxu0 %v5369
    %v5496 = vpop.f32.mrb[0].mxu0
    %v5497 = vadd.f32 0.0, %v5496
    %v5498 = vpop.f32.mrb[0].mxu0
    %5499 = vmatprep.mubr.f32.mxu0 0.0
    %5500 = vmatmul.mubr.f32.gmra.mrb[0].mxu0 %v5372
    %v5501 = vpop.f32.mrb[0].mxu0
    %v5502 = vadd.f32 0.0, %v5501
    %v5503 = vpop.f32.mrb[0].mxu0
    %5504 = vmatprep.mubr.f32.mxu0 0.0
    %5505 = vmatmul.mubr.f32.gmra.mrb[0].mxu0 %v5375
    %v5506 = vpop.f32.mrb[0].mxu0
    %v5507 = vadd.f32 0.0, %v5506
    %v5508 = vpop.f32.mrb[0].mxu0
    %5509 = vmatprep.mubr.f32.mxu0 0.0
    %5510 = vmatmul.mubr.f32.gmra.mrb[0].mxu0 %v5378
    %v5511 = vpop.f32.mrb[0].mxu0
    %v5512 = vadd.f32 0.0, %v5511
    %v5513 = vpop.f32.mrb[0].mxu0
    %5514 = vmatprep.mubr.f32.mxu0 0.0
    %5515 = vmatmul.mubr.f32.gmra.mrb[0].mxu0 %v5381
    %v5516 = vpop.f32.mrb[0].mxu0
    %v5517 = vadd.f32 0.0, %v5516
    %v5518 = vpop.f32.mrb[0].mxu0
    %5519 = vmatprep.mubr.f32.mxu0 0.0
    %5520 = vmatmul.mubr.f32.gmra.mrb[0].mxu0 %v5384
    %v5521 = vpop.f32.mrb[0].mxu0
    %v5522 = vadd.f32 0.0, %v5521
    %v5523 = vpop.f32.mrb[0].mxu0
    %5524 = vmatprep.mubr.f32.mxu0 0.0
    %5525 = vmatmul.mubr.f32.gmra.mrb[0].mxu0 %v5387
    %v5526 = vpop.f32.mrb[0].mxu0
    %v5527 = vadd.f32 0.0, %v5526
    %v5528 = vpop.f32.mrb[0].mxu0
    %5529 = vdwg.mxu0
    %s5530 = sld [smem:[#allocation2 + $0x1]]
    %v5531 = vmul.f32 %v5492, %v5492
    %v5532 = vmul.f32 %v5497, %v5497
    %v5533 = vmul.f32 %v5502, %v5502
    %v5534 = vmul.f32 %v5507, %v5507
    %v5535 = vmul.f32 %v5512, %v5512
    %v5536 = vmul.f32 %v5517, %v5517
    %v5537 = vmul.f32 %v5522, %v5522
    %v5538 = vmul.f32 %v5527, %v5527
    %v5539 = vsel %vm647, %v5531, 0.0
    %5540 = vadd.xlane.f32.xlu0 %v5539
    %v5541 = vpop.xlane.xlu0 %5540
    %v5542 = vsel %vm647, %v5532, 0.0
    %5543 = vadd.xlane.f32.xlu0 %v5542
    %v5544 = vpop.xlane.xlu0 %5543
    %v5545 = vsel %vm647, %v5533, 0.0
    %5546 = vadd.xlane.f32.xlu0 %v5545
    %v5547 = vpop.xlane.xlu0 %5546
    %v5548 = vsel %vm647, %v5534, 0.0
    %5549 = vadd.xlane.f32.xlu0 %v5548
    %v5550 = vpop.xlane.xlu0 %5549
    %v5551 = vsel %vm647, %v5535, 0.0
    %5552 = vadd.xlane.f32.xlu0 %v5551
    %v5553 = vpop.xlane.xlu0 %5552
    %v5554 = vsel %vm647, %v5536, 0.0
    %5555 = vadd.xlane.f32.xlu0 %v5554
    %v5556 = vpop.xlane.xlu0 %5555
    %v5557 = vsel %vm647, %v5537, 0.0
    %5558 = vadd.xlane.f32.xlu0 %v5557
    %v5559 = vpop.xlane.xlu0 %5558
    %v5560 = vsel %vm647, %v5538, 0.0
    %5561 = vadd.xlane.f32.xlu0 %v5560
    %v5562 = vpop.xlane.xlu0 %5561
    %v5563 = vmul.f32 %v5541, %v672
    %v5564 = vmul.f32 %v5544, %v672
    %v5565 = vmul.f32 %v5547, %v672
    %v5566 = vmul.f32 %v5550, %v672
    %v5567 = vmul.f32 %v5553, %v672
    %v5568 = vmul.f32 %v5556, %v672
    %v5569 = vmul.f32 %v5559, %v672
    %v5570 = vmul.f32 %v5562, %v672
    %v5571 = vadd.f32 %v5563, 1.1920929e-07
    %v5572 = vadd.f32 %v5564, 1.1920929e-07
    %v5573 = vadd.f32 %v5565, 1.1920929e-07
    %v5574 = vadd.f32 %v5566, 1.1920929e-07
    %v5575 = vadd.f32 %v5567, 1.1920929e-07
    %v5576 = vadd.f32 %v5568, 1.1920929e-07
    %v5577 = vadd.f32 %v5569, 1.1920929e-07
    %v5578 = vadd.f32 %v5570, 1.1920929e-07
    %v5579 = vrsqrt.pop %v5571
    %v5580 = vrsqrt.pop %v5572
    %v5581 = vrsqrt.pop %v5573
    %v5582 = vrsqrt.pop %v5574
    %v5583 = vrsqrt.pop %v5575
    %v5584 = vrsqrt.pop %v5576
    %v5585 = vrsqrt.pop %v5577
    %v5586 = vrsqrt.pop %v5578
    %v5587 = vmul.f32 %v5492, %v5579
    %v5588 = vmul.f32 %v5497, %v5580
    %v5589 = vmul.f32 %v5502, %v5581
    %v5590 = vmul.f32 %v5507, %v5582
    %v5591 = vmul.f32 %v5512, %v5583
    %v5592 = vmul.f32 %v5517, %v5584
    %v5593 = vmul.f32 %v5522, %v5585
    %v5594 = vmul.f32 %v5527, %v5586
    %5603 = vrot.lane.b32.xlu0 %v5587, 124
    %v5604 = vpop.permute.xlu0 %5603
    %5605 = vrot.lane.b32.xlu0 %v5588, 124
    %v5606 = vpop.permute.xlu0 %5605
    %5607 = vrot.lane.b32.xlu0 %v5589, 124
    %v5608 = vpop.permute.xlu0 %5607
    %5609 = vrot.lane.b32.xlu0 %v5590, 124
    %v5610 = vpop.permute.xlu0 %5609
    %5611 = vrot.lane.b32.xlu0 %v5591, 124
    %v5612 = vpop.permute.xlu0 %5611
    %5613 = vrot.lane.b32.xlu0 %v5592, 124
    %v5614 = vpop.permute.xlu0 %5613
    %5615 = vrot.lane.b32.xlu0 %v5593, 124
    %v5616 = vpop.permute.xlu0 %5615
    %5617 = vrot.lane.b32.xlu0 %v5594, 124
    %v5618 = vpop.permute.xlu0 %5617
    %5627 = vrot.lane.b32.xlu0 %v5587, 4
    %v5628 = vpop.permute.xlu0 %5627
    %5629 = vrot.lane.b32.xlu0 %v5588, 4
    %v5630 = vpop.permute.xlu0 %5629
    %5631 = vrot.lane.b32.xlu0 %v5589, 4
    %v5632 = vpop.permute.xlu0 %5631
    %5633 = vrot.lane.b32.xlu0 %v5590, 4
    %v5634 = vpop.permute.xlu0 %5633
    %5635 = vrot.lane.b32.xlu0 %v5591, 4
    %v5636 = vpop.permute.xlu0 %5635
    %5637 = vrot.lane.b32.xlu0 %v5592, 4
    %v5638 = vpop.permute.xlu0 %5637
    %5639 = vrot.lane.b32.xlu0 %v5593, 4
    %v5640 = vpop.permute.xlu0 %5639
    %5641 = vrot.lane.b32.xlu0 %v5594, 4
    %v5642 = vpop.permute.xlu0 %5641
    %v5651 = vsel %vm761, %v5604, %v5628
    %v5652 = vsel %vm761, %v5606, %v5630
    %v5653 = vsel %vm761, %v5608, %v5632
    %v5654 = vsel %vm761, %v5610, %v5634
    %v5655 = vsel %vm761, %v5612, %v5636
    %v5656 = vsel %vm761, %v5614, %v5638
    %v5657 = vsel %vm761, %v5616, %v5640
    %v5658 = vsel %vm761, %v5618, %v5642
    %v5659 = vmul.f32 %v5587, %v363
    %v5660 = vmul.f32 %v5588, %v364
    %v5661 = vmul.f32 %v5589, %v365
    %v5662 = vmul.f32 %v5590, %v366
    %v5663 = vmul.f32 %v5591, %v367
    %v5664 = vmul.f32 %v5592, %v368
    %v5665 = vmul.f32 %v5593, %v369
    %v5666 = vmul.f32 %v5594, %v370
    %v5667 = vmul.f32 %v5651, %v371
    %v5668 = vmul.f32 %v5652, %v372
    %v5669 = vmul.f32 %v5653, %v373
    %v5670 = vmul.f32 %v5654, %v374
    %v5671 = vmul.f32 %v5655, %v375
    %v5672 = vmul.f32 %v5656, %v376
    %v5673 = vmul.f32 %v5657, %v377
    %v5674 = vmul.f32 %v5658, %v378
    %v5675 = vadd.f32 %v5659, %v5667
    %v5676 = vadd.f32 %v5660, %v5668
    %v5677 = vadd.f32 %v5661, %v5669
    %v5678 = vadd.f32 %v5662, %v5670
    %v5679 = vadd.f32 %v5663, %v5671
    %v5680 = vadd.f32 %v5664, %v5672
    %v5681 = vadd.f32 %v5665, %v5673
    %v5682 = vadd.f32 %v5666, %v5674
    %5691 = vrot.lane.b32.xlu0 %v5531, 96
    %v5692 = vpop.permute.xlu0 %5691
    %5693 = vrot.lane.b32.xlu0 %v5532, 96
    %v5694 = vpop.permute.xlu0 %5693
    %5695 = vrot.lane.b32.xlu0 %v5533, 96
    %v5696 = vpop.permute.xlu0 %5695
    %5697 = vrot.lane.b32.xlu0 %v5534, 96
    %v5698 = vpop.permute.xlu0 %5697
    %5699 = vrot.lane.b32.xlu0 %v5535, 96
    %v5700 = vpop.permute.xlu0 %5699
    %5701 = vrot.lane.b32.xlu0 %v5536, 96
    %v5702 = vpop.permute.xlu0 %5701
    %5703 = vrot.lane.b32.xlu0 %v5537, 96
    %v5704 = vpop.permute.xlu0 %5703
    %5705 = vrot.lane.b32.xlu0 %v5538, 96
    %v5706 = vpop.permute.xlu0 %5705
    %v5715 = vsel %vm647, %v5692, 0.0
    %5716 = vadd.xlane.f32.xlu0 %v5715
    %v5717 = vpop.xlane.xlu0 %5716
    %v5718 = vsel %vm647, %v5694, 0.0
    %5719 = vadd.xlane.f32.xlu0 %v5718
    %v5720 = vpop.xlane.xlu0 %5719
    %v5721 = vsel %vm647, %v5696, 0.0
    %5722 = vadd.xlane.f32.xlu0 %v5721
    %v5723 = vpop.xlane.xlu0 %5722
    %v5724 = vsel %vm647, %v5698, 0.0
    %5725 = vadd.xlane.f32.xlu0 %v5724
    %v5726 = vpop.xlane.xlu0 %5725
    %v5727 = vsel %vm647, %v5700, 0.0
    %5728 = vadd.xlane.f32.xlu0 %v5727
    %v5729 = vpop.xlane.xlu0 %5728
    %v5730 = vsel %vm647, %v5702, 0.0
    %5731 = vadd.xlane.f32.xlu0 %v5730
    %v5732 = vpop.xlane.xlu0 %5731
    %v5733 = vsel %vm647, %v5704, 0.0
    %5734 = vadd.xlane.f32.xlu0 %v5733
    %v5735 = vpop.xlane.xlu0 %5734
    %v5736 = vsel %vm647, %v5706, 0.0
    %5737 = vadd.xlane.f32.xlu0 %v5736
    %v5738 = vpop.xlane.xlu0 %5737
    %v5739 = vmul.f32 %v5717, %v672
    %v5740 = vmul.f32 %v5720, %v672
    %v5741 = vmul.f32 %v5723, %v672
    %v5742 = vmul.f32 %v5726, %v672
    %v5743 = vmul.f32 %v5729, %v672
    %v5744 = vmul.f32 %v5732, %v672
    %v5745 = vmul.f32 %v5735, %v672
    %v5746 = vmul.f32 %v5738, %v672
    %v5747 = vadd.f32 %v5739, 1.1920929e-07
    %v5748 = vadd.f32 %v5740, 1.1920929e-07
    %v5749 = vadd.f32 %v5741, 1.1920929e-07
    %v5750 = vadd.f32 %v5742, 1.1920929e-07
    %v5751 = vadd.f32 %v5743, 1.1920929e-07
    %v5752 = vadd.f32 %v5744, 1.1920929e-07
    %v5753 = vadd.f32 %v5745, 1.1920929e-07
    %v5754 = vadd.f32 %v5746, 1.1920929e-07
    %v5755 = vrsqrt.pop %v5747
    %v5756 = vrsqrt.pop %v5748
    %v5757 = vrsqrt.pop %v5749
    %v5758 = vrsqrt.pop %v5750
    %v5759 = vrsqrt.pop %v5751
    %v5760 = vrsqrt.pop %v5752
    %v5761 = vrsqrt.pop %v5753
    %v5762 = vrsqrt.pop %v5754
    %v5763 = vmul.f32 %v5492, %v5755
    %v5764 = vmul.f32 %v5497, %v5756
    %v5765 = vmul.f32 %v5502, %v5757
    %v5766 = vmul.f32 %v5507, %v5758
    %v5767 = vmul.f32 %v5512, %v5759
    %v5768 = vmul.f32 %v5517, %v5760
    %v5769 = vmul.f32 %v5522, %v5761
    %v5770 = vmul.f32 %v5527, %v5762
    %5779 = vrot.lane.b32.xlu0 %v5763, 92
    %v5780 = vpop.permute.xlu0 %5779
    %5781 = vrot.lane.b32.xlu0 %v5764, 92
    %v5782 = vpop.permute.xlu0 %5781
    %5783 = vrot.lane.b32.xlu0 %v5765, 92
    %v5784 = vpop.permute.xlu0 %5783
    %5785 = vrot.lane.b32.xlu0 %v5766, 92
    %v5786 = vpop.permute.xlu0 %5785
    %5787 = vrot.lane.b32.xlu0 %v5767, 92
    %v5788 = vpop.permute.xlu0 %5787
    %5789 = vrot.lane.b32.xlu0 %v5768, 92
    %v5790 = vpop.permute.xlu0 %5789
    %5791 = vrot.lane.b32.xlu0 %v5769, 92
    %v5792 = vpop.permute.xlu0 %5791
    %5793 = vrot.lane.b32.xlu0 %v5770, 92
    %v5794 = vpop.permute.xlu0 %5793
    %5803 = vrot.lane.b32.xlu0 %v5763, 100
    %v5804 = vpop.permute.xlu0 %5803
    %5805 = vrot.lane.b32.xlu0 %v5764, 100
    %v5806 = vpop.permute.xlu0 %5805
    %5807 = vrot.lane.b32.xlu0 %v5765, 100
    %v5808 = vpop.permute.xlu0 %5807
    %5809 = vrot.lane.b32.xlu0 %v5766, 100
    %v5810 = vpop.permute.xlu0 %5809
    %5811 = vrot.lane.b32.xlu0 %v5767, 100
    %v5812 = vpop.permute.xlu0 %5811
    %5813 = vrot.lane.b32.xlu0 %v5768, 100
    %v5814 = vpop.permute.xlu0 %5813
    %5815 = vrot.lane.b32.xlu0 %v5769, 100
    %v5816 = vpop.permute.xlu0 %5815
    %5817 = vrot.lane.b32.xlu0 %v5770, 100
    %v5818 = vpop.permute.xlu0 %5817
    %v5827 = vsel %vm761, %v5780, %v5804
    %v5828 = vsel %vm761, %v5782, %v5806
    %v5829 = vsel %vm761, %v5784, %v5808
    %v5830 = vsel %vm761, %v5786, %v5810
    %v5831 = vsel %vm761, %v5788, %v5812
    %v5832 = vsel %vm761, %v5790, %v5814
    %v5833 = vsel %vm761, %v5792, %v5816
    %v5834 = vsel %vm761, %v5794, %v5818
    %v5835 = vmul.f32 %v5763, %v955
    %v5836 = vmul.f32 %v5764, %v957
    %v5837 = vmul.f32 %v5765, %v959
    %v5838 = vmul.f32 %v5766, %v961
    %v5839 = vmul.f32 %v5767, %v963
    %v5840 = vmul.f32 %v5768, %v965
    %v5841 = vmul.f32 %v5769, %v967
    %v5842 = vmul.f32 %v5770, %v969
    %v5843 = vmul.f32 %v5827, %v371
    %v5844 = vmul.f32 %v5828, %v372
    %v5845 = vmul.f32 %v5829, %v373
    %v5846 = vmul.f32 %v5830, %v374
    %v5847 = vmul.f32 %v5831, %v375
    %v5848 = vmul.f32 %v5832, %v376
    %v5849 = vmul.f32 %v5833, %v377
    %v5850 = vmul.f32 %v5834, %v378
    %5859 = vrot.lane.b32.xlu0 %v5843, 32
    %v5860 = vpop.permute.xlu0 %5859
    %5861 = vrot.lane.b32.xlu0 %v5844, 32
    %v5862 = vpop.permute.xlu0 %5861
    %5863 = vrot.lane.b32.xlu0 %v5845, 32
    %v5864 = vpop.permute.xlu0 %5863
    %5865 = vrot.lane.b32.xlu0 %v5846, 32
    %v5866 = vpop.permute.xlu0 %5865
    %5867 = vrot.lane.b32.xlu0 %v5847, 32
    %v5868 = vpop.permute.xlu0 %5867
    %5869 = vrot.lane.b32.xlu0 %v5848, 32
    %v5870 = vpop.permute.xlu0 %5869
    %5871 = vrot.lane.b32.xlu0 %v5849, 32
    %v5872 = vpop.permute.xlu0 %5871
    %5873 = vrot.lane.b32.xlu0 %v5850, 32
    %v5874 = vpop.permute.xlu0 %5873
    %v5883 = vadd.f32 %v5835, %v5860
    %v5884 = vadd.f32 %v5836, %v5862
    %v5885 = vadd.f32 %v5837, %v5864
    %v5886 = vadd.f32 %v5838, %v5866
    %v5887 = vadd.f32 %v5839, %v5868
    %v5888 = vadd.f32 %v5840, %v5870
    %v5889 = vadd.f32 %v5841, %v5872
    %v5890 = vadd.f32 %v5842, %v5874
    %v5891 = vstv %s5530
    %v5892 = vmul.f32 %v5891, %v5492
    %v5893 = vmul.f32 %v5891, %v5497
    %v5894 = vmul.f32 %v5891, %v5502
    %v5895 = vmul.f32 %v5891, %v5507
    %v5896 = vmul.f32 %v5891, %v5512
    %v5897 = vmul.f32 %v5891, %v5517
    %v5898 = vmul.f32 %v5891, %v5522
    %v5899 = vmul.f32 %v5891, %v5527
    %5908 = vrot.lane.b32.xlu0 %v5883, 96
    %v5909 = vpop.permute.xlu0 %5908
    %5910 = vrot.lane.b32.xlu0 %v5884, 96
    %v5911 = vpop.permute.xlu0 %5910
    %5912 = vrot.lane.b32.xlu0 %v5885, 96
    %v5913 = vpop.permute.xlu0 %5912
    %5914 = vrot.lane.b32.xlu0 %v5886, 96
    %v5915 = vpop.permute.xlu0 %5914
    %5916 = vrot.lane.b32.xlu0 %v5887, 96
    %v5917 = vpop.permute.xlu0 %5916
    %5918 = vrot.lane.b32.xlu0 %v5888, 96
    %v5919 = vpop.permute.xlu0 %5918
    %5920 = vrot.lane.b32.xlu0 %v5889, 96
    %v5921 = vpop.permute.xlu0 %5920
    %5922 = vrot.lane.b32.xlu0 %v5890, 96
    %v5923 = vpop.permute.xlu0 %5922
    %v5925 = vsel %vm647, %v5675, 0
    %v5928 = vsel %vm647, %v5676, 0
    %v5931 = vsel %vm647, %v5677, 0
    %v5934 = vsel %vm647, %v5678, 0
    %v5937 = vsel %vm647, %v5679, 0
    %v5940 = vsel %vm647, %v5680, 0
    %v5943 = vsel %vm647, %v5681, 0
    %v5946 = vsel %vm647, %v5682, 0
    %v5948 = vsel %vm647, %v5909, 0
    %v5950 = vsel %vm647, %v5911, 0
    %v5952 = vsel %vm647, %v5913, 0
    %v5954 = vsel %vm647, %v5915, 0
    %v5956 = vsel %vm647, %v5917, 0
    %v5958 = vsel %vm647, %v5919, 0
    %v5960 = vsel %vm647, %v5921, 0
    %v5962 = vsel %vm647, %v5923, 0
    %5964 = vmatprep.subr.mxu0 0.0
    %5965 = vmatpush1.xpose.msra.mxu0 %v5948
    %5966 = vmatprep.subr.mxu0 0.0
    %5967 = vmatpush1.xpose.msra.mxu0 %v5950
    %5968 = vmatprep.subr.mxu0 0.0
    %5969 = vmatpush1.xpose.msra.mxu0 %v5952
    %5970 = vmatprep.subr.mxu0 0.0
    %5971 = vmatpush1.xpose.msra.mxu0 %v5954
    %5972 = vmatprep.subr.mxu0 0.0
    %5973 = vmatpush1.xpose.msra.mxu0 %v5956
    %5974 = vmatprep.subr.mxu0 0.0
    %5975 = vmatpush1.xpose.msra.mxu0 %v5958
    %5976 = vmatprep.subr.mxu0 0.0
    %5977 = vmatpush1.xpose.msra.mxu0 %v5960
    %5978 = vmatprep.subr.mxu0 0.0
    %5979 = vmatpush1.xpose.msra.mxu0 %v5962
    %5980 = vmatprep.subr.mxu0 0.0
    %5981 = vmatpush1.xpose.msra.mxu0 0.0
    %5982 = vmatprep.subr.mxu0 0.0
    %5983 = vmatpush1.xpose.msra.mxu0 0.0
    %5984 = vmatprep.subr.mxu0 0.0
    %5985 = vmatpush1.xpose.msra.mxu0 0.0
    %5986 = vmatprep.subr.mxu0 0.0
    %5987 = vmatpush1.xpose.msra.mxu0 0.0
    %5988 = vmatprep.subr.mxu0 0.0
    %5989 = vmatpush1.xpose.msra.mxu0 0.0
    %5990 = vmatprep.subr.mxu0 0.0
    %5991 = vmatpush1.xpose.msra.mxu0 0.0
    %5992 = vmatprep.subr.mxu0 0.0
    %5993 = vmatpush1.xpose.msra.mxu0 0.0
    %5994 = vmatprep.subr.mxu0 0.0
    %5995 = vmatpush1.xpose.msra.mxu0 0.0
    %5996 = vmatprep.subr.mxu0 0.0
    %5997 = vmatpush1.xpose.msra.mxu0 0.0
    %5998 = vmatprep.subr.mxu0 0.0
    %5999 = vmatpush1.xpose.msra.mxu0 0.0
    %6000 = vmatprep.subr.mxu0 0.0
    %6001 = vmatpush1.xpose.msra.mxu0 0.0
    %6002 = vmatprep.subr.mxu0 0.0
    %6003 = vmatpush1.xpose.msra.mxu0 0.0
    %6004 = vmatprep.subr.mxu0 0.0
    %6005 = vmatpush1.xpose.msra.mxu0 0.0
    %6006 = vmatprep.subr.mxu0 0.0
    %6007 = vmatpush1.xpose.msra.mxu0 0.0
    %6008 = vmatprep.subr.mxu0 0.0
    %6009 = vmatpush1.xpose.msra.mxu0 0.0
    %6010 = vmatprep.subr.mxu0 0.0
    %6011 = vmatpush1.xpose.msra.mxu0 0.0
    %6012 = vmatprep.subr.mxu0 0.0
    %6013 = vmatpush1.xpose.msra.mxu0 0.0
    %6014 = vmatprep.subr.mxu0 0.0
    %6015 = vmatpush1.xpose.msra.mxu0 0.0
    %6016 = vmatprep.subr.mxu0 0.0
    %6017 = vmatpush1.xpose.msra.mxu0 0.0
    %6018 = vmatprep.subr.mxu0 0.0
    %6019 = vmatpush1.xpose.msra.mxu0 0.0
    %6020 = vmatprep.subr.mxu0 0.0
    %6021 = vmatpush1.xpose.msra.mxu0 0.0
    %6022 = vmatprep.subr.mxu0 0.0
    %6023 = vmatpush1.xpose.msra.mxu0 0.0
    %6024 = vmatprep.subr.mxu0 0.0
    %6025 = vmatpush1.xpose.msra.mxu0 0.0
    %6026 = vmatprep.subr.mxu0 0.0
    %6027 = vmatpush1.xpose.msra.mxu0 0.0
    %6028 = vmatprep.mubr.f32.mxu0 0.0
    %6029 = vmatmul.mubr.f32.gmra.mrb[0].mxu0 %v5925
    %v6030 = vpop.f32.mrb[0].mxu0
    %v6031 = vadd.f32 0.0, %v6030
    %v6032 = vpop.f32.mrb[0].mxu0
    %6033 = vmatprep.mubr.f32.mxu0 0.0
    %6034 = vmatmul.mubr.f32.gmra.mrb[0].mxu0 %v5928
    %v6035 = vpop.f32.mrb[0].mxu0
    %v6036 = vadd.f32 0.0, %v6035
    %v6037 = vpop.f32.mrb[0].mxu0
    %6038 = vmatprep.mubr.f32.mxu0 0.0
    %6039 = vmatmul.mubr.f32.gmra.mrb[0].mxu0 %v5931
    %v6040 = vpop.f32.mrb[0].mxu0
    %v6041 = vadd.f32 0.0, %v6040
    %v6042 = vpop.f32.mrb[0].mxu0
    %6043 = vmatprep.mubr.f32.mxu0 0.0
    %6044 = vmatmul.mubr.f32.gmra.mrb[0].mxu0 %v5934
    %v6045 = vpop.f32.mrb[0].mxu0
    %v6046 = vadd.f32 0.0, %v6045
    %v6047 = vpop.f32.mrb[0].mxu0
    %6048 = vmatprep.mubr.f32.mxu0 0.0
    %6049 = vmatmul.mubr.f32.gmra.mrb[0].mxu0 %v5937
    %v6050 = vpop.f32.mrb[0].mxu0
    %v6051 = vadd.f32 0.0, %v6050
    %v6052 = vpop.f32.mrb[0].mxu0
    %6053 = vmatprep.mubr.f32.mxu0 0.0
    %6054 = vmatmul.mubr.f32.gmra.mrb[0].mxu0 %v5940
    %v6055 = vpop.f32.mrb[0].mxu0
    %v6056 = vadd.f32 0.0, %v6055
    %v6057 = vpop.f32.mrb[0].mxu0
    %6058 = vmatprep.mubr.f32.mxu0 0.0
    %6059 = vmatmul.mubr.f32.gmra.mrb[0].mxu0 %v5943
    %v6060 = vpop.f32.mrb[0].mxu0
    %v6061 = vadd.f32 0.0, %v6060
    %v6062 = vpop.f32.mrb[0].mxu0
    %6063 = vmatprep.mubr.f32.mxu0 0.0
    %6064 = vmatmul.mubr.f32.gmra.mrb[0].mxu0 %v5946
    %v6065 = vpop.f32.mrb[0].mxu0
    %v6066 = vadd.f32 0.0, %v6065
    %v6067 = vpop.f32.mrb[0].mxu0
    %6068 = vdwg.mxu0
    %v6069 = vmul.f32 %v6031, 0.35355338
    %v6070 = vmul.f32 %v6036, 0.35355338
    %v6071 = vmul.f32 %v6041, 0.35355338
    %v6072 = vmul.f32 %v6046, 0.35355338
    %v6073 = vmul.f32 %v6051, 0.35355338
    %v6074 = vmul.f32 %v6056, 0.35355338
    %v6075 = vmul.f32 %v6061, 0.35355338
    %v6076 = vmul.f32 %v6066, 0.35355338
    %v6077 = vadd.f32 %v6069, %v379
    %v6078 = vadd.f32 %v6070, %v380
    %v6079 = vadd.f32 %v6071, %v381
    %v6080 = vadd.f32 %v6072, %v382
    %v6081 = vadd.f32 %v6073, %v383
    %v6082 = vadd.f32 %v6074, %v384
    %v6083 = vadd.f32 %v6075, %v385
    %v6084 = vadd.f32 %v6076, %v386
    %v6085 = vsel %vm1228, %v6077, -inf
    %6086 = vmax.xlane.f32.xlu0 %v6085
    %v6087 = vpop.xlane.xlu0 %6086
    %v6088 = vsel %vm1228, %v6078, -inf
    %6089 = vmax.xlane.f32.xlu0 %v6088
    %v6090 = vpop.xlane.xlu0 %6089
    %v6091 = vsel %vm1228, %v6079, -inf
    %6092 = vmax.xlane.f32.xlu0 %v6091
    %v6093 = vpop.xlane.xlu0 %6092
    %v6094 = vsel %vm1228, %v6080, -inf
    %6095 = vmax.xlane.f32.xlu0 %v6094
    %v6096 = vpop.xlane.xlu0 %6095
    %v6097 = vsel %vm1228, %v6081, -inf
    %6098 = vmax.xlane.f32.xlu0 %v6097
    %v6099 = vpop.xlane.xlu0 %6098
    %v6100 = vsel %vm1228, %v6082, -inf
    %6101 = vmax.xlane.f32.xlu0 %v6100
    %v6102 = vpop.xlane.xlu0 %6101
    %v6103 = vsel %vm1228, %v6083, -inf
    %6104 = vmax.xlane.f32.xlu0 %v6103
    %v6105 = vpop.xlane.xlu0 %6104
    %v6106 = vsel %vm1228, %v6084, -inf
    %6107 = vmax.xlane.f32.xlu0 %v6106
    %v6108 = vpop.xlane.xlu0 %6107
    %v6109 = vsub.f32 %v6077, %v6087
    %v6110 = vsub.f32 %v6078, %v6090
    %v6111 = vsub.f32 %v6079, %v6093
    %v6112 = vsub.f32 %v6080, %v6096
    %v6113 = vsub.f32 %v6081, %v6099
    %v6114 = vsub.f32 %v6082, %v6102
    %v6115 = vsub.f32 %v6083, %v6105
    %v6116 = vsub.f32 %v6084, %v6108
    %v6117 = vmul.f32 %v6109, 1.442695
    %v6118 = vpow.pop %v6117
    %v6119 = vmul.f32 %v6110, 1.442695
    %v6120 = vpow.pop %v6119
    %v6121 = vmul.f32 %v6111, 1.442695
    %v6122 = vpow.pop %v6121
    %v6123 = vmul.f32 %v6112, 1.442695
    %v6124 = vpow.pop %v6123
    %v6125 = vmul.f32 %v6113, 1.442695
    %v6126 = vpow.pop %v6125
    %v6127 = vmul.f32 %v6114, 1.442695
    %v6128 = vpow.pop %v6127
    %v6129 = vmul.f32 %v6115, 1.442695
    %v6130 = vpow.pop %v6129
    %v6131 = vmul.f32 %v6116, 1.442695
    %v6132 = vpow.pop %v6131
    %v6133 = vsel %vm1228, %v6118, 0.0
    %6134 = vadd.xlane.f32.xlu0 %v6133
    %v6135 = vpop.xlane.xlu0 %6134
    %v6136 = vsel %vm1228, %v6120, 0.0
    %6137 = vadd.xlane.f32.xlu0 %v6136
    %v6138 = vpop.xlane.xlu0 %6137
    %v6139 = vsel %vm1228, %v6122, 0.0
    %6140 = vadd.xlane.f32.xlu0 %v6139
    %v6141 = vpop.xlane.xlu0 %6140
    %v6142 = vsel %vm1228, %v6124, 0.0
    %6143 = vadd.xlane.f32.xlu0 %v6142
    %v6144 = vpop.xlane.xlu0 %6143
    %v6145 = vsel %vm1228, %v6126, 0.0
    %6146 = vadd.xlane.f32.xlu0 %v6145
    %v6147 = vpop.xlane.xlu0 %6146
    %v6148 = vsel %vm1228, %v6128, 0.0
    %6149 = vadd.xlane.f32.xlu0 %v6148
    %v6150 = vpop.xlane.xlu0 %6149
    %v6151 = vsel %vm1228, %v6130, 0.0
    %6152 = vadd.xlane.f32.xlu0 %v6151
    %v6153 = vpop.xlane.xlu0 %6152
    %v6154 = vsel %vm1228, %v6132, 0.0
    %6155 = vadd.xlane.f32.xlu0 %v6154
    %v6156 = vpop.xlane.xlu0 %6155
    %v6157 = vrcp.pop %v6135
    %v6158 = vmul.f32 %v6118, %v6157
    %v6159 = vrcp.pop %v6138
    %v6160 = vmul.f32 %v6120, %v6159
    %v6161 = vrcp.pop %v6141
    %v6162 = vmul.f32 %v6122, %v6161
    %v6163 = vrcp.pop %v6144
    %v6164 = vmul.f32 %v6124, %v6163
    %v6165 = vrcp.pop %v6147
    %v6166 = vmul.f32 %v6126, %v6165
    %v6167 = vrcp.pop %v6150
    %v6168 = vmul.f32 %v6128, %v6167
    %v6169 = vrcp.pop %v6153
    %v6170 = vmul.f32 %v6130, %v6169
    %v6171 = vrcp.pop %v6156
    %v6172 = vmul.f32 %v6132, %v6171
    %6181 = vrot.lane.b32.xlu0 %v5892, 64
    %v6182 = vpop.permute.xlu0 %6181
    %6183 = vrot.lane.b32.xlu0 %v5893, 64
    %v6184 = vpop.permute.xlu0 %6183
    %6185 = vrot.lane.b32.xlu0 %v5894, 64
    %v6186 = vpop.permute.xlu0 %6185
    %6187 = vrot.lane.b32.xlu0 %v5895, 64
    %v6188 = vpop.permute.xlu0 %6187
    %6189 = vrot.lane.b32.xlu0 %v5896, 64
    %v6190 = vpop.permute.xlu0 %6189
    %6191 = vrot.lane.b32.xlu0 %v5897, 64
    %v6192 = vpop.permute.xlu0 %6191
    %6193 = vrot.lane.b32.xlu0 %v5898, 64
    %v6194 = vpop.permute.xlu0 %6193
    %6195 = vrot.lane.b32.xlu0 %v5899, 64
    %v6196 = vpop.permute.xlu0 %6195
    %v6206 = vsel %vm1228, %v6158, 0
    %v6209 = vsel %vm1228, %v6160, 0
    %v6212 = vsel %vm1228, %v6162, 0
    %v6215 = vsel %vm1228, %v6164, 0
    %v6218 = vsel %vm1228, %v6166, 0
    %v6221 = vsel %vm1228, %v6168, 0
    %v6224 = vsel %vm1228, %v6170, 0
    %v6227 = vsel %vm1228, %v6172, 0
    %6229 = vmatprep.subr.mxu0 0.0
    %6230 = vmatpush1.msra.mxu0 %v6182
    %6231 = vmatprep.subr.mxu0 0.0
    %6232 = vmatpush1.msra.mxu0 %v6184
    %6233 = vmatprep.subr.mxu0 0.0
    %6234 = vmatpush1.msra.mxu0 %v6186
    %6235 = vmatprep.subr.mxu0 0.0
    %6236 = vmatpush1.msra.mxu0 %v6188
    %6237 = vmatprep.subr.mxu0 0.0
    %6238 = vmatpush1.msra.mxu0 %v6190
    %6239 = vmatprep.subr.mxu0 0.0
    %6240 = vmatpush1.msra.mxu0 %v6192
    %6241 = vmatprep.subr.mxu0 0.0
    %6242 = vmatpush1.msra.mxu0 %v6194
    %6243 = vmatprep.subr.mxu0 0.0
    %6244 = vmatpush1.msra.mxu0 %v6196
    %6245 = vmatprep.subr.mxu0 0.0
    %6246 = vmatpush1.msra.mxu0 0.0
    %6247 = vmatprep.subr.mxu0 0.0
    %6248 = vmatpush1.msra.mxu0 0.0
    %6249 = vmatprep.subr.mxu0 0.0
    %6250 = vmatpush1.msra.mxu0 0.0
    %6251 = vmatprep.subr.mxu0 0.0
    %6252 = vmatpush1.msra.mxu0 0.0
    %6253 = vmatprep.subr.mxu0 0.0
    %6254 = vmatpush1.msra.mxu0 0.0
    %6255 = vmatprep.subr.mxu0 0.0
    %6256 = vmatpush1.msra.mxu0 0.0
    %6257 = vmatprep.subr.mxu0 0.0
    %6258 = vmatpush1.msra.mxu0 0.0
    %6259 = vmatprep.subr.mxu0 0.0
    %6260 = vmatpush1.msra.mxu0 0.0
    %6261 = vmatprep.subr.mxu0 0.0
    %6262 = vmatpush1.msra.mxu0 0.0
    %6263 = vmatprep.subr.mxu0 0.0
    %6264 = vmatpush1.msra.mxu0 0.0
    %6265 = vmatprep.subr.mxu0 0.0
    %6266 = vmatpush1.msra.mxu0 0.0
    %6267 = vmatprep.subr.mxu0 0.0
    %6268 = vmatpush1.msra.mxu0 0.0
    %6269 = vmatprep.subr.mxu0 0.0
    %6270 = vmatpush1.msra.mxu0 0.0
    %6271 = vmatprep.subr.mxu0 0.0
    %6272 = vmatpush1.msra.mxu0 0.0
    %6273 = vmatprep.subr.mxu0 0.0
    %6274 = vmatpush1.msra.mxu0 0.0
    %6275 = vmatprep.subr.mxu0 0.0
    %6276 = vmatpush1.msra.mxu0 0.0
    %6277 = vmatprep.subr.mxu0 0.0
    %6278 = vmatpush1.msra.mxu0 0.0
    %6279 = vmatprep.subr.mxu0 0.0
    %6280 = vmatpush1.msra.mxu0 0.0
    %6281 = vmatprep.subr.mxu0 0.0
    %6282 = vmatpush1.msra.mxu0 0.0
    %6283 = vmatprep.subr.mxu0 0.0
    %6284 = vmatpush1.msra.mxu0 0.0
    %6285 = vmatprep.subr.mxu0 0.0
    %6286 = vmatpush1.msra.mxu0 0.0
    %6287 = vmatprep.subr.mxu0 0.0
    %6288 = vmatpush1.msra.mxu0 0.0
    %6289 = vmatprep.subr.mxu0 0.0
    %6290 = vmatpush1.msra.mxu0 0.0
    %6291 = vmatprep.subr.mxu0 0.0
    %6292 = vmatpush1.msra.mxu0 0.0
    %6293 = vmatprep.mubr.f32.mxu0 0.0
    %6294 = vmatmul.mubr.f32.gmra.mrb[0].mxu0 %v6206
    %v6295 = vpop.f32.mrb[0].mxu0
    %v6296 = vadd.f32 0.0, %v6295
    %v6297 = vpop.f32.mrb[0].mxu0
    %6298 = vmatprep.mubr.f32.mxu0 0.0
    %6299 = vmatmul.mubr.f32.gmra.mrb[0].mxu0 %v6209
    %v6300 = vpop.f32.mrb[0].mxu0
    %v6301 = vadd.f32 0.0, %v6300
    %v6302 = vpop.f32.mrb[0].mxu0
    %6303 = vmatprep.mubr.f32.mxu0 0.0
    %6304 = vmatmul.mubr.f32.gmra.mrb[0].mxu0 %v6212
    %v6305 = vpop.f32.mrb[0].mxu0
    %v6306 = vadd.f32 0.0, %v6305
    %v6307 = vpop.f32.mrb[0].mxu0
    %6308 = vmatprep.mubr.f32.mxu0 0.0
    %6309 = vmatmul.mubr.f32.gmra.mrb[0].mxu0 %v6215
    %v6310 = vpop.f32.mrb[0].mxu0
    %v6311 = vadd.f32 0.0, %v6310
    %v6312 = vpop.f32.mrb[0].mxu0
    %6313 = vmatprep.mubr.f32.mxu0 0.0
    %6314 = vmatmul.mubr.f32.gmra.mrb[0].mxu0 %v6218
    %v6315 = vpop.f32.mrb[0].mxu0
    %v6316 = vadd.f32 0.0, %v6315
    %v6317 = vpop.f32.mrb[0].mxu0
    %6318 = vmatprep.mubr.f32.mxu0 0.0
    %6319 = vmatmul.mubr.f32.gmra.mrb[0].mxu0 %v6221
    %v6320 = vpop.f32.mrb[0].mxu0
    %v6321 = vadd.f32 0.0, %v6320
    %v6322 = vpop.f32.mrb[0].mxu0
    %6323 = vmatprep.mubr.f32.mxu0 0.0
    %6324 = vmatmul.mubr.f32.gmra.mrb[0].mxu0 %v6224
    %v6325 = vpop.f32.mrb[0].mxu0
    %v6326 = vadd.f32 0.0, %v6325
    %v6327 = vpop.f32.mrb[0].mxu0
    %6328 = vmatprep.mubr.f32.mxu0 0.0
    %6329 = vmatmul.mubr.f32.gmra.mrb[0].mxu0 %v6227
    %v6330 = vpop.f32.mrb[0].mxu0
    %v6331 = vadd.f32 0.0, %v6330
    %v6332 = vpop.f32.mrb[0].mxu0
    %6333 = vdwg.mxu0
    %6334 = vrot.lane.b32.xlu0 %v5531, 120
    %v6335 = vpop.permute.xlu0 %6334
    %6336 = vrot.lane.b32.xlu0 %v5532, 120
    %v6337 = vpop.permute.xlu0 %6336
    %6338 = vrot.lane.b32.xlu0 %v5533, 120
    %v6339 = vpop.permute.xlu0 %6338
    %6340 = vrot.lane.b32.xlu0 %v5534, 120
    %v6341 = vpop.permute.xlu0 %6340
    %6342 = vrot.lane.b32.xlu0 %v5535, 120
    %v6343 = vpop.permute.xlu0 %6342
    %6344 = vrot.lane.b32.xlu0 %v5536, 120
    %v6345 = vpop.permute.xlu0 %6344
    %6346 = vrot.lane.b32.xlu0 %v5537, 120
    %v6347 = vpop.permute.xlu0 %6346
    %6348 = vrot.lane.b32.xlu0 %v5538, 120
    %v6349 = vpop.permute.xlu0 %6348
    %v6358 = vsel %vm647, %v6335, 0.0
    %6359 = vadd.xlane.f32.xlu0 %v6358
    %v6360 = vpop.xlane.xlu0 %6359
    %v6361 = vsel %vm647, %v6337, 0.0
    %6362 = vadd.xlane.f32.xlu0 %v6361
    %v6363 = vpop.xlane.xlu0 %6362
    %v6364 = vsel %vm647, %v6339, 0.0
    %6365 = vadd.xlane.f32.xlu0 %v6364
    %v6366 = vpop.xlane.xlu0 %6365
    %v6367 = vsel %vm647, %v6341, 0.0
    %6368 = vadd.xlane.f32.xlu0 %v6367
    %v6369 = vpop.xlane.xlu0 %6368
    %v6370 = vsel %vm647, %v6343, 0.0
    %6371 = vadd.xlane.f32.xlu0 %v6370
    %v6372 = vpop.xlane.xlu0 %6371
    %v6373 = vsel %vm647, %v6345, 0.0
    %6374 = vadd.xlane.f32.xlu0 %v6373
    %v6375 = vpop.xlane.xlu0 %6374
    %v6376 = vsel %vm647, %v6347, 0.0
    %6377 = vadd.xlane.f32.xlu0 %v6376
    %v6378 = vpop.xlane.xlu0 %6377
    %v6379 = vsel %vm647, %v6349, 0.0
    %6380 = vadd.xlane.f32.xlu0 %v6379
    %v6381 = vpop.xlane.xlu0 %6380
    %v6382 = vmul.f32 %v6360, %v672
    %v6383 = vmul.f32 %v6363, %v672
    %v6384 = vmul.f32 %v6366, %v672
    %v6385 = vmul.f32 %v6369, %v672
    %v6386 = vmul.f32 %v6372, %v672
    %v6387 = vmul.f32 %v6375, %v672
    %v6388 = vmul.f32 %v6378, %v672
    %v6389 = vmul.f32 %v6381, %v672
    %v6390 = vadd.f32 %v6382, 1.1920929e-07
    %v6391 = vadd.f32 %v6383, 1.1920929e-07
    %v6392 = vadd.f32 %v6384, 1.1920929e-07
    %v6393 = vadd.f32 %v6385, 1.1920929e-07
    %v6394 = vadd.f32 %v6386, 1.1920929e-07
    %v6395 = vadd.f32 %v6387, 1.1920929e-07
    %v6396 = vadd.f32 %v6388, 1.1920929e-07
    %v6397 = vadd.f32 %v6389, 1.1920929e-07
    %v6398 = vrsqrt.pop %v6390
    %v6399 = vrsqrt.pop %v6391
    %v6400 = vrsqrt.pop %v6392
    %v6401 = vrsqrt.pop %v6393
    %v6402 = vrsqrt.pop %v6394
    %v6403 = vrsqrt.pop %v6395
    %v6404 = vrsqrt.pop %v6396
    %v6405 = vrsqrt.pop %v6397
    %v6406 = vmul.f32 %v5492, %v6398
    %v6407 = vmul.f32 %v5497, %v6399
    %v6408 = vmul.f32 %v5502, %v6400
    %v6409 = vmul.f32 %v5507, %v6401
    %v6410 = vmul.f32 %v5512, %v6402
    %v6411 = vmul.f32 %v5517, %v6403
    %v6412 = vmul.f32 %v5522, %v6404
    %v6413 = vmul.f32 %v5527, %v6405
    %6422 = vrot.lane.b32.xlu0 %v6406, 116
    %v6423 = vpop.permute.xlu0 %6422
    %6424 = vrot.lane.b32.xlu0 %v6407, 116
    %v6425 = vpop.permute.xlu0 %6424
    %6426 = vrot.lane.b32.xlu0 %v6408, 116
    %v6427 = vpop.permute.xlu0 %6426
    %6428 = vrot.lane.b32.xlu0 %v6409, 116
    %v6429 = vpop.permute.xlu0 %6428
    %6430 = vrot.lane.b32.xlu0 %v6410, 116
    %v6431 = vpop.permute.xlu0 %6430
    %6432 = vrot.lane.b32.xlu0 %v6411, 116
    %v6433 = vpop.permute.xlu0 %6432
    %6434 = vrot.lane.b32.xlu0 %v6412, 116
    %v6435 = vpop.permute.xlu0 %6434
    %6436 = vrot.lane.b32.xlu0 %v6413, 116
    %v6437 = vpop.permute.xlu0 %6436
    %6446 = vrot.lane.b32.xlu0 %v6406, 124
    %v6447 = vpop.permute.xlu0 %6446
    %6448 = vrot.lane.b32.xlu0 %v6407, 124
    %v6449 = vpop.permute.xlu0 %6448
    %6450 = vrot.lane.b32.xlu0 %v6408, 124
    %v6451 = vpop.permute.xlu0 %6450
    %6452 = vrot.lane.b32.xlu0 %v6409, 124
    %v6453 = vpop.permute.xlu0 %6452
    %6454 = vrot.lane.b32.xlu0 %v6410, 124
    %v6455 = vpop.permute.xlu0 %6454
    %6456 = vrot.lane.b32.xlu0 %v6411, 124
    %v6457 = vpop.permute.xlu0 %6456
    %6458 = vrot.lane.b32.xlu0 %v6412, 124
    %v6459 = vpop.permute.xlu0 %6458
    %6460 = vrot.lane.b32.xlu0 %v6413, 124
    %v6461 = vpop.permute.xlu0 %6460
    %v6470 = vsel %vm761, %v6423, %v6447
    %v6471 = vsel %vm761, %v6425, %v6449
    %v6472 = vsel %vm761, %v6427, %v6451
    %v6473 = vsel %vm761, %v6429, %v6453
    %v6474 = vsel %vm761, %v6431, %v6455
    %v6475 = vsel %vm761, %v6433, %v6457
    %v6476 = vsel %vm761, %v6435, %v6459
    %v6477 = vsel %vm761, %v6437, %v6461
    %v6478 = vmul.f32 %v6406, %v1623
    %v6479 = vmul.f32 %v6407, %v1625
    %v6480 = vmul.f32 %v6408, %v1627
    %v6481 = vmul.f32 %v6409, %v1629
    %v6482 = vmul.f32 %v6410, %v1631
    %v6483 = vmul.f32 %v6411, %v1633
    %v6484 = vmul.f32 %v6412, %v1635
    %v6485 = vmul.f32 %v6413, %v1637
    %v6486 = vmul.f32 %v6470, %v371
    %v6487 = vmul.f32 %v6471, %v372
    %v6488 = vmul.f32 %v6472, %v373
    %v6489 = vmul.f32 %v6473, %v374
    %v6490 = vmul.f32 %v6474, %v375
    %v6491 = vmul.f32 %v6475, %v376
    %v6492 = vmul.f32 %v6476, %v377
    %v6493 = vmul.f32 %v6477, %v378
    %6502 = vrot.lane.b32.xlu0 %v6486, 8
    %v6503 = vpop.permute.xlu0 %6502
    %6504 = vrot.lane.b32.xlu0 %v6487, 8
    %v6505 = vpop.permute.xlu0 %6504
    %6506 = vrot.lane.b32.xlu0 %v6488, 8
    %v6507 = vpop.permute.xlu0 %6506
    %6508 = vrot.lane.b32.xlu0 %v6489, 8
    %v6509 = vpop.permute.xlu0 %6508
    %6510 = vrot.lane.b32.xlu0 %v6490, 8
    %v6511 = vpop.permute.xlu0 %6510
    %6512 = vrot.lane.b32.xlu0 %v6491, 8
    %v6513 = vpop.permute.xlu0 %6512
    %6514 = vrot.lane.b32.xlu0 %v6492, 8
    %v6515 = vpop.permute.xlu0 %6514
    %6516 = vrot.lane.b32.xlu0 %v6493, 8
    %v6517 = vpop.permute.xlu0 %6516
    %v6526 = vadd.f32 %v6478, %v6503
    %v6527 = vadd.f32 %v6479, %v6505
    %v6528 = vadd.f32 %v6480, %v6507
    %v6529 = vadd.f32 %v6481, %v6509
    %v6530 = vadd.f32 %v6482, %v6511
    %v6531 = vadd.f32 %v6483, %v6513
    %v6532 = vadd.f32 %v6484, %v6515
    %v6533 = vadd.f32 %v6485, %v6517
    %6534 = vrot.lane.b32.xlu0 %v5531, 88
    %v6535 = vpop.permute.xlu0 %6534
    %6536 = vrot.lane.b32.xlu0 %v5532, 88
    %v6537 = vpop.permute.xlu0 %6536
    %6538 = vrot.lane.b32.xlu0 %v5533, 88
    %v6539 = vpop.permute.xlu0 %6538
    %6540 = vrot.lane.b32.xlu0 %v5534, 88
    %v6541 = vpop.permute.xlu0 %6540
    %6542 = vrot.lane.b32.xlu0 %v5535, 88
    %v6543 = vpop.permute.xlu0 %6542
    %6544 = vrot.lane.b32.xlu0 %v5536, 88
    %v6545 = vpop.permute.xlu0 %6544
    %6546 = vrot.lane.b32.xlu0 %v5537, 88
    %v6547 = vpop.permute.xlu0 %6546
    %6548 = vrot.lane.b32.xlu0 %v5538, 88
    %v6549 = vpop.permute.xlu0 %6548
    %v6558 = vsel %vm647, %v6535, 0.0
    %6559 = vadd.xlane.f32.xlu0 %v6558
    %v6560 = vpop.xlane.xlu0 %6559
    %v6561 = vsel %vm647, %v6537, 0.0
    %6562 = vadd.xlane.f32.xlu0 %v6561
    %v6563 = vpop.xlane.xlu0 %6562
    %v6564 = vsel %vm647, %v6539, 0.0
    %6565 = vadd.xlane.f32.xlu0 %v6564
    %v6566 = vpop.xlane.xlu0 %6565
    %v6567 = vsel %vm647, %v6541, 0.0
    %6568 = vadd.xlane.f32.xlu0 %v6567
    %v6569 = vpop.xlane.xlu0 %6568
    %v6570 = vsel %vm647, %v6543, 0.0
    %6571 = vadd.xlane.f32.xlu0 %v6570
    %v6572 = vpop.xlane.xlu0 %6571
    %v6573 = vsel %vm647, %v6545, 0.0
    %6574 = vadd.xlane.f32.xlu0 %v6573
    %v6575 = vpop.xlane.xlu0 %6574
    %v6576 = vsel %vm647, %v6547, 0.0
    %6577 = vadd.xlane.f32.xlu0 %v6576
    %v6578 = vpop.xlane.xlu0 %6577
    %v6579 = vsel %vm647, %v6549, 0.0
    %6580 = vadd.xlane.f32.xlu0 %v6579
    %v6581 = vpop.xlane.xlu0 %6580
    %v6582 = vmul.f32 %v6560, %v672
    %v6583 = vmul.f32 %v6563, %v672
    %v6584 = vmul.f32 %v6566, %v672
    %v6585 = vmul.f32 %v6569, %v672
    %v6586 = vmul.f32 %v6572, %v672
    %v6587 = vmul.f32 %v6575, %v672
    %v6588 = vmul.f32 %v6578, %v672
    %v6589 = vmul.f32 %v6581, %v672
    %v6590 = vadd.f32 %v6582, 1.1920929e-07
    %v6591 = vadd.f32 %v6583, 1.1920929e-07
    %v6592 = vadd.f32 %v6584, 1.1920929e-07
    %v6593 = vadd.f32 %v6585, 1.1920929e-07
    %v6594 = vadd.f32 %v6586, 1.1920929e-07
    %v6595 = vadd.f32 %v6587, 1.1920929e-07
    %v6596 = vadd.f32 %v6588, 1.1920929e-07
    %v6597 = vadd.f32 %v6589, 1.1920929e-07
    %v6598 = vrsqrt.pop %v6590
    %v6599 = vrsqrt.pop %v6591
    %v6600 = vrsqrt.pop %v6592
    %v6601 = vrsqrt.pop %v6593
    %v6602 = vrsqrt.pop %v6594
    %v6603 = vrsqrt.pop %v6595
    %v6604 = vrsqrt.pop %v6596
    %v6605 = vrsqrt.pop %v6597
    %v6606 = vmul.f32 %v5492, %v6598
    %v6607 = vmul.f32 %v5497, %v6599
    %v6608 = vmul.f32 %v5502, %v6600
    %v6609 = vmul.f32 %v5507, %v6601
    %v6610 = vmul.f32 %v5512, %v6602
    %v6611 = vmul.f32 %v5517, %v6603
    %v6612 = vmul.f32 %v5522, %v6604
    %v6613 = vmul.f32 %v5527, %v6605
    %6622 = vrot.lane.b32.xlu0 %v6606, 84
    %v6623 = vpop.permute.xlu0 %6622
    %6624 = vrot.lane.b32.xlu0 %v6607, 84
    %v6625 = vpop.permute.xlu0 %6624
    %6626 = vrot.lane.b32.xlu0 %v6608, 84
    %v6627 = vpop.permute.xlu0 %6626
    %6628 = vrot.lane.b32.xlu0 %v6609, 84
    %v6629 = vpop.permute.xlu0 %6628
    %6630 = vrot.lane.b32.xlu0 %v6610, 84
    %v6631 = vpop.permute.xlu0 %6630
    %6632 = vrot.lane.b32.xlu0 %v6611, 84
    %v6633 = vpop.permute.xlu0 %6632
    %6634 = vrot.lane.b32.xlu0 %v6612, 84
    %v6635 = vpop.permute.xlu0 %6634
    %6636 = vrot.lane.b32.xlu0 %v6613, 84
    %v6637 = vpop.permute.xlu0 %6636
    %6646 = vrot.lane.b32.xlu0 %v6606, 92
    %v6647 = vpop.permute.xlu0 %6646
    %6648 = vrot.lane.b32.xlu0 %v6607, 92
    %v6649 = vpop.permute.xlu0 %6648
    %6650 = vrot.lane.b32.xlu0 %v6608, 92
    %v6651 = vpop.permute.xlu0 %6650
    %6652 = vrot.lane.b32.xlu0 %v6609, 92
    %v6653 = vpop.permute.xlu0 %6652
    %6654 = vrot.lane.b32.xlu0 %v6610, 92
    %v6655 = vpop.permute.xlu0 %6654
    %6656 = vrot.lane.b32.xlu0 %v6611, 92
    %v6657 = vpop.permute.xlu0 %6656
    %6658 = vrot.lane.b32.xlu0 %v6612, 92
    %v6659 = vpop.permute.xlu0 %6658
    %6660 = vrot.lane.b32.xlu0 %v6613, 92
    %v6661 = vpop.permute.xlu0 %6660
    %v6670 = vsel %vm761, %v6623, %v6647
    %v6671 = vsel %vm761, %v6625, %v6649
    %v6672 = vsel %vm761, %v6627, %v6651
    %v6673 = vsel %vm761, %v6629, %v6653
    %v6674 = vsel %vm761, %v6631, %v6655
    %v6675 = vsel %vm761, %v6633, %v6657
    %v6676 = vsel %vm761, %v6635, %v6659
    %v6677 = vsel %vm761, %v6637, %v6661
    %v6678 = vmul.f32 %v6606, %v1847
    %v6679 = vmul.f32 %v6607, %v1849
    %v6680 = vmul.f32 %v6608, %v1851
    %v6681 = vmul.f32 %v6609, %v1853
    %v6682 = vmul.f32 %v6610, %v1855
    %v6683 = vmul.f32 %v6611, %v1857
    %v6684 = vmul.f32 %v6612, %v1859
    %v6685 = vmul.f32 %v6613, %v1861
    %v6686 = vmul.f32 %v6670, %v371
    %v6687 = vmul.f32 %v6671, %v372
    %v6688 = vmul.f32 %v6672, %v373
    %v6689 = vmul.f32 %v6673, %v374
    %v6690 = vmul.f32 %v6674, %v375
    %v6691 = vmul.f32 %v6675, %v376
    %v6692 = vmul.f32 %v6676, %v377
    %v6693 = vmul.f32 %v6677, %v378
    %6702 = vrot.lane.b32.xlu0 %v6686, 40
    %v6703 = vpop.permute.xlu0 %6702
    %6704 = vrot.lane.b32.xlu0 %v6687, 40
    %v6705 = vpop.permute.xlu0 %6704
    %6706 = vrot.lane.b32.xlu0 %v6688, 40
    %v6707 = vpop.permute.xlu0 %6706
    %6708 = vrot.lane.b32.xlu0 %v6689, 40
    %v6709 = vpop.permute.xlu0 %6708
    %6710 = vrot.lane.b32.xlu0 %v6690, 40
    %v6711 = vpop.permute.xlu0 %6710
    %6712 = vrot.lane.b32.xlu0 %v6691, 40
    %v6713 = vpop.permute.xlu0 %6712
    %6714 = vrot.lane.b32.xlu0 %v6692, 40
    %v6715 = vpop.permute.xlu0 %6714
    %6716 = vrot.lane.b32.xlu0 %v6693, 40
    %v6717 = vpop.permute.xlu0 %6716
    %v6726 = vadd.f32 %v6678, %v6703
    %v6727 = vadd.f32 %v6679, %v6705
    %v6728 = vadd.f32 %v6680, %v6707
    %v6729 = vadd.f32 %v6681, %v6709
    %v6730 = vadd.f32 %v6682, %v6711
    %v6731 = vadd.f32 %v6683, %v6713
    %v6732 = vadd.f32 %v6684, %v6715
    %v6733 = vadd.f32 %v6685, %v6717
    %6742 = vrot.lane.b32.xlu0 %v6526, 120
    %v6743 = vpop.permute.xlu0 %6742
    %6744 = vrot.lane.b32.xlu0 %v6527, 120
    %v6745 = vpop.permute.xlu0 %6744
    %6746 = vrot.lane.b32.xlu0 %v6528, 120
    %v6747 = vpop.permute.xlu0 %6746
    %6748 = vrot.lane.b32.xlu0 %v6529, 120
    %v6749 = vpop.permute.xlu0 %6748
    %6750 = vrot.lane.b32.xlu0 %v6530, 120
    %v6751 = vpop.permute.xlu0 %6750
    %6752 = vrot.lane.b32.xlu0 %v6531, 120
    %v6753 = vpop.permute.xlu0 %6752
    %6754 = vrot.lane.b32.xlu0 %v6532, 120
    %v6755 = vpop.permute.xlu0 %6754
    %6756 = vrot.lane.b32.xlu0 %v6533, 120
    %v6757 = vpop.permute.xlu0 %6756
    %6766 = vrot.lane.b32.xlu0 %v6726, 88
    %v6767 = vpop.permute.xlu0 %6766
    %6768 = vrot.lane.b32.xlu0 %v6727, 88
    %v6769 = vpop.permute.xlu0 %6768
    %6770 = vrot.lane.b32.xlu0 %v6728, 88
    %v6771 = vpop.permute.xlu0 %6770
    %6772 = vrot.lane.b32.xlu0 %v6729, 88
    %v6773 = vpop.permute.xlu0 %6772
    %6774 = vrot.lane.b32.xlu0 %v6730, 88
    %v6775 = vpop.permute.xlu0 %6774
    %6776 = vrot.lane.b32.xlu0 %v6731, 88
    %v6777 = vpop.permute.xlu0 %6776
    %6778 = vrot.lane.b32.xlu0 %v6732, 88
    %v6779 = vpop.permute.xlu0 %6778
    %6780 = vrot.lane.b32.xlu0 %v6733, 88
    %v6781 = vpop.permute.xlu0 %6780
    %v6782 = vsel %vm647, %v6743, 0
    %v6784 = vsel %vm647, %v6745, 0
    %v6786 = vsel %vm647, %v6747, 0
    %v6788 = vsel %vm647, %v6749, 0
    %v6790 = vsel %vm647, %v6751, 0
    %v6792 = vsel %vm647, %v6753, 0
    %v6794 = vsel %vm647, %v6755, 0
    %v6796 = vsel %vm647, %v6757, 0
    %v6798 = vsel %vm647, %v6767, 0
    %v6800 = vsel %vm647, %v6769, 0
    %v6802 = vsel %vm647, %v6771, 0
    %v6804 = vsel %vm647, %v6773, 0
    %v6806 = vsel %vm647, %v6775, 0
    %v6808 = vsel %vm647, %v6777, 0
    %v6810 = vsel %vm647, %v6779, 0
    %v6812 = vsel %vm647, %v6781, 0
    %6814 = vmatprep.subr.mxu0 0.0
    %6815 = vmatpush1.xpose.msra.mxu0 %v6798
    %6816 = vmatprep.subr.mxu0 0.0
    %6817 = vmatpush1.xpose.msra.mxu0 %v6800
    %6818 = vmatprep.subr.mxu0 0.0
    %6819 = vmatpush1.xpose.msra.mxu0 %v6802
    %6820 = vmatprep.subr.mxu0 0.0
    %6821 = vmatpush1.xpose.msra.mxu0 %v6804
    %6822 = vmatprep.subr.mxu0 0.0
    %6823 = vmatpush1.xpose.msra.mxu0 %v6806
    %6824 = vmatprep.subr.mxu0 0.0
    %6825 = vmatpush1.xpose.msra.mxu0 %v6808
    %6826 = vmatprep.subr.mxu0 0.0
    %6827 = vmatpush1.xpose.msra.mxu0 %v6810
    %6828 = vmatprep.subr.mxu0 0.0
    %6829 = vmatpush1.xpose.msra.mxu0 %v6812
    %6830 = vmatprep.subr.mxu0 0.0
    %6831 = vmatpush1.xpose.msra.mxu0 0.0
    %6832 = vmatprep.subr.mxu0 0.0
    %6833 = vmatpush1.xpose.msra.mxu0 0.0
    %6834 = vmatprep.subr.mxu0 0.0
    %6835 = vmatpush1.xpose.msra.mxu0 0.0
    %6836 = vmatprep.subr.mxu0 0.0
    %6837 = vmatpush1.xpose.msra.mxu0 0.0
    %6838 = vmatprep.subr.mxu0 0.0
    %6839 = vmatpush1.xpose.msra.mxu0 0.0
    %6840 = vmatprep.subr.mxu0 0.0
    %6841 = vmatpush1.xpose.msra.mxu0 0.0
    %6842 = vmatprep.subr.mxu0 0.0
    %6843 = vmatpush1.xpose.msra.mxu0 0.0
    %6844 = vmatprep.subr.mxu0 0.0
    %6845 = vmatpush1.xpose.msra.mxu0 0.0
    %6846 = vmatprep.subr.mxu0 0.0
    %6847 = vmatpush1.xpose.msra.mxu0 0.0
    %6848 = vmatprep.subr.mxu0 0.0
    %6849 = vmatpush1.xpose.msra.mxu0 0.0
    %6850 = vmatprep.subr.mxu0 0.0
    %6851 = vmatpush1.xpose.msra.mxu0 0.0
    %6852 = vmatprep.subr.mxu0 0.0
    %6853 = vmatpush1.xpose.msra.mxu0 0.0
    %6854 = vmatprep.subr.mxu0 0.0
    %6855 = vmatpush1.xpose.msra.mxu0 0.0
    %6856 = vmatprep.subr.mxu0 0.0
    %6857 = vmatpush1.xpose.msra.mxu0 0.0
    %6858 = vmatprep.subr.mxu0 0.0
    %6859 = vmatpush1.xpose.msra.mxu0 0.0
    %6860 = vmatprep.subr.mxu0 0.0
    %6861 = vmatpush1.xpose.msra.mxu0 0.0
    %6862 = vmatprep.subr.mxu0 0.0
    %6863 = vmatpush1.xpose.msra.mxu0 0.0
    %6864 = vmatprep.subr.mxu0 0.0
    %6865 = vmatpush1.xpose.msra.mxu0 0.0
    %6866 = vmatprep.subr.mxu0 0.0
    %6867 = vmatpush1.xpose.msra.mxu0 0.0
    %6868 = vmatprep.subr.mxu0 0.0
    %6869 = vmatpush1.xpose.msra.mxu0 0.0
    %6870 = vmatprep.subr.mxu0 0.0
    %6871 = vmatpush1.xpose.msra.mxu0 0.0
    %6872 = vmatprep.subr.mxu0 0.0
    %6873 = vmatpush1.xpose.msra.mxu0 0.0
    %6874 = vmatprep.subr.mxu0 0.0
    %6875 = vmatpush1.xpose.msra.mxu0 0.0
    %6876 = vmatprep.subr.mxu0 0.0
    %6877 = vmatpush1.xpose.msra.mxu0 0.0
    %6878 = vmatprep.mubr.f32.mxu0 0.0
    %6879 = vmatmul.mubr.f32.gmra.mrb[0].mxu0 %v6782
    %v6880 = vpop.f32.mrb[0].mxu0
    %v6881 = vadd.f32 0.0, %v6880
    %v6882 = vpop.f32.mrb[0].mxu0
    %6883 = vmatprep.mubr.f32.mxu0 0.0
    %6884 = vmatmul.mubr.f32.gmra.mrb[0].mxu0 %v6784
    %v6885 = vpop.f32.mrb[0].mxu0
    %v6886 = vadd.f32 0.0, %v6885
    %v6887 = vpop.f32.mrb[0].mxu0
    %6888 = vmatprep.mubr.f32.mxu0 0.0
    %6889 = vmatmul.mubr.f32.gmra.mrb[0].mxu0 %v6786
    %v6890 = vpop.f32.mrb[0].mxu0
    %v6891 = vadd.f32 0.0, %v6890
    %v6892 = vpop.f32.mrb[0].mxu0
    %6893 = vmatprep.mubr.f32.mxu0 0.0
    %6894 = vmatmul.mubr.f32.gmra.mrb[0].mxu0 %v6788
    %v6895 = vpop.f32.mrb[0].mxu0
    %v6896 = vadd.f32 0.0, %v6895
    %v6897 = vpop.f32.mrb[0].mxu0
    %6898 = vmatprep.mubr.f32.mxu0 0.0
    %6899 = vmatmul.mubr.f32.gmra.mrb[0].mxu0 %v6790
    %v6900 = vpop.f32.mrb[0].mxu0
    %v6901 = vadd.f32 0.0, %v6900
    %v6902 = vpop.f32.mrb[0].mxu0
    %6903 = vmatprep.mubr.f32.mxu0 0.0
    %6904 = vmatmul.mubr.f32.gmra.mrb[0].mxu0 %v6792
    %v6905 = vpop.f32.mrb[0].mxu0
    %v6906 = vadd.f32 0.0, %v6905
    %v6907 = vpop.f32.mrb[0].mxu0
    %6908 = vmatprep.mubr.f32.mxu0 0.0
    %6909 = vmatmul.mubr.f32.gmra.mrb[0].mxu0 %v6794
    %v6910 = vpop.f32.mrb[0].mxu0
    %v6911 = vadd.f32 0.0, %v6910
    %v6912 = vpop.f32.mrb[0].mxu0
    %6913 = vmatprep.mubr.f32.mxu0 0.0
    %6914 = vmatmul.mubr.f32.gmra.mrb[0].mxu0 %v6796
    %v6915 = vpop.f32.mrb[0].mxu0
    %v6916 = vadd.f32 0.0, %v6915
    %v6917 = vpop.f32.mrb[0].mxu0
    %6918 = vdwg.mxu0
    %v6919 = vmul.f32 %v6881, 0.35355338
    %v6920 = vmul.f32 %v6886, 0.35355338
    %v6921 = vmul.f32 %v6891, 0.35355338
    %v6922 = vmul.f32 %v6896, 0.35355338
    %v6923 = vmul.f32 %v6901, 0.35355338
    %v6924 = vmul.f32 %v6906, 0.35355338
    %v6925 = vmul.f32 %v6911, 0.35355338
    %v6926 = vmul.f32 %v6916, 0.35355338
    %v6927 = vadd.f32 %v6919, %v379
    %v6928 = vadd.f32 %v6920, %v380
    %v6929 = vadd.f32 %v6921, %v381
    %v6930 = vadd.f32 %v6922, %v382
    %v6931 = vadd.f32 %v6923, %v383
    %v6932 = vadd.f32 %v6924, %v384
    %v6933 = vadd.f32 %v6925, %v385
    %v6934 = vadd.f32 %v6926, %v386
    %v6935 = vsel %vm1228, %v6927, -inf
    %6936 = vmax.xlane.f32.xlu0 %v6935
    %v6937 = vpop.xlane.xlu0 %6936
    %v6938 = vsel %vm1228, %v6928, -inf
    %6939 = vmax.xlane.f32.xlu0 %v6938
    %v6940 = vpop.xlane.xlu0 %6939
    %v6941 = vsel %vm1228, %v6929, -inf
    %6942 = vmax.xlane.f32.xlu0 %v6941
    %v6943 = vpop.xlane.xlu0 %6942
    %v6944 = vsel %vm1228, %v6930, -inf
    %6945 = vmax.xlane.f32.xlu0 %v6944
    %v6946 = vpop.xlane.xlu0 %6945
    %v6947 = vsel %vm1228, %v6931, -inf
    %6948 = vmax.xlane.f32.xlu0 %v6947
    %v6949 = vpop.xlane.xlu0 %6948
    %v6950 = vsel %vm1228, %v6932, -inf
    %6951 = vmax.xlane.f32.xlu0 %v6950
    %v6952 = vpop.xlane.xlu0 %6951
    %v6953 = vsel %vm1228, %v6933, -inf
    %6954 = vmax.xlane.f32.xlu0 %v6953
    %v6955 = vpop.xlane.xlu0 %6954
    %v6956 = vsel %vm1228, %v6934, -inf
    %6957 = vmax.xlane.f32.xlu0 %v6956
    %v6958 = vpop.xlane.xlu0 %6957
    %v6959 = vsub.f32 %v6927, %v6937
    %v6960 = vsub.f32 %v6928, %v6940
    %v6961 = vsub.f32 %v6929, %v6943
    %v6962 = vsub.f32 %v6930, %v6946
    %v6963 = vsub.f32 %v6931, %v6949
    %v6964 = vsub.f32 %v6932, %v6952
    %v6965 = vsub.f32 %v6933, %v6955
    %v6966 = vsub.f32 %v6934, %v6958
    %v6967 = vmul.f32 %v6959, 1.442695
    %v6968 = vpow.pop %v6967
    %v6969 = vmul.f32 %v6960, 1.442695
    %v6970 = vpow.pop %v6969
    %v6971 = vmul.f32 %v6961, 1.442695
    %v6972 = vpow.pop %v6971
    %v6973 = vmul.f32 %v6962, 1.442695
    %v6974 = vpow.pop %v6973
    %v6975 = vmul.f32 %v6963, 1.442695
    %v6976 = vpow.pop %v6975
    %v6977 = vmul.f32 %v6964, 1.442695
    %v6978 = vpow.pop %v6977
    %v6979 = vmul.f32 %v6965, 1.442695
    %v6980 = vpow.pop %v6979
    %v6981 = vmul.f32 %v6966, 1.442695
    %v6982 = vpow.pop %v6981
    %v6983 = vsel %vm1228, %v6968, 0.0
    %6984 = vadd.xlane.f32.xlu0 %v6983
    %v6985 = vpop.xlane.xlu0 %6984
    %v6986 = vsel %vm1228, %v6970, 0.0
    %6987 = vadd.xlane.f32.xlu0 %v6986
    %v6988 = vpop.xlane.xlu0 %6987
    %v6989 = vsel %vm1228, %v6972, 0.0
    %6990 = vadd.xlane.f32.xlu0 %v6989
    %v6991 = vpop.xlane.xlu0 %6990
    %v6992 = vsel %vm1228, %v6974, 0.0
    %6993 = vadd.xlane.f32.xlu0 %v6992
    %v6994 = vpop.xlane.xlu0 %6993
    %v6995 = vsel %vm1228, %v6976, 0.0
    %6996 = vadd.xlane.f32.xlu0 %v6995
    %v6997 = vpop.xlane.xlu0 %6996
    %v6998 = vsel %vm1228, %v6978, 0.0
    %6999 = vadd.xlane.f32.xlu0 %v6998
    %v7000 = vpop.xlane.xlu0 %6999
    %v7001 = vsel %vm1228, %v6980, 0.0
    %7002 = vadd.xlane.f32.xlu0 %v7001
    %v7003 = vpop.xlane.xlu0 %7002
    %v7004 = vsel %vm1228, %v6982, 0.0
    %7005 = vadd.xlane.f32.xlu0 %v7004
    %v7006 = vpop.xlane.xlu0 %7005
    %v7007 = vrcp.pop %v6985
    %v7008 = vmul.f32 %v6968, %v7007
    %v7009 = vrcp.pop %v6988
    %v7010 = vmul.f32 %v6970, %v7009
    %v7011 = vrcp.pop %v6991
    %v7012 = vmul.f32 %v6972, %v7011
    %v7013 = vrcp.pop %v6994
    %v7014 = vmul.f32 %v6974, %v7013
    %v7015 = vrcp.pop %v6997
    %v7016 = vmul.f32 %v6976, %v7015
    %v7017 = vrcp.pop %v7000
    %v7018 = vmul.f32 %v6978, %v7017
    %v7019 = vrcp.pop %v7003
    %v7020 = vmul.f32 %v6980, %v7019
    %v7021 = vrcp.pop %v7006
    %v7022 = vmul.f32 %v6982, %v7021
    %7023 = vrot.lane.b32.xlu0 %v5892, 56
    %v7024 = vpop.permute.xlu0 %7023
    %7025 = vrot.lane.b32.xlu0 %v5893, 56
    %v7026 = vpop.permute.xlu0 %7025
    %7027 = vrot.lane.b32.xlu0 %v5894, 56
    %v7028 = vpop.permute.xlu0 %7027
    %7029 = vrot.lane.b32.xlu0 %v5895, 56
    %v7030 = vpop.permute.xlu0 %7029
    %7031 = vrot.lane.b32.xlu0 %v5896, 56
    %v7032 = vpop.permute.xlu0 %7031
    %7033 = vrot.lane.b32.xlu0 %v5897, 56
    %v7034 = vpop.permute.xlu0 %7033
    %7035 = vrot.lane.b32.xlu0 %v5898, 56
    %v7036 = vpop.permute.xlu0 %7035
    %7037 = vrot.lane.b32.xlu0 %v5899, 56
    %v7038 = vpop.permute.xlu0 %7037
    %v7048 = vsel %vm1228, %v7008, 0
    %v7051 = vsel %vm1228, %v7010, 0
    %v7054 = vsel %vm1228, %v7012, 0
    %v7057 = vsel %vm1228, %v7014, 0
    %v7060 = vsel %vm1228, %v7016, 0
    %v7063 = vsel %vm1228, %v7018, 0
    %v7066 = vsel %vm1228, %v7020, 0
    %v7069 = vsel %vm1228, %v7022, 0
    %7071 = vmatprep.subr.mxu0 0.0
    %7072 = vmatpush1.msra.mxu0 %v7024
    %7073 = vmatprep.subr.mxu0 0.0
    %7074 = vmatpush1.msra.mxu0 %v7026
    %7075 = vmatprep.subr.mxu0 0.0
    %7076 = vmatpush1.msra.mxu0 %v7028
    %7077 = vmatprep.subr.mxu0 0.0
    %7078 = vmatpush1.msra.mxu0 %v7030
    %7079 = vmatprep.subr.mxu0 0.0
    %7080 = vmatpush1.msra.mxu0 %v7032
    %7081 = vmatprep.subr.mxu0 0.0
    %7082 = vmatpush1.msra.mxu0 %v7034
    %7083 = vmatprep.subr.mxu0 0.0
    %7084 = vmatpush1.msra.mxu0 %v7036
    %7085 = vmatprep.subr.mxu0 0.0
    %7086 = vmatpush1.msra.mxu0 %v7038
    %7087 = vmatprep.subr.mxu0 0.0
    %7088 = vmatpush1.msra.mxu0 0.0
    %7089 = vmatprep.subr.mxu0 0.0
    %7090 = vmatpush1.msra.mxu0 0.0
    %7091 = vmatprep.subr.mxu0 0.0
    %7092 = vmatpush1.msra.mxu0 0.0
    %7093 = vmatprep.subr.mxu0 0.0
    %7094 = vmatpush1.msra.mxu0 0.0
    %7095 = vmatprep.subr.mxu0 0.0
    %7096 = vmatpush1.msra.mxu0 0.0
    %7097 = vmatprep.subr.mxu0 0.0
    %7098 = vmatpush1.msra.mxu0 0.0
    %7099 = vmatprep.subr.mxu0 0.0
    %7100 = vmatpush1.msra.mxu0 0.0
    %7101 = vmatprep.subr.mxu0 0.0
    %7102 = vmatpush1.msra.mxu0 0.0
    %7103 = vmatprep.subr.mxu0 0.0
    %7104 = vmatpush1.msra.mxu0 0.0
    %7105 = vmatprep.subr.mxu0 0.0
    %7106 = vmatpush1.msra.mxu0 0.0
    %7107 = vmatprep.subr.mxu0 0.0
    %7108 = vmatpush1.msra.mxu0 0.0
    %7109 = vmatprep.subr.mxu0 0.0
    %7110 = vmatpush1.msra.mxu0 0.0
    %7111 = vmatprep.subr.mxu0 0.0
    %7112 = vmatpush1.msra.mxu0 0.0
    %7113 = vmatprep.subr.mxu0 0.0
    %7114 = vmatpush1.msra.mxu0 0.0
    %7115 = vmatprep.subr.mxu0 0.0
    %7116 = vmatpush1.msra.mxu0 0.0
    %7117 = vmatprep.subr.mxu0 0.0
    %7118 = vmatpush1.msra.mxu0 0.0
    %7119 = vmatprep.subr.mxu0 0.0
    %7120 = vmatpush1.msra.mxu0 0.0
    %7121 = vmatprep.subr.mxu0 0.0
    %7122 = vmatpush1.msra.mxu0 0.0
    %7123 = vmatprep.subr.mxu0 0.0
    %7124 = vmatpush1.msra.mxu0 0.0
    %7125 = vmatprep.subr.mxu0 0.0
    %7126 = vmatpush1.msra.mxu0 0.0
    %7127 = vmatprep.subr.mxu0 0.0
    %7128 = vmatpush1.msra.mxu0 0.0
    %7129 = vmatprep.subr.mxu0 0.0
    %7130 = vmatpush1.msra.mxu0 0.0
    %7131 = vmatprep.subr.mxu0 0.0
    %7132 = vmatpush1.msra.mxu0 0.0
    %7133 = vmatprep.subr.mxu0 0.0
    %7134 = vmatpush1.msra.mxu0 0.0
    %7135 = vmatprep.mubr.f32.mxu0 0.0
    %7136 = vmatmul.mubr.f32.gmra.mrb[0].mxu0 %v7048
    %v7137 = vpop.f32.mrb[0].mxu0
    %v7138 = vadd.f32 0.0, %v7137
    %v7139 = vpop.f32.mrb[0].mxu0
    %7140 = vmatprep.mubr.f32.mxu0 0.0
    %7141 = vmatmul.mubr.f32.gmra.mrb[0].mxu0 %v7051
    %v7142 = vpop.f32.mrb[0].mxu0
    %v7143 = vadd.f32 0.0, %v7142
    %v7144 = vpop.f32.mrb[0].mxu0
    %7145 = vmatprep.mubr.f32.mxu0 0.0
    %7146 = vmatmul.mubr.f32.gmra.mrb[0].mxu0 %v7054
    %v7147 = vpop.f32.mrb[0].mxu0
    %v7148 = vadd.f32 0.0, %v7147
    %v7149 = vpop.f32.mrb[0].mxu0
    %7150 = vmatprep.mubr.f32.mxu0 0.0
    %7151 = vmatmul.mubr.f32.gmra.mrb[0].mxu0 %v7057
    %v7152 = vpop.f32.mrb[0].mxu0
    %v7153 = vadd.f32 0.0, %v7152
    %v7154 = vpop.f32.mrb[0].mxu0
    %7155 = vmatprep.mubr.f32.mxu0 0.0
    %7156 = vmatmul.mubr.f32.gmra.mrb[0].mxu0 %v7060
    %v7157 = vpop.f32.mrb[0].mxu0
    %v7158 = vadd.f32 0.0, %v7157
    %v7159 = vpop.f32.mrb[0].mxu0
    %7160 = vmatprep.mubr.f32.mxu0 0.0
    %7161 = vmatmul.mubr.f32.gmra.mrb[0].mxu0 %v7063
    %v7162 = vpop.f32.mrb[0].mxu0
    %v7163 = vadd.f32 0.0, %v7162
    %v7164 = vpop.f32.mrb[0].mxu0
    %7165 = vmatprep.mubr.f32.mxu0 0.0
    %7166 = vmatmul.mubr.f32.gmra.mrb[0].mxu0 %v7066
    %v7167 = vpop.f32.mrb[0].mxu0
    %v7168 = vadd.f32 0.0, %v7167
    %v7169 = vpop.f32.mrb[0].mxu0
    %7170 = vmatprep.mubr.f32.mxu0 0.0
    %7171 = vmatmul.mubr.f32.gmra.mrb[0].mxu0 %v7069
    %v7172 = vpop.f32.mrb[0].mxu0
    %v7173 = vadd.f32 0.0, %v7172
    %v7174 = vpop.f32.mrb[0].mxu0
    %7175 = vdwg.mxu0
    %7176 = vrot.lane.b32.xlu0 %v5531, 112
    %v7177 = vpop.permute.xlu0 %7176
    %7178 = vrot.lane.b32.xlu0 %v5532, 112
    %v7179 = vpop.permute.xlu0 %7178
    %7180 = vrot.lane.b32.xlu0 %v5533, 112
    %v7181 = vpop.permute.xlu0 %7180
    %7182 = vrot.lane.b32.xlu0 %v5534, 112
    %v7183 = vpop.permute.xlu0 %7182
    %7184 = vrot.lane.b32.xlu0 %v5535, 112
    %v7185 = vpop.permute.xlu0 %7184
    %7186 = vrot.lane.b32.xlu0 %v5536, 112
    %v7187 = vpop.permute.xlu0 %7186
    %7188 = vrot.lane.b32.xlu0 %v5537, 112
    %v7189 = vpop.permute.xlu0 %7188
    %7190 = vrot.lane.b32.xlu0 %v5538, 112
    %v7191 = vpop.permute.xlu0 %7190
    %v7200 = vsel %vm647, %v7177, 0.0
    %7201 = vadd.xlane.f32.xlu0 %v7200
    %v7202 = vpop.xlane.xlu0 %7201
    %v7203 = vsel %vm647, %v7179, 0.0
    %7204 = vadd.xlane.f32.xlu0 %v7203
    %v7205 = vpop.xlane.xlu0 %7204
    %v7206 = vsel %vm647, %v7181, 0.0
    %7207 = vadd.xlane.f32.xlu0 %v7206
    %v7208 = vpop.xlane.xlu0 %7207
    %v7209 = vsel %vm647, %v7183, 0.0
    %7210 = vadd.xlane.f32.xlu0 %v7209
    %v7211 = vpop.xlane.xlu0 %7210
    %v7212 = vsel %vm647, %v7185, 0.0
    %7213 = vadd.xlane.f32.xlu0 %v7212
    %v7214 = vpop.xlane.xlu0 %7213
    %v7215 = vsel %vm647, %v7187, 0.0
    %7216 = vadd.xlane.f32.xlu0 %v7215
    %v7217 = vpop.xlane.xlu0 %7216
    %v7218 = vsel %vm647, %v7189, 0.0
    %7219 = vadd.xlane.f32.xlu0 %v7218
    %v7220 = vpop.xlane.xlu0 %7219
    %v7221 = vsel %vm647, %v7191, 0.0
    %7222 = vadd.xlane.f32.xlu0 %v7221
    %v7223 = vpop.xlane.xlu0 %7222
    %v7224 = vmul.f32 %v7202, %v672
    %v7225 = vmul.f32 %v7205, %v672
    %v7226 = vmul.f32 %v7208, %v672
    %v7227 = vmul.f32 %v7211, %v672
    %v7228 = vmul.f32 %v7214, %v672
    %v7229 = vmul.f32 %v7217, %v672
    %v7230 = vmul.f32 %v7220, %v672
    %v7231 = vmul.f32 %v7223, %v672
    %v7232 = vadd.f32 %v7224, 1.1920929e-07
    %v7233 = vadd.f32 %v7225, 1.1920929e-07
    %v7234 = vadd.f32 %v7226, 1.1920929e-07
    %v7235 = vadd.f32 %v7227, 1.1920929e-07
    %v7236 = vadd.f32 %v7228, 1.1920929e-07
    %v7237 = vadd.f32 %v7229, 1.1920929e-07
    %v7238 = vadd.f32 %v7230, 1.1920929e-07
    %v7239 = vadd.f32 %v7231, 1.1920929e-07
    %v7240 = vrsqrt.pop %v7232
    %v7241 = vrsqrt.pop %v7233
    %v7242 = vrsqrt.pop %v7234
    %v7243 = vrsqrt.pop %v7235
    %v7244 = vrsqrt.pop %v7236
    %v7245 = vrsqrt.pop %v7237
    %v7246 = vrsqrt.pop %v7238
    %v7247 = vrsqrt.pop %v7239
    %v7248 = vmul.f32 %v5492, %v7240
    %v7249 = vmul.f32 %v5497, %v7241
    %v7250 = vmul.f32 %v5502, %v7242
    %v7251 = vmul.f32 %v5507, %v7243
    %v7252 = vmul.f32 %v5512, %v7244
    %v7253 = vmul.f32 %v5517, %v7245
    %v7254 = vmul.f32 %v5522, %v7246
    %v7255 = vmul.f32 %v5527, %v7247
    %7264 = vrot.lane.b32.xlu0 %v7248, 108
    %v7265 = vpop.permute.xlu0 %7264
    %7266 = vrot.lane.b32.xlu0 %v7249, 108
    %v7267 = vpop.permute.xlu0 %7266
    %7268 = vrot.lane.b32.xlu0 %v7250, 108
    %v7269 = vpop.permute.xlu0 %7268
    %7270 = vrot.lane.b32.xlu0 %v7251, 108
    %v7271 = vpop.permute.xlu0 %7270
    %7272 = vrot.lane.b32.xlu0 %v7252, 108
    %v7273 = vpop.permute.xlu0 %7272
    %7274 = vrot.lane.b32.xlu0 %v7253, 108
    %v7275 = vpop.permute.xlu0 %7274
    %7276 = vrot.lane.b32.xlu0 %v7254, 108
    %v7277 = vpop.permute.xlu0 %7276
    %7278 = vrot.lane.b32.xlu0 %v7255, 108
    %v7279 = vpop.permute.xlu0 %7278
    %7288 = vrot.lane.b32.xlu0 %v7248, 116
    %v7289 = vpop.permute.xlu0 %7288
    %7290 = vrot.lane.b32.xlu0 %v7249, 116
    %v7291 = vpop.permute.xlu0 %7290
    %7292 = vrot.lane.b32.xlu0 %v7250, 116
    %v7293 = vpop.permute.xlu0 %7292
    %7294 = vrot.lane.b32.xlu0 %v7251, 116
    %v7295 = vpop.permute.xlu0 %7294
    %7296 = vrot.lane.b32.xlu0 %v7252, 116
    %v7297 = vpop.permute.xlu0 %7296
    %7298 = vrot.lane.b32.xlu0 %v7253, 116
    %v7299 = vpop.permute.xlu0 %7298
    %7300 = vrot.lane.b32.xlu0 %v7254, 116
    %v7301 = vpop.permute.xlu0 %7300
    %7302 = vrot.lane.b32.xlu0 %v7255, 116
    %v7303 = vpop.permute.xlu0 %7302
    %v7312 = vsel %vm761, %v7265, %v7289
    %v7313 = vsel %vm761, %v7267, %v7291
    %v7314 = vsel %vm761, %v7269, %v7293
    %v7315 = vsel %vm761, %v7271, %v7295
    %v7316 = vsel %vm761, %v7273, %v7297
    %v7317 = vsel %vm761, %v7275, %v7299
    %v7318 = vsel %vm761, %v7277, %v7301
    %v7319 = vsel %vm761, %v7279, %v7303
    %v7320 = vmul.f32 %v7248, %v2513
    %v7321 = vmul.f32 %v7249, %v2515
    %v7322 = vmul.f32 %v7250, %v2517
    %v7323 = vmul.f32 %v7251, %v2519
    %v7324 = vmul.f32 %v7252, %v2521
    %v7325 = vmul.f32 %v7253, %v2523
    %v7326 = vmul.f32 %v7254, %v2525
    %v7327 = vmul.f32 %v7255, %v2527
    %v7328 = vmul.f32 %v7312, %v371
    %v7329 = vmul.f32 %v7313, %v372
    %v7330 = vmul.f32 %v7314, %v373
    %v7331 = vmul.f32 %v7315, %v374
    %v7332 = vmul.f32 %v7316, %v375
    %v7333 = vmul.f32 %v7317, %v376
    %v7334 = vmul.f32 %v7318, %v377
    %v7335 = vmul.f32 %v7319, %v378
    %7344 = vrot.lane.b32.xlu0 %v7328, 16
    %v7345 = vpop.permute.xlu0 %7344
    %7346 = vrot.lane.b32.xlu0 %v7329, 16
    %v7347 = vpop.permute.xlu0 %7346
    %7348 = vrot.lane.b32.xlu0 %v7330, 16
    %v7349 = vpop.permute.xlu0 %7348
    %7350 = vrot.lane.b32.xlu0 %v7331, 16
    %v7351 = vpop.permute.xlu0 %7350
    %7352 = vrot.lane.b32.xlu0 %v7332, 16
    %v7353 = vpop.permute.xlu0 %7352
    %7354 = vrot.lane.b32.xlu0 %v7333, 16
    %v7355 = vpop.permute.xlu0 %7354
    %7356 = vrot.lane.b32.xlu0 %v7334, 16
    %v7357 = vpop.permute.xlu0 %7356
    %7358 = vrot.lane.b32.xlu0 %v7335, 16
    %v7359 = vpop.permute.xlu0 %7358
    %v7368 = vadd.f32 %v7320, %v7345
    %v7369 = vadd.f32 %v7321, %v7347
    %v7370 = vadd.f32 %v7322, %v7349
    %v7371 = vadd.f32 %v7323, %v7351
    %v7372 = vadd.f32 %v7324, %v7353
    %v7373 = vadd.f32 %v7325, %v7355
    %v7374 = vadd.f32 %v7326, %v7357
    %v7375 = vadd.f32 %v7327, %v7359
    %7376 = vrot.lane.b32.xlu0 %v5531, 80
    %v7377 = vpop.permute.xlu0 %7376
    %7378 = vrot.lane.b32.xlu0 %v5532, 80
    %v7379 = vpop.permute.xlu0 %7378
    %7380 = vrot.lane.b32.xlu0 %v5533, 80
    %v7381 = vpop.permute.xlu0 %7380
    %7382 = vrot.lane.b32.xlu0 %v5534, 80
    %v7383 = vpop.permute.xlu0 %7382
    %7384 = vrot.lane.b32.xlu0 %v5535, 80
    %v7385 = vpop.permute.xlu0 %7384
    %7386 = vrot.lane.b32.xlu0 %v5536, 80
    %v7387 = vpop.permute.xlu0 %7386
    %7388 = vrot.lane.b32.xlu0 %v5537, 80
    %v7389 = vpop.permute.xlu0 %7388
    %7390 = vrot.lane.b32.xlu0 %v5538, 80
    %v7391 = vpop.permute.xlu0 %7390
    %v7400 = vsel %vm647, %v7377, 0.0
    %7401 = vadd.xlane.f32.xlu0 %v7400
    %v7402 = vpop.xlane.xlu0 %7401
    %v7403 = vsel %vm647, %v7379, 0.0
    %7404 = vadd.xlane.f32.xlu0 %v7403
    %v7405 = vpop.xlane.xlu0 %7404
    %v7406 = vsel %vm647, %v7381, 0.0
    %7407 = vadd.xlane.f32.xlu0 %v7406
    %v7408 = vpop.xlane.xlu0 %7407
    %v7409 = vsel %vm647, %v7383, 0.0
    %7410 = vadd.xlane.f32.xlu0 %v7409
    %v7411 = vpop.xlane.xlu0 %7410
    %v7412 = vsel %vm647, %v7385, 0.0
    %7413 = vadd.xlane.f32.xlu0 %v7412
    %v7414 = vpop.xlane.xlu0 %7413
    %v7415 = vsel %vm647, %v7387, 0.0
    %7416 = vadd.xlane.f32.xlu0 %v7415
    %v7417 = vpop.xlane.xlu0 %7416
    %v7418 = vsel %vm647, %v7389, 0.0
    %7419 = vadd.xlane.f32.xlu0 %v7418
    %v7420 = vpop.xlane.xlu0 %7419
    %v7421 = vsel %vm647, %v7391, 0.0
    %7422 = vadd.xlane.f32.xlu0 %v7421
    %v7423 = vpop.xlane.xlu0 %7422
    %v7424 = vmul.f32 %v7402, %v672
    %v7425 = vmul.f32 %v7405, %v672
    %v7426 = vmul.f32 %v7408, %v672
    %v7427 = vmul.f32 %v7411, %v672
    %v7428 = vmul.f32 %v7414, %v672
    %v7429 = vmul.f32 %v7417, %v672
    %v7430 = vmul.f32 %v7420, %v672
    %v7431 = vmul.f32 %v7423, %v672
    %v7432 = vadd.f32 %v7424, 1.1920929e-07
    %v7433 = vadd.f32 %v7425, 1.1920929e-07
    %v7434 = vadd.f32 %v7426, 1.1920929e-07
    %v7435 = vadd.f32 %v7427, 1.1920929e-07
    %v7436 = vadd.f32 %v7428, 1.1920929e-07
    %v7437 = vadd.f32 %v7429, 1.1920929e-07
    %v7438 = vadd.f32 %v7430, 1.1920929e-07
    %v7439 = vadd.f32 %v7431, 1.1920929e-07
    %v7440 = vrsqrt.pop %v7432
    %v7441 = vrsqrt.pop %v7433
    %v7442 = vrsqrt.pop %v7434
    %v7443 = vrsqrt.pop %v7435
    %v7444 = vrsqrt.pop %v7436
    %v7445 = vrsqrt.pop %v7437
    %v7446 = vrsqrt.pop %v7438
    %v7447 = vrsqrt.pop %v7439
    %v7448 = vmul.f32 %v5492, %v7440
    %v7449 = vmul.f32 %v5497, %v7441
    %v7450 = vmul.f32 %v5502, %v7442
    %v7451 = vmul.f32 %v5507, %v7443
    %v7452 = vmul.f32 %v5512, %v7444
    %v7453 = vmul.f32 %v5517, %v7445
    %v7454 = vmul.f32 %v5522, %v7446
    %v7455 = vmul.f32 %v5527, %v7447
    %7464 = vrot.lane.b32.xlu0 %v7448, 76
    %v7465 = vpop.permute.xlu0 %7464
    %7466 = vrot.lane.b32.xlu0 %v7449, 76
    %v7467 = vpop.permute.xlu0 %7466
    %7468 = vrot.lane.b32.xlu0 %v7450, 76
    %v7469 = vpop.permute.xlu0 %7468
    %7470 = vrot.lane.b32.xlu0 %v7451, 76
    %v7471 = vpop.permute.xlu0 %7470
    %7472 = vrot.lane.b32.xlu0 %v7452, 76
    %v7473 = vpop.permute.xlu0 %7472
    %7474 = vrot.lane.b32.xlu0 %v7453, 76
    %v7475 = vpop.permute.xlu0 %7474
    %7476 = vrot.lane.b32.xlu0 %v7454, 76
    %v7477 = vpop.permute.xlu0 %7476
    %7478 = vrot.lane.b32.xlu0 %v7455, 76
    %v7479 = vpop.permute.xlu0 %7478
    %7488 = vrot.lane.b32.xlu0 %v7448, 84
    %v7489 = vpop.permute.xlu0 %7488
    %7490 = vrot.lane.b32.xlu0 %v7449, 84
    %v7491 = vpop.permute.xlu0 %7490
    %7492 = vrot.lane.b32.xlu0 %v7450, 84
    %v7493 = vpop.permute.xlu0 %7492
    %7494 = vrot.lane.b32.xlu0 %v7451, 84
    %v7495 = vpop.permute.xlu0 %7494
    %7496 = vrot.lane.b32.xlu0 %v7452, 84
    %v7497 = vpop.permute.xlu0 %7496
    %7498 = vrot.lane.b32.xlu0 %v7453, 84
    %v7499 = vpop.permute.xlu0 %7498
    %7500 = vrot.lane.b32.xlu0 %v7454, 84
    %v7501 = vpop.permute.xlu0 %7500
    %7502 = vrot.lane.b32.xlu0 %v7455, 84
    %v7503 = vpop.permute.xlu0 %7502
    %v7512 = vsel %vm761, %v7465, %v7489
    %v7513 = vsel %vm761, %v7467, %v7491
    %v7514 = vsel %vm761, %v7469, %v7493
    %v7515 = vsel %vm761, %v7471, %v7495
    %v7516 = vsel %vm761, %v7473, %v7497
    %v7517 = vsel %vm761, %v7475, %v7499
    %v7518 = vsel %vm761, %v7477, %v7501
    %v7519 = vsel %vm761, %v7479, %v7503
    %v7520 = vmul.f32 %v7448, %v2737
    %v7521 = vmul.f32 %v7449, %v2739
    %v7522 = vmul.f32 %v7450, %v2741
    %v7523 = vmul.f32 %v7451, %v2743
    %v7524 = vmul.f32 %v7452, %v2745
    %v7525 = vmul.f32 %v7453, %v2747
    %v7526 = vmul.f32 %v7454, %v2749
    %v7527 = vmul.f32 %v7455, %v2751
    %v7528 = vmul.f32 %v7512, %v371
    %v7529 = vmul.f32 %v7513, %v372
    %v7530 = vmul.f32 %v7514, %v373
    %v7531 = vmul.f32 %v7515, %v374
    %v7532 = vmul.f32 %v7516, %v375
    %v7533 = vmul.f32 %v7517, %v376
    %v7534 = vmul.f32 %v7518, %v377
    %v7535 = vmul.f32 %v7519, %v378
    %7544 = vrot.lane.b32.xlu0 %v7528, 48
    %v7545 = vpop.permute.xlu0 %7544
    %7546 = vrot.lane.b32.xlu0 %v7529, 48
    %v7547 = vpop.permute.xlu0 %7546
    %7548 = vrot.lane.b32.xlu0 %v7530, 48
    %v7549 = vpop.permute.xlu0 %7548
    %7550 = vrot.lane.b32.xlu0 %v7531, 48
    %v7551 = vpop.permute.xlu0 %7550
    %7552 = vrot.lane.b32.xlu0 %v7532, 48
    %v7553 = vpop.permute.xlu0 %7552
    %7554 = vrot.lane.b32.xlu0 %v7533, 48
    %v7555 = vpop.permute.xlu0 %7554
    %7556 = vrot.lane.b32.xlu0 %v7534, 48
    %v7557 = vpop.permute.xlu0 %7556
    %7558 = vrot.lane.b32.xlu0 %v7535, 48
    %v7559 = vpop.permute.xlu0 %7558
    %v7568 = vadd.f32 %v7520, %v7545
    %v7569 = vadd.f32 %v7521, %v7547
    %v7570 = vadd.f32 %v7522, %v7549
    %v7571 = vadd.f32 %v7523, %v7551
    %v7572 = vadd.f32 %v7524, %v7553
    %v7573 = vadd.f32 %v7525, %v7555
    %v7574 = vadd.f32 %v7526, %v7557
    %v7575 = vadd.f32 %v7527, %v7559
    %7584 = vrot.lane.b32.xlu0 %v7368, 112
    %v7585 = vpop.permute.xlu0 %7584
    %7586 = vrot.lane.b32.xlu0 %v7369, 112
    %v7587 = vpop.permute.xlu0 %7586
    %7588 = vrot.lane.b32.xlu0 %v7370, 112
    %v7589 = vpop.permute.xlu0 %7588
    %7590 = vrot.lane.b32.xlu0 %v7371, 112
    %v7591 = vpop.permute.xlu0 %7590
    %7592 = vrot.lane.b32.xlu0 %v7372, 112
    %v7593 = vpop.permute.xlu0 %7592
    %7594 = vrot.lane.b32.xlu0 %v7373, 112
    %v7595 = vpop.permute.xlu0 %7594
    %7596 = vrot.lane.b32.xlu0 %v7374, 112
    %v7597 = vpop.permute.xlu0 %7596
    %7598 = vrot.lane.b32.xlu0 %v7375, 112
    %v7599 = vpop.permute.xlu0 %7598
    %7608 = vrot.lane.b32.xlu0 %v7568, 80
    %v7609 = vpop.permute.xlu0 %7608
    %7610 = vrot.lane.b32.xlu0 %v7569, 80
    %v7611 = vpop.permute.xlu0 %7610
    %7612 = vrot.lane.b32.xlu0 %v7570, 80
    %v7613 = vpop.permute.xlu0 %7612
    %7614 = vrot.lane.b32.xlu0 %v7571, 80
    %v7615 = vpop.permute.xlu0 %7614
    %7616 = vrot.lane.b32.xlu0 %v7572, 80
    %v7617 = vpop.permute.xlu0 %7616
    %7618 = vrot.lane.b32.xlu0 %v7573, 80
    %v7619 = vpop.permute.xlu0 %7618
    %7620 = vrot.lane.b32.xlu0 %v7574, 80
    %v7621 = vpop.permute.xlu0 %7620
    %7622 = vrot.lane.b32.xlu0 %v7575, 80
    %v7623 = vpop.permute.xlu0 %7622
    %v7624 = vsel %vm647, %v7585, 0
    %v7626 = vsel %vm647, %v7587, 0
    %v7628 = vsel %vm647, %v7589, 0
    %v7630 = vsel %vm647, %v7591, 0
    %v7632 = vsel %vm647, %v7593, 0
    %v7634 = vsel %vm647, %v7595, 0
    %v7636 = vsel %vm647, %v7597, 0
    %v7638 = vsel %vm647, %v7599, 0
    %v7640 = vsel %vm647, %v7609, 0
    %v7642 = vsel %vm647, %v7611, 0
    %v7644 = vsel %vm647, %v7613, 0
    %v7646 = vsel %vm647, %v7615, 0
    %v7648 = vsel %vm647, %v7617, 0
    %v7650 = vsel %vm647, %v7619, 0
    %v7652 = vsel %vm647, %v7621, 0
    %v7654 = vsel %vm647, %v7623, 0
    %7656 = vmatprep.subr.mxu0 0.0
    %7657 = vmatpush1.xpose.msra.mxu0 %v7640
    %7658 = vmatprep.subr.mxu0 0.0
    %7659 = vmatpush1.xpose.msra.mxu0 %v7642
    %7660 = vmatprep.subr.mxu0 0.0
    %7661 = vmatpush1.xpose.msra.mxu0 %v7644
    %7662 = vmatprep.subr.mxu0 0.0
    %7663 = vmatpush1.xpose.msra.mxu0 %v7646
    %7664 = vmatprep.subr.mxu0 0.0
    %7665 = vmatpush1.xpose.msra.mxu0 %v7648
    %7666 = vmatprep.subr.mxu0 0.0
    %7667 = vmatpush1.xpose.msra.mxu0 %v7650
    %7668 = vmatprep.subr.mxu0 0.0
    %7669 = vmatpush1.xpose.msra.mxu0 %v7652
    %7670 = vmatprep.subr.mxu0 0.0
    %7671 = vmatpush1.xpose.msra.mxu0 %v7654
    %7672 = vmatprep.subr.mxu0 0.0
    %7673 = vmatpush1.xpose.msra.mxu0 0.0
    %7674 = vmatprep.subr.mxu0 0.0
    %7675 = vmatpush1.xpose.msra.mxu0 0.0
    %7676 = vmatprep.subr.mxu0 0.0
    %7677 = vmatpush1.xpose.msra.mxu0 0.0
    %7678 = vmatprep.subr.mxu0 0.0
    %7679 = vmatpush1.xpose.msra.mxu0 0.0
    %7680 = vmatprep.subr.mxu0 0.0
    %7681 = vmatpush1.xpose.msra.mxu0 0.0
    %7682 = vmatprep.subr.mxu0 0.0
    %7683 = vmatpush1.xpose.msra.mxu0 0.0
    %7684 = vmatprep.subr.mxu0 0.0
    %7685 = vmatpush1.xpose.msra.mxu0 0.0
    %7686 = vmatprep.subr.mxu0 0.0
    %7687 = vmatpush1.xpose.msra.mxu0 0.0
    %7688 = vmatprep.subr.mxu0 0.0
    %7689 = vmatpush1.xpose.msra.mxu0 0.0
    %7690 = vmatprep.subr.mxu0 0.0
    %7691 = vmatpush1.xpose.msra.mxu0 0.0
    %7692 = vmatprep.subr.mxu0 0.0
    %7693 = vmatpush1.xpose.msra.mxu0 0.0
    %7694 = vmatprep.subr.mxu0 0.0
    %7695 = vmatpush1.xpose.msra.mxu0 0.0
    %7696 = vmatprep.subr.mxu0 0.0
    %7697 = vmatpush1.xpose.msra.mxu0 0.0
    %7698 = vmatprep.subr.mxu0 0.0
    %7699 = vmatpush1.xpose.msra.mxu0 0.0
    %7700 = vmatprep.subr.mxu0 0.0
    %7701 = vmatpush1.xpose.msra.mxu0 0.0
    %7702 = vmatprep.subr.mxu0 0.0
    %7703 = vmatpush1.xpose.msra.mxu0 0.0
    %7704 = vmatprep.subr.mxu0 0.0
    %7705 = vmatpush1.xpose.msra.mxu0 0.0
    %7706 = vmatprep.subr.mxu0 0.0
    %7707 = vmatpush1.xpose.msra.mxu0 0.0
    %7708 = vmatprep.subr.mxu0 0.0
    %7709 = vmatpush1.xpose.msra.mxu0 0.0
    %7710 = vmatprep.subr.mxu0 0.0
    %7711 = vmatpush1.xpose.msra.mxu0 0.0
    %7712 = vmatprep.subr.mxu0 0.0
    %7713 = vmatpush1.xpose.msra.mxu0 0.0
    %7714 = vmatprep.subr.mxu0 0.0
    %7715 = vmatpush1.xpose.msra.mxu0 0.0
    %7716 = vmatprep.subr.mxu0 0.0
    %7717 = vmatpush1.xpose.msra.mxu0 0.0
    %7718 = vmatprep.subr.mxu0 0.0
    %7719 = vmatpush1.xpose.msra.mxu0 0.0
    %7720 = vmatprep.mubr.f32.mxu0 0.0
    %7721 = vmatmul.mubr.f32.gmra.mrb[0].mxu0 %v7624
    %v7722 = vpop.f32.mrb[0].mxu0
    %v7723 = vadd.f32 0.0, %v7722
    %v7724 = vpop.f32.mrb[0].mxu0
    %7725 = vmatprep.mubr.f32.mxu0 0.0
    %7726 = vmatmul.mubr.f32.gmra.mrb[0].mxu0 %v7626
    %v7727 = vpop.f32.mrb[0].mxu0
    %v7728 = vadd.f32 0.0, %v7727
    %v7729 = vpop.f32.mrb[0].mxu0
    %7730 = vmatprep.mubr.f32.mxu0 0.0
    %7731 = vmatmul.mubr.f32.gmra.mrb[0].mxu0 %v7628
    %v7732 = vpop.f32.mrb[0].mxu0
    %v7733 = vadd.f32 0.0, %v7732
    %v7734 = vpop.f32.mrb[0].mxu0
    %7735 = vmatprep.mubr.f32.mxu0 0.0
    %7736 = vmatmul.mubr.f32.gmra.mrb[0].mxu0 %v7630
    %v7737 = vpop.f32.mrb[0].mxu0
    %v7738 = vadd.f32 0.0, %v7737
    %v7739 = vpop.f32.mrb[0].mxu0
    %7740 = vmatprep.mubr.f32.mxu0 0.0
    %7741 = vmatmul.mubr.f32.gmra.mrb[0].mxu0 %v7632
    %v7742 = vpop.f32.mrb[0].mxu0
    %v7743 = vadd.f32 0.0, %v7742
    %v7744 = vpop.f32.mrb[0].mxu0
    %7745 = vmatprep.mubr.f32.mxu0 0.0
    %7746 = vmatmul.mubr.f32.gmra.mrb[0].mxu0 %v7634
    %v7747 = vpop.f32.mrb[0].mxu0
    %v7748 = vadd.f32 0.0, %v7747
    %v7749 = vpop.f32.mrb[0].mxu0
    %7750 = vmatprep.mubr.f32.mxu0 0.0
    %7751 = vmatmul.mubr.f32.gmra.mrb[0].mxu0 %v7636
    %v7752 = vpop.f32.mrb[0].mxu0
    %v7753 = vadd.f32 0.0, %v7752
    %v7754 = vpop.f32.mrb[0].mxu0
    %7755 = vmatprep.mubr.f32.mxu0 0.0
    %7756 = vmatmul.mubr.f32.gmra.mrb[0].mxu0 %v7638
    %v7757 = vpop.f32.mrb[0].mxu0
    %v7758 = vadd.f32 0.0, %v7757
    %v7759 = vpop.f32.mrb[0].mxu0
    %7760 = vdwg.mxu0
    %v7761 = vmul.f32 %v7723, 0.35355338
    %v7762 = vmul.f32 %v7728, 0.35355338
    %v7763 = vmul.f32 %v7733, 0.35355338
    %v7764 = vmul.f32 %v7738, 0.35355338
    %v7765 = vmul.f32 %v7743, 0.35355338
    %v7766 = vmul.f32 %v7748, 0.35355338
    %v7767 = vmul.f32 %v7753, 0.35355338
    %v7768 = vmul.f32 %v7758, 0.35355338
    %v7769 = vadd.f32 %v7761, %v379
    %v7770 = vadd.f32 %v7762, %v380
    %v7771 = vadd.f32 %v7763, %v381
    %v7772 = vadd.f32 %v7764, %v382
    %v7773 = vadd.f32 %v7765, %v383
    %v7774 = vadd.f32 %v7766, %v384
    %v7775 = vadd.f32 %v7767, %v385
    %v7776 = vadd.f32 %v7768, %v386
    %v7777 = vsel %vm1228, %v7769, -inf
    %7778 = vmax.xlane.f32.xlu0 %v7777
    %v7779 = vpop.xlane.xlu0 %7778
    %v7780 = vsel %vm1228, %v7770, -inf
    %7781 = vmax.xlane.f32.xlu0 %v7780
    %v7782 = vpop.xlane.xlu0 %7781
    %v7783 = vsel %vm1228, %v7771, -inf
    %7784 = vmax.xlane.f32.xlu0 %v7783
    %v7785 = vpop.xlane.xlu0 %7784
    %v7786 = vsel %vm1228, %v7772, -inf
    %7787 = vmax.xlane.f32.xlu0 %v7786
    %v7788 = vpop.xlane.xlu0 %7787
    %v7789 = vsel %vm1228, %v7773, -inf
    %7790 = vmax.xlane.f32.xlu0 %v7789
    %v7791 = vpop.xlane.xlu0 %7790
    %v7792 = vsel %vm1228, %v7774, -inf
    %7793 = vmax.xlane.f32.xlu0 %v7792
    %v7794 = vpop.xlane.xlu0 %7793
    %v7795 = vsel %vm1228, %v7775, -inf
    %7796 = vmax.xlane.f32.xlu0 %v7795
    %v7797 = vpop.xlane.xlu0 %7796
    %v7798 = vsel %vm1228, %v7776, -inf
    %7799 = vmax.xlane.f32.xlu0 %v7798
    %v7800 = vpop.xlane.xlu0 %7799
    %v7801 = vsub.f32 %v7769, %v7779
    %v7802 = vsub.f32 %v7770, %v7782
    %v7803 = vsub.f32 %v7771, %v7785
    %v7804 = vsub.f32 %v7772, %v7788
    %v7805 = vsub.f32 %v7773, %v7791
    %v7806 = vsub.f32 %v7774, %v7794
    %v7807 = vsub.f32 %v7775, %v7797
    %v7808 = vsub.f32 %v7776, %v7800
    %v7809 = vmul.f32 %v7801, 1.442695
    %v7810 = vpow.pop %v7809
    %v7811 = vmul.f32 %v7802, 1.442695
    %v7812 = vpow.pop %v7811
    %v7813 = vmul.f32 %v7803, 1.442695
    %v7814 = vpow.pop %v7813
    %v7815 = vmul.f32 %v7804, 1.442695
    %v7816 = vpow.pop %v7815
    %v7817 = vmul.f32 %v7805, 1.442695
    %v7818 = vpow.pop %v7817
    %v7819 = vmul.f32 %v7806, 1.442695
    %v7820 = vpow.pop %v7819
    %v7821 = vmul.f32 %v7807, 1.442695
    %v7822 = vpow.pop %v7821
    %v7823 = vmul.f32 %v7808, 1.442695
    %v7824 = vpow.pop %v7823
    %v7825 = vsel %vm1228, %v7810, 0.0
    %7826 = vadd.xlane.f32.xlu0 %v7825
    %v7827 = vpop.xlane.xlu0 %7826
    %v7828 = vsel %vm1228, %v7812, 0.0
    %7829 = vadd.xlane.f32.xlu0 %v7828
    %v7830 = vpop.xlane.xlu0 %7829
    %v7831 = vsel %vm1228, %v7814, 0.0
    %7832 = vadd.xlane.f32.xlu0 %v7831
    %v7833 = vpop.xlane.xlu0 %7832
    %v7834 = vsel %vm1228, %v7816, 0.0
    %7835 = vadd.xlane.f32.xlu0 %v7834
    %v7836 = vpop.xlane.xlu0 %7835
    %v7837 = vsel %vm1228, %v7818, 0.0
    %7838 = vadd.xlane.f32.xlu0 %v7837
    %v7839 = vpop.xlane.xlu0 %7838
    %v7840 = vsel %vm1228, %v7820, 0.0
    %7841 = vadd.xlane.f32.xlu0 %v7840
    %v7842 = vpop.xlane.xlu0 %7841
    %v7843 = vsel %vm1228, %v7822, 0.0
    %7844 = vadd.xlane.f32.xlu0 %v7843
    %v7845 = vpop.xlane.xlu0 %7844
    %v7846 = vsel %vm1228, %v7824, 0.0
    %7847 = vadd.xlane.f32.xlu0 %v7846
    %v7848 = vpop.xlane.xlu0 %7847
    %v7849 = vrcp.pop %v7827
    %v7850 = vmul.f32 %v7810, %v7849
    %v7851 = vrcp.pop %v7830
    %v7852 = vmul.f32 %v7812, %v7851
    %v7853 = vrcp.pop %v7833
    %v7854 = vmul.f32 %v7814, %v7853
    %v7855 = vrcp.pop %v7836
    %v7856 = vmul.f32 %v7816, %v7855
    %v7857 = vrcp.pop %v7839
    %v7858 = vmul.f32 %v7818, %v7857
    %v7859 = vrcp.pop %v7842
    %v7860 = vmul.f32 %v7820, %v7859
    %v7861 = vrcp.pop %v7845
    %v7862 = vmul.f32 %v7822, %v7861
    %v7863 = vrcp.pop %v7848
    %v7864 = vmul.f32 %v7824, %v7863
    %7865 = vrot.lane.b32.xlu0 %v5892, 48
    %v7866 = vpop.permute.xlu0 %7865
    %7867 = vrot.lane.b32.xlu0 %v5893, 48
    %v7868 = vpop.permute.xlu0 %7867
    %7869 = vrot.lane.b32.xlu0 %v5894, 48
    %v7870 = vpop.permute.xlu0 %7869
    %7871 = vrot.lane.b32.xlu0 %v5895, 48
    %v7872 = vpop.permute.xlu0 %7871
    %7873 = vrot.lane.b32.xlu0 %v5896, 48
    %v7874 = vpop.permute.xlu0 %7873
    %7875 = vrot.lane.b32.xlu0 %v5897, 48
    %v7876 = vpop.permute.xlu0 %7875
    %7877 = vrot.lane.b32.xlu0 %v5898, 48
    %v7878 = vpop.permute.xlu0 %7877
    %7879 = vrot.lane.b32.xlu0 %v5899, 48
    %v7880 = vpop.permute.xlu0 %7879
    %v7890 = vsel %vm1228, %v7850, 0
    %v7893 = vsel %vm1228, %v7852, 0
    %v7896 = vsel %vm1228, %v7854, 0
    %v7899 = vsel %vm1228, %v7856, 0
    %v7902 = vsel %vm1228, %v7858, 0
    %v7905 = vsel %vm1228, %v7860, 0
    %v7908 = vsel %vm1228, %v7862, 0
    %v7911 = vsel %vm1228, %v7864, 0
    %7913 = vmatprep.subr.mxu0 0.0
    %7914 = vmatpush1.msra.mxu0 %v7866
    %7915 = vmatprep.subr.mxu0 0.0
    %7916 = vmatpush1.msra.mxu0 %v7868
    %7917 = vmatprep.subr.mxu0 0.0
    %7918 = vmatpush1.msra.mxu0 %v7870
    %7919 = vmatprep.subr.mxu0 0.0
    %7920 = vmatpush1.msra.mxu0 %v7872
    %7921 = vmatprep.subr.mxu0 0.0
    %7922 = vmatpush1.msra.mxu0 %v7874
    %7923 = vmatprep.subr.mxu0 0.0
    %7924 = vmatpush1.msra.mxu0 %v7876
    %7925 = vmatprep.subr.mxu0 0.0
    %7926 = vmatpush1.msra.mxu0 %v7878
    %7927 = vmatprep.subr.mxu0 0.0
    %7928 = vmatpush1.msra.mxu0 %v7880
    %7929 = vmatprep.subr.mxu0 0.0
    %7930 = vmatpush1.msra.mxu0 0.0
    %7931 = vmatprep.subr.mxu0 0.0
    %7932 = vmatpush1.msra.mxu0 0.0
    %7933 = vmatprep.subr.mxu0 0.0
    %7934 = vmatpush1.msra.mxu0 0.0
    %7935 = vmatprep.subr.mxu0 0.0
    %7936 = vmatpush1.msra.mxu0 0.0
    %7937 = vmatprep.subr.mxu0 0.0
    %7938 = vmatpush1.msra.mxu0 0.0
    %7939 = vmatprep.subr.mxu0 0.0
    %7940 = vmatpush1.msra.mxu0 0.0
    %7941 = vmatprep.subr.mxu0 0.0
    %7942 = vmatpush1.msra.mxu0 0.0
    %7943 = vmatprep.subr.mxu0 0.0
    %7944 = vmatpush1.msra.mxu0 0.0
    %7945 = vmatprep.subr.mxu0 0.0
    %7946 = vmatpush1.msra.mxu0 0.0
    %7947 = vmatprep.subr.mxu0 0.0
    %7948 = vmatpush1.msra.mxu0 0.0
    %7949 = vmatprep.subr.mxu0 0.0
    %7950 = vmatpush1.msra.mxu0 0.0
    %7951 = vmatprep.subr.mxu0 0.0
    %7952 = vmatpush1.msra.mxu0 0.0
    %7953 = vmatprep.subr.mxu0 0.0
    %7954 = vmatpush1.msra.mxu0 0.0
    %7955 = vmatprep.subr.mxu0 0.0
    %7956 = vmatpush1.msra.mxu0 0.0
    %7957 = vmatprep.subr.mxu0 0.0
    %7958 = vmatpush1.msra.mxu0 0.0
    %7959 = vmatprep.subr.mxu0 0.0
    %7960 = vmatpush1.msra.mxu0 0.0
    %7961 = vmatprep.subr.mxu0 0.0
    %7962 = vmatpush1.msra.mxu0 0.0
    %7963 = vmatprep.subr.mxu0 0.0
    %7964 = vmatpush1.msra.mxu0 0.0
    %7965 = vmatprep.subr.mxu0 0.0
    %7966 = vmatpush1.msra.mxu0 0.0
    %7967 = vmatprep.subr.mxu0 0.0
    %7968 = vmatpush1.msra.mxu0 0.0
    %7969 = vmatprep.subr.mxu0 0.0
    %7970 = vmatpush1.msra.mxu0 0.0
    %7971 = vmatprep.subr.mxu0 0.0
    %7972 = vmatpush1.msra.mxu0 0.0
    %7973 = vmatprep.subr.mxu0 0.0
    %7974 = vmatpush1.msra.mxu0 0.0
    %7975 = vmatprep.subr.mxu0 0.0
    %7976 = vmatpush1.msra.mxu0 0.0
    %7977 = vmatprep.mubr.f32.mxu0 0.0
    %7978 = vmatmul.mubr.f32.gmra.mrb[0].mxu0 %v7890
    %v7979 = vpop.f32.mrb[0].mxu0
    %v7980 = vadd.f32 0.0, %v7979
    %v7981 = vpop.f32.mrb[0].mxu0
    %7982 = vmatprep.mubr.f32.mxu0 0.0
    %7983 = vmatmul.mubr.f32.gmra.mrb[0].mxu0 %v7893
    %v7984 = vpop.f32.mrb[0].mxu0
    %v7985 = vadd.f32 0.0, %v7984
    %v7986 = vpop.f32.mrb[0].mxu0
    %7987 = vmatprep.mubr.f32.mxu0 0.0
    %7988 = vmatmul.mubr.f32.gmra.mrb[0].mxu0 %v7896
    %v7989 = vpop.f32.mrb[0].mxu0
    %v7990 = vadd.f32 0.0, %v7989
    %v7991 = vpop.f32.mrb[0].mxu0
    %7992 = vmatprep.mubr.f32.mxu0 0.0
    %7993 = vmatmul.mubr.f32.gmra.mrb[0].mxu0 %v7899
    %v7994 = vpop.f32.mrb[0].mxu0
    %v7995 = vadd.f32 0.0, %v7994
    %v7996 = vpop.f32.mrb[0].mxu0
    %7997 = vmatprep.mubr.f32.mxu0 0.0
    %7998 = vmatmul.mubr.f32.gmra.mrb[0].mxu0 %v7902
    %v7999 = vpop.f32.mrb[0].mxu0
    %v8000 = vadd.f32 0.0, %v7999
    %v8001 = vpop.f32.mrb[0].mxu0
    %8002 = vmatprep.mubr.f32.mxu0 0.0
    %8003 = vmatmul.mubr.f32.gmra.mrb[0].mxu0 %v7905
    %v8004 = vpop.f32.mrb[0].mxu0
    %v8005 = vadd.f32 0.0, %v8004
    %v8006 = vpop.f32.mrb[0].mxu0
    %8007 = vmatprep.mubr.f32.mxu0 0.0
    %8008 = vmatmul.mubr.f32.gmra.mrb[0].mxu0 %v7908
    %v8009 = vpop.f32.mrb[0].mxu0
    %v8010 = vadd.f32 0.0, %v8009
    %v8011 = vpop.f32.mrb[0].mxu0
    %8012 = vmatprep.mubr.f32.mxu0 0.0
    %8013 = vmatmul.mubr.f32.gmra.mrb[0].mxu0 %v7911
    %v8014 = vpop.f32.mrb[0].mxu0
    %v8015 = vadd.f32 0.0, %v8014
    %v8016 = vpop.f32.mrb[0].mxu0
    %8017 = vdwg.mxu0
    %8018 = vrot.lane.b32.xlu0 %v5531, 104
    %v8019 = vpop.permute.xlu0 %8018
    %8020 = vrot.lane.b32.xlu0 %v5532, 104
    %v8021 = vpop.permute.xlu0 %8020
    %8022 = vrot.lane.b32.xlu0 %v5533, 104
    %v8023 = vpop.permute.xlu0 %8022
    %8024 = vrot.lane.b32.xlu0 %v5534, 104
    %v8025 = vpop.permute.xlu0 %8024
    %8026 = vrot.lane.b32.xlu0 %v5535, 104
    %v8027 = vpop.permute.xlu0 %8026
    %8028 = vrot.lane.b32.xlu0 %v5536, 104
    %v8029 = vpop.permute.xlu0 %8028
    %8030 = vrot.lane.b32.xlu0 %v5537, 104
    %v8031 = vpop.permute.xlu0 %8030
    %8032 = vrot.lane.b32.xlu0 %v5538, 104
    %v8033 = vpop.permute.xlu0 %8032
    %v8042 = vsel %vm647, %v8019, 0.0
    %8043 = vadd.xlane.f32.xlu0 %v8042
    %v8044 = vpop.xlane.xlu0 %8043
    %v8045 = vsel %vm647, %v8021, 0.0
    %8046 = vadd.xlane.f32.xlu0 %v8045
    %v8047 = vpop.xlane.xlu0 %8046
    %v8048 = vsel %vm647, %v8023, 0.0
    %8049 = vadd.xlane.f32.xlu0 %v8048
    %v8050 = vpop.xlane.xlu0 %8049
    %v8051 = vsel %vm647, %v8025, 0.0
    %8052 = vadd.xlane.f32.xlu0 %v8051
    %v8053 = vpop.xlane.xlu0 %8052
    %v8054 = vsel %vm647, %v8027, 0.0
    %8055 = vadd.xlane.f32.xlu0 %v8054
    %v8056 = vpop.xlane.xlu0 %8055
    %v8057 = vsel %vm647, %v8029, 0.0
    %8058 = vadd.xlane.f32.xlu0 %v8057
    %v8059 = vpop.xlane.xlu0 %8058
    %v8060 = vsel %vm647, %v8031, 0.0
    %8061 = vadd.xlane.f32.xlu0 %v8060
    %v8062 = vpop.xlane.xlu0 %8061
    %v8063 = vsel %vm647, %v8033, 0.0
    %8064 = vadd.xlane.f32.xlu0 %v8063
    %v8065 = vpop.xlane.xlu0 %8064
    %v8066 = vmul.f32 %v8044, %v672
    %v8067 = vmul.f32 %v8047, %v672
    %v8068 = vmul.f32 %v8050, %v672
    %v8069 = vmul.f32 %v8053, %v672
    %v8070 = vmul.f32 %v8056, %v672
    %v8071 = vmul.f32 %v8059, %v672
    %v8072 = vmul.f32 %v8062, %v672
    %v8073 = vmul.f32 %v8065, %v672
    %v8074 = vadd.f32 %v8066, 1.1920929e-07
    %v8075 = vadd.f32 %v8067, 1.1920929e-07
    %v8076 = vadd.f32 %v8068, 1.1920929e-07
    %v8077 = vadd.f32 %v8069, 1.1920929e-07
    %v8078 = vadd.f32 %v8070, 1.1920929e-07
    %v8079 = vadd.f32 %v8071, 1.1920929e-07
    %v8080 = vadd.f32 %v8072, 1.1920929e-07
    %v8081 = vadd.f32 %v8073, 1.1920929e-07
    %v8082 = vrsqrt.pop %v8074
    %v8083 = vrsqrt.pop %v8075
    %v8084 = vrsqrt.pop %v8076
    %v8085 = vrsqrt.pop %v8077
    %v8086 = vrsqrt.pop %v8078
    %v8087 = vrsqrt.pop %v8079
    %v8088 = vrsqrt.pop %v8080
    %v8089 = vrsqrt.pop %v8081
    %v8090 = vmul.f32 %v5492, %v8082
    %v8091 = vmul.f32 %v5497, %v8083
    %v8092 = vmul.f32 %v5502, %v8084
    %v8093 = vmul.f32 %v5507, %v8085
    %v8094 = vmul.f32 %v5512, %v8086
    %v8095 = vmul.f32 %v5517, %v8087
    %v8096 = vmul.f32 %v5522, %v8088
    %v8097 = vmul.f32 %v5527, %v8089
    %8106 = vrot.lane.b32.xlu0 %v8090, 100
    %v8107 = vpop.permute.xlu0 %8106
    %8108 = vrot.lane.b32.xlu0 %v8091, 100
    %v8109 = vpop.permute.xlu0 %8108
    %8110 = vrot.lane.b32.xlu0 %v8092, 100
    %v8111 = vpop.permute.xlu0 %8110
    %8112 = vrot.lane.b32.xlu0 %v8093, 100
    %v8113 = vpop.permute.xlu0 %8112
    %8114 = vrot.lane.b32.xlu0 %v8094, 100
    %v8115 = vpop.permute.xlu0 %8114
    %8116 = vrot.lane.b32.xlu0 %v8095, 100
    %v8117 = vpop.permute.xlu0 %8116
    %8118 = vrot.lane.b32.xlu0 %v8096, 100
    %v8119 = vpop.permute.xlu0 %8118
    %8120 = vrot.lane.b32.xlu0 %v8097, 100
    %v8121 = vpop.permute.xlu0 %8120
    %8130 = vrot.lane.b32.xlu0 %v8090, 108
    %v8131 = vpop.permute.xlu0 %8130
    %8132 = vrot.lane.b32.xlu0 %v8091, 108
    %v8133 = vpop.permute.xlu0 %8132
    %8134 = vrot.lane.b32.xlu0 %v8092, 108
    %v8135 = vpop.permute.xlu0 %8134
    %8136 = vrot.lane.b32.xlu0 %v8093, 108
    %v8137 = vpop.permute.xlu0 %8136
    %8138 = vrot.lane.b32.xlu0 %v8094, 108
    %v8139 = vpop.permute.xlu0 %8138
    %8140 = vrot.lane.b32.xlu0 %v8095, 108
    %v8141 = vpop.permute.xlu0 %8140
    %8142 = vrot.lane.b32.xlu0 %v8096, 108
    %v8143 = vpop.permute.xlu0 %8142
    %8144 = vrot.lane.b32.xlu0 %v8097, 108
    %v8145 = vpop.permute.xlu0 %8144
    %v8154 = vsel %vm761, %v8107, %v8131
    %v8155 = vsel %vm761, %v8109, %v8133
    %v8156 = vsel %vm761, %v8111, %v8135
    %v8157 = vsel %vm761, %v8113, %v8137
    %v8158 = vsel %vm761, %v8115, %v8139
    %v8159 = vsel %vm761, %v8117, %v8141
    %v8160 = vsel %vm761, %v8119, %v8143
    %v8161 = vsel %vm761, %v8121, %v8145
    %v8162 = vmul.f32 %v8090, %v3403
    %v8163 = vmul.f32 %v8091, %v3405
    %v8164 = vmul.f32 %v8092, %v3407
    %v8165 = vmul.f32 %v8093, %v3409
    %v8166 = vmul.f32 %v8094, %v3411
    %v8167 = vmul.f32 %v8095, %v3413
    %v8168 = vmul.f32 %v8096, %v3415
    %v8169 = vmul.f32 %v8097, %v3417
    %v8170 = vmul.f32 %v8154, %v371
    %v8171 = vmul.f32 %v8155, %v372
    %v8172 = vmul.f32 %v8156, %v373
    %v8173 = vmul.f32 %v8157, %v374
    %v8174 = vmul.f32 %v8158, %v375
    %v8175 = vmul.f32 %v8159, %v376
    %v8176 = vmul.f32 %v8160, %v377
    %v8177 = vmul.f32 %v8161, %v378
    %8186 = vrot.lane.b32.xlu0 %v8170, 24
    %v8187 = vpop.permute.xlu0 %8186
    %8188 = vrot.lane.b32.xlu0 %v8171, 24
    %v8189 = vpop.permute.xlu0 %8188
    %8190 = vrot.lane.b32.xlu0 %v8172, 24
    %v8191 = vpop.permute.xlu0 %8190
    %8192 = vrot.lane.b32.xlu0 %v8173, 24
    %v8193 = vpop.permute.xlu0 %8192
    %8194 = vrot.lane.b32.xlu0 %v8174, 24
    %v8195 = vpop.permute.xlu0 %8194
    %8196 = vrot.lane.b32.xlu0 %v8175, 24
    %v8197 = vpop.permute.xlu0 %8196
    %8198 = vrot.lane.b32.xlu0 %v8176, 24
    %v8199 = vpop.permute.xlu0 %8198
    %8200 = vrot.lane.b32.xlu0 %v8177, 24
    %v8201 = vpop.permute.xlu0 %8200
    %v8210 = vadd.f32 %v8162, %v8187
    %v8211 = vadd.f32 %v8163, %v8189
    %v8212 = vadd.f32 %v8164, %v8191
    %v8213 = vadd.f32 %v8165, %v8193
    %v8214 = vadd.f32 %v8166, %v8195
    %v8215 = vadd.f32 %v8167, %v8197
    %v8216 = vadd.f32 %v8168, %v8199
    %v8217 = vadd.f32 %v8169, %v8201
    %8218 = vrot.lane.b32.xlu0 %v5531, 72
    %v8219 = vpop.permute.xlu0 %8218
    %8220 = vrot.lane.b32.xlu0 %v5532, 72
    %v8221 = vpop.permute.xlu0 %8220
    %8222 = vrot.lane.b32.xlu0 %v5533, 72
    %v8223 = vpop.permute.xlu0 %8222
    %8224 = vrot.lane.b32.xlu0 %v5534, 72
    %v8225 = vpop.permute.xlu0 %8224
    %8226 = vrot.lane.b32.xlu0 %v5535, 72
    %v8227 = vpop.permute.xlu0 %8226
    %8228 = vrot.lane.b32.xlu0 %v5536, 72
    %v8229 = vpop.permute.xlu0 %8228
    %8230 = vrot.lane.b32.xlu0 %v5537, 72
    %v8231 = vpop.permute.xlu0 %8230
    %8232 = vrot.lane.b32.xlu0 %v5538, 72
    %v8233 = vpop.permute.xlu0 %8232
    %v8242 = vsel %vm647, %v8219, 0.0
    %8243 = vadd.xlane.f32.xlu0 %v8242
    %v8244 = vpop.xlane.xlu0 %8243
    %v8245 = vsel %vm647, %v8221, 0.0
    %8246 = vadd.xlane.f32.xlu0 %v8245
    %v8247 = vpop.xlane.xlu0 %8246
    %v8248 = vsel %vm647, %v8223, 0.0
    %8249 = vadd.xlane.f32.xlu0 %v8248
    %v8250 = vpop.xlane.xlu0 %8249
    %v8251 = vsel %vm647, %v8225, 0.0
    %8252 = vadd.xlane.f32.xlu0 %v8251
    %v8253 = vpop.xlane.xlu0 %8252
    %v8254 = vsel %vm647, %v8227, 0.0
    %8255 = vadd.xlane.f32.xlu0 %v8254
    %v8256 = vpop.xlane.xlu0 %8255
    %v8257 = vsel %vm647, %v8229, 0.0
    %8258 = vadd.xlane.f32.xlu0 %v8257
    %v8259 = vpop.xlane.xlu0 %8258
    %v8260 = vsel %vm647, %v8231, 0.0
    %8261 = vadd.xlane.f32.xlu0 %v8260
    %v8262 = vpop.xlane.xlu0 %8261
    %v8263 = vsel %vm647, %v8233, 0.0
    %8264 = vadd.xlane.f32.xlu0 %v8263
    %v8265 = vpop.xlane.xlu0 %8264
    %v8266 = vmul.f32 %v8244, %v672
    %v8267 = vmul.f32 %v8247, %v672
    %v8268 = vmul.f32 %v8250, %v672
    %v8269 = vmul.f32 %v8253, %v672
    %v8270 = vmul.f32 %v8256, %v672
    %v8271 = vmul.f32 %v8259, %v672
    %v8272 = vmul.f32 %v8262, %v672
    %v8273 = vmul.f32 %v8265, %v672
    %v8274 = vadd.f32 %v8266, 1.1920929e-07
    %v8275 = vadd.f32 %v8267, 1.1920929e-07
    %v8276 = vadd.f32 %v8268, 1.1920929e-07
    %v8277 = vadd.f32 %v8269, 1.1920929e-07
    %v8278 = vadd.f32 %v8270, 1.1920929e-07
    %v8279 = vadd.f32 %v8271, 1.1920929e-07
    %v8280 = vadd.f32 %v8272, 1.1920929e-07
    %v8281 = vadd.f32 %v8273, 1.1920929e-07
    %v8282 = vrsqrt.pop %v8274
    %v8283 = vrsqrt.pop %v8275
    %v8284 = vrsqrt.pop %v8276
    %v8285 = vrsqrt.pop %v8277
    %v8286 = vrsqrt.pop %v8278
    %v8287 = vrsqrt.pop %v8279
    %v8288 = vrsqrt.pop %v8280
    %v8289 = vrsqrt.pop %v8281
    %v8290 = vmul.f32 %v5492, %v8282
    %v8291 = vmul.f32 %v5497, %v8283
    %v8292 = vmul.f32 %v5502, %v8284
    %v8293 = vmul.f32 %v5507, %v8285
    %v8294 = vmul.f32 %v5512, %v8286
    %v8295 = vmul.f32 %v5517, %v8287
    %v8296 = vmul.f32 %v5522, %v8288
    %v8297 = vmul.f32 %v5527, %v8289
    %8306 = vrot.lane.b32.xlu0 %v8290, 68
    %v8307 = vpop.permute.xlu0 %8306
    %8308 = vrot.lane.b32.xlu0 %v8291, 68
    %v8309 = vpop.permute.xlu0 %8308
    %8310 = vrot.lane.b32.xlu0 %v8292, 68
    %v8311 = vpop.permute.xlu0 %8310
    %8312 = vrot.lane.b32.xlu0 %v8293, 68
    %v8313 = vpop.permute.xlu0 %8312
    %8314 = vrot.lane.b32.xlu0 %v8294, 68
    %v8315 = vpop.permute.xlu0 %8314
    %8316 = vrot.lane.b32.xlu0 %v8295, 68
    %v8317 = vpop.permute.xlu0 %8316
    %8318 = vrot.lane.b32.xlu0 %v8296, 68
    %v8319 = vpop.permute.xlu0 %8318
    %8320 = vrot.lane.b32.xlu0 %v8297, 68
    %v8321 = vpop.permute.xlu0 %8320
    %8330 = vrot.lane.b32.xlu0 %v8290, 76
    %v8331 = vpop.permute.xlu0 %8330
    %8332 = vrot.lane.b32.xlu0 %v8291, 76
    %v8333 = vpop.permute.xlu0 %8332
    %8334 = vrot.lane.b32.xlu0 %v8292, 76
    %v8335 = vpop.permute.xlu0 %8334
    %8336 = vrot.lane.b32.xlu0 %v8293, 76
    %v8337 = vpop.permute.xlu0 %8336
    %8338 = vrot.lane.b32.xlu0 %v8294, 76
    %v8339 = vpop.permute.xlu0 %8338
    %8340 = vrot.lane.b32.xlu0 %v8295, 76
    %v8341 = vpop.permute.xlu0 %8340
    %8342 = vrot.lane.b32.xlu0 %v8296, 76
    %v8343 = vpop.permute.xlu0 %8342
    %8344 = vrot.lane.b32.xlu0 %v8297, 76
    %v8345 = vpop.permute.xlu0 %8344
    %v8354 = vsel %vm761, %v8307, %v8331
    %v8355 = vsel %vm761, %v8309, %v8333
    %v8356 = vsel %vm761, %v8311, %v8335
    %v8357 = vsel %vm761, %v8313, %v8337
    %v8358 = vsel %vm761, %v8315, %v8339
    %v8359 = vsel %vm761, %v8317, %v8341
    %v8360 = vsel %vm761, %v8319, %v8343
    %v8361 = vsel %vm761, %v8321, %v8345
    %v8362 = vmul.f32 %v8290, %v3627
    %v8363 = vmul.f32 %v8291, %v3629
    %v8364 = vmul.f32 %v8292, %v3631
    %v8365 = vmul.f32 %v8293, %v3633
    %v8366 = vmul.f32 %v8294, %v3635
    %v8367 = vmul.f32 %v8295, %v3637
    %v8368 = vmul.f32 %v8296, %v3639
    %v8369 = vmul.f32 %v8297, %v3641
    %v8370 = vmul.f32 %v8354, %v371
    %v8371 = vmul.f32 %v8355, %v372
    %v8372 = vmul.f32 %v8356, %v373
    %v8373 = vmul.f32 %v8357, %v374
    %v8374 = vmul.f32 %v8358, %v375
    %v8375 = vmul.f32 %v8359, %v376
    %v8376 = vmul.f32 %v8360, %v377
    %v8377 = vmul.f32 %v8361, %v378
    %8386 = vrot.lane.b32.xlu0 %v8370, 56
    %v8387 = vpop.permute.xlu0 %8386
    %8388 = vrot.lane.b32.xlu0 %v8371, 56
    %v8389 = vpop.permute.xlu0 %8388
    %8390 = vrot.lane.b32.xlu0 %v8372, 56
    %v8391 = vpop.permute.xlu0 %8390
    %8392 = vrot.lane.b32.xlu0 %v8373, 56
    %v8393 = vpop.permute.xlu0 %8392
    %8394 = vrot.lane.b32.xlu0 %v8374, 56
    %v8395 = vpop.permute.xlu0 %8394
    %8396 = vrot.lane.b32.xlu0 %v8375, 56
    %v8397 = vpop.permute.xlu0 %8396
    %8398 = vrot.lane.b32.xlu0 %v8376, 56
    %v8399 = vpop.permute.xlu0 %8398
    %8400 = vrot.lane.b32.xlu0 %v8377, 56
    %v8401 = vpop.permute.xlu0 %8400
    %v8410 = vadd.f32 %v8362, %v8387
    %v8411 = vadd.f32 %v8363, %v8389
    %v8412 = vadd.f32 %v8364, %v8391
    %v8413 = vadd.f32 %v8365, %v8393
    %v8414 = vadd.f32 %v8366, %v8395
    %v8415 = vadd.f32 %v8367, %v8397
    %v8416 = vadd.f32 %v8368, %v8399
    %v8417 = vadd.f32 %v8369, %v8401
    %8426 = vrot.lane.b32.xlu0 %v8210, 104
    %v8427 = vpop.permute.xlu0 %8426
    %8428 = vrot.lane.b32.xlu0 %v8211, 104
    %v8429 = vpop.permute.xlu0 %8428
    %8430 = vrot.lane.b32.xlu0 %v8212, 104
    %v8431 = vpop.permute.xlu0 %8430
    %8432 = vrot.lane.b32.xlu0 %v8213, 104
    %v8433 = vpop.permute.xlu0 %8432
    %8434 = vrot.lane.b32.xlu0 %v8214, 104
    %v8435 = vpop.permute.xlu0 %8434
    %8436 = vrot.lane.b32.xlu0 %v8215, 104
    %v8437 = vpop.permute.xlu0 %8436
    %8438 = vrot.lane.b32.xlu0 %v8216, 104
    %v8439 = vpop.permute.xlu0 %8438
    %8440 = vrot.lane.b32.xlu0 %v8217, 104
    %v8441 = vpop.permute.xlu0 %8440
    %8450 = vrot.lane.b32.xlu0 %v8410, 72
    %v8451 = vpop.permute.xlu0 %8450
    %8452 = vrot.lane.b32.xlu0 %v8411, 72
    %v8453 = vpop.permute.xlu0 %8452
    %8454 = vrot.lane.b32.xlu0 %v8412, 72
    %v8455 = vpop.permute.xlu0 %8454
    %8456 = vrot.lane.b32.xlu0 %v8413, 72
    %v8457 = vpop.permute.xlu0 %8456
    %8458 = vrot.lane.b32.xlu0 %v8414, 72
    %v8459 = vpop.permute.xlu0 %8458
    %8460 = vrot.lane.b32.xlu0 %v8415, 72
    %v8461 = vpop.permute.xlu0 %8460
    %8462 = vrot.lane.b32.xlu0 %v8416, 72
    %v8463 = vpop.permute.xlu0 %8462
    %8464 = vrot.lane.b32.xlu0 %v8417, 72
    %v8465 = vpop.permute.xlu0 %8464
    %v8466 = vsel %vm647, %v8427, 0
    %v8468 = vsel %vm647, %v8429, 0
    %v8470 = vsel %vm647, %v8431, 0
    %v8472 = vsel %vm647, %v8433, 0
    %v8474 = vsel %vm647, %v8435, 0
    %v8476 = vsel %vm647, %v8437, 0
    %v8478 = vsel %vm647, %v8439, 0
    %v8480 = vsel %vm647, %v8441, 0
    %v8482 = vsel %vm647, %v8451, 0
    %v8484 = vsel %vm647, %v8453, 0
    %v8486 = vsel %vm647, %v8455, 0
    %v8488 = vsel %vm647, %v8457, 0
    %v8490 = vsel %vm647, %v8459, 0
    %v8492 = vsel %vm647, %v8461, 0
    %v8494 = vsel %vm647, %v8463, 0
    %v8496 = vsel %vm647, %v8465, 0
    %8498 = vmatprep.subr.mxu0 0.0
    %8499 = vmatpush1.xpose.msra.mxu0 %v8482
    %8500 = vmatprep.subr.mxu0 0.0
    %8501 = vmatpush1.xpose.msra.mxu0 %v8484
    %8502 = vmatprep.subr.mxu0 0.0
    %8503 = vmatpush1.xpose.msra.mxu0 %v8486
    %8504 = vmatprep.subr.mxu0 0.0
    %8505 = vmatpush1.xpose.msra.mxu0 %v8488
    %8506 = vmatprep.subr.mxu0 0.0
    %8507 = vmatpush1.xpose.msra.mxu0 %v8490
    %8508 = vmatprep.subr.mxu0 0.0
    %8509 = vmatpush1.xpose.msra.mxu0 %v8492
    %8510 = vmatprep.subr.mxu0 0.0
    %8511 = vmatpush1.xpose.msra.mxu0 %v8494
    %8512 = vmatprep.subr.mxu0 0.0
    %8513 = vmatpush1.xpose.msra.mxu0 %v8496
    %8514 = vmatprep.subr.mxu0 0.0
    %8515 = vmatpush1.xpose.msra.mxu0 0.0
    %8516 = vmatprep.subr.mxu0 0.0
    %8517 = vmatpush1.xpose.msra.mxu0 0.0
    %8518 = vmatprep.subr.mxu0 0.0
    %8519 = vmatpush1.xpose.msra.mxu0 0.0
    %8520 = vmatprep.subr.mxu0 0.0
    %8521 = vmatpush1.xpose.msra.mxu0 0.0
    %8522 = vmatprep.subr.mxu0 0.0
    %8523 = vmatpush1.xpose.msra.mxu0 0.0
    %8524 = vmatprep.subr.mxu0 0.0
    %8525 = vmatpush1.xpose.msra.mxu0 0.0
    %8526 = vmatprep.subr.mxu0 0.0
    %8527 = vmatpush1.xpose.msra.mxu0 0.0
    %8528 = vmatprep.subr.mxu0 0.0
    %8529 = vmatpush1.xpose.msra.mxu0 0.0
    %8530 = vmatprep.subr.mxu0 0.0
    %8531 = vmatpush1.xpose.msra.mxu0 0.0
    %8532 = vmatprep.subr.mxu0 0.0
    %8533 = vmatpush1.xpose.msra.mxu0 0.0
    %8534 = vmatprep.subr.mxu0 0.0
    %8535 = vmatpush1.xpose.msra.mxu0 0.0
    %8536 = vmatprep.subr.mxu0 0.0
    %8537 = vmatpush1.xpose.msra.mxu0 0.0
    %8538 = vmatprep.subr.mxu0 0.0
    %8539 = vmatpush1.xpose.msra.mxu0 0.0
    %8540 = vmatprep.subr.mxu0 0.0
    %8541 = vmatpush1.xpose.msra.mxu0 0.0
    %8542 = vmatprep.subr.mxu0 0.0
    %8543 = vmatpush1.xpose.msra.mxu0 0.0
    %8544 = vmatprep.subr.mxu0 0.0
    %8545 = vmatpush1.xpose.msra.mxu0 0.0
    %8546 = vmatprep.subr.mxu0 0.0
    %8547 = vmatpush1.xpose.msra.mxu0 0.0
    %8548 = vmatprep.subr.mxu0 0.0
    %8549 = vmatpush1.xpose.msra.mxu0 0.0
    %8550 = vmatprep.subr.mxu0 0.0
    %8551 = vmatpush1.xpose.msra.mxu0 0.0
    %8552 = vmatprep.subr.mxu0 0.0
    %8553 = vmatpush1.xpose.msra.mxu0 0.0
    %8554 = vmatprep.subr.mxu0 0.0
    %8555 = vmatpush1.xpose.msra.mxu0 0.0
    %8556 = vmatprep.subr.mxu0 0.0
    %8557 = vmatpush1.xpose.msra.mxu0 0.0
    %8558 = vmatprep.subr.mxu0 0.0
    %8559 = vmatpush1.xpose.msra.mxu0 0.0
    %8560 = vmatprep.subr.mxu0 0.0
    %8561 = vmatpush1.xpose.msra.mxu0 0.0
    %8562 = vmatprep.mubr.f32.mxu0 0.0
    %8563 = vmatmul.mubr.f32.gmra.mrb[0].mxu0 %v8466
    %v8564 = vpop.f32.mrb[0].mxu0
    %v8565 = vadd.f32 0.0, %v8564
    %v8566 = vpop.f32.mrb[0].mxu0
    %8567 = vmatprep.mubr.f32.mxu0 0.0
    %8568 = vmatmul.mubr.f32.gmra.mrb[0].mxu0 %v8468
    %v8569 = vpop.f32.mrb[0].mxu0
    %v8570 = vadd.f32 0.0, %v8569
    %v8571 = vpop.f32.mrb[0].mxu0
    %8572 = vmatprep.mubr.f32.mxu0 0.0
    %8573 = vmatmul.mubr.f32.gmra.mrb[0].mxu0 %v8470
    %v8574 = vpop.f32.mrb[0].mxu0
    %v8575 = vadd.f32 0.0, %v8574
    %v8576 = vpop.f32.mrb[0].mxu0
    %8577 = vmatprep.mubr.f32.mxu0 0.0
    %8578 = vmatmul.mubr.f32.gmra.mrb[0].mxu0 %v8472
    %v8579 = vpop.f32.mrb[0].mxu0
    %v8580 = vadd.f32 0.0, %v8579
    %v8581 = vpop.f32.mrb[0].mxu0
    %8582 = vmatprep.mubr.f32.mxu0 0.0
    %8583 = vmatmul.mubr.f32.gmra.mrb[0].mxu0 %v8474
    %v8584 = vpop.f32.mrb[0].mxu0
    %v8585 = vadd.f32 0.0, %v8584
    %v8586 = vpop.f32.mrb[0].mxu0
    %8587 = vmatprep.mubr.f32.mxu0 0.0
    %8588 = vmatmul.mubr.f32.gmra.mrb[0].mxu0 %v8476
    %v8589 = vpop.f32.mrb[0].mxu0
    %v8590 = vadd.f32 0.0, %v8589
    %v8591 = vpop.f32.mrb[0].mxu0
    %8592 = vmatprep.mubr.f32.mxu0 0.0
    %8593 = vmatmul.mubr.f32.gmra.mrb[0].mxu0 %v8478
    %v8594 = vpop.f32.mrb[0].mxu0
    %v8595 = vadd.f32 0.0, %v8594
    %v8596 = vpop.f32.mrb[0].mxu0
    %8597 = vmatprep.mubr.f32.mxu0 0.0
    %8598 = vmatmul.mubr.f32.gmra.mrb[0].mxu0 %v8480
    %v8599 = vpop.f32.mrb[0].mxu0
    %v8600 = vadd.f32 0.0, %v8599
    %v8601 = vpop.f32.mrb[0].mxu0
    %8602 = vdwg.mxu0
    %v8603 = vmul.f32 %v8565, 0.35355338
    %v8604 = vmul.f32 %v8570, 0.35355338
    %v8605 = vmul.f32 %v8575, 0.35355338
    %v8606 = vmul.f32 %v8580, 0.35355338
    %v8607 = vmul.f32 %v8585, 0.35355338
    %v8608 = vmul.f32 %v8590, 0.35355338
    %v8609 = vmul.f32 %v8595, 0.35355338
    %v8610 = vmul.f32 %v8600, 0.35355338
    %v8611 = vadd.f32 %v8603, %v379
    %v8612 = vadd.f32 %v8604, %v380
    %v8613 = vadd.f32 %v8605, %v381
    %v8614 = vadd.f32 %v8606, %v382
    %v8615 = vadd.f32 %v8607, %v383
    %v8616 = vadd.f32 %v8608, %v384
    %v8617 = vadd.f32 %v8609, %v385
    %v8618 = vadd.f32 %v8610, %v386
    %v8619 = vsel %vm1228, %v8611, -inf
    %8620 = vmax.xlane.f32.xlu0 %v8619
    %v8621 = vpop.xlane.xlu0 %8620
    %v8622 = vsel %vm1228, %v8612, -inf
    %8623 = vmax.xlane.f32.xlu0 %v8622
    %v8624 = vpop.xlane.xlu0 %8623
    %v8625 = vsel %vm1228, %v8613, -inf
    %8626 = vmax.xlane.f32.xlu0 %v8625
    %v8627 = vpop.xlane.xlu0 %8626
    %v8628 = vsel %vm1228, %v8614, -inf
    %8629 = vmax.xlane.f32.xlu0 %v8628
    %v8630 = vpop.xlane.xlu0 %8629
    %v8631 = vsel %vm1228, %v8615, -inf
    %8632 = vmax.xlane.f32.xlu0 %v8631
    %v8633 = vpop.xlane.xlu0 %8632
    %v8634 = vsel %vm1228, %v8616, -inf
    %8635 = vmax.xlane.f32.xlu0 %v8634
    %v8636 = vpop.xlane.xlu0 %8635
    %v8637 = vsel %vm1228, %v8617, -inf
    %8638 = vmax.xlane.f32.xlu0 %v8637
    %v8639 = vpop.xlane.xlu0 %8638
    %v8640 = vsel %vm1228, %v8618, -inf
    %8641 = vmax.xlane.f32.xlu0 %v8640
    %v8642 = vpop.xlane.xlu0 %8641
    %v8643 = vsub.f32 %v8611, %v8621
    %v8644 = vsub.f32 %v8612, %v8624
    %v8645 = vsub.f32 %v8613, %v8627
    %v8646 = vsub.f32 %v8614, %v8630
    %v8647 = vsub.f32 %v8615, %v8633
    %v8648 = vsub.f32 %v8616, %v8636
    %v8649 = vsub.f32 %v8617, %v8639
    %v8650 = vsub.f32 %v8618, %v8642
    %v8651 = vmul.f32 %v8643, 1.442695
    %v8652 = vpow.pop %v8651
    %v8653 = vmul.f32 %v8644, 1.442695
    %v8654 = vpow.pop %v8653
    %v8655 = vmul.f32 %v8645, 1.442695
    %v8656 = vpow.pop %v8655
    %v8657 = vmul.f32 %v8646, 1.442695
    %v8658 = vpow.pop %v8657
    %v8659 = vmul.f32 %v8647, 1.442695
    %v8660 = vpow.pop %v8659
    %v8661 = vmul.f32 %v8648, 1.442695
    %v8662 = vpow.pop %v8661
    %v8663 = vmul.f32 %v8649, 1.442695
    %v8664 = vpow.pop %v8663
    %v8665 = vmul.f32 %v8650, 1.442695
    %v8666 = vpow.pop %v8665
    %v8667 = vsel %vm1228, %v8652, 0.0
    %8668 = vadd.xlane.f32.xlu0 %v8667
    %v8669 = vpop.xlane.xlu0 %8668
    %v8670 = vsel %vm1228, %v8654, 0.0
    %8671 = vadd.xlane.f32.xlu0 %v8670
    %v8672 = vpop.xlane.xlu0 %8671
    %v8673 = vsel %vm1228, %v8656, 0.0
    %8674 = vadd.xlane.f32.xlu0 %v8673
    %v8675 = vpop.xlane.xlu0 %8674
    %v8676 = vsel %vm1228, %v8658, 0.0
    %8677 = vadd.xlane.f32.xlu0 %v8676
    %v8678 = vpop.xlane.xlu0 %8677
    %v8679 = vsel %vm1228, %v8660, 0.0
    %8680 = vadd.xlane.f32.xlu0 %v8679
    %v8681 = vpop.xlane.xlu0 %8680
    %v8682 = vsel %vm1228, %v8662, 0.0
    %8683 = vadd.xlane.f32.xlu0 %v8682
    %v8684 = vpop.xlane.xlu0 %8683
    %v8685 = vsel %vm1228, %v8664, 0.0
    %8686 = vadd.xlane.f32.xlu0 %v8685
    %v8687 = vpop.xlane.xlu0 %8686
    %v8688 = vsel %vm1228, %v8666, 0.0
    %8689 = vadd.xlane.f32.xlu0 %v8688
    %v8690 = vpop.xlane.xlu0 %8689
    %v8691 = vrcp.pop %v8669
    %v8692 = vmul.f32 %v8652, %v8691
    %v8693 = vrcp.pop %v8672
    %v8694 = vmul.f32 %v8654, %v8693
    %v8695 = vrcp.pop %v8675
    %v8696 = vmul.f32 %v8656, %v8695
    %v8697 = vrcp.pop %v8678
    %v8698 = vmul.f32 %v8658, %v8697
    %v8699 = vrcp.pop %v8681
    %v8700 = vmul.f32 %v8660, %v8699
    %v8701 = vrcp.pop %v8684
    %v8702 = vmul.f32 %v8662, %v8701
    %v8703 = vrcp.pop %v8687
    %v8704 = vmul.f32 %v8664, %v8703
    %v8705 = vrcp.pop %v8690
    %v8706 = vmul.f32 %v8666, %v8705
    %8707 = vrot.lane.b32.xlu0 %v5892, 40
    %v8708 = vpop.permute.xlu0 %8707
    %8709 = vrot.lane.b32.xlu0 %v5893, 40
    %v8710 = vpop.permute.xlu0 %8709
    %8711 = vrot.lane.b32.xlu0 %v5894, 40
    %v8712 = vpop.permute.xlu0 %8711
    %8713 = vrot.lane.b32.xlu0 %v5895, 40
    %v8714 = vpop.permute.xlu0 %8713
    %8715 = vrot.lane.b32.xlu0 %v5896, 40
    %v8716 = vpop.permute.xlu0 %8715
    %8717 = vrot.lane.b32.xlu0 %v5897, 40
    %v8718 = vpop.permute.xlu0 %8717
    %8719 = vrot.lane.b32.xlu0 %v5898, 40
    %v8720 = vpop.permute.xlu0 %8719
    %8721 = vrot.lane.b32.xlu0 %v5899, 40
    %v8722 = vpop.permute.xlu0 %8721
    %v8732 = vsel %vm1228, %v8692, 0
    %v8735 = vsel %vm1228, %v8694, 0
    %v8738 = vsel %vm1228, %v8696, 0
    %v8741 = vsel %vm1228, %v8698, 0
    %v8744 = vsel %vm1228, %v8700, 0
    %v8747 = vsel %vm1228, %v8702, 0
    %v8750 = vsel %vm1228, %v8704, 0
    %v8753 = vsel %vm1228, %v8706, 0
    %8755 = vmatprep.subr.mxu0 0.0
    %8756 = vmatpush1.msra.mxu0 %v8708
    %8757 = vmatprep.subr.mxu0 0.0
    %8758 = vmatpush1.msra.mxu0 %v8710
    %8759 = vmatprep.subr.mxu0 0.0
    %8760 = vmatpush1.msra.mxu0 %v8712
    %8761 = vmatprep.subr.mxu0 0.0
    %8762 = vmatpush1.msra.mxu0 %v8714
    %8763 = vmatprep.subr.mxu0 0.0
    %8764 = vmatpush1.msra.mxu0 %v8716
    %8765 = vmatprep.subr.mxu0 0.0
    %8766 = vmatpush1.msra.mxu0 %v8718
    %8767 = vmatprep.subr.mxu0 0.0
    %8768 = vmatpush1.msra.mxu0 %v8720
    %8769 = vmatprep.subr.mxu0 0.0
    %8770 = vmatpush1.msra.mxu0 %v8722
    %8771 = vmatprep.subr.mxu0 0.0
    %8772 = vmatpush1.msra.mxu0 0.0
    %8773 = vmatprep.subr.mxu0 0.0
    %8774 = vmatpush1.msra.mxu0 0.0
    %8775 = vmatprep.subr.mxu0 0.0
    %8776 = vmatpush1.msra.mxu0 0.0
    %8777 = vmatprep.subr.mxu0 0.0
    %8778 = vmatpush1.msra.mxu0 0.0
    %8779 = vmatprep.subr.mxu0 0.0
    %8780 = vmatpush1.msra.mxu0 0.0
    %8781 = vmatprep.subr.mxu0 0.0
    %8782 = vmatpush1.msra.mxu0 0.0
    %8783 = vmatprep.subr.mxu0 0.0
    %8784 = vmatpush1.msra.mxu0 0.0
    %8785 = vmatprep.subr.mxu0 0.0
    %8786 = vmatpush1.msra.mxu0 0.0
    %8787 = vmatprep.subr.mxu0 0.0
    %8788 = vmatpush1.msra.mxu0 0.0
    %8789 = vmatprep.subr.mxu0 0.0
    %8790 = vmatpush1.msra.mxu0 0.0
    %8791 = vmatprep.subr.mxu0 0.0
    %8792 = vmatpush1.msra.mxu0 0.0
    %8793 = vmatprep.subr.mxu0 0.0
    %8794 = vmatpush1.msra.mxu0 0.0
    %8795 = vmatprep.subr.mxu0 0.0
    %8796 = vmatpush1.msra.mxu0 0.0
    %8797 = vmatprep.subr.mxu0 0.0
    %8798 = vmatpush1.msra.mxu0 0.0
    %8799 = vmatprep.subr.mxu0 0.0
    %8800 = vmatpush1.msra.mxu0 0.0
    %8801 = vmatprep.subr.mxu0 0.0
    %8802 = vmatpush1.msra.mxu0 0.0
    %8803 = vmatprep.subr.mxu0 0.0
    %8804 = vmatpush1.msra.mxu0 0.0
    %8805 = vmatprep.subr.mxu0 0.0
    %8806 = vmatpush1.msra.mxu0 0.0
    %8807 = vmatprep.subr.mxu0 0.0
    %8808 = vmatpush1.msra.mxu0 0.0
    %8809 = vmatprep.subr.mxu0 0.0
    %8810 = vmatpush1.msra.mxu0 0.0
    %8811 = vmatprep.subr.mxu0 0.0
    %8812 = vmatpush1.msra.mxu0 0.0
    %8813 = vmatprep.subr.mxu0 0.0
    %8814 = vmatpush1.msra.mxu0 0.0
    %8815 = vmatprep.subr.mxu0 0.0
    %8816 = vmatpush1.msra.mxu0 0.0
    %8817 = vmatprep.subr.mxu0 0.0
    %8818 = vmatpush1.msra.mxu0 0.0
    %8819 = vmatprep.mubr.f32.mxu0 0.0
    %8820 = vmatmul.mubr.f32.gmra.mrb[0].mxu0 %v8732
    %v8821 = vpop.f32.mrb[0].mxu0
    %v8822 = vadd.f32 0.0, %v8821
    %v8823 = vpop.f32.mrb[0].mxu0
    %8824 = vmatprep.mubr.f32.mxu0 0.0
    %8825 = vmatmul.mubr.f32.gmra.mrb[0].mxu0 %v8735
    %v8826 = vpop.f32.mrb[0].mxu0
    %v8827 = vadd.f32 0.0, %v8826
    %v8828 = vpop.f32.mrb[0].mxu0
    %8829 = vmatprep.mubr.f32.mxu0 0.0
    %8830 = vmatmul.mubr.f32.gmra.mrb[0].mxu0 %v8738
    %v8831 = vpop.f32.mrb[0].mxu0
    %v8832 = vadd.f32 0.0, %v8831
    %v8833 = vpop.f32.mrb[0].mxu0
    %8834 = vmatprep.mubr.f32.mxu0 0.0
    %8835 = vmatmul.mubr.f32.gmra.mrb[0].mxu0 %v8741
    %v8836 = vpop.f32.mrb[0].mxu0
    %v8837 = vadd.f32 0.0, %v8836
    %v8838 = vpop.f32.mrb[0].mxu0
    %8839 = vmatprep.mubr.f32.mxu0 0.0
    %8840 = vmatmul.mubr.f32.gmra.mrb[0].mxu0 %v8744
    %v8841 = vpop.f32.mrb[0].mxu0
    %v8842 = vadd.f32 0.0, %v8841
    %v8843 = vpop.f32.mrb[0].mxu0
    %8844 = vmatprep.mubr.f32.mxu0 0.0
    %8845 = vmatmul.mubr.f32.gmra.mrb[0].mxu0 %v8747
    %v8846 = vpop.f32.mrb[0].mxu0
    %v8847 = vadd.f32 0.0, %v8846
    %v8848 = vpop.f32.mrb[0].mxu0
    %8849 = vmatprep.mubr.f32.mxu0 0.0
    %8850 = vmatmul.mubr.f32.gmra.mrb[0].mxu0 %v8750
    %v8851 = vpop.f32.mrb[0].mxu0
    %v8852 = vadd.f32 0.0, %v8851
    %v8853 = vpop.f32.mrb[0].mxu0
    %8854 = vmatprep.mubr.f32.mxu0 0.0
    %8855 = vmatmul.mubr.f32.gmra.mrb[0].mxu0 %v8753
    %v8856 = vpop.f32.mrb[0].mxu0
    %v8857 = vadd.f32 0.0, %v8856
    %v8858 = vpop.f32.mrb[0].mxu0
    %8859 = vdwg.mxu0
    %8868 = vrot.lane.b32.xlu0 %v7138, 8
    %v8869 = vpop.permute.xlu0 %8868
    %8870 = vrot.lane.b32.xlu0 %v7143, 8
    %v8871 = vpop.permute.xlu0 %8870
    %8872 = vrot.lane.b32.xlu0 %v7148, 8
    %v8873 = vpop.permute.xlu0 %8872
    %8874 = vrot.lane.b32.xlu0 %v7153, 8
    %v8875 = vpop.permute.xlu0 %8874
    %8876 = vrot.lane.b32.xlu0 %v7158, 8
    %v8877 = vpop.permute.xlu0 %8876
    %8878 = vrot.lane.b32.xlu0 %v7163, 8
    %v8879 = vpop.permute.xlu0 %8878
    %8880 = vrot.lane.b32.xlu0 %v7168, 8
    %v8881 = vpop.permute.xlu0 %8880
    %8882 = vrot.lane.b32.xlu0 %v7173, 8
    %v8883 = vpop.permute.xlu0 %8882
    %8900 = vrot.lane.b32.xlu0 %v7980, 16
    %v8901 = vpop.permute.xlu0 %8900
    %8902 = vrot.lane.b32.xlu0 %v7985, 16
    %v8903 = vpop.permute.xlu0 %8902
    %8904 = vrot.lane.b32.xlu0 %v7990, 16
    %v8905 = vpop.permute.xlu0 %8904
    %8906 = vrot.lane.b32.xlu0 %v7995, 16
    %v8907 = vpop.permute.xlu0 %8906
    %8908 = vrot.lane.b32.xlu0 %v8000, 16
    %v8909 = vpop.permute.xlu0 %8908
    %8910 = vrot.lane.b32.xlu0 %v8005, 16
    %v8911 = vpop.permute.xlu0 %8910
    %8912 = vrot.lane.b32.xlu0 %v8010, 16
    %v8913 = vpop.permute.xlu0 %8912
    %8914 = vrot.lane.b32.xlu0 %v8015, 16
    %v8915 = vpop.permute.xlu0 %8914
    %8932 = vrot.lane.b32.xlu0 %v8822, 24
    %v8933 = vpop.permute.xlu0 %8932
    %8934 = vrot.lane.b32.xlu0 %v8827, 24
    %v8935 = vpop.permute.xlu0 %8934
    %8936 = vrot.lane.b32.xlu0 %v8832, 24
    %v8937 = vpop.permute.xlu0 %8936
    %8938 = vrot.lane.b32.xlu0 %v8837, 24
    %v8939 = vpop.permute.xlu0 %8938
    %8940 = vrot.lane.b32.xlu0 %v8842, 24
    %v8941 = vpop.permute.xlu0 %8940
    %8942 = vrot.lane.b32.xlu0 %v8847, 24
    %v8943 = vpop.permute.xlu0 %8942
    %8944 = vrot.lane.b32.xlu0 %v8852, 24
    %v8945 = vpop.permute.xlu0 %8944
    %8946 = vrot.lane.b32.xlu0 %v8857, 24
    %v8947 = vpop.permute.xlu0 %8946
    %v8956 = vsel %vm647, %v6296, %v8869
    %v8957 = vsel %vm647, %v6301, %v8871
    %v8958 = vsel %vm647, %v6306, %v8873
    %v8959 = vsel %vm647, %v6311, %v8875
    %v8960 = vsel %vm647, %v6316, %v8877
    %v8961 = vsel %vm647, %v6321, %v8879
    %v8962 = vsel %vm647, %v6326, %v8881
    %v8963 = vsel %vm647, %v6331, %v8883
    %v8964 = vsel %vm4252, %v8956, %v8901
    %v8965 = vsel %vm4252, %v8957, %v8903
    %v8966 = vsel %vm4252, %v8958, %v8905
    %v8967 = vsel %vm4252, %v8959, %v8907
    %v8968 = vsel %vm4252, %v8960, %v8909
    %v8969 = vsel %vm4252, %v8961, %v8911
    %v8970 = vsel %vm4252, %v8962, %v8913
    %v8971 = vsel %vm4252, %v8963, %v8915
    %v8972 = vsel %vm4261, %v8964, %v8933
    %v8973 = vsel %vm4261, %v8965, %v8935
    %v8974 = vsel %vm4261, %v8966, %v8937
    %v8975 = vsel %vm4261, %v8967, %v8939
    %v8976 = vsel %vm4261, %v8968, %v8941
    %v8977 = vsel %vm4261, %v8969, %v8943
    %v8978 = vsel %vm4261, %v8970, %v8945
    %v8979 = vsel %vm4261, %v8971, %v8947
    %s8980 = scalar_lea.vmem %s12, 32
    %v8981 = vld [vmem:[%s8980] sm:$0xff]
    %v8982 = vld [vmem:[%s8980 + $0x8] sm:$0xff]
    %v8983 = vld [vmem:[%s8980 + $0x10] sm:$0xff]
    %v8984 = vld [vmem:[%s8980 + $0x18] sm:$0xff]
    %v8986 = vsel %vm101, %v8972, 0
    %v8989 = vsel %vm101, %v8973, 0
    %v8992 = vsel %vm101, %v8974, 0
    %v8995 = vsel %vm101, %v8975, 0
    %v8998 = vsel %vm101, %v8976, 0
    %v9001 = vsel %vm101, %v8977, 0
    %v9004 = vsel %vm101, %v8978, 0
    %v9007 = vsel %vm101, %v8979, 0
    %v9010 = vsel %vm101, %v8981, 0
    %v9013 = vsel %vm101, %v8982, 0
    %v9016 = vsel %vm101, %v8983, 0
    %v9019 = vsel %vm101, %v8984, 0
    %9021 = vmatprep.subr.mxu0 0.0
    %9022 = vmatpush1.xpose.msra.mxu0 %v9010
    %9023 = vmatprep.subr.mxu0 0.0
    %9024 = vmatpush1.xpose.msra.mxu0 %v9013
    %9025 = vmatprep.subr.mxu0 0.0
    %9026 = vmatpush1.xpose.msra.mxu0 %v9016
    %9027 = vmatprep.subr.mxu0 0.0
    %9028 = vmatpush1.xpose.msra.mxu0 %v9019
    %9029 = vmatprep.subr.mxu0 0.0
    %9030 = vmatpush1.xpose.msra.mxu0 0.0
    %9031 = vmatprep.subr.mxu0 0.0
    %9032 = vmatpush1.xpose.msra.mxu0 0.0
    %9033 = vmatprep.subr.mxu0 0.0
    %9034 = vmatpush1.xpose.msra.mxu0 0.0
    %9035 = vmatprep.subr.mxu0 0.0
    %9036 = vmatpush1.xpose.msra.mxu0 0.0
    %9037 = vmatprep.subr.mxu0 0.0
    %9038 = vmatpush1.xpose.msra.mxu0 0.0
    %9039 = vmatprep.subr.mxu0 0.0
    %9040 = vmatpush1.xpose.msra.mxu0 0.0
    %9041 = vmatprep.subr.mxu0 0.0
    %9042 = vmatpush1.xpose.msra.mxu0 0.0
    %9043 = vmatprep.subr.mxu0 0.0
    %9044 = vmatpush1.xpose.msra.mxu0 0.0
    %9045 = vmatprep.subr.mxu0 0.0
    %9046 = vmatpush1.xpose.msra.mxu0 0.0
    %9047 = vmatprep.subr.mxu0 0.0
    %9048 = vmatpush1.xpose.msra.mxu0 0.0
    %9049 = vmatprep.subr.mxu0 0.0
    %9050 = vmatpush1.xpose.msra.mxu0 0.0
    %9051 = vmatprep.subr.mxu0 0.0
    %9052 = vmatpush1.xpose.msra.mxu0 0.0
    %9053 = vmatprep.subr.mxu0 0.0
    %9054 = vmatpush1.xpose.msra.mxu0 0.0
    %9055 = vmatprep.subr.mxu0 0.0
    %9056 = vmatpush1.xpose.msra.mxu0 0.0
    %9057 = vmatprep.subr.mxu0 0.0
    %9058 = vmatpush1.xpose.msra.mxu0 0.0
    %9059 = vmatprep.subr.mxu0 0.0
    %9060 = vmatpush1.xpose.msra.mxu0 0.0
    %9061 = vmatprep.subr.mxu0 0.0
    %9062 = vmatpush1.xpose.msra.mxu0 0.0
    %9063 = vmatprep.subr.mxu0 0.0
    %9064 = vmatpush1.xpose.msra.mxu0 0.0
    %9065 = vmatprep.subr.mxu0 0.0
    %9066 = vmatpush1.xpose.msra.mxu0 0.0
    %9067 = vmatprep.subr.mxu0 0.0
    %9068 = vmatpush1.xpose.msra.mxu0 0.0
    %9069 = vmatprep.subr.mxu0 0.0
    %9070 = vmatpush1.xpose.msra.mxu0 0.0
    %9071 = vmatprep.subr.mxu0 0.0
    %9072 = vmatpush1.xpose.msra.mxu0 0.0
    %9073 = vmatprep.subr.mxu0 0.0
    %9074 = vmatpush1.xpose.msra.mxu0 0.0
    %9075 = vmatprep.subr.mxu0 0.0
    %9076 = vmatpush1.xpose.msra.mxu0 0.0
    %9077 = vmatprep.subr.mxu0 0.0
    %9078 = vmatpush1.xpose.msra.mxu0 0.0
    %9079 = vmatprep.subr.mxu0 0.0
    %9080 = vmatpush1.xpose.msra.mxu0 0.0
    %9081 = vmatprep.subr.mxu0 0.0
    %9082 = vmatpush1.xpose.msra.mxu0 0.0
    %9083 = vmatprep.subr.mxu0 0.0
    %9084 = vmatpush1.xpose.msra.mxu0 0.0
    %9085 = vmatprep.mubr.f32.mxu0 0.0
    %9086 = vmatmul.mubr.f32.gmra.mrb[0].mxu0 %v8986
    %v9087 = vpop.f32.mrb[0].mxu0
    %v9088 = vadd.f32 0.0, %v9087
    %v9089 = vpop.f32.mrb[0].mxu0
    %9090 = vmatprep.mubr.f32.mxu0 0.0
    %9091 = vmatmul.mubr.f32.gmra.mrb[0].mxu0 %v8989
    %v9092 = vpop.f32.mrb[0].mxu0
    %v9093 = vadd.f32 0.0, %v9092
    %v9094 = vpop.f32.mrb[0].mxu0
    %9095 = vmatprep.mubr.f32.mxu0 0.0
    %9096 = vmatmul.mubr.f32.gmra.mrb[0].mxu0 %v8992
    %v9097 = vpop.f32.mrb[0].mxu0
    %v9098 = vadd.f32 0.0, %v9097
    %v9099 = vpop.f32.mrb[0].mxu0
    %9100 = vmatprep.mubr.f32.mxu0 0.0
    %9101 = vmatmul.mubr.f32.gmra.mrb[0].mxu0 %v8995
    %v9102 = vpop.f32.mrb[0].mxu0
    %v9103 = vadd.f32 0.0, %v9102
    %v9104 = vpop.f32.mrb[0].mxu0
    %9105 = vmatprep.mubr.f32.mxu0 0.0
    %9106 = vmatmul.mubr.f32.gmra.mrb[0].mxu0 %v8998
    %v9107 = vpop.f32.mrb[0].mxu0
    %v9108 = vadd.f32 0.0, %v9107
    %v9109 = vpop.f32.mrb[0].mxu0
    %9110 = vmatprep.mubr.f32.mxu0 0.0
    %9111 = vmatmul.mubr.f32.gmra.mrb[0].mxu0 %v9001
    %v9112 = vpop.f32.mrb[0].mxu0
    %v9113 = vadd.f32 0.0, %v9112
    %v9114 = vpop.f32.mrb[0].mxu0
    %9115 = vmatprep.mubr.f32.mxu0 0.0
    %9116 = vmatmul.mubr.f32.gmra.mrb[0].mxu0 %v9004
    %v9117 = vpop.f32.mrb[0].mxu0
    %v9118 = vadd.f32 0.0, %v9117
    %v9119 = vpop.f32.mrb[0].mxu0
    %9120 = vmatprep.mubr.f32.mxu0 0.0
    %9121 = vmatmul.mubr.f32.gmra.mrb[0].mxu0 %v9007
    %v9122 = vpop.f32.mrb[0].mxu0
    %v9123 = vadd.f32 0.0, %v9122
    %v9124 = vpop.f32.mrb[0].mxu0
    %9125 = vdwg.mxu0
    %v9126 = vadd.f32 %v5280, %v9088
    %v9127 = vadd.f32 %v5281, %v9093
    %v9128 = vadd.f32 %v5282, %v9098
    %v9129 = vadd.f32 %v5283, %v9103
    %v9130 = vadd.f32 %v5284, %v9108
    %v9131 = vadd.f32 %v5285, %v9113
    %v9132 = vadd.f32 %v5286, %v9118
    %v9133 = vadd.f32 %v5287, %v9123
    %v9134 = vmul.f32 %v9126, %v9126
    %v9135 = vmul.f32 %v9127, %v9127
    %v9136 = vmul.f32 %v9128, %v9128
    %v9137 = vmul.f32 %v9129, %v9129
    %v9138 = vmul.f32 %v9130, %v9130
    %v9139 = vmul.f32 %v9131, %v9131
    %v9140 = vmul.f32 %v9132, %v9132
    %v9141 = vmul.f32 %v9133, %v9133
    %v9142 = vsel %vm101, %v9134, 0.0
    %9143 = vadd.xlane.f32.xlu0 %v9142
    %v9144 = vpop.xlane.xlu0 %9143
    %v9145 = vsel %vm101, %v9135, 0.0
    %9146 = vadd.xlane.f32.xlu0 %v9145
    %v9147 = vpop.xlane.xlu0 %9146
    %v9148 = vsel %vm101, %v9136, 0.0
    %9149 = vadd.xlane.f32.xlu0 %v9148
    %v9150 = vpop.xlane.xlu0 %9149
    %v9151 = vsel %vm101, %v9137, 0.0
    %9152 = vadd.xlane.f32.xlu0 %v9151
    %v9153 = vpop.xlane.xlu0 %9152
    %v9154 = vsel %vm101, %v9138, 0.0
    %9155 = vadd.xlane.f32.xlu0 %v9154
    %v9156 = vpop.xlane.xlu0 %9155
    %v9157 = vsel %vm101, %v9139, 0.0
    %9158 = vadd.xlane.f32.xlu0 %v9157
    %v9159 = vpop.xlane.xlu0 %9158
    %v9160 = vsel %vm101, %v9140, 0.0
    %9161 = vadd.xlane.f32.xlu0 %v9160
    %v9162 = vpop.xlane.xlu0 %9161
    %v9163 = vsel %vm101, %v9141, 0.0
    %9164 = vadd.xlane.f32.xlu0 %v9163
    %v9165 = vpop.xlane.xlu0 %9164
    %v9166 = vmul.f32 %v9144, %v318
    %v9167 = vmul.f32 %v9147, %v318
    %v9168 = vmul.f32 %v9150, %v318
    %v9169 = vmul.f32 %v9153, %v318
    %v9170 = vmul.f32 %v9156, %v318
    %v9171 = vmul.f32 %v9159, %v318
    %v9172 = vmul.f32 %v9162, %v318
    %v9173 = vmul.f32 %v9165, %v318
    %v9174 = vadd.f32 %v9166, 1.1920929e-07
    %v9175 = vadd.f32 %v9167, 1.1920929e-07
    %v9176 = vadd.f32 %v9168, 1.1920929e-07
    %v9177 = vadd.f32 %v9169, 1.1920929e-07
    %v9178 = vadd.f32 %v9170, 1.1920929e-07
    %v9179 = vadd.f32 %v9171, 1.1920929e-07
    %v9180 = vadd.f32 %v9172, 1.1920929e-07
    %v9181 = vadd.f32 %v9173, 1.1920929e-07
    %v9182 = vrsqrt.pop %v9174
    %v9183 = vrsqrt.pop %v9175
    %v9184 = vrsqrt.pop %v9176
    %v9185 = vrsqrt.pop %v9177
    %v9186 = vrsqrt.pop %v9178
    %v9187 = vrsqrt.pop %v9179
    %v9188 = vrsqrt.pop %v9180
    %v9189 = vrsqrt.pop %v9181
    %v9190 = vmul.f32 %v9126, %v9182
    %v9191 = vmul.f32 %v9127, %v9183
    %v9192 = vmul.f32 %v9128, %v9184
    %v9193 = vmul.f32 %v9129, %v9185
    %v9194 = vmul.f32 %v9130, %v9186
    %v9195 = vmul.f32 %v9131, %v9187
    %v9196 = vmul.f32 %v9132, %v9188
    %v9197 = vmul.f32 %v9133, %v9189
    %s9198 = scalar_lea.vmem %s13, 128
    %v9199 = vld [vmem:[%s9198] sm:$0xff]
    %v9200 = vld [vmem:[%s9198 + $0x8] sm:$0xff]
    %v9201 = vld [vmem:[%s9198 + $0x10] sm:$0xff]
    %v9202 = vld [vmem:[%s9198 + $0x18] sm:$0xff]
    %v9203 = vld [vmem:[%s9198 + $0x20] sm:$0xff]
    %v9204 = vld [vmem:[%s9198 + $0x28] sm:$0xff]
    %v9205 = vld [vmem:[%s9198 + $0x30] sm:$0xff]
    %v9206 = vld [vmem:[%s9198 + $0x38] sm:$0xff]
    %v9207 = vld [vmem:[%s9198 + $0x40] sm:$0xff]
    %v9208 = vld [vmem:[%s9198 + $0x48] sm:$0xff]
    %v9209 = vld [vmem:[%s9198 + $0x50] sm:$0xff]
    %v9210 = vld [vmem:[%s9198 + $0x58] sm:$0xff]
    %v9211 = vld [vmem:[%s9198 + $0x60] sm:$0xff]
    %v9212 = vld [vmem:[%s9198 + $0x68] sm:$0xff]
    %v9213 = vld [vmem:[%s9198 + $0x70] sm:$0xff]
    %v9214 = vld [vmem:[%s9198 + $0x78] sm:$0xff]
    %v9216 = vsel %vm101, %v9190, 0
    %v9219 = vsel %vm101, %v9191, 0
    %v9222 = vsel %vm101, %v9192, 0
    %v9225 = vsel %vm101, %v9193, 0
    %v9228 = vsel %vm101, %v9194, 0
    %v9231 = vsel %vm101, %v9195, 0
    %v9234 = vsel %vm101, %v9196, 0
    %v9237 = vsel %vm101, %v9197, 0
    %v9240 = vsel %vm101, %v9199, 0
    %v9243 = vsel %vm101, %v9200, 0
    %v9246 = vsel %vm101, %v9201, 0
    %v9249 = vsel %vm101, %v9202, 0
    %v9252 = vsel %vm101, %v9203, 0
    %v9255 = vsel %vm101, %v9204, 0
    %v9258 = vsel %vm101, %v9205, 0
    %v9261 = vsel %vm101, %v9206, 0
    %v9264 = vsel %vm101, %v9207, 0
    %v9267 = vsel %vm101, %v9208, 0
    %v9270 = vsel %vm101, %v9209, 0
    %v9273 = vsel %vm101, %v9210, 0
    %v9276 = vsel %vm101, %v9211, 0
    %v9279 = vsel %vm101, %v9212, 0
    %v9282 = vsel %vm101, %v9213, 0
    %v9285 = vsel %vm101, %v9214, 0
    %9287 = vmatprep.subr.mxu0 0.0
    %9288 = vmatpush1.xpose.msra.mxu0 %v9240
    %9289 = vmatprep.subr.mxu0 0.0
    %9290 = vmatpush1.xpose.msra.mxu0 %v9243
    %9291 = vmatprep.subr.mxu0 0.0
    %9292 = vmatpush1.xpose.msra.mxu0 %v9246
    %9293 = vmatprep.subr.mxu0 0.0
    %9294 = vmatpush1.xpose.msra.mxu0 %v9249
    %9295 = vmatprep.subr.mxu0 0.0
    %9296 = vmatpush1.xpose.msra.mxu0 %v9252
    %9297 = vmatprep.subr.mxu0 0.0
    %9298 = vmatpush1.xpose.msra.mxu0 %v9255
    %9299 = vmatprep.subr.mxu0 0.0
    %9300 = vmatpush1.xpose.msra.mxu0 %v9258
    %9301 = vmatprep.subr.mxu0 0.0
    %9302 = vmatpush1.xpose.msra.mxu0 %v9261
    %9303 = vmatprep.subr.mxu0 0.0
    %9304 = vmatpush1.xpose.msra.mxu0 %v9264
    %9305 = vmatprep.subr.mxu0 0.0
    %9306 = vmatpush1.xpose.msra.mxu0 %v9267
    %9307 = vmatprep.subr.mxu0 0.0
    %9308 = vmatpush1.xpose.msra.mxu0 %v9270
    %9309 = vmatprep.subr.mxu0 0.0
    %9310 = vmatpush1.xpose.msra.mxu0 %v9273
    %9311 = vmatprep.subr.mxu0 0.0
    %9312 = vmatpush1.xpose.msra.mxu0 %v9276
    %9313 = vmatprep.subr.mxu0 0.0
    %9314 = vmatpush1.xpose.msra.mxu0 %v9279
    %9315 = vmatprep.subr.mxu0 0.0
    %9316 = vmatpush1.xpose.msra.mxu0 %v9282
    %9317 = vmatprep.subr.mxu0 0.0
    %9318 = vmatpush1.xpose.msra.mxu0 %v9285
    %9319 = vmatprep.subr.mxu0 0.0
    %9320 = vmatpush1.xpose.msra.mxu0 0.0
    %9321 = vmatprep.subr.mxu0 0.0
    %9322 = vmatpush1.xpose.msra.mxu0 0.0
    %9323 = vmatprep.subr.mxu0 0.0
    %9324 = vmatpush1.xpose.msra.mxu0 0.0
    %9325 = vmatprep.subr.mxu0 0.0
    %9326 = vmatpush1.xpose.msra.mxu0 0.0
    %9327 = vmatprep.subr.mxu0 0.0
    %9328 = vmatpush1.xpose.msra.mxu0 0.0
    %9329 = vmatprep.subr.mxu0 0.0
    %9330 = vmatpush1.xpose.msra.mxu0 0.0
    %9331 = vmatprep.subr.mxu0 0.0
    %9332 = vmatpush1.xpose.msra.mxu0 0.0
    %9333 = vmatprep.subr.mxu0 0.0
    %9334 = vmatpush1.xpose.msra.mxu0 0.0
    %9335 = vmatprep.subr.mxu0 0.0
    %9336 = vmatpush1.xpose.msra.mxu0 0.0
    %9337 = vmatprep.subr.mxu0 0.0
    %9338 = vmatpush1.xpose.msra.mxu0 0.0
    %9339 = vmatprep.subr.mxu0 0.0
    %9340 = vmatpush1.xpose.msra.mxu0 0.0
    %9341 = vmatprep.subr.mxu0 0.0
    %9342 = vmatpush1.xpose.msra.mxu0 0.0
    %9343 = vmatprep.subr.mxu0 0.0
    %9344 = vmatpush1.xpose.msra.mxu0 0.0
    %9345 = vmatprep.subr.mxu0 0.0
    %9346 = vmatpush1.xpose.msra.mxu0 0.0
    %9347 = vmatprep.subr.mxu0 0.0
    %9348 = vmatpush1.xpose.msra.mxu0 0.0
    %9349 = vmatprep.subr.mxu0 0.0
    %9350 = vmatpush1.xpose.msra.mxu0 0.0
    %9351 = vmatprep.mubr.f32.mxu0 0.0
    %9352 = vmatmul.mubr.f32.gmra.mrb[0].mxu0 %v9216
    %v9353 = vpop.f32.mrb[0].mxu0
    %v9354 = vadd.f32 0.0, %v9353
    %v9355 = vpop.f32.mrb[0].mxu0
    %9356 = vmatprep.mubr.f32.mxu0 0.0
    %9357 = vmatmul.mubr.f32.gmra.mrb[0].mxu0 %v9219
    %v9358 = vpop.f32.mrb[0].mxu0
    %v9359 = vadd.f32 0.0, %v9358
    %v9360 = vpop.f32.mrb[0].mxu0
    %9361 = vmatprep.mubr.f32.mxu0 0.0
    %9362 = vmatmul.mubr.f32.gmra.mrb[0].mxu0 %v9222
    %v9363 = vpop.f32.mrb[0].mxu0
    %v9364 = vadd.f32 0.0, %v9363
    %v9365 = vpop.f32.mrb[0].mxu0
    %9366 = vmatprep.mubr.f32.mxu0 0.0
    %9367 = vmatmul.mubr.f32.gmra.mrb[0].mxu0 %v9225
    %v9368 = vpop.f32.mrb[0].mxu0
    %v9369 = vadd.f32 0.0, %v9368
    %v9370 = vpop.f32.mrb[0].mxu0
    %9371 = vmatprep.mubr.f32.mxu0 0.0
    %9372 = vmatmul.mubr.f32.gmra.mrb[0].mxu0 %v9228
    %v9373 = vpop.f32.mrb[0].mxu0
    %v9374 = vadd.f32 0.0, %v9373
    %v9375 = vpop.f32.mrb[0].mxu0
    %9376 = vmatprep.mubr.f32.mxu0 0.0
    %9377 = vmatmul.mubr.f32.gmra.mrb[0].mxu0 %v9231
    %v9378 = vpop.f32.mrb[0].mxu0
    %v9379 = vadd.f32 0.0, %v9378
    %v9380 = vpop.f32.mrb[0].mxu0
    %9381 = vmatprep.mubr.f32.mxu0 0.0
    %9382 = vmatmul.mubr.f32.gmra.mrb[0].mxu0 %v9234
    %v9383 = vpop.f32.mrb[0].mxu0
    %v9384 = vadd.f32 0.0, %v9383
    %v9385 = vpop.f32.mrb[0].mxu0
    %9386 = vmatprep.mubr.f32.mxu0 0.0
    %9387 = vmatmul.mubr.f32.gmra.mrb[0].mxu0 %v9237
    %v9388 = vpop.f32.mrb[0].mxu0
    %v9389 = vadd.f32 0.0, %v9388
    %v9390 = vpop.f32.mrb[0].mxu0
    %9391 = vdwg.mxu0
    %v9392 = vmax.f32 %v9354, 0.0
    %v9393 = vmax.f32 %v9359, 0.0
    %v9394 = vmax.f32 %v9364, 0.0
    %v9395 = vmax.f32 %v9369, 0.0
    %v9396 = vmax.f32 %v9374, 0.0
    %v9397 = vmax.f32 %v9379, 0.0
    %v9398 = vmax.f32 %v9384, 0.0
    %v9399 = vmax.f32 %v9389, 0.0
    %s9400 = scalar_lea.vmem %s14, 32
    %v9401 = vld [vmem:[%s9400] sm:$0xff]
    %v9402 = vld [vmem:[%s9400 + $0x8] sm:$0xff]
    %v9403 = vld [vmem:[%s9400 + $0x10] sm:$0xff]
    %v9404 = vld [vmem:[%s9400 + $0x18] sm:$0xff]
    %9405 = vmatprep.subr.mxu0 0.0
    %9406 = vmatpush1.xpose.msra.mxu0 %v9401
    %9407 = vmatprep.subr.mxu0 0.0
    %9408 = vmatpush1.xpose.msra.mxu0 %v9402
    %9409 = vmatprep.subr.mxu0 0.0
    %9410 = vmatpush1.xpose.msra.mxu0 %v9403
    %9411 = vmatprep.subr.mxu0 0.0
    %9412 = vmatpush1.xpose.msra.mxu0 %v9404
    %9413 = vmatprep.subr.mxu0 0.0
    %9414 = vmatpush1.xpose.msra.mxu0 0.0
    %9415 = vmatprep.subr.mxu0 0.0
    %9416 = vmatpush1.xpose.msra.mxu0 0.0
    %9417 = vmatprep.subr.mxu0 0.0
    %9418 = vmatpush1.xpose.msra.mxu0 0.0
    %9419 = vmatprep.subr.mxu0 0.0
    %9420 = vmatpush1.xpose.msra.mxu0 0.0
    %9421 = vmatprep.subr.mxu0 0.0
    %9422 = vmatpush1.xpose.msra.mxu0 0.0
    %9423 = vmatprep.subr.mxu0 0.0
    %9424 = vmatpush1.xpose.msra.mxu0 0.0
    %9425 = vmatprep.subr.mxu0 0.0
    %9426 = vmatpush1.xpose.msra.mxu0 0.0
    %9427 = vmatprep.subr.mxu0 0.0
    %9428 = vmatpush1.xpose.msra.mxu0 0.0
    %9429 = vmatprep.subr.mxu0 0.0
    %9430 = vmatpush1.xpose.msra.mxu0 0.0
    %9431 = vmatprep.subr.mxu0 0.0
    %9432 = vmatpush1.xpose.msra.mxu0 0.0
    %9433 = vmatprep.subr.mxu0 0.0
    %9434 = vmatpush1.xpose.msra.mxu0 0.0
    %9435 = vmatprep.subr.mxu0 0.0
    %9436 = vmatpush1.xpose.msra.mxu0 0.0
    %9437 = vmatprep.subr.mxu0 0.0
    %9438 = vmatpush1.xpose.msra.mxu0 0.0
    %9439 = vmatprep.subr.mxu0 0.0
    %9440 = vmatpush1.xpose.msra.mxu0 0.0
    %9441 = vmatprep.subr.mxu0 0.0
    %9442 = vmatpush1.xpose.msra.mxu0 0.0
    %9443 = vmatprep.subr.mxu0 0.0
    %9444 = vmatpush1.xpose.msra.mxu0 0.0
    %9445 = vmatprep.subr.mxu0 0.0
    %9446 = vmatpush1.xpose.msra.mxu0 0.0
    %9447 = vmatprep.subr.mxu0 0.0
    %9448 = vmatpush1.xpose.msra.mxu0 0.0
    %9449 = vmatprep.subr.mxu0 0.0
    %9450 = vmatpush1.xpose.msra.mxu0 0.0
    %9451 = vmatprep.subr.mxu0 0.0
    %9452 = vmatpush1.xpose.msra.mxu0 0.0
    %9453 = vmatprep.subr.mxu0 0.0
    %9454 = vmatpush1.xpose.msra.mxu0 0.0
    %9455 = vmatprep.subr.mxu0 0.0
    %9456 = vmatpush1.xpose.msra.mxu0 0.0
    %9457 = vmatprep.subr.mxu0 0.0
    %9458 = vmatpush1.xpose.msra.mxu0 0.0
    %9459 = vmatprep.subr.mxu0 0.0
    %9460 = vmatpush1.xpose.msra.mxu0 0.0
    %9461 = vmatprep.subr.mxu0 0.0
    %9462 = vmatpush1.xpose.msra.mxu0 0.0
    %9463 = vmatprep.subr.mxu0 0.0
    %9464 = vmatpush1.xpose.msra.mxu0 0.0
    %9465 = vmatprep.subr.mxu0 0.0
    %9466 = vmatpush1.xpose.msra.mxu0 0.0
    %9467 = vmatprep.subr.mxu0 0.0
    %9468 = vmatpush1.xpose.msra.mxu0 0.0
    %9469 = vmatprep.mubr.f32.mxu0 0.0
    %9470 = vmatmul.mubr.f32.gmra.mrb[0].mxu0 %v9392
    %v9471 = vpop.f32.mrb[0].mxu0
    %v9472 = vadd.f32 0.0, %v9471
    %v9473 = vpop.f32.mrb[0].mxu0
    %9474 = vmatprep.mubr.f32.mxu0 0.0
    %9475 = vmatmul.mubr.f32.gmra.mrb[0].mxu0 %v9393
    %v9476 = vpop.f32.mrb[0].mxu0
    %v9477 = vadd.f32 0.0, %v9476
    %v9478 = vpop.f32.mrb[0].mxu0
    %9479 = vmatprep.mubr.f32.mxu0 0.0
    %9480 = vmatmul.mubr.f32.gmra.mrb[0].mxu0 %v9394
    %v9481 = vpop.f32.mrb[0].mxu0
    %v9482 = vadd.f32 0.0, %v9481
    %v9483 = vpop.f32.mrb[0].mxu0
    %9484 = vmatprep.mubr.f32.mxu0 0.0
    %9485 = vmatmul.mubr.f32.gmra.mrb[0].mxu0 %v9395
    %v9486 = vpop.f32.mrb[0].mxu0
    %v9487 = vadd.f32 0.0, %v9486
    %v9488 = vpop.f32.mrb[0].mxu0
    %9489 = vmatprep.mubr.f32.mxu0 0.0
    %9490 = vmatmul.mubr.f32.gmra.mrb[0].mxu0 %v9396
    %v9491 = vpop.f32.mrb[0].mxu0
    %v9492 = vadd.f32 0.0, %v9491
    %v9493 = vpop.f32.mrb[0].mxu0
    %9494 = vmatprep.mubr.f32.mxu0 0.0
    %9495 = vmatmul.mubr.f32.gmra.mrb[0].mxu0 %v9397
    %v9496 = vpop.f32.mrb[0].mxu0
    %v9497 = vadd.f32 0.0, %v9496
    %v9498 = vpop.f32.mrb[0].mxu0
    %9499 = vmatprep.mubr.f32.mxu0 0.0
    %9500 = vmatmul.mubr.f32.gmra.mrb[0].mxu0 %v9398
    %v9501 = vpop.f32.mrb[0].mxu0
    %v9502 = vadd.f32 0.0, %v9501
    %v9503 = vpop.f32.mrb[0].mxu0
    %9504 = vmatprep.mubr.f32.mxu0 0.0
    %9505 = vmatmul.mubr.f32.gmra.mrb[0].mxu0 %v9399
    %v9506 = vpop.f32.mrb[0].mxu0
    %v9507 = vadd.f32 0.0, %v9506
    %v9508 = vpop.f32.mrb[0].mxu0
    %9509 = vdwg.mxu0
    %v9510 = vadd.f32 %v9126, %v9472
    %v9511 = vadd.f32 %v9127, %v9477
    %v9512 = vadd.f32 %v9128, %v9482
    %v9513 = vadd.f32 %v9129, %v9487
    %v9514 = vadd.f32 %v9130, %v9492
    %v9515 = vadd.f32 %v9131, %v9497
    %v9516 = vadd.f32 %v9132, %v9502
    %v9517 = vadd.f32 %v9133, %v9507
    %s9518 = scalar_lea.vmem %s15, 256
    %v9519 = vld [vmem:[%s9518] sm:$0xff]
    %v9520 = vld [vmem:[%s9518 + $0x8] sm:$0xff]
    %v9521 = vld [vmem:[%s9518 + $0x10] sm:$0xff]
    %v9522 = vld [vmem:[%s9518 + $0x18] sm:$0xff]
    %v9523 = vld [vmem:[%s9518 + $0x20] sm:$0xff]
    %v9524 = vld [vmem:[%s9518 + $0x28] sm:$0xff]
    %v9525 = vld [vmem:[%s9518 + $0x30] sm:$0xff]
    %v9526 = vld [vmem:[%s9518 + $0x38] sm:$0xff]
    %v9527 = vld [vmem:[%s9518 + $0x40] sm:$0xff]
    %v9528 = vld [vmem:[%s9518 + $0x48] sm:$0xff]
    %v9529 = vld [vmem:[%s9518 + $0x50] sm:$0xff]
    %v9530 = vld [vmem:[%s9518 + $0x58] sm:$0xff]
    %v9531 = vld [vmem:[%s9518 + $0x60] sm:$0xff]
    %v9532 = vld [vmem:[%s9518 + $0x68] sm:$0xff]
    %v9533 = vld [vmem:[%s9518 + $0x70] sm:$0xff]
    %v9534 = vld [vmem:[%s9518 + $0x78] sm:$0xff]
    %v9535 = vld [vmem:[%s9518 + $0x80] sm:$0xff]
    %v9536 = vld [vmem:[%s9518 + $0x88] sm:$0xff]
    %v9537 = vld [vmem:[%s9518 + $0x90] sm:$0xff]
    %v9538 = vld [vmem:[%s9518 + $0x98] sm:$0xff]
    %v9539 = vld [vmem:[%s9518 + $0xa0] sm:$0xff]
    %v9540 = vld [vmem:[%s9518 + $0xa8] sm:$0xff]
    %v9541 = vld [vmem:[%s9518 + $0xb0] sm:$0xff]
    %v9542 = vld [vmem:[%s9518 + $0xb8] sm:$0xff]
    %v9543 = vld [vmem:[%s9518 + $0xc0] sm:$0xff]
    %v9544 = vld [vmem:[%s9518 + $0xc8] sm:$0xff]
    %v9545 = vld [vmem:[%s9518 + $0xd0] sm:$0xff]
    %v9546 = vld [vmem:[%s9518 + $0xd8] sm:$0xff]
    %v9547 = vld [vmem:[%s9518 + $0xe0] sm:$0xff]
    %v9548 = vld [vmem:[%s9518 + $0xe8] sm:$0xff]
    %v9549 = vld [vmem:[%s9518 + $0xf0] sm:$0xff]
    %v9550 = vld [vmem:[%s9518 + $0xf8] sm:$0xff]
    %s9551 = scalar_lea.vmem %s16, 2
    %v9552 = vld [vmem:[%s9551] sm:$0x3]
    %v9554 = vlaneseq
    %v9555 = vshrl.u32 %v9554, 7
    %v9556 = vsub.s32 0, %v9555
    %v9557 = vrot.slane %v9552, %v9556
    %v9558 = vlaneseq
    %v9559 = vshrl.u32 %v9558, 7
    %v9560 = vsub.s32 1, %v9559
    %v9561 = vrot.slane %v9552, %v9560
    %v9565 = vsel %vm101, %v9126, 0
    %v9568 = vsel %vm101, %v9127, 0
    %v9571 = vsel %vm101, %v9128, 0
    %v9574 = vsel %vm101, %v9129, 0
    %v9577 = vsel %vm101, %v9130, 0
    %v9580 = vsel %vm101, %v9131, 0
    %v9583 = vsel %vm101, %v9132, 0
    %v9586 = vsel %vm101, %v9133, 0
    %v9589 = vsel %vm101, %v9519, 0
    %v9592 = vsel %vm101, %v9520, 0
    %v9595 = vsel %vm101, %v9521, 0
    %v9598 = vsel %vm101, %v9522, 0
    %v9601 = vsel %vm101, %v9523, 0
    %v9604 = vsel %vm101, %v9524, 0
    %v9607 = vsel %vm101, %v9525, 0
    %v9610 = vsel %vm101, %v9526, 0
    %v9613 = vsel %vm101, %v9527, 0
    %v9616 = vsel %vm101, %v9528, 0
    %v9619 = vsel %vm101, %v9529, 0
    %v9622 = vsel %vm101, %v9530, 0
    %v9625 = vsel %vm101, %v9531, 0
    %v9628 = vsel %vm101, %v9532, 0
    %v9631 = vsel %vm101, %v9533, 0
    %v9634 = vsel %vm101, %v9534, 0
    %v9637 = vsel %vm101, %v9535, 0
    %v9640 = vsel %vm101, %v9536, 0
    %v9643 = vsel %vm101, %v9537, 0
    %v9646 = vsel %vm101, %v9538, 0
    %v9649 = vsel %vm101, %v9539, 0
    %v9652 = vsel %vm101, %v9540, 0
    %v9655 = vsel %vm101, %v9541, 0
    %v9658 = vsel %vm101, %v9542, 0
    %v9661 = vsel %vm101, %v9543, 0
    %v9664 = vsel %vm101, %v9544, 0
    %v9667 = vsel %vm101, %v9545, 0
    %v9670 = vsel %vm101, %v9546, 0
    %v9673 = vsel %vm101, %v9547, 0
    %v9676 = vsel %vm101, %v9548, 0
    %v9679 = vsel %vm101, %v9549, 0
    %v9682 = vsel %vm101, %v9550, 0
    %9684 = vmatprep.subr.mxu0 0.0
    %9685 = vmatpush1.xpose.msra.mxu0 %v9589
    %9686 = vmatprep.subr.mxu0 0.0
    %9687 = vmatpush1.xpose.msra.mxu0 %v9592
    %9688 = vmatprep.subr.mxu0 0.0
    %9689 = vmatpush1.xpose.msra.mxu0 %v9595
    %9690 = vmatprep.subr.mxu0 0.0
    %9691 = vmatpush1.xpose.msra.mxu0 %v9598
    %9692 = vmatprep.subr.mxu0 0.0
    %9693 = vmatpush1.xpose.msra.mxu0 %v9601
    %9694 = vmatprep.subr.mxu0 0.0
    %9695 = vmatpush1.xpose.msra.mxu0 %v9604
    %9696 = vmatprep.subr.mxu0 0.0
    %9697 = vmatpush1.xpose.msra.mxu0 %v9607
    %9698 = vmatprep.subr.mxu0 0.0
    %9699 = vmatpush1.xpose.msra.mxu0 %v9610
    %9700 = vmatprep.subr.mxu0 0.0
    %9701 = vmatpush1.xpose.msra.mxu0 %v9613
    %9702 = vmatprep.subr.mxu0 0.0
    %9703 = vmatpush1.xpose.msra.mxu0 %v9616
    %9704 = vmatprep.subr.mxu0 0.0
    %9705 = vmatpush1.xpose.msra.mxu0 %v9619
    %9706 = vmatprep.subr.mxu0 0.0
    %9707 = vmatpush1.xpose.msra.mxu0 %v9622
    %9708 = vmatprep.subr.mxu0 0.0
    %9709 = vmatpush1.xpose.msra.mxu0 %v9625
    %9710 = vmatprep.subr.mxu0 0.0
    %9711 = vmatpush1.xpose.msra.mxu0 %v9628
    %9712 = vmatprep.subr.mxu0 0.0
    %9713 = vmatpush1.xpose.msra.mxu0 %v9631
    %9714 = vmatprep.subr.mxu0 0.0
    %9715 = vmatpush1.xpose.msra.mxu0 %v9634
    %9716 = vmatprep.subr.mxu0 0.0
    %9717 = vmatpush1.xpose.msra.mxu0 %v9637
    %9718 = vmatprep.subr.mxu0 0.0
    %9719 = vmatpush1.xpose.msra.mxu0 %v9640
    %9720 = vmatprep.subr.mxu0 0.0
    %9721 = vmatpush1.xpose.msra.mxu0 %v9643
    %9722 = vmatprep.subr.mxu0 0.0
    %9723 = vmatpush1.xpose.msra.mxu0 %v9646
    %9724 = vmatprep.subr.mxu0 0.0
    %9725 = vmatpush1.xpose.msra.mxu0 %v9649
    %9726 = vmatprep.subr.mxu0 0.0
    %9727 = vmatpush1.xpose.msra.mxu0 %v9652
    %9728 = vmatprep.subr.mxu0 0.0
    %9729 = vmatpush1.xpose.msra.mxu0 %v9655
    %9730 = vmatprep.subr.mxu0 0.0
    %9731 = vmatpush1.xpose.msra.mxu0 %v9658
    %9732 = vmatprep.subr.mxu0 0.0
    %9733 = vmatpush1.xpose.msra.mxu0 %v9661
    %9734 = vmatprep.subr.mxu0 0.0
    %9735 = vmatpush1.xpose.msra.mxu0 %v9664
    %9736 = vmatprep.subr.mxu0 0.0
    %9737 = vmatpush1.xpose.msra.mxu0 %v9667
    %9738 = vmatprep.subr.mxu0 0.0
    %9739 = vmatpush1.xpose.msra.mxu0 %v9670
    %9740 = vmatprep.subr.mxu0 0.0
    %9741 = vmatpush1.xpose.msra.mxu0 %v9673
    %9742 = vmatprep.subr.mxu0 0.0
    %9743 = vmatpush1.xpose.msra.mxu0 %v9676
    %9744 = vmatprep.subr.mxu0 0.0
    %9745 = vmatpush1.xpose.msra.mxu0 %v9679
    %9746 = vmatprep.subr.mxu0 0.0
    %9747 = vmatpush1.xpose.msra.mxu0 %v9682
    %9748 = vmatprep.mubr.f32.mxu0 0.0
    %9749 = vmatmul.mubr.f32.gmra.mrb[0].mxu0 %v9565
    %v9750 = vpop.f32.mrb[0].mxu0
    %v9751 = vadd.f32 %v9557, %v9750
    %v9752 = vpop.f32.mrb[0].mxu0
    %v9753 = vadd.f32 %v9561, %v9752
    %9754 = vmatprep.mubr.f32.mxu0 0.0
    %9755 = vmatmul.mubr.f32.gmra.mrb[0].mxu0 %v9568
    %v9756 = vpop.f32.mrb[0].mxu0
    %v9757 = vadd.f32 %v9557, %v9756
    %v9758 = vpop.f32.mrb[0].mxu0
    %v9759 = vadd.f32 %v9561, %v9758
    %9760 = vmatprep.mubr.f32.mxu0 0.0
    %9761 = vmatmul.mubr.f32.gmra.mrb[0].mxu0 %v9571
    %v9762 = vpop.f32.mrb[0].mxu0
    %v9763 = vadd.f32 %v9557, %v9762
    %v9764 = vpop.f32.mrb[0].mxu0
    %v9765 = vadd.f32 %v9561, %v9764
    %9766 = vmatprep.mubr.f32.mxu0 0.0
    %9767 = vmatmul.mubr.f32.gmra.mrb[0].mxu0 %v9574
    %v9768 = vpop.f32.mrb[0].mxu0
    %v9769 = vadd.f32 %v9557, %v9768
    %v9770 = vpop.f32.mrb[0].mxu0
    %v9771 = vadd.f32 %v9561, %v9770
    %9772 = vmatprep.mubr.f32.mxu0 0.0
    %9773 = vmatmul.mubr.f32.gmra.mrb[0].mxu0 %v9577
    %v9774 = vpop.f32.mrb[0].mxu0
    %v9775 = vadd.f32 %v9557, %v9774
    %v9776 = vpop.f32.mrb[0].mxu0
    %v9777 = vadd.f32 %v9561, %v9776
    %9778 = vmatprep.mubr.f32.mxu0 0.0
    %9779 = vmatmul.mubr.f32.gmra.mrb[0].mxu0 %v9580
    %v9780 = vpop.f32.mrb[0].mxu0
    %v9781 = vadd.f32 %v9557, %v9780
    %v9782 = vpop.f32.mrb[0].mxu0
    %v9783 = vadd.f32 %v9561, %v9782
    %9784 = vmatprep.mubr.f32.mxu0 0.0
    %9785 = vmatmul.mubr.f32.gmra.mrb[0].mxu0 %v9583
    %v9786 = vpop.f32.mrb[0].mxu0
    %v9787 = vadd.f32 %v9557, %v9786
    %v9788 = vpop.f32.mrb[0].mxu0
    %v9789 = vadd.f32 %v9561, %v9788
    %9790 = vmatprep.mubr.f32.mxu0 0.0
    %9791 = vmatmul.mubr.f32.gmra.mrb[0].mxu0 %v9586
    %v9792 = vpop.f32.mrb[0].mxu0
    %v9793 = vadd.f32 %v9557, %v9792
    %v9794 = vpop.f32.mrb[0].mxu0
    %v9795 = vadd.f32 %v9561, %v9794
    %9796 = vdwg.mxu0
    %v9797 = vmax.f32 %v9751, 0.0
    %v9798 = vmax.f32 %v9753, 0.0
    %v9799 = vmax.f32 %v9757, 0.0
    %v9800 = vmax.f32 %v9759, 0.0
    %v9801 = vmax.f32 %v9763, 0.0
    %v9802 = vmax.f32 %v9765, 0.0
    %v9803 = vmax.f32 %v9769, 0.0
    %v9804 = vmax.f32 %v9771, 0.0
    %v9805 = vmax.f32 %v9775, 0.0
    %v9806 = vmax.f32 %v9777, 0.0
    %v9807 = vmax.f32 %v9781, 0.0
    %v9808 = vmax.f32 %v9783, 0.0
    %v9809 = vmax.f32 %v9787, 0.0
    %v9810 = vmax.f32 %v9789, 0.0
    %v9811 = vmax.f32 %v9793, 0.0
    %v9812 = vmax.f32 %v9795, 0.0
    %s9813 = scalar_lea.vmem %s17, 64
    %v9814 = vld [vmem:[%s9813] sm:$0xff]
    %v9815 = vld [vmem:[%s9813 + $0x8] sm:$0xff]
    %v9816 = vld [vmem:[%s9813 + $0x10] sm:$0xff]
    %v9817 = vld [vmem:[%s9813 + $0x18] sm:$0xff]
    %v9818 = vld [vmem:[%s9813 + $0x20] sm:$0xff]
    %v9819 = vld [vmem:[%s9813 + $0x28] sm:$0xff]
    %v9820 = vld [vmem:[%s9813 + $0x30] sm:$0xff]
    %v9821 = vld [vmem:[%s9813 + $0x38] sm:$0xff]
    %s9822 = scalar_lea.vmem %s18, 1
    %v9823 = vld [vmem:[%s9822] sm:$0x1]
    %v9825 = vlaneseq
    %v9826 = vshrl.u32 %v9825, 7
    %v9827 = vsub.s32 0, %v9826
    %v9828 = vrot.slane %v9823, %v9827
    %9830 = vmatprep.subr.mxu0 %v9815
    %9831 = vmatpush1.xpose.msra.mxu0 %v9814
    %9832 = vmatprep.subr.mxu0 %v9817
    %9833 = vmatpush1.xpose.msra.mxu0 %v9816
    %9834 = vmatprep.subr.mxu0 %v9819
    %9835 = vmatpush1.xpose.msra.mxu0 %v9818
    %9836 = vmatprep.subr.mxu0 %v9821
    %9837 = vmatpush1.xpose.msra.mxu0 %v9820
    %9838 = vmatprep.subr.mxu0 0.0
    %9839 = vmatpush1.xpose.msra.mxu0 0.0
    %9840 = vmatprep.subr.mxu0 0.0
    %9841 = vmatpush1.xpose.msra.mxu0 0.0
    %9842 = vmatprep.subr.mxu0 0.0
    %9843 = vmatpush1.xpose.msra.mxu0 0.0
    %9844 = vmatprep.subr.mxu0 0.0
    %9845 = vmatpush1.xpose.msra.mxu0 0.0
    %9846 = vmatprep.subr.mxu0 0.0
    %9847 = vmatpush1.xpose.msra.mxu0 0.0
    %9848 = vmatprep.subr.mxu0 0.0
    %9849 = vmatpush1.xpose.msra.mxu0 0.0
    %9850 = vmatprep.subr.mxu0 0.0
    %9851 = vmatpush1.xpose.msra.mxu0 0.0
    %9852 = vmatprep.subr.mxu0 0.0
    %9853 = vmatpush1.xpose.msra.mxu0 0.0
    %9854 = vmatprep.subr.mxu0 0.0
    %9855 = vmatpush1.xpose.msra.mxu0 0.0
    %9856 = vmatprep.subr.mxu0 0.0
    %9857 = vmatpush1.xpose.msra.mxu0 0.0
    %9858 = vmatprep.subr.mxu0 0.0
    %9859 = vmatpush1.xpose.msra.mxu0 0.0
    %9860 = vmatprep.subr.mxu0 0.0
    %9861 = vmatpush1.xpose.msra.mxu0 0.0
    %9862 = vmatprep.subr.mxu0 0.0
    %9863 = vmatpush1.xpose.msra.mxu0 0.0
    %9864 = vmatprep.subr.mxu0 0.0
    %9865 = vmatpush1.xpose.msra.mxu0 0.0
    %9866 = vmatprep.subr.mxu0 0.0
    %9867 = vmatpush1.xpose.msra.mxu0 0.0
    %9868 = vmatprep.subr.mxu0 0.0
    %9869 = vmatpush1.xpose.msra.mxu0 0.0
    %9870 = vmatprep.subr.mxu0 0.0
    %9871 = vmatpush1.xpose.msra.mxu0 0.0
    %9872 = vmatprep.subr.mxu0 0.0
    %9873 = vmatpush1.xpose.msra.mxu0 0.0
    %9874 = vmatprep.subr.mxu0 0.0
    %9875 = vmatpush1.xpose.msra.mxu0 0.0
    %9876 = vmatprep.subr.mxu0 0.0
    %9877 = vmatpush1.xpose.msra.mxu0 0.0
    %9878 = vmatprep.subr.mxu0 0.0
    %9879 = vmatpush1.xpose.msra.mxu0 0.0
    %9880 = vmatprep.subr.mxu0 0.0
    %9881 = vmatpush1.xpose.msra.mxu0 0.0
    %9882 = vmatprep.subr.mxu0 0.0
    %9883 = vmatpush1.xpose.msra.mxu0 0.0
    %9884 = vmatprep.subr.mxu0 0.0
    %9885 = vmatpush1.xpose.msra.mxu0 0.0
    %9886 = vmatprep.subr.mxu0 0.0
    %9887 = vmatpush1.xpose.msra.mxu0 0.0
    %9888 = vmatprep.subr.mxu0 0.0
    %9889 = vmatpush1.xpose.msra.mxu0 0.0
    %9890 = vmatprep.subr.mxu0 0.0
    %9891 = vmatpush1.xpose.msra.mxu0 0.0
    %9892 = vmatprep.subr.mxu0 0.0
    %9893 = vmatpush1.xpose.msra.mxu0 0.0
    %9894 = vmatprep.mubr.f32.mxu0 %v9798
    %9895 = vmatmul.mubr.f32.gmra.mrb[0].mxu0 %v9797
    %v9896 = vpop.f32.mrb[0].mxu0
    %v9897 = vadd.f32 %v9828, %v9896
    %v9898 = vpop.f32.mrb[0].mxu0
    %9899 = vmatprep.mubr.f32.mxu0 %v9800
    %9900 = vmatmul.mubr.f32.gmra.mrb[0].mxu0 %v9799
    %v9901 = vpop.f32.mrb[0].mxu0
    %v9902 = vadd.f32 %v9828, %v9901
    %v9903 = vpop.f32.mrb[0].mxu0
    %9904 = vmatprep.mubr.f32.mxu0 %v9802
    %9905 = vmatmul.mubr.f32.gmra.mrb[0].mxu0 %v9801
    %v9906 = vpop.f32.mrb[0].mxu0
    %v9907 = vadd.f32 %v9828, %v9906
    %v9908 = vpop.f32.mrb[0].mxu0
    %9909 = vmatprep.mubr.f32.mxu0 %v9804
    %9910 = vmatmul.mubr.f32.gmra.mrb[0].mxu0 %v9803
    %v9911 = vpop.f32.mrb[0].mxu0
    %v9912 = vadd.f32 %v9828, %v9911
    %v9913 = vpop.f32.mrb[0].mxu0
    %9914 = vmatprep.mubr.f32.mxu0 %v9806
    %9915 = vmatmul.mubr.f32.gmra.mrb[0].mxu0 %v9805
    %v9916 = vpop.f32.mrb[0].mxu0
    %v9917 = vadd.f32 %v9828, %v9916
    %v9918 = vpop.f32.mrb[0].mxu0
    %9919 = vmatprep.mubr.f32.mxu0 %v9808
    %9920 = vmatmul.mubr.f32.gmra.mrb[0].mxu0 %v9807
    %v9921 = vpop.f32.mrb[0].mxu0
    %v9922 = vadd.f32 %v9828, %v9921
    %v9923 = vpop.f32.mrb[0].mxu0
    %9924 = vmatprep.mubr.f32.mxu0 %v9810
    %9925 = vmatmul.mubr.f32.gmra.mrb[0].mxu0 %v9809
    %v9926 = vpop.f32.mrb[0].mxu0
    %v9927 = vadd.f32 %v9828, %v9926
    %v9928 = vpop.f32.mrb[0].mxu0
    %9929 = vmatprep.mubr.f32.mxu0 %v9812
    %9930 = vmatmul.mubr.f32.gmra.mrb[0].mxu0 %v9811
    %v9931 = vpop.f32.mrb[0].mxu0
    %v9932 = vadd.f32 %v9828, %v9931
    %v9933 = vpop.f32.mrb[0].mxu0
    %9934 = vdwg.mxu0
    %s9935 = scalar_lea.vmem %s22, 128
    %9936 = vst [vmem:[%s9935] sm:$0xff] %v9797
    %9937 = vst [vmem:[%s9935 + $0x8] sm:$0xff] %v9798
    %9938 = vst [vmem:[%s9935 + $0x10] sm:$0xff] %v9799
    %9939 = vst [vmem:[%s9935 + $0x18] sm:$0xff] %v9800
    %9940 = vst [vmem:[%s9935 + $0x20] sm:$0xff] %v9801
    %9941 = vst [vmem:[%s9935 + $0x28] sm:$0xff] %v9802
    %9942 = vst [vmem:[%s9935 + $0x30] sm:$0xff] %v9803
    %9943 = vst [vmem:[%s9935 + $0x38] sm:$0xff] %v9804
    %9944 = vst [vmem:[%s9935 + $0x40] sm:$0xff] %v9805
    %9945 = vst [vmem:[%s9935 + $0x48] sm:$0xff] %v9806
    %9946 = vst [vmem:[%s9935 + $0x50] sm:$0xff] %v9807
    %9947 = vst [vmem:[%s9935 + $0x58] sm:$0xff] %v9808
    %9948 = vst [vmem:[%s9935 + $0x60] sm:$0xff] %v9809
    %9949 = vst [vmem:[%s9935 + $0x68] sm:$0xff] %v9810
    %9950 = vst [vmem:[%s9935 + $0x70] sm:$0xff] %v9811
    %9951 = vst [vmem:[%s9935 + $0x78] sm:$0xff] %v9812
    %v9952 = vsub.f32 %v9897, %v9510
    %v9953 = vsub.f32 %v9902, %v9511
    %v9954 = vsub.f32 %v9907, %v9512
    %v9955 = vsub.f32 %v9912, %v9513
    %v9956 = vsub.f32 %v9917, %v9514
    %v9957 = vsub.f32 %v9922, %v9515
    %v9958 = vsub.f32 %v9927, %v9516
    %v9959 = vsub.f32 %v9932, %v9517
    %v9960 = vmul.f32 %v9952, %v9952
    %v9961 = vmul.f32 %v9953, %v9953
    %v9962 = vmul.f32 %v9954, %v9954
    %v9963 = vmul.f32 %v9955, %v9955
    %v9964 = vmul.f32 %v9956, %v9956
    %v9965 = vmul.f32 %v9957, %v9957
    %v9966 = vmul.f32 %v9958, %v9958
    %v9967 = vmul.f32 %v9959, %v9959
    %v9968 = vsel %vm101, %v9960, 0.0
    %v9969 = vsel %vm101, %v9961, 0.0
    %v9970 = vadd.f32 %v9968, %v9969
    %v9971 = vsel %vm101, %v9962, 0.0
    %v9972 = vadd.f32 %v9970, %v9971
    %v9973 = vsel %vm101, %v9963, 0.0
    %v9974 = vadd.f32 %v9972, %v9973
    %v9975 = vsel %vm101, %v9964, 0.0
    %v9976 = vadd.f32 %v9974, %v9975
    %v9977 = vsel %vm101, %v9965, 0.0
    %v9978 = vadd.f32 %v9976, %v9977
    %v9979 = vsel %vm101, %v9966, 0.0
    %v9980 = vadd.f32 %v9978, %v9979
    %v9981 = vsel %vm101, %v9967, 0.0
    %v9982 = vadd.f32 %v9980, %v9981
    %9983 = vadd.xlane.f32.xlu0 %v9982
    %v9984 = vpop.xlane.xlu0 %9983
    %v9985 = vrot.slane %v9984, 4
    %v9986 = vadd.f32 %v9984, %v9985
    %v9987 = vrot.slane %v9986, 2
    %v9988 = vadd.f32 %v9986, %v9987
    %v9989 = vrot.slane %v9988, 1
    %v9990 = vadd.f32 %v9988, %v9989
    %s9991 = vtos %v9990
    %v9992 = vrcp.pop 2048.0
    %s9993 = vtos %v9992
    %s9994 = smul.f32 %s9991, %s9993
    %s9995 = sadd.f32 %s5277, %s9994
    %s9996 = scalar_lea.smem [#allocation9], 0
    %9997 = sst [smem:[%s9996]] %s9995
    %v9998 = vmul.f32 %v9510, %v9510
    %v9999 = vmul.f32 %v9511, %v9511
    %v10000 = vmul.f32 %v9512, %v9512
    %v10001 = vmul.f32 %v9513, %v9513
    %v10002 = vmul.f32 %v9514, %v9514
    %v10003 = vmul.f32 %v9515, %v9515
    %v10004 = vmul.f32 %v9516, %v9516
    %v10005 = vmul.f32 %v9517, %v9517
    %v10006 = vsel %vm101, %v9998, 0.0
    %10007 = vadd.xlane.f32.xlu0 %v10006
    %v10008 = vpop.xlane.xlu0 %10007
    %v10009 = vsel %vm101, %v9999, 0.0
    %10010 = vadd.xlane.f32.xlu0 %v10009
    %v10011 = vpop.xlane.xlu0 %10010
    %v10012 = vsel %vm101, %v10000, 0.0
    %10013 = vadd.xlane.f32.xlu0 %v10012
    %v10014 = vpop.xlane.xlu0 %10013
    %v10015 = vsel %vm101, %v10001, 0.0
    %10016 = vadd.xlane.f32.xlu0 %v10015
    %v10017 = vpop.xlane.xlu0 %10016
    %v10018 = vsel %vm101, %v10002, 0.0
    %10019 = vadd.xlane.f32.xlu0 %v10018
    %v10020 = vpop.xlane.xlu0 %10019
    %v10021 = vsel %vm101, %v10003, 0.0
    %10022 = vadd.xlane.f32.xlu0 %v10021
    %v10023 = vpop.xlane.xlu0 %10022
    %v10024 = vsel %vm101, %v10004, 0.0
    %10025 = vadd.xlane.f32.xlu0 %v10024
    %v10026 = vpop.xlane.xlu0 %10025
    %v10027 = vsel %vm101, %v10005, 0.0
    %10028 = vadd.xlane.f32.xlu0 %v10027
    %v10029 = vpop.xlane.xlu0 %10028
    %v10030 = vmul.f32 %v10008, %v318
    %v10031 = vmul.f32 %v10011, %v318
    %v10032 = vmul.f32 %v10014, %v318
    %v10033 = vmul.f32 %v10017, %v318
    %v10034 = vmul.f32 %v10020, %v318
    %v10035 = vmul.f32 %v10023, %v318
    %v10036 = vmul.f32 %v10026, %v318
    %v10037 = vmul.f32 %v10029, %v318
    %v10038 = vadd.f32 %v10030, 1.1920929e-07
    %v10039 = vadd.f32 %v10031, 1.1920929e-07
    %v10040 = vadd.f32 %v10032, 1.1920929e-07
    %v10041 = vadd.f32 %v10033, 1.1920929e-07
    %v10042 = vadd.f32 %v10034, 1.1920929e-07
    %v10043 = vadd.f32 %v10035, 1.1920929e-07
    %v10044 = vadd.f32 %v10036, 1.1920929e-07
    %v10045 = vadd.f32 %v10037, 1.1920929e-07
    %v10046 = vrsqrt.pop %v10038
    %v10047 = vrsqrt.pop %v10039
    %v10048 = vrsqrt.pop %v10040
    %v10049 = vrsqrt.pop %v10041
    %v10050 = vrsqrt.pop %v10042
    %v10051 = vrsqrt.pop %v10043
    %v10052 = vrsqrt.pop %v10044
    %v10053 = vrsqrt.pop %v10045
    %v10054 = vmul.f32 %v9510, %v10046
    %v10055 = vmul.f32 %v9511, %v10047
    %v10056 = vmul.f32 %v9512, %v10048
    %v10057 = vmul.f32 %v9513, %v10049
    %v10058 = vmul.f32 %v9514, %v10050
    %v10059 = vmul.f32 %v9515, %v10051
    %v10060 = vmul.f32 %v9516, %v10052
    %v10061 = vmul.f32 %v9517, %v10053
    %v10062 = vld [vmem:[%s19] sm:$0xff]
    %v10063 = vld [vmem:[%s19 + $0x8] sm:$0xff]
    %v10064 = vld [vmem:[%s19 + $0x10] sm:$0xff]
    %v10065 = vld [vmem:[%s19 + $0x18] sm:$0xff]
    %v10066 = vld [vmem:[%s19 + $0x20] sm:$0xff]
    %v10067 = vld [vmem:[%s19 + $0x28] sm:$0xff]
    %v10068 = vld [vmem:[%s19 + $0x30] sm:$0xff]
    %v10069 = vld [vmem:[%s19 + $0x38] sm:$0xff]
    %v10070 = vld [vmem:[%s19 + $0x40] sm:$0xff]
    %v10071 = vld [vmem:[%s19 + $0x48] sm:$0xff]
    %v10072 = vld [vmem:[%s19 + $0x50] sm:$0xff]
    %v10073 = vld [vmem:[%s19 + $0x58] sm:$0xff]
    %v10074 = vld [vmem:[%s19 + $0x60] sm:$0xff]
    %v10075 = vld [vmem:[%s19 + $0x68] sm:$0xff]
    %v10076 = vld [vmem:[%s19 + $0x70] sm:$0xff]
    %v10077 = vld [vmem:[%s19 + $0x78] sm:$0xff]
    %v10079 = vsel %vm101, %v10054, 0
    %v10082 = vsel %vm101, %v10055, 0
    %v10085 = vsel %vm101, %v10056, 0
    %v10088 = vsel %vm101, %v10057, 0
    %v10091 = vsel %vm101, %v10058, 0
    %v10094 = vsel %vm101, %v10059, 0
    %v10097 = vsel %vm101, %v10060, 0
    %v10100 = vsel %vm101, %v10061, 0
    %v10103 = vsel %vm101, %v10062, 0
    %v10106 = vsel %vm101, %v10063, 0
    %v10109 = vsel %vm101, %v10064, 0
    %v10112 = vsel %vm101, %v10065, 0
    %v10115 = vsel %vm101, %v10066, 0
    %v10118 = vsel %vm101, %v10067, 0
    %v10121 = vsel %vm101, %v10068, 0
    %v10124 = vsel %vm101, %v10069, 0
    %v10127 = vsel %vm101, %v10070, 0
    %v10130 = vsel %vm101, %v10071, 0
    %v10133 = vsel %vm101, %v10072, 0
    %v10136 = vsel %vm101, %v10073, 0
    %v10139 = vsel %vm101, %v10074, 0
    %v10142 = vsel %vm101, %v10075, 0
    %v10145 = vsel %vm101, %v10076, 0
    %v10148 = vsel %vm101, %v10077, 0
    %10150 = vmatprep.subr.mxu0 0.0
    %10151 = vmatpush1.xpose.msra.mxu0 %v10103
    %10152 = vmatprep.subr.mxu0 0.0
    %10153 = vmatpush1.xpose.msra.mxu0 %v10106
    %10154 = vmatprep.subr.mxu0 0.0
    %10155 = vmatpush1.xpose.msra.mxu0 %v10109
    %10156 = vmatprep.subr.mxu0 0.0
    %10157 = vmatpush1.xpose.msra.mxu0 %v10112
    %10158 = vmatprep.subr.mxu0 0.0
    %10159 = vmatpush1.xpose.msra.mxu0 %v10115
    %10160 = vmatprep.subr.mxu0 0.0
    %10161 = vmatpush1.xpose.msra.mxu0 %v10118
    %10162 = vmatprep.subr.mxu0 0.0
    %10163 = vmatpush1.xpose.msra.mxu0 %v10121
    %10164 = vmatprep.subr.mxu0 0.0
    %10165 = vmatpush1.xpose.msra.mxu0 %v10124
    %10166 = vmatprep.subr.mxu0 0.0
    %10167 = vmatpush1.xpose.msra.mxu0 %v10127
    %10168 = vmatprep.subr.mxu0 0.0
    %10169 = vmatpush1.xpose.msra.mxu0 %v10130
    %10170 = vmatprep.subr.mxu0 0.0
    %10171 = vmatpush1.xpose.msra.mxu0 %v10133
    %10172 = vmatprep.subr.mxu0 0.0
    %10173 = vmatpush1.xpose.msra.mxu0 %v10136
    %10174 = vmatprep.subr.mxu0 0.0
    %10175 = vmatpush1.xpose.msra.mxu0 %v10139
    %10176 = vmatprep.subr.mxu0 0.0
    %10177 = vmatpush1.xpose.msra.mxu0 %v10142
    %10178 = vmatprep.subr.mxu0 0.0
    %10179 = vmatpush1.xpose.msra.mxu0 %v10145
    %10180 = vmatprep.subr.mxu0 0.0
    %10181 = vmatpush1.xpose.msra.mxu0 %v10148
    %10182 = vmatprep.subr.mxu0 0.0
    %10183 = vmatpush1.xpose.msra.mxu0 0.0
    %10184 = vmatprep.subr.mxu0 0.0
    %10185 = vmatpush1.xpose.msra.mxu0 0.0
    %10186 = vmatprep.subr.mxu0 0.0
    %10187 = vmatpush1.xpose.msra.mxu0 0.0
    %10188 = vmatprep.subr.mxu0 0.0
    %10189 = vmatpush1.xpose.msra.mxu0 0.0
    %10190 = vmatprep.subr.mxu0 0.0
    %10191 = vmatpush1.xpose.msra.mxu0 0.0
    %10192 = vmatprep.subr.mxu0 0.0
    %10193 = vmatpush1.xpose.msra.mxu0 0.0
    %10194 = vmatprep.subr.mxu0 0.0
    %10195 = vmatpush1.xpose.msra.mxu0 0.0
    %10196 = vmatprep.subr.mxu0 0.0
    %10197 = vmatpush1.xpose.msra.mxu0 0.0
    %10198 = vmatprep.subr.mxu0 0.0
    %10199 = vmatpush1.xpose.msra.mxu0 0.0
    %10200 = vmatprep.subr.mxu0 0.0
    %10201 = vmatpush1.xpose.msra.mxu0 0.0
    %10202 = vmatprep.subr.mxu0 0.0
    %10203 = vmatpush1.xpose.msra.mxu0 0.0
    %10204 = vmatprep.subr.mxu0 0.0
    %10205 = vmatpush1.xpose.msra.mxu0 0.0
    %10206 = vmatprep.subr.mxu0 0.0
    %10207 = vmatpush1.xpose.msra.mxu0 0.0
    %10208 = vmatprep.subr.mxu0 0.0
    %10209 = vmatpush1.xpose.msra.mxu0 0.0
    %10210 = vmatprep.subr.mxu0 0.0
    %10211 = vmatpush1.xpose.msra.mxu0 0.0
    %10212 = vmatprep.subr.mxu0 0.0
    %10213 = vmatpush1.xpose.msra.mxu0 0.0
    %10214 = vmatprep.mubr.f32.mxu0 0.0
    %10215 = vmatmul.mubr.f32.gmra.mrb[0].mxu0 %v10079
    %v10216 = vpop.f32.mrb[0].mxu0
    %v10217 = vadd.f32 0.0, %v10216
    %v10218 = vpop.f32.mrb[0].mxu0
    %10219 = vmatprep.mubr.f32.mxu0 0.0
    %10220 = vmatmul.mubr.f32.gmra.mrb[0].mxu0 %v10082
    %v10221 = vpop.f32.mrb[0].mxu0
    %v10222 = vadd.f32 0.0, %v10221
    %v10223 = vpop.f32.mrb[0].mxu0
    %10224 = vmatprep.mubr.f32.mxu0 0.0
    %10225 = vmatmul.mubr.f32.gmra.mrb[0].mxu0 %v10085
    %v10226 = vpop.f32.mrb[0].mxu0
    %v10227 = vadd.f32 0.0, %v10226
    %v10228 = vpop.f32.mrb[0].mxu0
    %10229 = vmatprep.mubr.f32.mxu0 0.0
    %10230 = vmatmul.mubr.f32.gmra.mrb[0].mxu0 %v10088
    %v10231 = vpop.f32.mrb[0].mxu0
    %v10232 = vadd.f32 0.0, %v10231
    %v10233 = vpop.f32.mrb[0].mxu0
    %10234 = vmatprep.mubr.f32.mxu0 0.0
    %10235 = vmatmul.mubr.f32.gmra.mrb[0].mxu0 %v10091
    %v10236 = vpop.f32.mrb[0].mxu0
    %v10237 = vadd.f32 0.0, %v10236
    %v10238 = vpop.f32.mrb[0].mxu0
    %10239 = vmatprep.mubr.f32.mxu0 0.0
    %10240 = vmatmul.mubr.f32.gmra.mrb[0].mxu0 %v10094
    %v10241 = vpop.f32.mrb[0].mxu0
    %v10242 = vadd.f32 0.0, %v10241
    %v10243 = vpop.f32.mrb[0].mxu0
    %10244 = vmatprep.mubr.f32.mxu0 0.0
    %10245 = vmatmul.mubr.f32.gmra.mrb[0].mxu0 %v10097
    %v10246 = vpop.f32.mrb[0].mxu0
    %v10247 = vadd.f32 0.0, %v10246
    %v10248 = vpop.f32.mrb[0].mxu0
    %10249 = vmatprep.mubr.f32.mxu0 0.0
    %10250 = vmatmul.mubr.f32.gmra.mrb[0].mxu0 %v10100
    %v10251 = vpop.f32.mrb[0].mxu0
    %v10252 = vadd.f32 0.0, %v10251
    %v10253 = vpop.f32.mrb[0].mxu0
    %10254 = vdwg.mxu0
    %v10255 = vrcp.pop 42.426407
    %v10256 = vmul.f32 %v10217, %v10255
    %v10257 = vmul.f32 %v10222, %v10255
    %v10258 = vmul.f32 %v10227, %v10255
    %v10259 = vmul.f32 %v10232, %v10255
    %v10260 = vmul.f32 %v10237, %v10255
    %v10261 = vmul.f32 %v10242, %v10255
    %v10262 = vmul.f32 %v10247, %v10255
    %v10263 = vmul.f32 %v10252, %v10255
    %v10264 = vxor.u32 %v10256, 2147483648
    %v10265 = vxor.u32 %v10257, 2147483648
    %v10266 = vxor.u32 %v10258, 2147483648
    %v10267 = vxor.u32 %v10259, 2147483648
    %v10268 = vxor.u32 %v10260, 2147483648
    %v10269 = vxor.u32 %v10261, 2147483648
    %v10270 = vxor.u32 %v10262, 2147483648
    %v10271 = vxor.u32 %v10263, 2147483648
    %v10272 = vmul.f32 %v10264, 1.442695
    %v10273 = vpow.pop %v10272
    %v10274 = vmul.f32 %v10265, 1.442695
    %v10275 = vpow.pop %v10274
    %v10276 = vmul.f32 %v10266, 1.442695
    %v10277 = vpow.pop %v10276
    %v10278 = vmul.f32 %v10267, 1.442695
    %v10279 = vpow.pop %v10278
    %v10280 = vmul.f32 %v10268, 1.442695
    %v10281 = vpow.pop %v10280
    %v10282 = vmul.f32 %v10269, 1.442695
    %v10283 = vpow.pop %v10282
    %v10284 = vmul.f32 %v10270, 1.442695
    %v10285 = vpow.pop %v10284
    %v10286 = vmul.f32 %v10271, 1.442695
    %v10287 = vpow.pop %v10286
    %v10288 = vadd.f32 %v10273, 1.0
    %v10289 = vadd.f32 %v10275, 1.0
    %v10290 = vadd.f32 %v10277, 1.0
    %v10291 = vadd.f32 %v10279, 1.0
    %v10292 = vadd.f32 %v10281, 1.0
    %v10293 = vadd.f32 %v10283, 1.0
    %v10294 = vadd.f32 %v10285, 1.0
    %v10295 = vadd.f32 %v10287, 1.0
    %v10296 = vrcp.pop %v10288
    %v10297 = vmul.f32 1.0, %v10296
    %v10298 = vrcp.pop %v10289
    %v10299 = vmul.f32 1.0, %v10298
    %v10300 = vrcp.pop %v10290
    %v10301 = vmul.f32 1.0, %v10300
    %v10302 = vrcp.pop %v10291
    %v10303 = vmul.f32 1.0, %v10302
    %v10304 = vrcp.pop %v10292
    %v10305 = vmul.f32 1.0, %v10304
    %v10306 = vrcp.pop %v10293
    %v10307 = vmul.f32 1.0, %v10306
    %v10308 = vrcp.pop %v10294
    %v10309 = vmul.f32 1.0, %v10308
    %v10310 = vrcp.pop %v10295
    %v10311 = vmul.f32 1.0, %v10310
    %v10312 = vmul.f32 %v10297, 30.0
    %v10313 = vmul.f32 %v10299, 30.0
    %v10314 = vmul.f32 %v10301, 30.0
    %v10315 = vmul.f32 %v10303, 30.0
    %v10316 = vmul.f32 %v10305, 30.0
    %v10317 = vmul.f32 %v10307, 30.0
    %v10318 = vmul.f32 %v10309, 30.0
    %v10319 = vmul.f32 %v10311, 30.0
    %10320 = vst [vmem:[#allocation8] sm:$0xff] %v10312
    %10321 = vst [vmem:[#allocation8 + $0x8] sm:$0xff] %v10313
    %10322 = vst [vmem:[#allocation8 + $0x10] sm:$0xff] %v10314
    %10323 = vst [vmem:[#allocation8 + $0x18] sm:$0xff] %v10315
    %10324 = vst [vmem:[#allocation8 + $0x20] sm:$0xff] %v10316
    %10325 = vst [vmem:[#allocation8 + $0x28] sm:$0xff] %v10317
    %10326 = vst [vmem:[#allocation8 + $0x30] sm:$0xff] %v10318
    %10327 = vst [vmem:[#allocation8 + $0x38] sm:$0xff] %v10319
    // Predicated region
    $region90: #{_lambda_.1} parent=1 // pred_check
      _
    $region91: #{_lambda_.1} parent=1 // pred_check_branch
      %10329 = sbr.rel (0) target = $region93
    $region92: #{_lambda_.1} parent=1 // pred_region
      %s10331 = ssub.s32 1024, 1024
      %10332 = vsyncadd [#allocation3], %s10331
      %s10333 = sshll.u32 [#allocation8], 4
      %s10334 = int_to_ptr.vmem [resolvable:$true] %s10333
      %10339 = dma.vmem_to_hbm [thread:$0]  %s10334, 1024, %s20, [#allocation3], 128, 128, 8
    $region93: #{_lambda_.1} parent=1 // pred_fallthru
      _
    // Predicated region
    $region94: #{_lambda_.1} parent=1 // pred_check
      _
    $region95: #{_lambda_.1} parent=1 // pred_check_branch
      %10341 = sbr.rel (0) target = $region97
    $region96: #{_lambda_.1} parent=1 // pred_region
      %s10343 = ssub.s32 16, 16
      %10344 = vsyncadd [#allocation4], %s10343
      %10347 = dma.smem_to_hbm [#allocation9], 16, %s21, [#allocation4]
    $region97: #{_lambda_.1} parent=1 // pred_fallthru
      _
    // Predicated region
    $region98: #{_lambda_.1} parent=1 // pred_check
      _
    $region99: #{_lambda_.1} parent=1 // pred_check_branch
      %10349 = sbr.rel (0) target = $region101
    $region100: #{_lambda_.1} parent=1 // pred_region
      _
    $region101: #{_lambda_.1} parent=1 // pred_fallthru
      _
    // Predicated region
    $region102: #{_lambda_.1} parent=1 // pred_check
      _
    $region103: #{_lambda_.1} parent=1 // pred_check_branch
      %10351 = sbr.rel (0) target = $region105
    $region104: #{_lambda_.1} parent=1 // pred_region
      %10352 = dma.done [#allocation3], 1024
    $region105: #{_lambda_.1} parent=1 // pred_fallthru
      _
    // Predicated region
    $region106: #{_lambda_.1} parent=1 // pred_check
      _
    $region107: #{_lambda_.1} parent=1 // pred_check_branch
      %10354 = sbr.rel (0) target = $region109
    $region108: #{_lambda_.1} parent=1 // pred_region
      %10355 = dma.done [#allocation4], 16
    $region109: #{_lambda_.1} parent=1 // pred_fallthru
      _
    // Predicated region
    $region110: #{_lambda_.1} parent=1 // pred_check
      _
    $region111: #{_lambda_.1} parent=1 // pred_check_branch
      %10357 = sbr.rel (0) target = $region113
    $region112: #{_lambda_.1} parent=1 // pred_region
      _
    $region113: #{_lambda_.1} parent=1 // pred_fallthru
      _
    %10358 = sfence
    %10359 = vsyncpa [#allocation3], 1
    %10360 = vsyncpa [#allocation4], 1
    %10361 = vsyncpa [#allocation5], 1
    %10362 = vsyncpa [#allocation7], 1

</llo_original>
